<compile_context>
chip_gen: v5e
topology: v5e:2x2
jax: 0.10.0
libtpu: 0.0.40
codegen_flags: <defaults>
</compile_context>

<pallas_src>
import math
from types import SimpleNamespace

import jax
import jax.numpy as jnp
from jax.experimental import pallas as pl
from jax.experimental.pallas import tpu as pltpu


# ----------------------------------------------------------------------------
# In-kernel building blocks (all operate on VMEM-resident values)
# ----------------------------------------------------------------------------
def _valid_conv(a, w):
    # a: (Cin, L) value, w: (K, Cout, Cin) value -> (Cout, L - K + 1)
    K = w.shape[0]
    Lout = a.shape[1] - K + 1
    acc = jnp.dot(w[0], a[:, 0:Lout], preferred_element_type=jnp.float32)
    for k in range(1, K):
        acc = acc + jnp.dot(w[k], a[:, k:k + Lout],
                            preferred_element_type=jnp.float32)
    return acc


def _maxpool3_via_select(y):
    # y: (C, Lout) -> (C, (Lout-3)//3 + 1) ; MaxPool1d(kernel=3, stride=3).
    # Downsample with exact one-hot selection matmuls (no strided slicing).
    Lout = y.shape[1]
    Lp = (Lout - 3) // 3 + 1
    row = jax.lax.broadcasted_iota(jnp.int32, (Lout, Lp), 0)
    col3 = 3 * jax.lax.broadcasted_iota(jnp.int32, (Lout, Lp), 1)
    pooled = None
    for r in range(3):
        sel = (row == col3 + r).astype(jnp.float32)          # (Lout, Lp) one-hot
        t = jnp.dot(y, sel, preferred_element_type=jnp.float32)
        pooled = t if pooled is None else jnp.maximum(pooled, t)
    return pooled


def _dgcn_fused_kernel(x_ref,
                       w1_ref, s1_ref, w2_ref, s2_ref,
                       w3_ref, s3_ref, w4_ref, s4_ref,
                       wr_ref, br_ref, wc_ref, bc_ref,
                       o_ref):
    B = x_ref.shape[0]
    acts = [x_ref[b] for b in range(B)]                      # list of (Cin, L)

    # 4x fused (grouped conv [BN folded] + LeakyReLU + MaxPool(3,3))
    for w_ref, s_ref in ((w1_ref, s1_ref), (w2_ref, s2_ref),
                         (w3_ref, s3_ref), (w4_ref, s4_ref)):
        w = w_ref[...]                                       # (K, Cout, Cin) block-diag
        shift = s_ref[...]                                   # (Cout, 1)
        for b in range(B):
            y = _valid_conv(acts[b], w) + shift              # conv + folded BN
            y = jnp.where(y >= 0.0, y, 0.2 * y)              # LeakyReLU(0.2)
            acts[b] = _maxpool3_via_select(y)                # fused MaxPool(3,3)

    wr, br = wr_ref[...], br_ref[...]
    wc, bc = wc_ref[...], bc_ref[...]
    for b in range(B):
        # channel-reduction conv + ELU(alpha=1)
        a = _valid_conv(acts[b], wr) + br
        # (exp(a)-1 kept instead of expm1 for guaranteed Mosaic lowering;
        #  difference is < 1e-7 absolute)
        a = jnp.where(a > 0.0, a, jnp.exp(a) - 1.0)
        # TODO(synk): nn.Dropout is eval-mode identity (no random masking);
        #             BatchNorm uses running stats (eval mode), folded host-side.
        y = _valid_conv(a, wc) + bc                          # classifier conv
        z = y - jnp.max(y, axis=0, keepdims=True)            # log-softmax (axis 0)
        o_ref[b] = z - jnp.log(jnp.sum(jnp.exp(z), axis=0, keepdims=True))


# ----------------------------------------------------------------------------
# Host-side: BN folding, block-diagonal weight packing, single pallas_call
# ----------------------------------------------------------------------------
def _fold_grouped_weight(w, bn, groups, conv_bias=None, eps=1e-5):
    # w: PyTorch layout (Cout, Cin/groups, K); returns
    #   wbd:   (K, Cout, Cin_total) block-diagonal weight with BN scale folded in
    #   shift: (Cout, 1) folded BN shift (incl. conv bias if present)
    gamma, beta, mean, var = bn
    scale = gamma / jnp.sqrt(var + eps)
    if conv_bias is None:
        shift = beta - scale * mean
    else:
        shift = beta + scale * (conv_bias - mean)
    wf = w * scale[:, None, None]
    Cout, cin_g, K = w.shape
    cout_g = Cout // groups
    cin_total = cin_g * groups
    wbd = jnp.zeros((K, Cout, cin_total), jnp.float32)
    for g in range(groups):
        blk = wf[g * cout_g:(g + 1) * cout_g].transpose(2, 0, 1)   # (K, cout_g, cin_g)
        wbd = wbd.at[:, g * cout_g:(g + 1) * cout_g,
                     g * cin_g:(g + 1) * cin_g].set(blk)
    return wbd, shift.reshape(Cout, 1).astype(jnp.float32)


def dgcn_forward_pallas(p, x, opt):
    assert not opt.stride_before_pool   # conv_stride == 1 path of DGCN.__init__
    nc = opt.input_nc
    B = x.shape[0]
    n_classes = p["w_cls"].shape[0]

    w1, s1 = _fold_grouped_weight(p["w_time"], p["bn_time"], nc, conv_bias=p["b_time"])
    w2, s2 = _fold_grouped_weight(p["w_2"], p["bn_2"], nc)
    w3, s3 = _fold_grouped_weight(p["w_3"], p["bn_3"], nc)
    w4, s4 = _fold_grouped_weight(p["w_4"], p["bn_4"], nc)
    wr = jnp.transpose(p["w_res"], (2, 0, 1)).astype(jnp.float32)   # (K, Cout, Cin)
    br = p["b_res"].reshape(-1, 1).astype(jnp.float32)
    wc = jnp.transpose(p["w_cls"], (2, 0, 1)).astype(jnp.float32)
    bc = p["b_cls"].reshape(-1, 1).astype(jnp.float32)

    inputs = (x.astype(jnp.float32),
              w1, s1, w2, s2, w3, s3, w4, s4, wr, br, wc, bc)
    in_specs = [pl.BlockSpec(a.shape, lambda i, n=a.ndim: (0,) * n) for a in inputs]

    out = pl.pallas_call(
        _dgcn_fused_kernel,
        out_shape=jax.ShapeDtypeStruct((B, n_classes, 1), jnp.float32),
        grid=(1,),
        in_specs=in_specs,
        out_specs=pl.BlockSpec((B, n_classes, 1), lambda i: (0, 0, 0)),
        compiler_params=pltpu.CompilerParams(dimension_semantics=("arbitrary",)),
    )(*inputs)
    return out


# ----------------------------------------------------------------------------
# Model parameters (deterministic random init mirroring the PyTorch module)
# ----------------------------------------------------------------------------
def _len_after_conv(L, K):
    return L - K + 1


def _len_after_pool(L):
    return (L - 3) // 3 + 1


def compute_final_conv_length(opt):
    # mirrors DGCN.test() shape arithmetic (conv_stride=1 when not stride_before_pool)
    L = opt.input_length
    L = _len_after_pool(_len_after_conv(L, opt.filter_length))
    L = _len_after_pool(_len_after_conv(L, opt.filter_length_2))
    L = _len_after_pool(_len_after_conv(L, opt.filter_length_3))
    L = _len_after_pool(_len_after_conv(L, opt.filter_length_4))
    L = _len_after_conv(L, opt.channel_res_conv_length)
    return L


def init_params(key, opt):
    nc = opt.input_nc
    keys = iter(jax.random.split(key, 64))

    def conv_w(shape):
        fan_in = shape[1] * shape[2]
        bound = 1.0 / math.sqrt(fan_in)
        return jax.random.uniform(next(keys), shape, jnp.float32, -bound, bound)

    def conv_b(cout, fan_in):
        bound = 1.0 / math.sqrt(fan_in)
        return jax.random.uniform(next(keys), (cout,), jnp.float32, -bound, bound)

    def bn(c):
        gamma = jax.random.uniform(next(keys), (c,), jnp.float32, 0.5, 1.5)
        beta = 0.1 * jax.random.normal(next(keys), (c,), jnp.float32)
        mean = 0.1 * jax.random.normal(next(keys), (c,), jnp.float32)
        var = jax.random.uniform(next(keys), (c,), jnp.float32, 0.5, 1.5)
        return gamma, beta, mean, var

    p = {}
    c1 = opt.n_filters * nc
    p["w_time"] = conv_w((c1, 1, opt.filter_length))
    p["b_time"] = conv_b(c1, 1 * opt.filter_length)
    p["bn_time"] = bn(c1)

    chans = [opt.n_filters, opt.n_filters_2, opt.n_filters_3, opt.n_filters_4]
    klens = [opt.filter_length_2, opt.filter_length_3, opt.filter_length_4]
    for i, blk in enumerate(("2", "3", "4")):
        cin_g = chans[i]
        cout = chans[i + 1] * nc
        p["w_" + blk] = conv_w((cout, cin_g, klens[i]))   # batch_norm=True -> no conv bias
        p["bn_" + blk] = bn(cout)

    cres_in = opt.n_filters_4 * nc
    p["w_res"] = conv_w((nc, cres_in, opt.channel_res_conv_length))
    p["b_res"] = conv_b(nc, cres_in * opt.channel_res_conv_length)

    fcl = compute_final_conv_length(opt)
    p["final_conv_length"] = fcl
    p["w_cls"] = conv_w((opt.n_classes, nc, fcl))
    p["b_cls"] = conv_b(opt.n_classes, nc * fcl)
    return p


# ----------------------------------------------------------------------------
# Pure-JAX reference (for numerical validation)
# ----------------------------------------------------------------------------
def dgcn_forward_ref(p, x, opt):
    nc = opt.input_nc
    eps = 1e-5

    def conv(x, w, b, groups):
        y = jax.lax.conv_general_dilated(
            x, w, window_strides=(1,), padding="VALID",
            dimension_numbers=("NCH", "OIH", "NCH"),
            feature_group_count=groups)
        if b is not None:
            y = y + b[None, :, None]
        return y

    def bn(y, prm):
        g, be, m, v = prm
        return (y - m[None, :, None]) / jnp.sqrt(v[None, :, None] + eps) * g[None, :, None] \
            + be[None, :, None]

    def lrelu(y):
        return jnp.where(y >= 0, y, 0.2 * y)

    def pool(y):
        B, C, L = y.shape
        Lp = (L - 3) // 3 + 1
        return y[:, :, :3 * Lp].reshape(B, C, Lp, 3).max(axis=-1)

    x = pool(lrelu(bn(conv(x, p["w_time"], p["b_time"], nc), p["bn_time"])))
    for blk in ("2", "3", "4"):
        x = pool(lrelu(bn(conv(x, p["w_" + blk], None, nc), p["bn_" + blk])))
    x = conv(x, p["w_res"], p["b_res"], 1)
    x = jnp.where(x > 0, x, jnp.exp(x) - 1.0)
    x = conv(x, p["w_cls"], p["b_cls"], 1)
    return jax.nn.log_softmax(x, axis=1)


# ----------------------------------------------------------------------------
if __name__ == "__main__":
    opt = SimpleNamespace(
        input_nc=2,
        n_filters=4, n_filters_2=4, n_filters_3=4, n_filters_4=4,
        filter_length=5, filter_length_2=5, filter_length_3=5, filter_length_4=5,
        channel_res_conv_length=3,
        input_length=512,
        pool_stride=3,
        stride_before_pool=False,
        batch_norm=True,
        drop_prob=0.5,
        n_classes=4,
    )

    key = jax.random.PRNGKey(0)
    pkey, xkey = jax.random.split(key)
    params = init_params(pkey, opt)

    B = 2
    x = jax.random.normal(xkey, (B, opt.input_nc, opt.input_length), jnp.float32)

    fwd = jax.jit(lambda p_, x_: dgcn_forward_pallas(p_, x_, opt))
    out = jax.block_until_ready(fwd(params, x))
    ref = jax.block_until_ready(dgcn_forward_ref(params, x, opt))

    assert out.shape == (B, opt.n_classes, 1), out.shape
    assert bool(jnp.all(jnp.isfinite(out)))
    assert bool(jnp.allclose(out, ref, atol=5e-4, rtol=5e-4)), (out, ref)
    # log-softmax sanity: probabilities sum to 1 over the class axis
    assert bool(jnp.allclose(jnp.exp(out).sum(axis=1), 1.0, atol=1e-4))

    print("KERNEL_OK")
</pallas_src>

<mosaic_0001>
module attributes {stable_mosaic.version = 11 : i64} {
  func.func @_dgcn_fused_kernel(%arg0: i32, %arg1: memref<2x2x512xf32, #tpu.memory_space<vmem>>, %arg2: memref<5x8x2xf32, #tpu.memory_space<vmem>>, %arg3: memref<8x1xf32, #tpu.memory_space<vmem>>, %arg4: memref<5x8x8xf32, #tpu.memory_space<vmem>>, %arg5: memref<8x1xf32, #tpu.memory_space<vmem>>, %arg6: memref<5x8x8xf32, #tpu.memory_space<vmem>>, %arg7: memref<8x1xf32, #tpu.memory_space<vmem>>, %arg8: memref<5x8x8xf32, #tpu.memory_space<vmem>>, %arg9: memref<8x1xf32, #tpu.memory_space<vmem>>, %arg10: memref<3x2x8xf32, #tpu.memory_space<vmem>>, %arg11: memref<2x1xf32, #tpu.memory_space<vmem>>, %arg12: memref<2x4x2xf32, #tpu.memory_space<vmem>>, %arg13: memref<4x1xf32, #tpu.memory_space<vmem>>, %arg14: memref<2x4x1xf32, #tpu.memory_space<vmem>>) attributes {dimension_semantics = [#tpu.dimension_semantics<arbitrary>], iteration_bounds = array<i64: 1>, scalar_prefetch = 0 : i64, scratch_operands = 0 : i64, tpu.core_type = #tpu.core_type<tc>, window_params = [{pipeline_mode = #tpu.pipeline_mode<synchronous>, transform_indices = @transform_0, window_bounds = array<i64: 2, 2, 512>}, {pipeline_mode = #tpu.pipeline_mode<synchronous>, transform_indices = @transform_1, window_bounds = array<i64: 5, 8, 2>}, {pipeline_mode = #tpu.pipeline_mode<synchronous>, transform_indices = @transform_2, window_bounds = array<i64: 8, 1>}, {pipeline_mode = #tpu.pipeline_mode<synchronous>, transform_indices = @transform_3, window_bounds = array<i64: 5, 8, 8>}, {pipeline_mode = #tpu.pipeline_mode<synchronous>, transform_indices = @transform_4, window_bounds = array<i64: 8, 1>}, {pipeline_mode = #tpu.pipeline_mode<synchronous>, transform_indices = @transform_5, window_bounds = array<i64: 5, 8, 8>}, {pipeline_mode = #tpu.pipeline_mode<synchronous>, transform_indices = @transform_6, window_bounds = array<i64: 8, 1>}, {pipeline_mode = #tpu.pipeline_mode<synchronous>, transform_indices = @transform_7, window_bounds = array<i64: 5, 8, 8>}, {pipeline_mode = #tpu.pipeline_mode<synchronous>, transform_indices = @transform_8, window_bounds = array<i64: 8, 1>}, {pipeline_mode = #tpu.pipeline_mode<synchronous>, transform_indices = @transform_9, window_bounds = array<i64: 3, 2, 8>}, {pipeline_mode = #tpu.pipeline_mode<synchronous>, transform_indices = @transform_10, window_bounds = array<i64: 2, 1>}, {pipeline_mode = #tpu.pipeline_mode<synchronous>, transform_indices = @transform_11, window_bounds = array<i64: 2, 4, 2>}, {pipeline_mode = #tpu.pipeline_mode<synchronous>, transform_indices = @transform_12, window_bounds = array<i64: 4, 1>}, {pipeline_mode = #tpu.pipeline_mode<synchronous>, transform_indices = @transform_13, window_bounds = array<i64: 2, 4, 1>}]} {
    %c0 = arith.constant 0 : index
    %c0_0 = arith.constant 0 : index
    %c0_1 = arith.constant 0 : index
    %0 = vector.load %arg1[%c0, %c0_0, %c0_1] : memref<2x2x512xf32, #tpu.memory_space<vmem>>, vector<1x2x512xf32>
    %1 = vector.shape_cast %0 : vector<1x2x512xf32> to vector<2x512xf32>
    %c1 = arith.constant 1 : index
    %c0_2 = arith.constant 0 : index
    %c0_3 = arith.constant 0 : index
    %2 = vector.load %arg1[%c1, %c0_2, %c0_3] : memref<2x2x512xf32, #tpu.memory_space<vmem>>, vector<1x2x512xf32>
    %3 = vector.shape_cast %2 : vector<1x2x512xf32> to vector<2x512xf32>
    %c0_4 = arith.constant 0 : index
    %c0_5 = arith.constant 0 : index
    %c0_6 = arith.constant 0 : index
    %4 = vector.load %arg2[%c0_4, %c0_5, %c0_6] : memref<5x8x2xf32, #tpu.memory_space<vmem>>, vector<5x8x2xf32>
    %c0_7 = arith.constant 0 : index
    %c0_8 = arith.constant 0 : index
    %5 = vector.load %arg3[%c0_7, %c0_8] : memref<8x1xf32, #tpu.memory_space<vmem>>, vector<8x1xf32>
    %6 = vector.extract_strided_slice %4 {offsets = [0, 0, 0], sizes = [1, 8, 2], strides = [1, 1, 1]} : vector<5x8x2xf32> to vector<1x8x2xf32>
    %7 = vector.shape_cast %6 : vector<1x8x2xf32> to vector<8x2xf32>
    %8 = vector.extract_strided_slice %1 {offsets = [0, 0], sizes = [2, 508], strides = [1, 1]} : vector<2x512xf32> to vector<2x508xf32>
    %cst = arith.constant dense<0.000000e+00> : vector<8x508xf32>
    %9 = tpu.matmul %7, %8, %cst {dimension_numbers = #tpu.dot_dimension_numbers<[1], [0], [0], [1], [0, 0, 1, 1], [], []>} : vector<8x2xf32>, vector<2x508xf32>, vector<8x508xf32> -> vector<8x508xf32>
    %10 = vector.extract_strided_slice %4 {offsets = [1, 0, 0], sizes = [1, 8, 2], strides = [1, 1, 1]} : vector<5x8x2xf32> to vector<1x8x2xf32>
    %11 = vector.shape_cast %10 : vector<1x8x2xf32> to vector<8x2xf32>
    %12 = vector.extract_strided_slice %1 {offsets = [0, 1], sizes = [2, 508], strides = [1, 1]} : vector<2x512xf32> to vector<2x508xf32>
    %cst_9 = arith.constant dense<0.000000e+00> : vector<8x508xf32>
    %13 = tpu.matmul %11, %12, %cst_9 {dimension_numbers = #tpu.dot_dimension_numbers<[1], [0], [0], [1], [0, 0, 1, 1], [], []>} : vector<8x2xf32>, vector<2x508xf32>, vector<8x508xf32> -> vector<8x508xf32>
    %14 = arith.addf %9, %13 : vector<8x508xf32>
    %15 = vector.extract_strided_slice %4 {offsets = [2, 0, 0], sizes = [1, 8, 2], strides = [1, 1, 1]} : vector<5x8x2xf32> to vector<1x8x2xf32>
    %16 = vector.shape_cast %15 : vector<1x8x2xf32> to vector<8x2xf32>
    %17 = vector.extract_strided_slice %1 {offsets = [0, 2], sizes = [2, 508], strides = [1, 1]} : vector<2x512xf32> to vector<2x508xf32>
    %cst_10 = arith.constant dense<0.000000e+00> : vector<8x508xf32>
    %18 = tpu.matmul %16, %17, %cst_10 {dimension_numbers = #tpu.dot_dimension_numbers<[1], [0], [0], [1], [0, 0, 1, 1], [], []>} : vector<8x2xf32>, vector<2x508xf32>, vector<8x508xf32> -> vector<8x508xf32>
    %19 = arith.addf %14, %18 : vector<8x508xf32>
    %20 = vector.extract_strided_slice %4 {offsets = [3, 0, 0], sizes = [1, 8, 2], strides = [1, 1, 1]} : vector<5x8x2xf32> to vector<1x8x2xf32>
    %21 = vector.shape_cast %20 : vector<1x8x2xf32> to vector<8x2xf32>
    %22 = vector.extract_strided_slice %1 {offsets = [0, 3], sizes = [2, 508], strides = [1, 1]} : vector<2x512xf32> to vector<2x508xf32>
    %cst_11 = arith.constant dense<0.000000e+00> : vector<8x508xf32>
    %23 = tpu.matmul %21, %22, %cst_11 {dimension_numbers = #tpu.dot_dimension_numbers<[1], [0], [0], [1], [0, 0, 1, 1], [], []>} : vector<8x2xf32>, vector<2x508xf32>, vector<8x508xf32> -> vector<8x508xf32>
    %24 = arith.addf %19, %23 : vector<8x508xf32>
    %25 = vector.extract_strided_slice %4 {offsets = [4, 0, 0], sizes = [1, 8, 2], strides = [1, 1, 1]} : vector<5x8x2xf32> to vector<1x8x2xf32>
    %26 = vector.shape_cast %25 : vector<1x8x2xf32> to vector<8x2xf32>
    %27 = vector.extract_strided_slice %1 {offsets = [0, 4], sizes = [2, 508], strides = [1, 1]} : vector<2x512xf32> to vector<2x508xf32>
    %cst_12 = arith.constant dense<0.000000e+00> : vector<8x508xf32>
    %28 = tpu.matmul %26, %27, %cst_12 {dimension_numbers = #tpu.dot_dimension_numbers<[1], [0], [0], [1], [0, 0, 1, 1], [], []>} : vector<8x2xf32>, vector<2x508xf32>, vector<8x508xf32> -> vector<8x508xf32>
    %29 = arith.addf %24, %28 : vector<8x508xf32>
    %30 = vector.broadcast %5 : vector<8x1xf32> to vector<8x508xf32>
    %31 = arith.addf %29, %30 : vector<8x508xf32>
    %cst_13 = arith.constant 0.000000e+00 : f32
    %32 = vector.broadcast %cst_13 : f32 to vector<8x508xf32>
    %33 = arith.cmpf oge, %31, %32 : vector<8x508xf32>
    %cst_14 = arith.constant 2.000000e-01 : f32
    %34 = vector.broadcast %cst_14 : f32 to vector<8x508xf32>
    %35 = arith.mulf %34, %31 : vector<8x508xf32>
    %36 = arith.select %33, %31, %35 : vector<8x508xi1>, vector<8x508xf32>
    %37 = tpu.iota {dimensions = array<i32: 0>} : vector<508x169xi32>
    %38 = tpu.iota {dimensions = array<i32: 1>} : vector<508x169xi32>
    %c3_i32 = arith.constant 3 : i32
    %39 = vector.broadcast %c3_i32 : i32 to vector<508x169xi32>
    %40 = arith.muli %39, %38 : vector<508x169xi32>
    %c0_i32 = arith.constant 0 : i32
    %41 = vector.broadcast %c0_i32 : i32 to vector<508x169xi32>
    %42 = arith.addi %40, %41 : vector<508x169xi32>
    %43 = arith.cmpi eq, %37, %42 : vector<508x169xi32>
    %44 = arith.extui %43 : vector<508x169xi1> to vector<508x169xi32>
    %45 = arith.sitofp %44 : vector<508x169xi32> to vector<508x169xf32>
    %cst_15 = arith.constant dense<0.000000e+00> : vector<8x169xf32>
    %46 = tpu.matmul %36, %45, %cst_15 {dimension_numbers = #tpu.dot_dimension_numbers<[1], [0], [0], [1], [0, 0, 1, 1], [], []>} : vector<8x508xf32>, vector<508x169xf32>, vector<8x169xf32> -> vector<8x169xf32>
    %c1_i32 = arith.constant 1 : i32
    %47 = vector.broadcast %c1_i32 : i32 to vector<508x169xi32>
    %48 = arith.addi %40, %47 : vector<508x169xi32>
    %49 = arith.cmpi eq, %37, %48 : vector<508x169xi32>
    %50 = arith.extui %49 : vector<508x169xi1> to vector<508x169xi32>
    %51 = arith.sitofp %50 : vector<508x169xi32> to vector<508x169xf32>
    %cst_16 = arith.constant dense<0.000000e+00> : vector<8x169xf32>
    %52 = tpu.matmul %36, %51, %cst_16 {dimension_numbers = #tpu.dot_dimension_numbers<[1], [0], [0], [1], [0, 0, 1, 1], [], []>} : vector<8x508xf32>, vector<508x169xf32>, vector<8x169xf32> -> vector<8x169xf32>
    %53 = arith.maximumf %46, %52 : vector<8x169xf32>
    %c2_i32 = arith.constant 2 : i32
    %54 = vector.broadcast %c2_i32 : i32 to vector<508x169xi32>
    %55 = arith.addi %40, %54 : vector<508x169xi32>
    %56 = arith.cmpi eq, %37, %55 : vector<508x169xi32>
    %57 = arith.extui %56 : vector<508x169xi1> to vector<508x169xi32>
    %58 = arith.sitofp %57 : vector<508x169xi32> to vector<508x169xf32>
    %cst_17 = arith.constant dense<0.000000e+00> : vector<8x169xf32>
    %59 = tpu.matmul %36, %58, %cst_17 {dimension_numbers = #tpu.dot_dimension_numbers<[1], [0], [0], [1], [0, 0, 1, 1], [], []>} : vector<8x508xf32>, vector<508x169xf32>, vector<8x169xf32> -> vector<8x169xf32>
    %60 = arith.maximumf %53, %59 : vector<8x169xf32>
    %61 = vector.extract_strided_slice %4 {offsets = [0, 0, 0], sizes = [1, 8, 2], strides = [1, 1, 1]} : vector<5x8x2xf32> to vector<1x8x2xf32>
    %62 = vector.shape_cast %61 : vector<1x8x2xf32> to vector<8x2xf32>
    %63 = vector.extract_strided_slice %3 {offsets = [0, 0], sizes = [2, 508], strides = [1, 1]} : vector<2x512xf32> to vector<2x508xf32>
    %cst_18 = arith.constant dense<0.000000e+00> : vector<8x508xf32>
    %64 = tpu.matmul %62, %63, %cst_18 {dimension_numbers = #tpu.dot_dimension_numbers<[1], [0], [0], [1], [0, 0, 1, 1], [], []>} : vector<8x2xf32>, vector<2x508xf32>, vector<8x508xf32> -> vector<8x508xf32>
    %65 = vector.extract_strided_slice %4 {offsets = [1, 0, 0], sizes = [1, 8, 2], strides = [1, 1, 1]} : vector<5x8x2xf32> to vector<1x8x2xf32>
    %66 = vector.shape_cast %65 : vector<1x8x2xf32> to vector<8x2xf32>
    %67 = vector.extract_strided_slice %3 {offsets = [0, 1], sizes = [2, 508], strides = [1, 1]} : vector<2x512xf32> to vector<2x508xf32>
    %cst_19 = arith.constant dense<0.000000e+00> : vector<8x508xf32>
    %68 = tpu.matmul %66, %67, %cst_19 {dimension_numbers = #tpu.dot_dimension_numbers<[1], [0], [0], [1], [0, 0, 1, 1], [], []>} : vector<8x2xf32>, vector<2x508xf32>, vector<8x508xf32> -> vector<8x508xf32>
    %69 = arith.addf %64, %68 : vector<8x508xf32>
    %70 = vector.extract_strided_slice %4 {offsets = [2, 0, 0], sizes = [1, 8, 2], strides = [1, 1, 1]} : vector<5x8x2xf32> to vector<1x8x2xf32>
    %71 = vector.shape_cast %70 : vector<1x8x2xf32> to vector<8x2xf32>
    %72 = vector.extract_strided_slice %3 {offsets = [0, 2], sizes = [2, 508], strides = [1, 1]} : vector<2x512xf32> to vector<2x508xf32>
    %cst_20 = arith.constant dense<0.000000e+00> : vector<8x508xf32>
    %73 = tpu.matmul %71, %72, %cst_20 {dimension_numbers = #tpu.dot_dimension_numbers<[1], [0], [0], [1], [0, 0, 1, 1], [], []>} : vector<8x2xf32>, vector<2x508xf32>, vector<8x508xf32> -> vector<8x508xf32>
    %74 = arith.addf %69, %73 : vector<8x508xf32>
    %75 = vector.extract_strided_slice %4 {offsets = [3, 0, 0], sizes = [1, 8, 2], strides = [1, 1, 1]} : vector<5x8x2xf32> to vector<1x8x2xf32>
    %76 = vector.shape_cast %75 : vector<1x8x2xf32> to vector<8x2xf32>
    %77 = vector.extract_strided_slice %3 {offsets = [0, 3], sizes = [2, 508], strides = [1, 1]} : vector<2x512xf32> to vector<2x508xf32>
    %cst_21 = arith.constant dense<0.000000e+00> : vector<8x508xf32>
    %78 = tpu.matmul %76, %77, %cst_21 {dimension_numbers = #tpu.dot_dimension_numbers<[1], [0], [0], [1], [0, 0, 1, 1], [], []>} : vector<8x2xf32>, vector<2x508xf32>, vector<8x508xf32> -> vector<8x508xf32>
    %79 = arith.addf %74, %78 : vector<8x508xf32>
    %80 = vector.extract_strided_slice %4 {offsets = [4, 0, 0], sizes = [1, 8, 2], strides = [1, 1, 1]} : vector<5x8x2xf32> to vector<1x8x2xf32>
    %81 = vector.shape_cast %80 : vector<1x8x2xf32> to vector<8x2xf32>
    %82 = vector.extract_strided_slice %3 {offsets = [0, 4], sizes = [2, 508], strides = [1, 1]} : vector<2x512xf32> to vector<2x508xf32>
    %cst_22 = arith.constant dense<0.000000e+00> : vector<8x508xf32>
    %83 = tpu.matmul %81, %82, %cst_22 {dimension_numbers = #tpu.dot_dimension_numbers<[1], [0], [0], [1], [0, 0, 1, 1], [], []>} : vector<8x2xf32>, vector<2x508xf32>, vector<8x508xf32> -> vector<8x508xf32>
    %84 = arith.addf %79, %83 : vector<8x508xf32>
    %85 = vector.broadcast %5 : vector<8x1xf32> to vector<8x508xf32>
    %86 = arith.addf %84, %85 : vector<8x508xf32>
    %cst_23 = arith.constant 0.000000e+00 : f32
    %87 = vector.broadcast %cst_23 : f32 to vector<8x508xf32>
    %88 = arith.cmpf oge, %86, %87 : vector<8x508xf32>
    %cst_24 = arith.constant 2.000000e-01 : f32
    %89 = vector.broadcast %cst_24 : f32 to vector<8x508xf32>
    %90 = arith.mulf %89, %86 : vector<8x508xf32>
    %91 = arith.select %88, %86, %90 : vector<8x508xi1>, vector<8x508xf32>
    %92 = tpu.iota {dimensions = array<i32: 0>} : vector<508x169xi32>
    %93 = tpu.iota {dimensions = array<i32: 1>} : vector<508x169xi32>
    %c3_i32_25 = arith.constant 3 : i32
    %94 = vector.broadcast %c3_i32_25 : i32 to vector<508x169xi32>
    %95 = arith.muli %94, %93 : vector<508x169xi32>
    %c0_i32_26 = arith.constant 0 : i32
    %96 = vector.broadcast %c0_i32_26 : i32 to vector<508x169xi32>
    %97 = arith.addi %95, %96 : vector<508x169xi32>
    %98 = arith.cmpi eq, %92, %97 : vector<508x169xi32>
    %99 = arith.extui %98 : vector<508x169xi1> to vector<508x169xi32>
    %100 = arith.sitofp %99 : vector<508x169xi32> to vector<508x169xf32>
    %cst_27 = arith.constant dense<0.000000e+00> : vector<8x169xf32>
    %101 = tpu.matmul %91, %100, %cst_27 {dimension_numbers = #tpu.dot_dimension_numbers<[1], [0], [0], [1], [0, 0, 1, 1], [], []>} : vector<8x508xf32>, vector<508x169xf32>, vector<8x169xf32> -> vector<8x169xf32>
    %c1_i32_28 = arith.constant 1 : i32
    %102 = vector.broadcast %c1_i32_28 : i32 to vector<508x169xi32>
    %103 = arith.addi %95, %102 : vector<508x169xi32>
    %104 = arith.cmpi eq, %92, %103 : vector<508x169xi32>
    %105 = arith.extui %104 : vector<508x169xi1> to vector<508x169xi32>
    %106 = arith.sitofp %105 : vector<508x169xi32> to vector<508x169xf32>
    %cst_29 = arith.constant dense<0.000000e+00> : vector<8x169xf32>
    %107 = tpu.matmul %91, %106, %cst_29 {dimension_numbers = #tpu.dot_dimension_numbers<[1], [0], [0], [1], [0, 0, 1, 1], [], []>} : vector<8x508xf32>, vector<508x169xf32>, vector<8x169xf32> -> vector<8x169xf32>
    %108 = arith.maximumf %101, %107 : vector<8x169xf32>
    %c2_i32_30 = arith.constant 2 : i32
    %109 = vector.broadcast %c2_i32_30 : i32 to vector<508x169xi32>
    %110 = arith.addi %95, %109 : vector<508x169xi32>
    %111 = arith.cmpi eq, %92, %110 : vector<508x169xi32>
    %112 = arith.extui %111 : vector<508x169xi1> to vector<508x169xi32>
    %113 = arith.sitofp %112 : vector<508x169xi32> to vector<508x169xf32>
    %cst_31 = arith.constant dense<0.000000e+00> : vector<8x169xf32>
    %114 = tpu.matmul %91, %113, %cst_31 {dimension_numbers = #tpu.dot_dimension_numbers<[1], [0], [0], [1], [0, 0, 1, 1], [], []>} : vector<8x508xf32>, vector<508x169xf32>, vector<8x169xf32> -> vector<8x169xf32>
    %115 = arith.maximumf %108, %114 : vector<8x169xf32>
    %c0_32 = arith.constant 0 : index
    %c0_33 = arith.constant 0 : index
    %c0_34 = arith.constant 0 : index
    %116 = vector.load %arg4[%c0_32, %c0_33, %c0_34] : memref<5x8x8xf32, #tpu.memory_space<vmem>>, vector<5x8x8xf32>
    %c0_35 = arith.constant 0 : index
    %c0_36 = arith.constant 0 : index
    %117 = vector.load %arg5[%c0_35, %c0_36] : memref<8x1xf32, #tpu.memory_space<vmem>>, vector<8x1xf32>
    %118 = vector.extract_strided_slice %116 {offsets = [0, 0, 0], sizes = [1, 8, 8], strides = [1, 1, 1]} : vector<5x8x8xf32> to vector<1x8x8xf32>
    %119 = vector.shape_cast %118 : vector<1x8x8xf32> to vector<8x8xf32>
    %120 = vector.extract_strided_slice %60 {offsets = [0, 0], sizes = [8, 165], strides = [1, 1]} : vector<8x169xf32> to vector<8x165xf32>
    %cst_37 = arith.constant dense<0.000000e+00> : vector<8x165xf32>
    %121 = tpu.matmul %119, %120, %cst_37 {dimension_numbers = #tpu.dot_dimension_numbers<[1], [0], [0], [1], [0, 0, 1, 1], [], []>} : vector<8x8xf32>, vector<8x165xf32>, vector<8x165xf32> -> vector<8x165xf32>
    %122 = vector.extract_strided_slice %116 {offsets = [1, 0, 0], sizes = [1, 8, 8], strides = [1, 1, 1]} : vector<5x8x8xf32> to vector<1x8x8xf32>
    %123 = vector.shape_cast %122 : vector<1x8x8xf32> to vector<8x8xf32>
    %124 = vector.extract_strided_slice %60 {offsets = [0, 1], sizes = [8, 165], strides = [1, 1]} : vector<8x169xf32> to vector<8x165xf32>
    %cst_38 = arith.constant dense<0.000000e+00> : vector<8x165xf32>
    %125 = tpu.matmul %123, %124, %cst_38 {dimension_numbers = #tpu.dot_dimension_numbers<[1], [0], [0], [1], [0, 0, 1, 1], [], []>} : vector<8x8xf32>, vector<8x165xf32>, vector<8x165xf32> -> vector<8x165xf32>
    %126 = arith.addf %121, %125 : vector<8x165xf32>
    %127 = vector.extract_strided_slice %116 {offsets = [2, 0, 0], sizes = [1, 8, 8], strides = [1, 1, 1]} : vector<5x8x8xf32> to vector<1x8x8xf32>
    %128 = vector.shape_cast %127 : vector<1x8x8xf32> to vector<8x8xf32>
    %129 = vector.extract_strided_slice %60 {offsets = [0, 2], sizes = [8, 165], strides = [1, 1]} : vector<8x169xf32> to vector<8x165xf32>
    %cst_39 = arith.constant dense<0.000000e+00> : vector<8x165xf32>
    %130 = tpu.matmul %128, %129, %cst_39 {dimension_numbers = #tpu.dot_dimension_numbers<[1], [0], [0], [1], [0, 0, 1, 1], [], []>} : vector<8x8xf32>, vector<8x165xf32>, vector<8x165xf32> -> vector<8x165xf32>
    %131 = arith.addf %126, %130 : vector<8x165xf32>
    %132 = vector.extract_strided_slice %116 {offsets = [3, 0, 0], sizes = [1, 8, 8], strides = [1, 1, 1]} : vector<5x8x8xf32> to vector<1x8x8xf32>
    %133 = vector.shape_cast %132 : vector<1x8x8xf32> to vector<8x8xf32>
    %134 = vector.extract_strided_slice %60 {offsets = [0, 3], sizes = [8, 165], strides = [1, 1]} : vector<8x169xf32> to vector<8x165xf32>
    %cst_40 = arith.constant dense<0.000000e+00> : vector<8x165xf32>
    %135 = tpu.matmul %133, %134, %cst_40 {dimension_numbers = #tpu.dot_dimension_numbers<[1], [0], [0], [1], [0, 0, 1, 1], [], []>} : vector<8x8xf32>, vector<8x165xf32>, vector<8x165xf32> -> vector<8x165xf32>
    %136 = arith.addf %131, %135 : vector<8x165xf32>
    %137 = vector.extract_strided_slice %116 {offsets = [4, 0, 0], sizes = [1, 8, 8], strides = [1, 1, 1]} : vector<5x8x8xf32> to vector<1x8x8xf32>
    %138 = vector.shape_cast %137 : vector<1x8x8xf32> to vector<8x8xf32>
    %139 = vector.extract_strided_slice %60 {offsets = [0, 4], sizes = [8, 165], strides = [1, 1]} : vector<8x169xf32> to vector<8x165xf32>
    %cst_41 = arith.constant dense<0.000000e+00> : vector<8x165xf32>
    %140 = tpu.matmul %138, %139, %cst_41 {dimension_numbers = #tpu.dot_dimension_numbers<[1], [0], [0], [1], [0, 0, 1, 1], [], []>} : vector<8x8xf32>, vector<8x165xf32>, vector<8x165xf32> -> vector<8x165xf32>
    %141 = arith.addf %136, %140 : vector<8x165xf32>
    %142 = vector.broadcast %117 : vector<8x1xf32> to vector<8x165xf32>
    %143 = arith.addf %141, %142 : vector<8x165xf32>
    %cst_42 = arith.constant 0.000000e+00 : f32
    %144 = vector.broadcast %cst_42 : f32 to vector<8x165xf32>
    %145 = arith.cmpf oge, %143, %144 : vector<8x165xf32>
    %cst_43 = arith.constant 2.000000e-01 : f32
    %146 = vector.broadcast %cst_43 : f32 to vector<8x165xf32>
    %147 = arith.mulf %146, %143 : vector<8x165xf32>
    %148 = arith.select %145, %143, %147 : vector<8x165xi1>, vector<8x165xf32>
    %149 = tpu.iota {dimensions = array<i32: 0>} : vector<165x55xi32>
    %150 = tpu.iota {dimensions = array<i32: 1>} : vector<165x55xi32>
    %c3_i32_44 = arith.constant 3 : i32
    %151 = vector.broadcast %c3_i32_44 : i32 to vector<165x55xi32>
    %152 = arith.muli %151, %150 : vector<165x55xi32>
    %c0_i32_45 = arith.constant 0 : i32
    %153 = vector.broadcast %c0_i32_45 : i32 to vector<165x55xi32>
    %154 = arith.addi %152, %153 : vector<165x55xi32>
    %155 = arith.cmpi eq, %149, %154 : vector<165x55xi32>
    %156 = arith.extui %155 : vector<165x55xi1> to vector<165x55xi32>
    %157 = arith.sitofp %156 : vector<165x55xi32> to vector<165x55xf32>
    %cst_46 = arith.constant dense<0.000000e+00> : vector<8x55xf32>
    %158 = tpu.matmul %148, %157, %cst_46 {dimension_numbers = #tpu.dot_dimension_numbers<[1], [0], [0], [1], [0, 0, 1, 1], [], []>} : vector<8x165xf32>, vector<165x55xf32>, vector<8x55xf32> -> vector<8x55xf32>
    %c1_i32_47 = arith.constant 1 : i32
    %159 = vector.broadcast %c1_i32_47 : i32 to vector<165x55xi32>
    %160 = arith.addi %152, %159 : vector<165x55xi32>
    %161 = arith.cmpi eq, %149, %160 : vector<165x55xi32>
    %162 = arith.extui %161 : vector<165x55xi1> to vector<165x55xi32>
    %163 = arith.sitofp %162 : vector<165x55xi32> to vector<165x55xf32>
    %cst_48 = arith.constant dense<0.000000e+00> : vector<8x55xf32>
    %164 = tpu.matmul %148, %163, %cst_48 {dimension_numbers = #tpu.dot_dimension_numbers<[1], [0], [0], [1], [0, 0, 1, 1], [], []>} : vector<8x165xf32>, vector<165x55xf32>, vector<8x55xf32> -> vector<8x55xf32>
    %165 = arith.maximumf %158, %164 : vector<8x55xf32>
    %c2_i32_49 = arith.constant 2 : i32
    %166 = vector.broadcast %c2_i32_49 : i32 to vector<165x55xi32>
    %167 = arith.addi %152, %166 : vector<165x55xi32>
    %168 = arith.cmpi eq, %149, %167 : vector<165x55xi32>
    %169 = arith.extui %168 : vector<165x55xi1> to vector<165x55xi32>
    %170 = arith.sitofp %169 : vector<165x55xi32> to vector<165x55xf32>
    %cst_50 = arith.constant dense<0.000000e+00> : vector<8x55xf32>
    %171 = tpu.matmul %148, %170, %cst_50 {dimension_numbers = #tpu.dot_dimension_numbers<[1], [0], [0], [1], [0, 0, 1, 1], [], []>} : vector<8x165xf32>, vector<165x55xf32>, vector<8x55xf32> -> vector<8x55xf32>
    %172 = arith.maximumf %165, %171 : vector<8x55xf32>
    %173 = vector.extract_strided_slice %116 {offsets = [0, 0, 0], sizes = [1, 8, 8], strides = [1, 1, 1]} : vector<5x8x8xf32> to vector<1x8x8xf32>
    %174 = vector.shape_cast %173 : vector<1x8x8xf32> to vector<8x8xf32>
    %175 = vector.extract_strided_slice %115 {offsets = [0, 0], sizes = [8, 165], strides = [1, 1]} : vector<8x169xf32> to vector<8x165xf32>
    %cst_51 = arith.constant dense<0.000000e+00> : vector<8x165xf32>
    %176 = tpu.matmul %174, %175, %cst_51 {dimension_numbers = #tpu.dot_dimension_numbers<[1], [0], [0], [1], [0, 0, 1, 1], [], []>} : vector<8x8xf32>, vector<8x165xf32>, vector<8x165xf32> -> vector<8x165xf32>
    %177 = vector.extract_strided_slice %116 {offsets = [1, 0, 0], sizes = [1, 8, 8], strides = [1, 1, 1]} : vector<5x8x8xf32> to vector<1x8x8xf32>
    %178 = vector.shape_cast %177 : vector<1x8x8xf32> to vector<8x8xf32>
    %179 = vector.extract_strided_slice %115 {offsets = [0, 1], sizes = [8, 165], strides = [1, 1]} : vector<8x169xf32> to vector<8x165xf32>
    %cst_52 = arith.constant dense<0.000000e+00> : vector<8x165xf32>
    %180 = tpu.matmul %178, %179, %cst_52 {dimension_numbers = #tpu.dot_dimension_numbers<[1], [0], [0], [1], [0, 0, 1, 1], [], []>} : vector<8x8xf32>, vector<8x165xf32>, vector<8x165xf32> -> vector<8x165xf32>
    %181 = arith.addf %176, %180 : vector<8x165xf32>
    %182 = vector.extract_strided_slice %116 {offsets = [2, 0, 0], sizes = [1, 8, 8], strides = [1, 1, 1]} : vector<5x8x8xf32> to vector<1x8x8xf32>
    %183 = vector.shape_cast %182 : vector<1x8x8xf32> to vector<8x8xf32>
    %184 = vector.extract_strided_slice %115 {offsets = [0, 2], sizes = [8, 165], strides = [1, 1]} : vector<8x169xf32> to vector<8x165xf32>
    %cst_53 = arith.constant dense<0.000000e+00> : vector<8x165xf32>
    %185 = tpu.matmul %183, %184, %cst_53 {dimension_numbers = #tpu.dot_dimension_numbers<[1], [0], [0], [1], [0, 0, 1, 1], [], []>} : vector<8x8xf32>, vector<8x165xf32>, vector<8x165xf32> -> vector<8x165xf32>
    %186 = arith.addf %181, %185 : vector<8x165xf32>
    %187 = vector.extract_strided_slice %116 {offsets = [3, 0, 0], sizes = [1, 8, 8], strides = [1, 1, 1]} : vector<5x8x8xf32> to vector<1x8x8xf32>
    %188 = vector.shape_cast %187 : vector<1x8x8xf32> to vector<8x8xf32>
    %189 = vector.extract_strided_slice %115 {offsets = [0, 3], sizes = [8, 165], strides = [1, 1]} : vector<8x169xf32> to vector<8x165xf32>
    %cst_54 = arith.constant dense<0.000000e+00> : vector<8x165xf32>
    %190 = tpu.matmul %188, %189, %cst_54 {dimension_numbers = #tpu.dot_dimension_numbers<[1], [0], [0], [1], [0, 0, 1, 1], [], []>} : vector<8x8xf32>, vector<8x165xf32>, vector<8x165xf32> -> vector<8x165xf32>
    %191 = arith.addf %186, %190 : vector<8x165xf32>
    %192 = vector.extract_strided_slice %116 {offsets = [4, 0, 0], sizes = [1, 8, 8], strides = [1, 1, 1]} : vector<5x8x8xf32> to vector<1x8x8xf32>
    %193 = vector.shape_cast %192 : vector<1x8x8xf32> to vector<8x8xf32>
    %194 = vector.extract_strided_slice %115 {offsets = [0, 4], sizes = [8, 165], strides = [1, 1]} : vector<8x169xf32> to vector<8x165xf32>
    %cst_55 = arith.constant dense<0.000000e+00> : vector<8x165xf32>
    %195 = tpu.matmul %193, %194, %cst_55 {dimension_numbers = #tpu.dot_dimension_numbers<[1], [0], [0], [1], [0, 0, 1, 1], [], []>} : vector<8x8xf32>, vector<8x165xf32>, vector<8x165xf32> -> vector<8x165xf32>
    %196 = arith.addf %191, %195 : vector<8x165xf32>
    %197 = vector.broadcast %117 : vector<8x1xf32> to vector<8x165xf32>
    %198 = arith.addf %196, %197 : vector<8x165xf32>
    %cst_56 = arith.constant 0.000000e+00 : f32
    %199 = vector.broadcast %cst_56 : f32 to vector<8x165xf32>
    %200 = arith.cmpf oge, %198, %199 : vector<8x165xf32>
    %cst_57 = arith.constant 2.000000e-01 : f32
    %201 = vector.broadcast %cst_57 : f32 to vector<8x165xf32>
    %202 = arith.mulf %201, %198 : vector<8x165xf32>
    %203 = arith.select %200, %198, %202 : vector<8x165xi1>, vector<8x165xf32>
    %204 = tpu.iota {dimensions = array<i32: 0>} : vector<165x55xi32>
    %205 = tpu.iota {dimensions = array<i32: 1>} : vector<165x55xi32>
    %c3_i32_58 = arith.constant 3 : i32
    %206 = vector.broadcast %c3_i32_58 : i32 to vector<165x55xi32>
    %207 = arith.muli %206, %205 : vector<165x55xi32>
    %c0_i32_59 = arith.constant 0 : i32
    %208 = vector.broadcast %c0_i32_59 : i32 to vector<165x55xi32>
    %209 = arith.addi %207, %208 : vector<165x55xi32>
    %210 = arith.cmpi eq, %204, %209 : vector<165x55xi32>
    %211 = arith.extui %210 : vector<165x55xi1> to vector<165x55xi32>
    %212 = arith.sitofp %211 : vector<165x55xi32> to vector<165x55xf32>
    %cst_60 = arith.constant dense<0.000000e+00> : vector<8x55xf32>
    %213 = tpu.matmul %203, %212, %cst_60 {dimension_numbers = #tpu.dot_dimension_numbers<[1], [0], [0], [1], [0, 0, 1, 1], [], []>} : vector<8x165xf32>, vector<165x55xf32>, vector<8x55xf32> -> vector<8x55xf32>
    %c1_i32_61 = arith.constant 1 : i32
    %214 = vector.broadcast %c1_i32_61 : i32 to vector<165x55xi32>
    %215 = arith.addi %207, %214 : vector<165x55xi32>
    %216 = arith.cmpi eq, %204, %215 : vector<165x55xi32>
    %217 = arith.extui %216 : vector<165x55xi1> to vector<165x55xi32>
    %218 = arith.sitofp %217 : vector<165x55xi32> to vector<165x55xf32>
    %cst_62 = arith.constant dense<0.000000e+00> : vector<8x55xf32>
    %219 = tpu.matmul %203, %218, %cst_62 {dimension_numbers = #tpu.dot_dimension_numbers<[1], [0], [0], [1], [0, 0, 1, 1], [], []>} : vector<8x165xf32>, vector<165x55xf32>, vector<8x55xf32> -> vector<8x55xf32>
    %220 = arith.maximumf %213, %219 : vector<8x55xf32>
    %c2_i32_63 = arith.constant 2 : i32
    %221 = vector.broadcast %c2_i32_63 : i32 to vector<165x55xi32>
    %222 = arith.addi %207, %221 : vector<165x55xi32>
    %223 = arith.cmpi eq, %204, %222 : vector<165x55xi32>
    %224 = arith.extui %223 : vector<165x55xi1> to vector<165x55xi32>
    %225 = arith.sitofp %224 : vector<165x55xi32> to vector<165x55xf32>
    %cst_64 = arith.constant dense<0.000000e+00> : vector<8x55xf32>
    %226 = tpu.matmul %203, %225, %cst_64 {dimension_numbers = #tpu.dot_dimension_numbers<[1], [0], [0], [1], [0, 0, 1, 1], [], []>} : vector<8x165xf32>, vector<165x55xf32>, vector<8x55xf32> -> vector<8x55xf32>
    %227 = arith.maximumf %220, %226 : vector<8x55xf32>
    %c0_65 = arith.constant 0 : index
    %c0_66 = arith.constant 0 : index
    %c0_67 = arith.constant 0 : index
    %228 = vector.load %arg6[%c0_65, %c0_66, %c0_67] : memref<5x8x8xf32, #tpu.memory_space<vmem>>, vector<5x8x8xf32>
    %c0_68 = arith.constant 0 : index
    %c0_69 = arith.constant 0 : index
    %229 = vector.load %arg7[%c0_68, %c0_69] : memref<8x1xf32, #tpu.memory_space<vmem>>, vector<8x1xf32>
    %230 = vector.extract_strided_slice %228 {offsets = [0, 0, 0], sizes = [1, 8, 8], strides = [1, 1, 1]} : vector<5x8x8xf32> to vector<1x8x8xf32>
    %231 = vector.shape_cast %230 : vector<1x8x8xf32> to vector<8x8xf32>
    %232 = vector.extract_strided_slice %172 {offsets = [0, 0], sizes = [8, 51], strides = [1, 1]} : vector<8x55xf32> to vector<8x51xf32>
    %cst_70 = arith.constant dense<0.000000e+00> : vector<8x51xf32>
    %233 = tpu.matmul %231, %232, %cst_70 {dimension_numbers = #tpu.dot_dimension_numbers<[1], [0], [0], [1], [0, 0, 1, 1], [], []>} : vector<8x8xf32>, vector<8x51xf32>, vector<8x51xf32> -> vector<8x51xf32>
    %234 = vector.extract_strided_slice %228 {offsets = [1, 0, 0], sizes = [1, 8, 8], strides = [1, 1, 1]} : vector<5x8x8xf32> to vector<1x8x8xf32>
    %235 = vector.shape_cast %234 : vector<1x8x8xf32> to vector<8x8xf32>
    %236 = vector.extract_strided_slice %172 {offsets = [0, 1], sizes = [8, 51], strides = [1, 1]} : vector<8x55xf32> to vector<8x51xf32>
    %cst_71 = arith.constant dense<0.000000e+00> : vector<8x51xf32>
    %237 = tpu.matmul %235, %236, %cst_71 {dimension_numbers = #tpu.dot_dimension_numbers<[1], [0], [0], [1], [0, 0, 1, 1], [], []>} : vector<8x8xf32>, vector<8x51xf32>, vector<8x51xf32> -> vector<8x51xf32>
    %238 = arith.addf %233, %237 : vector<8x51xf32>
    %239 = vector.extract_strided_slice %228 {offsets = [2, 0, 0], sizes = [1, 8, 8], strides = [1, 1, 1]} : vector<5x8x8xf32> to vector<1x8x8xf32>
    %240 = vector.shape_cast %239 : vector<1x8x8xf32> to vector<8x8xf32>
    %241 = vector.extract_strided_slice %172 {offsets = [0, 2], sizes = [8, 51], strides = [1, 1]} : vector<8x55xf32> to vector<8x51xf32>
    %cst_72 = arith.constant dense<0.000000e+00> : vector<8x51xf32>
    %242 = tpu.matmul %240, %241, %cst_72 {dimension_numbers = #tpu.dot_dimension_numbers<[1], [0], [0], [1], [0, 0, 1, 1], [], []>} : vector<8x8xf32>, vector<8x51xf32>, vector<8x51xf32> -> vector<8x51xf32>
    %243 = arith.addf %238, %242 : vector<8x51xf32>
    %244 = vector.extract_strided_slice %228 {offsets = [3, 0, 0], sizes = [1, 8, 8], strides = [1, 1, 1]} : vector<5x8x8xf32> to vector<1x8x8xf32>
    %245 = vector.shape_cast %244 : vector<1x8x8xf32> to vector<8x8xf32>
    %246 = vector.extract_strided_slice %172 {offsets = [0, 3], sizes = [8, 51], strides = [1, 1]} : vector<8x55xf32> to vector<8x51xf32>
    %cst_73 = arith.constant dense<0.000000e+00> : vector<8x51xf32>
    %247 = tpu.matmul %245, %246, %cst_73 {dimension_numbers = #tpu.dot_dimension_numbers<[1], [0], [0], [1], [0, 0, 1, 1], [], []>} : vector<8x8xf32>, vector<8x51xf32>, vector<8x51xf32> -> vector<8x51xf32>
    %248 = arith.addf %243, %247 : vector<8x51xf32>
    %249 = vector.extract_strided_slice %228 {offsets = [4, 0, 0], sizes = [1, 8, 8], strides = [1, 1, 1]} : vector<5x8x8xf32> to vector<1x8x8xf32>
    %250 = vector.shape_cast %249 : vector<1x8x8xf32> to vector<8x8xf32>
    %251 = vector.extract_strided_slice %172 {offsets = [0, 4], sizes = [8, 51], strides = [1, 1]} : vector<8x55xf32> to vector<8x51xf32>
    %cst_74 = arith.constant dense<0.000000e+00> : vector<8x51xf32>
    %252 = tpu.matmul %250, %251, %cst_74 {dimension_numbers = #tpu.dot_dimension_numbers<[1], [0], [0], [1], [0, 0, 1, 1], [], []>} : vector<8x8xf32>, vector<8x51xf32>, vector<8x51xf32> -> vector<8x51xf32>
    %253 = arith.addf %248, %252 : vector<8x51xf32>
    %254 = vector.broadcast %229 : vector<8x1xf32> to vector<8x51xf32>
    %255 = arith.addf %253, %254 : vector<8x51xf32>
    %cst_75 = arith.constant 0.000000e+00 : f32
    %256 = vector.broadcast %cst_75 : f32 to vector<8x51xf32>
    %257 = arith.cmpf oge, %255, %256 : vector<8x51xf32>
    %cst_76 = arith.constant 2.000000e-01 : f32
    %258 = vector.broadcast %cst_76 : f32 to vector<8x51xf32>
    %259 = arith.mulf %258, %255 : vector<8x51xf32>
    %260 = arith.select %257, %255, %259 : vector<8x51xi1>, vector<8x51xf32>
    %261 = tpu.iota {dimensions = array<i32: 0>} : vector<51x17xi32>
    %262 = tpu.iota {dimensions = array<i32: 1>} : vector<51x17xi32>
    %c3_i32_77 = arith.constant 3 : i32
    %263 = vector.broadcast %c3_i32_77 : i32 to vector<51x17xi32>
    %264 = arith.muli %263, %262 : vector<51x17xi32>
    %c0_i32_78 = arith.constant 0 : i32
    %265 = vector.broadcast %c0_i32_78 : i32 to vector<51x17xi32>
    %266 = arith.addi %264, %265 : vector<51x17xi32>
    %267 = arith.cmpi eq, %261, %266 : vector<51x17xi32>
    %268 = arith.extui %267 : vector<51x17xi1> to vector<51x17xi32>
    %269 = arith.sitofp %268 : vector<51x17xi32> to vector<51x17xf32>
    %cst_79 = arith.constant dense<0.000000e+00> : vector<8x17xf32>
    %270 = tpu.matmul %260, %269, %cst_79 {dimension_numbers = #tpu.dot_dimension_numbers<[1], [0], [0], [1], [0, 0, 1, 1], [], []>} : vector<8x51xf32>, vector<51x17xf32>, vector<8x17xf32> -> vector<8x17xf32>
    %c1_i32_80 = arith.constant 1 : i32
    %271 = vector.broadcast %c1_i32_80 : i32 to vector<51x17xi32>
    %272 = arith.addi %264, %271 : vector<51x17xi32>
    %273 = arith.cmpi eq, %261, %272 : vector<51x17xi32>
    %274 = arith.extui %273 : vector<51x17xi1> to vector<51x17xi32>
    %275 = arith.sitofp %274 : vector<51x17xi32> to vector<51x17xf32>
    %cst_81 = arith.constant dense<0.000000e+00> : vector<8x17xf32>
    %276 = tpu.matmul %260, %275, %cst_81 {dimension_numbers = #tpu.dot_dimension_numbers<[1], [0], [0], [1], [0, 0, 1, 1], [], []>} : vector<8x51xf32>, vector<51x17xf32>, vector<8x17xf32> -> vector<8x17xf32>
    %277 = arith.maximumf %270, %276 : vector<8x17xf32>
    %c2_i32_82 = arith.constant 2 : i32
    %278 = vector.broadcast %c2_i32_82 : i32 to vector<51x17xi32>
    %279 = arith.addi %264, %278 : vector<51x17xi32>
    %280 = arith.cmpi eq, %261, %279 : vector<51x17xi32>
    %281 = arith.extui %280 : vector<51x17xi1> to vector<51x17xi32>
    %282 = arith.sitofp %281 : vector<51x17xi32> to vector<51x17xf32>
    %cst_83 = arith.constant dense<0.000000e+00> : vector<8x17xf32>
    %283 = tpu.matmul %260, %282, %cst_83 {dimension_numbers = #tpu.dot_dimension_numbers<[1], [0], [0], [1], [0, 0, 1, 1], [], []>} : vector<8x51xf32>, vector<51x17xf32>, vector<8x17xf32> -> vector<8x17xf32>
    %284 = arith.maximumf %277, %283 : vector<8x17xf32>
    %285 = vector.extract_strided_slice %228 {offsets = [0, 0, 0], sizes = [1, 8, 8], strides = [1, 1, 1]} : vector<5x8x8xf32> to vector<1x8x8xf32>
    %286 = vector.shape_cast %285 : vector<1x8x8xf32> to vector<8x8xf32>
    %287 = vector.extract_strided_slice %227 {offsets = [0, 0], sizes = [8, 51], strides = [1, 1]} : vector<8x55xf32> to vector<8x51xf32>
    %cst_84 = arith.constant dense<0.000000e+00> : vector<8x51xf32>
    %288 = tpu.matmul %286, %287, %cst_84 {dimension_numbers = #tpu.dot_dimension_numbers<[1], [0], [0], [1], [0, 0, 1, 1], [], []>} : vector<8x8xf32>, vector<8x51xf32>, vector<8x51xf32> -> vector<8x51xf32>
    %289 = vector.extract_strided_slice %228 {offsets = [1, 0, 0], sizes = [1, 8, 8], strides = [1, 1, 1]} : vector<5x8x8xf32> to vector<1x8x8xf32>
    %290 = vector.shape_cast %289 : vector<1x8x8xf32> to vector<8x8xf32>
    %291 = vector.extract_strided_slice %227 {offsets = [0, 1], sizes = [8, 51], strides = [1, 1]} : vector<8x55xf32> to vector<8x51xf32>
    %cst_85 = arith.constant dense<0.000000e+00> : vector<8x51xf32>
    %292 = tpu.matmul %290, %291, %cst_85 {dimension_numbers = #tpu.dot_dimension_numbers<[1], [0], [0], [1], [0, 0, 1, 1], [], []>} : vector<8x8xf32>, vector<8x51xf32>, vector<8x51xf32> -> vector<8x51xf32>
    %293 = arith.addf %288, %292 : vector<8x51xf32>
    %294 = vector.extract_strided_slice %228 {offsets = [2, 0, 0], sizes = [1, 8, 8], strides = [1, 1, 1]} : vector<5x8x8xf32> to vector<1x8x8xf32>
    %295 = vector.shape_cast %294 : vector<1x8x8xf32> to vector<8x8xf32>
    %296 = vector.extract_strided_slice %227 {offsets = [0, 2], sizes = [8, 51], strides = [1, 1]} : vector<8x55xf32> to vector<8x51xf32>
    %cst_86 = arith.constant dense<0.000000e+00> : vector<8x51xf32>
    %297 = tpu.matmul %295, %296, %cst_86 {dimension_numbers = #tpu.dot_dimension_numbers<[1], [0], [0], [1], [0, 0, 1, 1], [], []>} : vector<8x8xf32>, vector<8x51xf32>, vector<8x51xf32> -> vector<8x51xf32>
    %298 = arith.addf %293, %297 : vector<8x51xf32>
    %299 = vector.extract_strided_slice %228 {offsets = [3, 0, 0], sizes = [1, 8, 8], strides = [1, 1, 1]} : vector<5x8x8xf32> to vector<1x8x8xf32>
    %300 = vector.shape_cast %299 : vector<1x8x8xf32> to vector<8x8xf32>
    %301 = vector.extract_strided_slice %227 {offsets = [0, 3], sizes = [8, 51], strides = [1, 1]} : vector<8x55xf32> to vector<8x51xf32>
    %cst_87 = arith.constant dense<0.000000e+00> : vector<8x51xf32>
    %302 = tpu.matmul %300, %301, %cst_87 {dimension_numbers = #tpu.dot_dimension_numbers<[1], [0], [0], [1], [0, 0, 1, 1], [], []>} : vector<8x8xf32>, vector<8x51xf32>, vector<8x51xf32> -> vector<8x51xf32>
    %303 = arith.addf %298, %302 : vector<8x51xf32>
    %304 = vector.extract_strided_slice %228 {offsets = [4, 0, 0], sizes = [1, 8, 8], strides = [1, 1, 1]} : vector<5x8x8xf32> to vector<1x8x8xf32>
    %305 = vector.shape_cast %304 : vector<1x8x8xf32> to vector<8x8xf32>
    %306 = vector.extract_strided_slice %227 {offsets = [0, 4], sizes = [8, 51], strides = [1, 1]} : vector<8x55xf32> to vector<8x51xf32>
    %cst_88 = arith.constant dense<0.000000e+00> : vector<8x51xf32>
    %307 = tpu.matmul %305, %306, %cst_88 {dimension_numbers = #tpu.dot_dimension_numbers<[1], [0], [0], [1], [0, 0, 1, 1], [], []>} : vector<8x8xf32>, vector<8x51xf32>, vector<8x51xf32> -> vector<8x51xf32>
    %308 = arith.addf %303, %307 : vector<8x51xf32>
    %309 = vector.broadcast %229 : vector<8x1xf32> to vector<8x51xf32>
    %310 = arith.addf %308, %309 : vector<8x51xf32>
    %cst_89 = arith.constant 0.000000e+00 : f32
    %311 = vector.broadcast %cst_89 : f32 to vector<8x51xf32>
    %312 = arith.cmpf oge, %310, %311 : vector<8x51xf32>
    %cst_90 = arith.constant 2.000000e-01 : f32
    %313 = vector.broadcast %cst_90 : f32 to vector<8x51xf32>
    %314 = arith.mulf %313, %310 : vector<8x51xf32>
    %315 = arith.select %312, %310, %314 : vector<8x51xi1>, vector<8x51xf32>
    %316 = tpu.iota {dimensions = array<i32: 0>} : vector<51x17xi32>
    %317 = tpu.iota {dimensions = array<i32: 1>} : vector<51x17xi32>
    %c3_i32_91 = arith.constant 3 : i32
    %318 = vector.broadcast %c3_i32_91 : i32 to vector<51x17xi32>
    %319 = arith.muli %318, %317 : vector<51x17xi32>
    %c0_i32_92 = arith.constant 0 : i32
    %320 = vector.broadcast %c0_i32_92 : i32 to vector<51x17xi32>
    %321 = arith.addi %319, %320 : vector<51x17xi32>
    %322 = arith.cmpi eq, %316, %321 : vector<51x17xi32>
    %323 = arith.extui %322 : vector<51x17xi1> to vector<51x17xi32>
    %324 = arith.sitofp %323 : vector<51x17xi32> to vector<51x17xf32>
    %cst_93 = arith.constant dense<0.000000e+00> : vector<8x17xf32>
    %325 = tpu.matmul %315, %324, %cst_93 {dimension_numbers = #tpu.dot_dimension_numbers<[1], [0], [0], [1], [0, 0, 1, 1], [], []>} : vector<8x51xf32>, vector<51x17xf32>, vector<8x17xf32> -> vector<8x17xf32>
    %c1_i32_94 = arith.constant 1 : i32
    %326 = vector.broadcast %c1_i32_94 : i32 to vector<51x17xi32>
    %327 = arith.addi %319, %326 : vector<51x17xi32>
    %328 = arith.cmpi eq, %316, %327 : vector<51x17xi32>
    %329 = arith.extui %328 : vector<51x17xi1> to vector<51x17xi32>
    %330 = arith.sitofp %329 : vector<51x17xi32> to vector<51x17xf32>
    %cst_95 = arith.constant dense<0.000000e+00> : vector<8x17xf32>
    %331 = tpu.matmul %315, %330, %cst_95 {dimension_numbers = #tpu.dot_dimension_numbers<[1], [0], [0], [1], [0, 0, 1, 1], [], []>} : vector<8x51xf32>, vector<51x17xf32>, vector<8x17xf32> -> vector<8x17xf32>
    %332 = arith.maximumf %325, %331 : vector<8x17xf32>
    %c2_i32_96 = arith.constant 2 : i32
    %333 = vector.broadcast %c2_i32_96 : i32 to vector<51x17xi32>
    %334 = arith.addi %319, %333 : vector<51x17xi32>
    %335 = arith.cmpi eq, %316, %334 : vector<51x17xi32>
    %336 = arith.extui %335 : vector<51x17xi1> to vector<51x17xi32>
    %337 = arith.sitofp %336 : vector<51x17xi32> to vector<51x17xf32>
    %cst_97 = arith.constant dense<0.000000e+00> : vector<8x17xf32>
    %338 = tpu.matmul %315, %337, %cst_97 {dimension_numbers = #tpu.dot_dimension_numbers<[1], [0], [0], [1], [0, 0, 1, 1], [], []>} : vector<8x51xf32>, vector<51x17xf32>, vector<8x17xf32> -> vector<8x17xf32>
    %339 = arith.maximumf %332, %338 : vector<8x17xf32>
    %c0_98 = arith.constant 0 : index
    %c0_99 = arith.constant 0 : index
    %c0_100 = arith.constant 0 : index
    %340 = vector.load %arg8[%c0_98, %c0_99, %c0_100] : memref<5x8x8xf32, #tpu.memory_space<vmem>>, vector<5x8x8xf32>
    %c0_101 = arith.constant 0 : index
    %c0_102 = arith.constant 0 : index
    %341 = vector.load %arg9[%c0_101, %c0_102] : memref<8x1xf32, #tpu.memory_space<vmem>>, vector<8x1xf32>
    %342 = vector.extract_strided_slice %340 {offsets = [0, 0, 0], sizes = [1, 8, 8], strides = [1, 1, 1]} : vector<5x8x8xf32> to vector<1x8x8xf32>
    %343 = vector.shape_cast %342 : vector<1x8x8xf32> to vector<8x8xf32>
    %344 = vector.extract_strided_slice %284 {offsets = [0, 0], sizes = [8, 13], strides = [1, 1]} : vector<8x17xf32> to vector<8x13xf32>
    %cst_103 = arith.constant dense<0.000000e+00> : vector<8x13xf32>
    %345 = tpu.matmul %343, %344, %cst_103 {dimension_numbers = #tpu.dot_dimension_numbers<[1], [0], [0], [1], [0, 0, 1, 1], [], []>} : vector<8x8xf32>, vector<8x13xf32>, vector<8x13xf32> -> vector<8x13xf32>
    %346 = vector.extract_strided_slice %340 {offsets = [1, 0, 0], sizes = [1, 8, 8], strides = [1, 1, 1]} : vector<5x8x8xf32> to vector<1x8x8xf32>
    %347 = vector.shape_cast %346 : vector<1x8x8xf32> to vector<8x8xf32>
    %348 = vector.extract_strided_slice %284 {offsets = [0, 1], sizes = [8, 13], strides = [1, 1]} : vector<8x17xf32> to vector<8x13xf32>
    %cst_104 = arith.constant dense<0.000000e+00> : vector<8x13xf32>
    %349 = tpu.matmul %347, %348, %cst_104 {dimension_numbers = #tpu.dot_dimension_numbers<[1], [0], [0], [1], [0, 0, 1, 1], [], []>} : vector<8x8xf32>, vector<8x13xf32>, vector<8x13xf32> -> vector<8x13xf32>
    %350 = arith.addf %345, %349 : vector<8x13xf32>
    %351 = vector.extract_strided_slice %340 {offsets = [2, 0, 0], sizes = [1, 8, 8], strides = [1, 1, 1]} : vector<5x8x8xf32> to vector<1x8x8xf32>
    %352 = vector.shape_cast %351 : vector<1x8x8xf32> to vector<8x8xf32>
    %353 = vector.extract_strided_slice %284 {offsets = [0, 2], sizes = [8, 13], strides = [1, 1]} : vector<8x17xf32> to vector<8x13xf32>
    %cst_105 = arith.constant dense<0.000000e+00> : vector<8x13xf32>
    %354 = tpu.matmul %352, %353, %cst_105 {dimension_numbers = #tpu.dot_dimension_numbers<[1], [0], [0], [1], [0, 0, 1, 1], [], []>} : vector<8x8xf32>, vector<8x13xf32>, vector<8x13xf32> -> vector<8x13xf32>
    %355 = arith.addf %350, %354 : vector<8x13xf32>
    %356 = vector.extract_strided_slice %340 {offsets = [3, 0, 0], sizes = [1, 8, 8], strides = [1, 1, 1]} : vector<5x8x8xf32> to vector<1x8x8xf32>
    %357 = vector.shape_cast %356 : vector<1x8x8xf32> to vector<8x8xf32>
    %358 = vector.extract_strided_slice %284 {offsets = [0, 3], sizes = [8, 13], strides = [1, 1]} : vector<8x17xf32> to vector<8x13xf32>
    %cst_106 = arith.constant dense<0.000000e+00> : vector<8x13xf32>
    %359 = tpu.matmul %357, %358, %cst_106 {dimension_numbers = #tpu.dot_dimension_numbers<[1], [0], [0], [1], [0, 0, 1, 1], [], []>} : vector<8x8xf32>, vector<8x13xf32>, vector<8x13xf32> -> vector<8x13xf32>
    %360 = arith.addf %355, %359 : vector<8x13xf32>
    %361 = vector.extract_strided_slice %340 {offsets = [4, 0, 0], sizes = [1, 8, 8], strides = [1, 1, 1]} : vector<5x8x8xf32> to vector<1x8x8xf32>
    %362 = vector.shape_cast %361 : vector<1x8x8xf32> to vector<8x8xf32>
    %363 = vector.extract_strided_slice %284 {offsets = [0, 4], sizes = [8, 13], strides = [1, 1]} : vector<8x17xf32> to vector<8x13xf32>
    %cst_107 = arith.constant dense<0.000000e+00> : vector<8x13xf32>
    %364 = tpu.matmul %362, %363, %cst_107 {dimension_numbers = #tpu.dot_dimension_numbers<[1], [0], [0], [1], [0, 0, 1, 1], [], []>} : vector<8x8xf32>, vector<8x13xf32>, vector<8x13xf32> -> vector<8x13xf32>
    %365 = arith.addf %360, %364 : vector<8x13xf32>
    %366 = vector.broadcast %341 : vector<8x1xf32> to vector<8x13xf32>
    %367 = arith.addf %365, %366 : vector<8x13xf32>
    %cst_108 = arith.constant 0.000000e+00 : f32
    %368 = vector.broadcast %cst_108 : f32 to vector<8x13xf32>
    %369 = arith.cmpf oge, %367, %368 : vector<8x13xf32>
    %cst_109 = arith.constant 2.000000e-01 : f32
    %370 = vector.broadcast %cst_109 : f32 to vector<8x13xf32>
    %371 = arith.mulf %370, %367 : vector<8x13xf32>
    %372 = arith.select %369, %367, %371 : vector<8x13xi1>, vector<8x13xf32>
    %373 = tpu.iota {dimensions = array<i32: 0>} : vector<13x4xi32>
    %374 = tpu.iota {dimensions = array<i32: 1>} : vector<13x4xi32>
    %c3_i32_110 = arith.constant 3 : i32
    %375 = vector.broadcast %c3_i32_110 : i32 to vector<13x4xi32>
    %376 = arith.muli %375, %374 : vector<13x4xi32>
    %c0_i32_111 = arith.constant 0 : i32
    %377 = vector.broadcast %c0_i32_111 : i32 to vector<13x4xi32>
    %378 = arith.addi %376, %377 : vector<13x4xi32>
    %379 = arith.cmpi eq, %373, %378 : vector<13x4xi32>
    %380 = arith.extui %379 : vector<13x4xi1> to vector<13x4xi32>
    %381 = arith.sitofp %380 : vector<13x4xi32> to vector<13x4xf32>
    %cst_112 = arith.constant dense<0.000000e+00> : vector<8x4xf32>
    %382 = tpu.matmul %372, %381, %cst_112 {dimension_numbers = #tpu.dot_dimension_numbers<[1], [0], [0], [1], [0, 0, 1, 1], [], []>} : vector<8x13xf32>, vector<13x4xf32>, vector<8x4xf32> -> vector<8x4xf32>
    %c1_i32_113 = arith.constant 1 : i32
    %383 = vector.broadcast %c1_i32_113 : i32 to vector<13x4xi32>
    %384 = arith.addi %376, %383 : vector<13x4xi32>
    %385 = arith.cmpi eq, %373, %384 : vector<13x4xi32>
    %386 = arith.extui %385 : vector<13x4xi1> to vector<13x4xi32>
    %387 = arith.sitofp %386 : vector<13x4xi32> to vector<13x4xf32>
    %cst_114 = arith.constant dense<0.000000e+00> : vector<8x4xf32>
    %388 = tpu.matmul %372, %387, %cst_114 {dimension_numbers = #tpu.dot_dimension_numbers<[1], [0], [0], [1], [0, 0, 1, 1], [], []>} : vector<8x13xf32>, vector<13x4xf32>, vector<8x4xf32> -> vector<8x4xf32>
    %389 = arith.maximumf %382, %388 : vector<8x4xf32>
    %c2_i32_115 = arith.constant 2 : i32
    %390 = vector.broadcast %c2_i32_115 : i32 to vector<13x4xi32>
    %391 = arith.addi %376, %390 : vector<13x4xi32>
    %392 = arith.cmpi eq, %373, %391 : vector<13x4xi32>
    %393 = arith.extui %392 : vector<13x4xi1> to vector<13x4xi32>
    %394 = arith.sitofp %393 : vector<13x4xi32> to vector<13x4xf32>
    %cst_116 = arith.constant dense<0.000000e+00> : vector<8x4xf32>
    %395 = tpu.matmul %372, %394, %cst_116 {dimension_numbers = #tpu.dot_dimension_numbers<[1], [0], [0], [1], [0, 0, 1, 1], [], []>} : vector<8x13xf32>, vector<13x4xf32>, vector<8x4xf32> -> vector<8x4xf32>
    %396 = arith.maximumf %389, %395 : vector<8x4xf32>
    %397 = vector.extract_strided_slice %340 {offsets = [0, 0, 0], sizes = [1, 8, 8], strides = [1, 1, 1]} : vector<5x8x8xf32> to vector<1x8x8xf32>
    %398 = vector.shape_cast %397 : vector<1x8x8xf32> to vector<8x8xf32>
    %399 = vector.extract_strided_slice %339 {offsets = [0, 0], sizes = [8, 13], strides = [1, 1]} : vector<8x17xf32> to vector<8x13xf32>
    %cst_117 = arith.constant dense<0.000000e+00> : vector<8x13xf32>
    %400 = tpu.matmul %398, %399, %cst_117 {dimension_numbers = #tpu.dot_dimension_numbers<[1], [0], [0], [1], [0, 0, 1, 1], [], []>} : vector<8x8xf32>, vector<8x13xf32>, vector<8x13xf32> -> vector<8x13xf32>
    %401 = vector.extract_strided_slice %340 {offsets = [1, 0, 0], sizes = [1, 8, 8], strides = [1, 1, 1]} : vector<5x8x8xf32> to vector<1x8x8xf32>
    %402 = vector.shape_cast %401 : vector<1x8x8xf32> to vector<8x8xf32>
    %403 = vector.extract_strided_slice %339 {offsets = [0, 1], sizes = [8, 13], strides = [1, 1]} : vector<8x17xf32> to vector<8x13xf32>
    %cst_118 = arith.constant dense<0.000000e+00> : vector<8x13xf32>
    %404 = tpu.matmul %402, %403, %cst_118 {dimension_numbers = #tpu.dot_dimension_numbers<[1], [0], [0], [1], [0, 0, 1, 1], [], []>} : vector<8x8xf32>, vector<8x13xf32>, vector<8x13xf32> -> vector<8x13xf32>
    %405 = arith.addf %400, %404 : vector<8x13xf32>
    %406 = vector.extract_strided_slice %340 {offsets = [2, 0, 0], sizes = [1, 8, 8], strides = [1, 1, 1]} : vector<5x8x8xf32> to vector<1x8x8xf32>
    %407 = vector.shape_cast %406 : vector<1x8x8xf32> to vector<8x8xf32>
    %408 = vector.extract_strided_slice %339 {offsets = [0, 2], sizes = [8, 13], strides = [1, 1]} : vector<8x17xf32> to vector<8x13xf32>
    %cst_119 = arith.constant dense<0.000000e+00> : vector<8x13xf32>
    %409 = tpu.matmul %407, %408, %cst_119 {dimension_numbers = #tpu.dot_dimension_numbers<[1], [0], [0], [1], [0, 0, 1, 1], [], []>} : vector<8x8xf32>, vector<8x13xf32>, vector<8x13xf32> -> vector<8x13xf32>
    %410 = arith.addf %405, %409 : vector<8x13xf32>
    %411 = vector.extract_strided_slice %340 {offsets = [3, 0, 0], sizes = [1, 8, 8], strides = [1, 1, 1]} : vector<5x8x8xf32> to vector<1x8x8xf32>
    %412 = vector.shape_cast %411 : vector<1x8x8xf32> to vector<8x8xf32>
    %413 = vector.extract_strided_slice %339 {offsets = [0, 3], sizes = [8, 13], strides = [1, 1]} : vector<8x17xf32> to vector<8x13xf32>
    %cst_120 = arith.constant dense<0.000000e+00> : vector<8x13xf32>
    %414 = tpu.matmul %412, %413, %cst_120 {dimension_numbers = #tpu.dot_dimension_numbers<[1], [0], [0], [1], [0, 0, 1, 1], [], []>} : vector<8x8xf32>, vector<8x13xf32>, vector<8x13xf32> -> vector<8x13xf32>
    %415 = arith.addf %410, %414 : vector<8x13xf32>
    %416 = vector.extract_strided_slice %340 {offsets = [4, 0, 0], sizes = [1, 8, 8], strides = [1, 1, 1]} : vector<5x8x8xf32> to vector<1x8x8xf32>
    %417 = vector.shape_cast %416 : vector<1x8x8xf32> to vector<8x8xf32>
    %418 = vector.extract_strided_slice %339 {offsets = [0, 4], sizes = [8, 13], strides = [1, 1]} : vector<8x17xf32> to vector<8x13xf32>
    %cst_121 = arith.constant dense<0.000000e+00> : vector<8x13xf32>
    %419 = tpu.matmul %417, %418, %cst_121 {dimension_numbers = #tpu.dot_dimension_numbers<[1], [0], [0], [1], [0, 0, 1, 1], [], []>} : vector<8x8xf32>, vector<8x13xf32>, vector<8x13xf32> -> vector<8x13xf32>
    %420 = arith.addf %415, %419 : vector<8x13xf32>
    %421 = vector.broadcast %341 : vector<8x1xf32> to vector<8x13xf32>
    %422 = arith.addf %420, %421 : vector<8x13xf32>
    %cst_122 = arith.constant 0.000000e+00 : f32
    %423 = vector.broadcast %cst_122 : f32 to vector<8x13xf32>
    %424 = arith.cmpf oge, %422, %423 : vector<8x13xf32>
    %cst_123 = arith.constant 2.000000e-01 : f32
    %425 = vector.broadcast %cst_123 : f32 to vector<8x13xf32>
    %426 = arith.mulf %425, %422 : vector<8x13xf32>
    %427 = arith.select %424, %422, %426 : vector<8x13xi1>, vector<8x13xf32>
    %428 = tpu.iota {dimensions = array<i32: 0>} : vector<13x4xi32>
    %429 = tpu.iota {dimensions = array<i32: 1>} : vector<13x4xi32>
    %c3_i32_124 = arith.constant 3 : i32
    %430 = vector.broadcast %c3_i32_124 : i32 to vector<13x4xi32>
    %431 = arith.muli %430, %429 : vector<13x4xi32>
    %c0_i32_125 = arith.constant 0 : i32
    %432 = vector.broadcast %c0_i32_125 : i32 to vector<13x4xi32>
    %433 = arith.addi %431, %432 : vector<13x4xi32>
    %434 = arith.cmpi eq, %428, %433 : vector<13x4xi32>
    %435 = arith.extui %434 : vector<13x4xi1> to vector<13x4xi32>
    %436 = arith.sitofp %435 : vector<13x4xi32> to vector<13x4xf32>
    %cst_126 = arith.constant dense<0.000000e+00> : vector<8x4xf32>
    %437 = tpu.matmul %427, %436, %cst_126 {dimension_numbers = #tpu.dot_dimension_numbers<[1], [0], [0], [1], [0, 0, 1, 1], [], []>} : vector<8x13xf32>, vector<13x4xf32>, vector<8x4xf32> -> vector<8x4xf32>
    %c1_i32_127 = arith.constant 1 : i32
    %438 = vector.broadcast %c1_i32_127 : i32 to vector<13x4xi32>
    %439 = arith.addi %431, %438 : vector<13x4xi32>
    %440 = arith.cmpi eq, %428, %439 : vector<13x4xi32>
    %441 = arith.extui %440 : vector<13x4xi1> to vector<13x4xi32>
    %442 = arith.sitofp %441 : vector<13x4xi32> to vector<13x4xf32>
    %cst_128 = arith.constant dense<0.000000e+00> : vector<8x4xf32>
    %443 = tpu.matmul %427, %442, %cst_128 {dimension_numbers = #tpu.dot_dimension_numbers<[1], [0], [0], [1], [0, 0, 1, 1], [], []>} : vector<8x13xf32>, vector<13x4xf32>, vector<8x4xf32> -> vector<8x4xf32>
    %444 = arith.maximumf %437, %443 : vector<8x4xf32>
    %c2_i32_129 = arith.constant 2 : i32
    %445 = vector.broadcast %c2_i32_129 : i32 to vector<13x4xi32>
    %446 = arith.addi %431, %445 : vector<13x4xi32>
    %447 = arith.cmpi eq, %428, %446 : vector<13x4xi32>
    %448 = arith.extui %447 : vector<13x4xi1> to vector<13x4xi32>
    %449 = arith.sitofp %448 : vector<13x4xi32> to vector<13x4xf32>
    %cst_130 = arith.constant dense<0.000000e+00> : vector<8x4xf32>
    %450 = tpu.matmul %427, %449, %cst_130 {dimension_numbers = #tpu.dot_dimension_numbers<[1], [0], [0], [1], [0, 0, 1, 1], [], []>} : vector<8x13xf32>, vector<13x4xf32>, vector<8x4xf32> -> vector<8x4xf32>
    %451 = arith.maximumf %444, %450 : vector<8x4xf32>
    %c0_131 = arith.constant 0 : index
    %c0_132 = arith.constant 0 : index
    %c0_133 = arith.constant 0 : index
    %452 = vector.load %arg10[%c0_131, %c0_132, %c0_133] : memref<3x2x8xf32, #tpu.memory_space<vmem>>, vector<3x2x8xf32>
    %c0_134 = arith.constant 0 : index
    %c0_135 = arith.constant 0 : index
    %453 = vector.load %arg11[%c0_134, %c0_135] : memref<2x1xf32, #tpu.memory_space<vmem>>, vector<2x1xf32>
    %c0_136 = arith.constant 0 : index
    %c0_137 = arith.constant 0 : index
    %c0_138 = arith.constant 0 : index
    %454 = vector.load %arg12[%c0_136, %c0_137, %c0_138] : memref<2x4x2xf32, #tpu.memory_space<vmem>>, vector<2x4x2xf32>
    %c0_139 = arith.constant 0 : index
    %c0_140 = arith.constant 0 : index
    %455 = vector.load %arg13[%c0_139, %c0_140] : memref<4x1xf32, #tpu.memory_space<vmem>>, vector<4x1xf32>
    %456 = vector.extract_strided_slice %452 {offsets = [0, 0, 0], sizes = [1, 2, 8], strides = [1, 1, 1]} : vector<3x2x8xf32> to vector<1x2x8xf32>
    %457 = vector.shape_cast %456 : vector<1x2x8xf32> to vector<2x8xf32>
    %458 = vector.extract_strided_slice %396 {offsets = [0, 0], sizes = [8, 2], strides = [1, 1]} : vector<8x4xf32> to vector<8x2xf32>
    %cst_141 = arith.constant dense<0.000000e+00> : vector<2x2xf32>
    %459 = tpu.matmul %457, %458, %cst_141 {dimension_numbers = #tpu.dot_dimension_numbers<[1], [0], [0], [1], [0, 0, 1, 1], [], []>} : vector<2x8xf32>, vector<8x2xf32>, vector<2x2xf32> -> vector<2x2xf32>
    %460 = vector.extract_strided_slice %452 {offsets = [1, 0, 0], sizes = [1, 2, 8], strides = [1, 1, 1]} : vector<3x2x8xf32> to vector<1x2x8xf32>
    %461 = vector.shape_cast %460 : vector<1x2x8xf32> to vector<2x8xf32>
    %462 = vector.extract_strided_slice %396 {offsets = [0, 1], sizes = [8, 2], strides = [1, 1]} : vector<8x4xf32> to vector<8x2xf32>
    %cst_142 = arith.constant dense<0.000000e+00> : vector<2x2xf32>
    %463 = tpu.matmul %461, %462, %cst_142 {dimension_numbers = #tpu.dot_dimension_numbers<[1], [0], [0], [1], [0, 0, 1, 1], [], []>} : vector<2x8xf32>, vector<8x2xf32>, vector<2x2xf32> -> vector<2x2xf32>
    %464 = arith.addf %459, %463 : vector<2x2xf32>
    %465 = vector.extract_strided_slice %452 {offsets = [2, 0, 0], sizes = [1, 2, 8], strides = [1, 1, 1]} : vector<3x2x8xf32> to vector<1x2x8xf32>
    %466 = vector.shape_cast %465 : vector<1x2x8xf32> to vector<2x8xf32>
    %467 = vector.extract_strided_slice %396 {offsets = [0, 2], sizes = [8, 2], strides = [1, 1]} : vector<8x4xf32> to vector<8x2xf32>
    %cst_143 = arith.constant dense<0.000000e+00> : vector<2x2xf32>
    %468 = tpu.matmul %466, %467, %cst_143 {dimension_numbers = #tpu.dot_dimension_numbers<[1], [0], [0], [1], [0, 0, 1, 1], [], []>} : vector<2x8xf32>, vector<8x2xf32>, vector<2x2xf32> -> vector<2x2xf32>
    %469 = arith.addf %464, %468 : vector<2x2xf32>
    %470 = vector.broadcast %453 : vector<2x1xf32> to vector<2x2xf32>
    %471 = arith.addf %469, %470 : vector<2x2xf32>
    %cst_144 = arith.constant 0.000000e+00 : f32
    %472 = vector.broadcast %cst_144 : f32 to vector<2x2xf32>
    %473 = arith.cmpf ogt, %471, %472 : vector<2x2xf32>
    %474 = math.exp %471 : vector<2x2xf32>
    %cst_145 = arith.constant 1.000000e+00 : f32
    %475 = vector.broadcast %cst_145 : f32 to vector<2x2xf32>
    %476 = arith.subf %474, %475 : vector<2x2xf32>
    %477 = arith.select %473, %471, %476 : vector<2x2xi1>, vector<2x2xf32>
    %478 = vector.extract_strided_slice %454 {offsets = [0, 0, 0], sizes = [1, 4, 2], strides = [1, 1, 1]} : vector<2x4x2xf32> to vector<1x4x2xf32>
    %479 = vector.shape_cast %478 : vector<1x4x2xf32> to vector<4x2xf32>
    %480 = vector.extract_strided_slice %477 {offsets = [0, 0], sizes = [2, 1], strides = [1, 1]} : vector<2x2xf32> to vector<2x1xf32>
    %cst_146 = arith.constant dense<0.000000e+00> : vector<4x1xf32>
    %481 = tpu.matmul %479, %480, %cst_146 {dimension_numbers = #tpu.dot_dimension_numbers<[1], [0], [0], [1], [0, 0, 1, 1], [], []>} : vector<4x2xf32>, vector<2x1xf32>, vector<4x1xf32> -> vector<4x1xf32>
    %482 = vector.extract_strided_slice %454 {offsets = [1, 0, 0], sizes = [1, 4, 2], strides = [1, 1, 1]} : vector<2x4x2xf32> to vector<1x4x2xf32>
    %483 = vector.shape_cast %482 : vector<1x4x2xf32> to vector<4x2xf32>
    %484 = vector.extract_strided_slice %477 {offsets = [0, 1], sizes = [2, 1], strides = [1, 1]} : vector<2x2xf32> to vector<2x1xf32>
    %cst_147 = arith.constant dense<0.000000e+00> : vector<4x1xf32>
    %485 = tpu.matmul %483, %484, %cst_147 {dimension_numbers = #tpu.dot_dimension_numbers<[1], [0], [0], [1], [0, 0, 1, 1], [], []>} : vector<4x2xf32>, vector<2x1xf32>, vector<4x1xf32> -> vector<4x1xf32>
    %486 = arith.addf %481, %485 : vector<4x1xf32>
    %487 = arith.addf %486, %455 : vector<4x1xf32>
    %cst_148 = arith.constant dense<0xFF800000> : vector<1xf32>
    %488 = vector.multi_reduction <maximumf>, %487, %cst_148 [0] : vector<4x1xf32> to vector<1xf32>
    %489 = vector.shape_cast %488 : vector<1xf32> to vector<1x1xf32>
    %490 = vector.broadcast %489 : vector<1x1xf32> to vector<4x1xf32>
    %491 = arith.subf %487, %490 : vector<4x1xf32>
    %492 = math.exp %491 : vector<4x1xf32>
    %cst_149 = arith.constant dense<0.000000e+00> : vector<1xf32>
    %493 = vector.multi_reduction <add>, %492, %cst_149 [0] : vector<4x1xf32> to vector<1xf32>
    %494 = vector.shape_cast %493 : vector<1xf32> to vector<1x1xf32>
    %495 = math.log %494 : vector<1x1xf32>
    %496 = vector.broadcast %495 : vector<1x1xf32> to vector<4x1xf32>
    %497 = arith.subf %491, %496 : vector<4x1xf32>
    %c0_150 = arith.constant 0 : index
    %c0_151 = arith.constant 0 : index
    %c0_152 = arith.constant 0 : index
    %498 = vector.load %arg14[%c0_150, %c0_151, %c0_152] : memref<2x4x1xf32, #tpu.memory_space<vmem>>, vector<1x4x1xf32>
    %499 = vector.shape_cast %498 : vector<1x4x1xf32> to vector<4x1xf32>
    %500 = vector.shape_cast %497 : vector<4x1xf32> to vector<1x4x1xf32>
    tpu.vector_store %arg14[%c0_150, %c0_151, %c0_152], %500 {strides = array<i32>} : memref<2x4x1xf32, #tpu.memory_space<vmem>>, vector<1x4x1xf32>,
    %501 = vector.extract_strided_slice %452 {offsets = [0, 0, 0], sizes = [1, 2, 8], strides = [1, 1, 1]} : vector<3x2x8xf32> to vector<1x2x8xf32>
    %502 = vector.shape_cast %501 : vector<1x2x8xf32> to vector<2x8xf32>
    %503 = vector.extract_strided_slice %451 {offsets = [0, 0], sizes = [8, 2], strides = [1, 1]} : vector<8x4xf32> to vector<8x2xf32>
    %cst_153 = arith.constant dense<0.000000e+00> : vector<2x2xf32>
    %504 = tpu.matmul %502, %503, %cst_153 {dimension_numbers = #tpu.dot_dimension_numbers<[1], [0], [0], [1], [0, 0, 1, 1], [], []>} : vector<2x8xf32>, vector<8x2xf32>, vector<2x2xf32> -> vector<2x2xf32>
    %505 = vector.extract_strided_slice %452 {offsets = [1, 0, 0], sizes = [1, 2, 8], strides = [1, 1, 1]} : vector<3x2x8xf32> to vector<1x2x8xf32>
    %506 = vector.shape_cast %505 : vector<1x2x8xf32> to vector<2x8xf32>
    %507 = vector.extract_strided_slice %451 {offsets = [0, 1], sizes = [8, 2], strides = [1, 1]} : vector<8x4xf32> to vector<8x2xf32>
    %cst_154 = arith.constant dense<0.000000e+00> : vector<2x2xf32>
    %508 = tpu.matmul %506, %507, %cst_154 {dimension_numbers = #tpu.dot_dimension_numbers<[1], [0], [0], [1], [0, 0, 1, 1], [], []>} : vector<2x8xf32>, vector<8x2xf32>, vector<2x2xf32> -> vector<2x2xf32>
    %509 = arith.addf %504, %508 : vector<2x2xf32>
    %510 = vector.extract_strided_slice %452 {offsets = [2, 0, 0], sizes = [1, 2, 8], strides = [1, 1, 1]} : vector<3x2x8xf32> to vector<1x2x8xf32>
    %511 = vector.shape_cast %510 : vector<1x2x8xf32> to vector<2x8xf32>
    %512 = vector.extract_strided_slice %451 {offsets = [0, 2], sizes = [8, 2], strides = [1, 1]} : vector<8x4xf32> to vector<8x2xf32>
    %cst_155 = arith.constant dense<0.000000e+00> : vector<2x2xf32>
    %513 = tpu.matmul %511, %512, %cst_155 {dimension_numbers = #tpu.dot_dimension_numbers<[1], [0], [0], [1], [0, 0, 1, 1], [], []>} : vector<2x8xf32>, vector<8x2xf32>, vector<2x2xf32> -> vector<2x2xf32>
    %514 = arith.addf %509, %513 : vector<2x2xf32>
    %515 = vector.broadcast %453 : vector<2x1xf32> to vector<2x2xf32>
    %516 = arith.addf %514, %515 : vector<2x2xf32>
    %cst_156 = arith.constant 0.000000e+00 : f32
    %517 = vector.broadcast %cst_156 : f32 to vector<2x2xf32>
    %518 = arith.cmpf ogt, %516, %517 : vector<2x2xf32>
    %519 = math.exp %516 : vector<2x2xf32>
    %cst_157 = arith.constant 1.000000e+00 : f32
    %520 = vector.broadcast %cst_157 : f32 to vector<2x2xf32>
    %521 = arith.subf %519, %520 : vector<2x2xf32>
    %522 = arith.select %518, %516, %521 : vector<2x2xi1>, vector<2x2xf32>
    %523 = vector.extract_strided_slice %454 {offsets = [0, 0, 0], sizes = [1, 4, 2], strides = [1, 1, 1]} : vector<2x4x2xf32> to vector<1x4x2xf32>
    %524 = vector.shape_cast %523 : vector<1x4x2xf32> to vector<4x2xf32>
    %525 = vector.extract_strided_slice %522 {offsets = [0, 0], sizes = [2, 1], strides = [1, 1]} : vector<2x2xf32> to vector<2x1xf32>
    %cst_158 = arith.constant dense<0.000000e+00> : vector<4x1xf32>
    %526 = tpu.matmul %524, %525, %cst_158 {dimension_numbers = #tpu.dot_dimension_numbers<[1], [0], [0], [1], [0, 0, 1, 1], [], []>} : vector<4x2xf32>, vector<2x1xf32>, vector<4x1xf32> -> vector<4x1xf32>
    %527 = vector.extract_strided_slice %454 {offsets = [1, 0, 0], sizes = [1, 4, 2], strides = [1, 1, 1]} : vector<2x4x2xf32> to vector<1x4x2xf32>
    %528 = vector.shape_cast %527 : vector<1x4x2xf32> to vector<4x2xf32>
    %529 = vector.extract_strided_slice %522 {offsets = [0, 1], sizes = [2, 1], strides = [1, 1]} : vector<2x2xf32> to vector<2x1xf32>
    %cst_159 = arith.constant dense<0.000000e+00> : vector<4x1xf32>
    %530 = tpu.matmul %528, %529, %cst_159 {dimension_numbers = #tpu.dot_dimension_numbers<[1], [0], [0], [1], [0, 0, 1, 1], [], []>} : vector<4x2xf32>, vector<2x1xf32>, vector<4x1xf32> -> vector<4x1xf32>
    %531 = arith.addf %526, %530 : vector<4x1xf32>
    %532 = arith.addf %531, %455 : vector<4x1xf32>
    %cst_160 = arith.constant dense<0xFF800000> : vector<1xf32>
    %533 = vector.multi_reduction <maximumf>, %532, %cst_160 [0] : vector<4x1xf32> to vector<1xf32>
    %534 = vector.shape_cast %533 : vector<1xf32> to vector<1x1xf32>
    %535 = vector.broadcast %534 : vector<1x1xf32> to vector<4x1xf32>
    %536 = arith.subf %532, %535 : vector<4x1xf32>
    %537 = math.exp %536 : vector<4x1xf32>
    %cst_161 = arith.constant dense<0.000000e+00> : vector<1xf32>
    %538 = vector.multi_reduction <add>, %537, %cst_161 [0] : vector<4x1xf32> to vector<1xf32>
    %539 = vector.shape_cast %538 : vector<1xf32> to vector<1x1xf32>
    %540 = math.log %539 : vector<1x1xf32>
    %541 = vector.broadcast %540 : vector<1x1xf32> to vector<4x1xf32>
    %542 = arith.subf %536, %541 : vector<4x1xf32>
    %c1_162 = arith.constant 1 : index
    %c0_163 = arith.constant 0 : index
    %c0_164 = arith.constant 0 : index
    %543 = vector.load %arg14[%c1_162, %c0_163, %c0_164] : memref<2x4x1xf32, #tpu.memory_space<vmem>>, vector<1x4x1xf32>
    %544 = vector.shape_cast %543 : vector<1x4x1xf32> to vector<4x1xf32>
    %545 = vector.shape_cast %542 : vector<4x1xf32> to vector<1x4x1xf32>
    tpu.vector_store %arg14[%c1_162, %c0_163, %c0_164], %545 {strides = array<i32>} : memref<2x4x1xf32, #tpu.memory_space<vmem>>, vector<1x4x1xf32>,
    return
  }
  func.func @transform_0(%arg0: i32) -> (i32, i32, i32) {
    %c0_i32 = arith.constant 0 : i32
    %c0_i32_0 = arith.constant 0 : i32
    %c0_i32_1 = arith.constant 0 : i32
    %c0_i32_2 = arith.constant 0 : i32
    return %c0_i32, %c0_i32_0, %c0_i32_1 : i32, i32, i32
  }
  func.func @transform_1(%arg0: i32) -> (i32, i32, i32) {
    %c0_i32 = arith.constant 0 : i32
    %c0_i32_0 = arith.constant 0 : i32
    %c0_i32_1 = arith.constant 0 : i32
    %c0_i32_2 = arith.constant 0 : i32
    return %c0_i32, %c0_i32_0, %c0_i32_1 : i32, i32, i32
  }
  func.func @transform_2(%arg0: i32) -> (i32, i32) {
    %c0_i32 = arith.constant 0 : i32
    %c0_i32_0 = arith.constant 0 : i32
    %c0_i32_1 = arith.constant 0 : i32
    return %c0_i32, %c0_i32_0 : i32, i32
  }
  func.func @transform_3(%arg0: i32) -> (i32, i32, i32) {
    %c0_i32 = arith.constant 0 : i32
    %c0_i32_0 = arith.constant 0 : i32
    %c0_i32_1 = arith.constant 0 : i32
    %c0_i32_2 = arith.constant 0 : i32
    return %c0_i32, %c0_i32_0, %c0_i32_1 : i32, i32, i32
  }
  func.func @transform_4(%arg0: i32) -> (i32, i32) {
    %c0_i32 = arith.constant 0 : i32
    %c0_i32_0 = arith.constant 0 : i32
    %c0_i32_1 = arith.constant 0 : i32
    return %c0_i32, %c0_i32_0 : i32, i32
  }
  func.func @transform_5(%arg0: i32) -> (i32, i32, i32) {
    %c0_i32 = arith.constant 0 : i32
    %c0_i32_0 = arith.constant 0 : i32
    %c0_i32_1 = arith.constant 0 : i32
    %c0_i32_2 = arith.constant 0 : i32
    return %c0_i32, %c0_i32_0, %c0_i32_1 : i32, i32, i32
  }
  func.func @transform_6(%arg0: i32) -> (i32, i32) {
    %c0_i32 = arith.constant 0 : i32
    %c0_i32_0 = arith.constant 0 : i32
    %c0_i32_1 = arith.constant 0 : i32
    return %c0_i32, %c0_i32_0 : i32, i32
  }
  func.func @transform_7(%arg0: i32) -> (i32, i32, i32) {
    %c0_i32 = arith.constant 0 : i32
    %c0_i32_0 = arith.constant 0 : i32
    %c0_i32_1 = arith.constant 0 : i32
    %c0_i32_2 = arith.constant 0 : i32
    return %c0_i32, %c0_i32_0, %c0_i32_1 : i32, i32, i32
  }
  func.func @transform_8(%arg0: i32) -> (i32, i32) {
    %c0_i32 = arith.constant 0 : i32
    %c0_i32_0 = arith.constant 0 : i32
    %c0_i32_1 = arith.constant 0 : i32
    return %c0_i32, %c0_i32_0 : i32, i32
  }
  func.func @transform_9(%arg0: i32) -> (i32, i32, i32) {
    %c0_i32 = arith.constant 0 : i32
    %c0_i32_0 = arith.constant 0 : i32
    %c0_i32_1 = arith.constant 0 : i32
    %c0_i32_2 = arith.constant 0 : i32
    return %c0_i32, %c0_i32_0, %c0_i32_1 : i32, i32, i32
  }
  func.func @transform_10(%arg0: i32) -> (i32, i32) {
    %c0_i32 = arith.constant 0 : i32
    %c0_i32_0 = arith.constant 0 : i32
    %c0_i32_1 = arith.constant 0 : i32
    return %c0_i32, %c0_i32_0 : i32, i32
  }
  func.func @transform_11(%arg0: i32) -> (i32, i32, i32) {
    %c0_i32 = arith.constant 0 : i32
    %c0_i32_0 = arith.constant 0 : i32
    %c0_i32_1 = arith.constant 0 : i32
    %c0_i32_2 = arith.constant 0 : i32
    return %c0_i32, %c0_i32_0, %c0_i32_1 : i32, i32, i32
  }
  func.func @transform_12(%arg0: i32) -> (i32, i32) {
    %c0_i32 = arith.constant 0 : i32
    %c0_i32_0 = arith.constant 0 : i32
    %c0_i32_1 = arith.constant 0 : i32
    return %c0_i32, %c0_i32_0 : i32, i32
  }
  func.func @transform_13(%arg0: i32) -> (i32, i32, i32) {
    %c0_i32 = arith.constant 0 : i32
    %c0_i32_0 = arith.constant 0 : i32
    %c0_i32_1 = arith.constant 0 : i32
    %c0_i32_2 = arith.constant 0 : i32
    return %c0_i32, %c0_i32_0, %c0_i32_1 : i32, i32, i32
  }
}

</mosaic_0001>

<llo_original>
// kernel: _lambda_.1
$region0: #{_lambda_.1}
  #allocation0 [shape = 'u32[]', space=smem, size = 0x4, offset = 0x4, fixed_abs, tag = 'smem constant byte address 0x4 - core index']
  #allocation1 [shape = 'u32[72,128]{1,0:T(1,128)}', space=vmem, size = 0x9000, scoped, tag = 'internal scratch']
  %s0 = inlined_call_operand.vmem [shape: f32[2,2,512], index: 0, kind: input, shape index: {}]
  %s1 = inlined_call_operand.vmem [shape: f32[5,8,2], index: 1, kind: input, shape index: {}]
  %s2 = inlined_call_operand.vmem [shape: f32[8,1], index: 2, kind: input, shape index: {}]
  %s3 = inlined_call_operand.vmem [shape: f32[5,8,8], index: 3, kind: input, shape index: {}]
  %s4 = inlined_call_operand.vmem [shape: f32[8,1], index: 4, kind: input, shape index: {}]
  %s5 = inlined_call_operand.vmem [shape: f32[5,8,8], index: 5, kind: input, shape index: {}]
  %s6 = inlined_call_operand.vmem [shape: f32[8,1], index: 6, kind: input, shape index: {}]
  %s7 = inlined_call_operand.vmem [shape: f32[5,8,8], index: 7, kind: input, shape index: {}]
  %s8 = inlined_call_operand.vmem [shape: f32[8,1], index: 8, kind: input, shape index: {}]
  %s9 = inlined_call_operand.vmem [shape: f32[3,2,8], index: 9, kind: input, shape index: {}]
  %s10 = inlined_call_operand.vmem [shape: f32[2,1], index: 10, kind: input, shape index: {}]
  %s11 = inlined_call_operand.vmem [shape: f32[2,4,2], index: 11, kind: input, shape index: {}]
  %s12 = inlined_call_operand.vmem [shape: f32[4,1], index: 12, kind: input, shape index: {}]
  %s13 = inlined_call_operand.vmem [shape: f32[2,4,1], index: 13, kind: output, shape index: {}]
  %s14 = sld [smem:[#allocation0]]
  $region62: #{_lambda_.1} parent=0
    _
  %s16 = ssub.s32 1, %s14
  %s17 = scalar_select 0, %s16, %s14
  // Predicated region
  $region2: #{_lambda_.1} parent=0 // pred_check
    _
  $region3: #{_lambda_.1} parent=0 // pred_check_branch
    %19 = sbr.rel (0) target = $region5
  $region4: #{_lambda_.1} parent=0 // pred_region
    _
  $region5: #{_lambda_.1} parent=0 // pred_fallthru
    _
  // Predicated region
  $region6: #{_lambda_.1} parent=0 // pred_check
    _
  $region7: #{_lambda_.1} parent=0 // pred_check_branch
    %21 = sbr.rel (0) target = $region9
  $region8: #{_lambda_.1} parent=0 // pred_region
    _
  $region9: #{_lambda_.1} parent=0 // pred_fallthru
    _
  // Predicated region
  $region10: #{_lambda_.1} parent=0 // pred_check
    _
  $region11: #{_lambda_.1} parent=0 // pred_check_branch
    %23 = sbr.rel (0) target = $region13
  $region12: #{_lambda_.1} parent=0 // pred_region
    _
  $region13: #{_lambda_.1} parent=0 // pred_fallthru
    _
  // Predicated region
  $region14: #{_lambda_.1} parent=0 // pred_check
    _
  $region15: #{_lambda_.1} parent=0 // pred_check_branch
    %25 = sbr.rel (0) target = $region17
  $region16: #{_lambda_.1} parent=0 // pred_region
    _
  $region17: #{_lambda_.1} parent=0 // pred_fallthru
    _
  // Predicated region
  $region18: #{_lambda_.1} parent=0 // pred_check
    _
  $region19: #{_lambda_.1} parent=0 // pred_check_branch
    %27 = sbr.rel (0) target = $region21
  $region20: #{_lambda_.1} parent=0 // pred_region
    _
  $region21: #{_lambda_.1} parent=0 // pred_fallthru
    _
  // Predicated region
  $region22: #{_lambda_.1} parent=0 // pred_check
    _
  $region23: #{_lambda_.1} parent=0 // pred_check_branch
    %29 = sbr.rel (0) target = $region25
  $region24: #{_lambda_.1} parent=0 // pred_region
    _
  $region25: #{_lambda_.1} parent=0 // pred_fallthru
    _
  // Predicated region
  $region26: #{_lambda_.1} parent=0 // pred_check
    _
  $region27: #{_lambda_.1} parent=0 // pred_check_branch
    %31 = sbr.rel (0) target = $region29
  $region28: #{_lambda_.1} parent=0 // pred_region
    _
  $region29: #{_lambda_.1} parent=0 // pred_fallthru
    _
  // Predicated region
  $region30: #{_lambda_.1} parent=0 // pred_check
    _
  $region31: #{_lambda_.1} parent=0 // pred_check_branch
    %33 = sbr.rel (0) target = $region33
  $region32: #{_lambda_.1} parent=0 // pred_region
    _
  $region33: #{_lambda_.1} parent=0 // pred_fallthru
    _
  // Predicated region
  $region34: #{_lambda_.1} parent=0 // pred_check
    _
  $region35: #{_lambda_.1} parent=0 // pred_check_branch
    %35 = sbr.rel (0) target = $region37
  $region36: #{_lambda_.1} parent=0 // pred_region
    _
  $region37: #{_lambda_.1} parent=0 // pred_fallthru
    _
  // Predicated region
  $region38: #{_lambda_.1} parent=0 // pred_check
    _
  $region39: #{_lambda_.1} parent=0 // pred_check_branch
    %37 = sbr.rel (0) target = $region41
  $region40: #{_lambda_.1} parent=0 // pred_region
    _
  $region41: #{_lambda_.1} parent=0 // pred_fallthru
    _
  // Predicated region
  $region42: #{_lambda_.1} parent=0 // pred_check
    _
  $region43: #{_lambda_.1} parent=0 // pred_check_branch
    %39 = sbr.rel (0) target = $region45
  $region44: #{_lambda_.1} parent=0 // pred_region
    _
  $region45: #{_lambda_.1} parent=0 // pred_fallthru
    _
  // Predicated region
  $region46: #{_lambda_.1} parent=0 // pred_check
    _
  $region47: #{_lambda_.1} parent=0 // pred_check_branch
    %41 = sbr.rel (0) target = $region49
  $region48: #{_lambda_.1} parent=0 // pred_region
    _
  $region49: #{_lambda_.1} parent=0 // pred_fallthru
    _
  // Predicated region
  $region50: #{_lambda_.1} parent=0 // pred_check
    _
  $region51: #{_lambda_.1} parent=0 // pred_check_branch
    %43 = sbr.rel (0) target = $region53
  $region52: #{_lambda_.1} parent=0 // pred_region
    _
  $region53: #{_lambda_.1} parent=0 // pred_fallthru
    _
  %v44 = vld [vmem:[%s0] sm:$0xff]
  %s45 = scalar_lea.vmem %s0, 8
  %v46 = vld [vmem:[%s45] sm:$0xff]
  %v47 = vld [vmem:[%s1] sm:$0xff]
  %v48 = vld [vmem:[%s1 + $0x8] sm:$0xff]
  %v49 = vld [vmem:[%s1 + $0x10] sm:$0xff]
  %v50 = vld [vmem:[%s1 + $0x18] sm:$0xff]
  %v51 = vld [vmem:[%s1 + $0x20] sm:$0xff]
  %v52 = vld [vmem:[%s2] sm:$0xff]
  %54 = vst [vmem:[#allocation1] ss:$4 sm:$0xff] %v44
  %v55 = vld.sshfl [vmem:[#allocation1] sm:$0xff pattern:$0x73625140]
  %v56 = vld.sshfl [vmem:[#allocation1 + $0x8] sm:$0xff pattern:$0x73625140]
  %v57 = vld.sshfl [vmem:[#allocation1 + $0x10] sm:$0xff pattern:$0x73625140]
  %v58 = vld.sshfl [vmem:[#allocation1 + $0x18] sm:$0xff pattern:$0x73625140]
  %59 = vrot.lane.b32.xlu0 %v55, 127
  %v60 = vpop.permute.xlu0 %59
  %61 = vrot.lane.b32.xlu0 %v56, 127
  %v62 = vpop.permute.xlu0 %61
  %63 = vrot.lane.b32.xlu0 %v57, 127
  %v64 = vpop.permute.xlu0 %63
  %65 = vrot.lane.b32.xlu0 %v58, 127
  %v66 = vpop.permute.xlu0 %65
  %vm67 = vcmask 1039360
  %v68 = vsel %vm67, %v60, %v62
  %v69 = vsel %vm67, %v62, %v64
  %v70 = vsel %vm67, %v64, %v66
  %vm71 = vcmask 15360
  %v73 = vsel %vm71, %v48, 0
  %vm75 = vcmask 1041408
  %v76 = vsel %vm75, %v68, 0
  %v78 = vsel %vm75, %v69, 0
  %v80 = vsel %vm75, %v70, 0
  %v82 = vsel %vm75, %v66, 0
  %84 = vmatpush.msra.mxu0 0.0
  %85 = vmatpush.msra.mxu0 0.0
  %86 = vmatpush.msra.mxu0 0.0
  %87 = vmatpush.msra.mxu0 0.0
  %88 = vmatpush.msra.mxu0 0.0
  %89 = vmatpush.msra.mxu0 0.0
  %90 = vmatpush.msra.mxu0 0.0
  %91 = vmatpush.msra.mxu0 0.0
  %92 = vmatpush.msra.mxu0 0.0
  %93 = vmatpush.msra.mxu0 0.0
  %94 = vmatpush.msra.mxu0 0.0
  %95 = vmatpush.msra.mxu0 0.0
  %96 = vmatpush.msra.mxu0 0.0
  %97 = vmatpush.msra.mxu0 0.0
  %98 = vmatpush.msra.mxu0 0.0
  %99 = vmatpush.msra.mxu0 %v76
  %100 = vmatmul.f32.gmra.mxu0 %v73
  %v101 = vpop.f32.mrf.mxu0
  %v102 = vadd.f32 0.0, %v101
  %103 = vdwg.mxu0
  %104 = vmatpush.msra.mxu0 0.0
  %105 = vmatpush.msra.mxu0 0.0
  %106 = vmatpush.msra.mxu0 0.0
  %107 = vmatpush.msra.mxu0 0.0
  %108 = vmatpush.msra.mxu0 0.0
  %109 = vmatpush.msra.mxu0 0.0
  %110 = vmatpush.msra.mxu0 0.0
  %111 = vmatpush.msra.mxu0 0.0
  %112 = vmatpush.msra.mxu0 0.0
  %113 = vmatpush.msra.mxu0 0.0
  %114 = vmatpush.msra.mxu0 0.0
  %115 = vmatpush.msra.mxu0 0.0
  %116 = vmatpush.msra.mxu0 0.0
  %117 = vmatpush.msra.mxu0 0.0
  %118 = vmatpush.msra.mxu0 0.0
  %119 = vmatpush.msra.mxu0 %v78
  %120 = vmatmul.f32.gmra.mxu0 %v73
  %v121 = vpop.f32.mrf.mxu0
  %v122 = vadd.f32 0.0, %v121
  %123 = vdwg.mxu0
  %124 = vmatpush.msra.mxu0 0.0
  %125 = vmatpush.msra.mxu0 0.0
  %126 = vmatpush.msra.mxu0 0.0
  %127 = vmatpush.msra.mxu0 0.0
  %128 = vmatpush.msra.mxu0 0.0
  %129 = vmatpush.msra.mxu0 0.0
  %130 = vmatpush.msra.mxu0 0.0
  %131 = vmatpush.msra.mxu0 0.0
  %132 = vmatpush.msra.mxu0 0.0
  %133 = vmatpush.msra.mxu0 0.0
  %134 = vmatpush.msra.mxu0 0.0
  %135 = vmatpush.msra.mxu0 0.0
  %136 = vmatpush.msra.mxu0 0.0
  %137 = vmatpush.msra.mxu0 0.0
  %138 = vmatpush.msra.mxu0 0.0
  %139 = vmatpush.msra.mxu0 %v80
  %140 = vmatmul.f32.gmra.mxu0 %v73
  %v141 = vpop.f32.mrf.mxu0
  %v142 = vadd.f32 0.0, %v141
  %143 = vdwg.mxu0
  %144 = vmatpush.msra.mxu0 0.0
  %145 = vmatpush.msra.mxu0 0.0
  %146 = vmatpush.msra.mxu0 0.0
  %147 = vmatpush.msra.mxu0 0.0
  %148 = vmatpush.msra.mxu0 0.0
  %149 = vmatpush.msra.mxu0 0.0
  %150 = vmatpush.msra.mxu0 0.0
  %151 = vmatpush.msra.mxu0 0.0
  %152 = vmatpush.msra.mxu0 0.0
  %153 = vmatpush.msra.mxu0 0.0
  %154 = vmatpush.msra.mxu0 0.0
  %155 = vmatpush.msra.mxu0 0.0
  %156 = vmatpush.msra.mxu0 0.0
  %157 = vmatpush.msra.mxu0 0.0
  %158 = vmatpush.msra.mxu0 0.0
  %159 = vmatpush.msra.mxu0 %v82
  %160 = vmatmul.f32.gmra.mxu0 %v73
  %v161 = vpop.f32.mrf.mxu0
  %v162 = vadd.f32 0.0, %v161
  %163 = vdwg.mxu0
  %164 = vst [vmem:[#allocation1] ss:$4 sm:$0xff] %v44
  %v165 = vld.sshfl [vmem:[#allocation1] sm:$0xff pattern:$0x73625140]
  %v166 = vld.sshfl [vmem:[#allocation1 + $0x8] sm:$0xff pattern:$0x73625140]
  %v167 = vld.sshfl [vmem:[#allocation1 + $0x10] sm:$0xff pattern:$0x73625140]
  %v168 = vld.sshfl [vmem:[#allocation1 + $0x18] sm:$0xff pattern:$0x73625140]
  %v170 = vsel %vm71, %v47, 0
  %v172 = vsel %vm75, %v165, 0
  %v174 = vsel %vm75, %v166, 0
  %v176 = vsel %vm75, %v167, 0
  %v178 = vsel %vm75, %v168, 0
  %180 = vmatpush.msra.mxu0 0.0
  %181 = vmatpush.msra.mxu0 0.0
  %182 = vmatpush.msra.mxu0 0.0
  %183 = vmatpush.msra.mxu0 0.0
  %184 = vmatpush.msra.mxu0 0.0
  %185 = vmatpush.msra.mxu0 0.0
  %186 = vmatpush.msra.mxu0 0.0
  %187 = vmatpush.msra.mxu0 0.0
  %188 = vmatpush.msra.mxu0 0.0
  %189 = vmatpush.msra.mxu0 0.0
  %190 = vmatpush.msra.mxu0 0.0
  %191 = vmatpush.msra.mxu0 0.0
  %192 = vmatpush.msra.mxu0 0.0
  %193 = vmatpush.msra.mxu0 0.0
  %194 = vmatpush.msra.mxu0 0.0
  %195 = vmatpush.msra.mxu0 %v172
  %196 = vmatmul.f32.gmra.mxu0 %v170
  %v197 = vpop.f32.mrf.mxu0
  %v198 = vadd.f32 %v102, %v197
  %199 = vdwg.mxu0
  %200 = vmatpush.msra.mxu0 0.0
  %201 = vmatpush.msra.mxu0 0.0
  %202 = vmatpush.msra.mxu0 0.0
  %203 = vmatpush.msra.mxu0 0.0
  %204 = vmatpush.msra.mxu0 0.0
  %205 = vmatpush.msra.mxu0 0.0
  %206 = vmatpush.msra.mxu0 0.0
  %207 = vmatpush.msra.mxu0 0.0
  %208 = vmatpush.msra.mxu0 0.0
  %209 = vmatpush.msra.mxu0 0.0
  %210 = vmatpush.msra.mxu0 0.0
  %211 = vmatpush.msra.mxu0 0.0
  %212 = vmatpush.msra.mxu0 0.0
  %213 = vmatpush.msra.mxu0 0.0
  %214 = vmatpush.msra.mxu0 0.0
  %215 = vmatpush.msra.mxu0 %v174
  %216 = vmatmul.f32.gmra.mxu0 %v170
  %v217 = vpop.f32.mrf.mxu0
  %v218 = vadd.f32 %v122, %v217
  %219 = vdwg.mxu0
  %220 = vmatpush.msra.mxu0 0.0
  %221 = vmatpush.msra.mxu0 0.0
  %222 = vmatpush.msra.mxu0 0.0
  %223 = vmatpush.msra.mxu0 0.0
  %224 = vmatpush.msra.mxu0 0.0
  %225 = vmatpush.msra.mxu0 0.0
  %226 = vmatpush.msra.mxu0 0.0
  %227 = vmatpush.msra.mxu0 0.0
  %228 = vmatpush.msra.mxu0 0.0
  %229 = vmatpush.msra.mxu0 0.0
  %230 = vmatpush.msra.mxu0 0.0
  %231 = vmatpush.msra.mxu0 0.0
  %232 = vmatpush.msra.mxu0 0.0
  %233 = vmatpush.msra.mxu0 0.0
  %234 = vmatpush.msra.mxu0 0.0
  %235 = vmatpush.msra.mxu0 %v176
  %236 = vmatmul.f32.gmra.mxu0 %v170
  %v237 = vpop.f32.mrf.mxu0
  %v238 = vadd.f32 %v142, %v237
  %239 = vdwg.mxu0
  %240 = vmatpush.msra.mxu0 0.0
  %241 = vmatpush.msra.mxu0 0.0
  %242 = vmatpush.msra.mxu0 0.0
  %243 = vmatpush.msra.mxu0 0.0
  %244 = vmatpush.msra.mxu0 0.0
  %245 = vmatpush.msra.mxu0 0.0
  %246 = vmatpush.msra.mxu0 0.0
  %247 = vmatpush.msra.mxu0 0.0
  %248 = vmatpush.msra.mxu0 0.0
  %249 = vmatpush.msra.mxu0 0.0
  %250 = vmatpush.msra.mxu0 0.0
  %251 = vmatpush.msra.mxu0 0.0
  %252 = vmatpush.msra.mxu0 0.0
  %253 = vmatpush.msra.mxu0 0.0
  %254 = vmatpush.msra.mxu0 0.0
  %255 = vmatpush.msra.mxu0 %v178
  %256 = vmatmul.f32.gmra.mxu0 %v170
  %v257 = vpop.f32.mrf.mxu0
  %v258 = vadd.f32 %v162, %v257
  %259 = vdwg.mxu0
  %260 = vst [vmem:[#allocation1] ss:$4 sm:$0xff] %v44
  %v261 = vld.sshfl [vmem:[#allocation1] sm:$0xff pattern:$0x73625140]
  %v262 = vld.sshfl [vmem:[#allocation1 + $0x8] sm:$0xff pattern:$0x73625140]
  %v263 = vld.sshfl [vmem:[#allocation1 + $0x10] sm:$0xff pattern:$0x73625140]
  %v264 = vld.sshfl [vmem:[#allocation1 + $0x18] sm:$0xff pattern:$0x73625140]
  %265 = vrot.lane.b32.xlu0 %v261, 126
  %v266 = vpop.permute.xlu0 %265
  %267 = vrot.lane.b32.xlu0 %v262, 126
  %v268 = vpop.permute.xlu0 %267
  %269 = vrot.lane.b32.xlu0 %v263, 126
  %v270 = vpop.permute.xlu0 %269
  %271 = vrot.lane.b32.xlu0 %v264, 126
  %v272 = vpop.permute.xlu0 %271
  %vm273 = vcmask 1031168
  %v274 = vsel %vm273, %v266, %v268
  %v275 = vsel %vm273, %v268, %v270
  %v276 = vsel %vm273, %v270, %v272
  %v278 = vsel %vm71, %v49, 0
  %v280 = vsel %vm75, %v274, 0
  %v282 = vsel %vm75, %v275, 0
  %v284 = vsel %vm75, %v276, 0
  %v286 = vsel %vm75, %v272, 0
  %288 = vmatpush.msra.mxu0 0.0
  %289 = vmatpush.msra.mxu0 0.0
  %290 = vmatpush.msra.mxu0 0.0
  %291 = vmatpush.msra.mxu0 0.0
  %292 = vmatpush.msra.mxu0 0.0
  %293 = vmatpush.msra.mxu0 0.0
  %294 = vmatpush.msra.mxu0 0.0
  %295 = vmatpush.msra.mxu0 0.0
  %296 = vmatpush.msra.mxu0 0.0
  %297 = vmatpush.msra.mxu0 0.0
  %298 = vmatpush.msra.mxu0 0.0
  %299 = vmatpush.msra.mxu0 0.0
  %300 = vmatpush.msra.mxu0 0.0
  %301 = vmatpush.msra.mxu0 0.0
  %302 = vmatpush.msra.mxu0 0.0
  %303 = vmatpush.msra.mxu0 %v280
  %304 = vmatmul.f32.gmra.mxu0 %v278
  %v305 = vpop.f32.mrf.mxu0
  %v306 = vadd.f32 0.0, %v305
  %307 = vdwg.mxu0
  %308 = vmatpush.msra.mxu0 0.0
  %309 = vmatpush.msra.mxu0 0.0
  %310 = vmatpush.msra.mxu0 0.0
  %311 = vmatpush.msra.mxu0 0.0
  %312 = vmatpush.msra.mxu0 0.0
  %313 = vmatpush.msra.mxu0 0.0
  %314 = vmatpush.msra.mxu0 0.0
  %315 = vmatpush.msra.mxu0 0.0
  %316 = vmatpush.msra.mxu0 0.0
  %317 = vmatpush.msra.mxu0 0.0
  %318 = vmatpush.msra.mxu0 0.0
  %319 = vmatpush.msra.mxu0 0.0
  %320 = vmatpush.msra.mxu0 0.0
  %321 = vmatpush.msra.mxu0 0.0
  %322 = vmatpush.msra.mxu0 0.0
  %323 = vmatpush.msra.mxu0 %v282
  %324 = vmatmul.f32.gmra.mxu0 %v278
  %v325 = vpop.f32.mrf.mxu0
  %v326 = vadd.f32 0.0, %v325
  %327 = vdwg.mxu0
  %328 = vmatpush.msra.mxu0 0.0
  %329 = vmatpush.msra.mxu0 0.0
  %330 = vmatpush.msra.mxu0 0.0
  %331 = vmatpush.msra.mxu0 0.0
  %332 = vmatpush.msra.mxu0 0.0
  %333 = vmatpush.msra.mxu0 0.0
  %334 = vmatpush.msra.mxu0 0.0
  %335 = vmatpush.msra.mxu0 0.0
  %336 = vmatpush.msra.mxu0 0.0
  %337 = vmatpush.msra.mxu0 0.0
  %338 = vmatpush.msra.mxu0 0.0
  %339 = vmatpush.msra.mxu0 0.0
  %340 = vmatpush.msra.mxu0 0.0
  %341 = vmatpush.msra.mxu0 0.0
  %342 = vmatpush.msra.mxu0 0.0
  %343 = vmatpush.msra.mxu0 %v284
  %344 = vmatmul.f32.gmra.mxu0 %v278
  %v345 = vpop.f32.mrf.mxu0
  %v346 = vadd.f32 0.0, %v345
  %347 = vdwg.mxu0
  %348 = vmatpush.msra.mxu0 0.0
  %349 = vmatpush.msra.mxu0 0.0
  %350 = vmatpush.msra.mxu0 0.0
  %351 = vmatpush.msra.mxu0 0.0
  %352 = vmatpush.msra.mxu0 0.0
  %353 = vmatpush.msra.mxu0 0.0
  %354 = vmatpush.msra.mxu0 0.0
  %355 = vmatpush.msra.mxu0 0.0
  %356 = vmatpush.msra.mxu0 0.0
  %357 = vmatpush.msra.mxu0 0.0
  %358 = vmatpush.msra.mxu0 0.0
  %359 = vmatpush.msra.mxu0 0.0
  %360 = vmatpush.msra.mxu0 0.0
  %361 = vmatpush.msra.mxu0 0.0
  %362 = vmatpush.msra.mxu0 0.0
  %363 = vmatpush.msra.mxu0 %v286
  %364 = vmatmul.f32.gmra.mxu0 %v278
  %v365 = vpop.f32.mrf.mxu0
  %v366 = vadd.f32 0.0, %v365
  %367 = vdwg.mxu0
  %v368 = vadd.f32 %v198, %v306
  %v369 = vadd.f32 %v218, %v326
  %v370 = vadd.f32 %v238, %v346
  %v371 = vadd.f32 %v258, %v366
  %372 = vst [vmem:[#allocation1] ss:$4 sm:$0xff] %v44
  %v373 = vld.sshfl [vmem:[#allocation1] sm:$0xff pattern:$0x73625140]
  %v374 = vld.sshfl [vmem:[#allocation1 + $0x8] sm:$0xff pattern:$0x73625140]
  %v375 = vld.sshfl [vmem:[#allocation1 + $0x10] sm:$0xff pattern:$0x73625140]
  %v376 = vld.sshfl [vmem:[#allocation1 + $0x18] sm:$0xff pattern:$0x73625140]
  %377 = vrot.lane.b32.xlu0 %v373, 125
  %v378 = vpop.permute.xlu0 %377
  %379 = vrot.lane.b32.xlu0 %v374, 125
  %v380 = vpop.permute.xlu0 %379
  %381 = vrot.lane.b32.xlu0 %v375, 125
  %v382 = vpop.permute.xlu0 %381
  %383 = vrot.lane.b32.xlu0 %v376, 125
  %v384 = vpop.permute.xlu0 %383
  %vm385 = vcmask 1022976
  %v386 = vsel %vm385, %v378, %v380
  %v387 = vsel %vm385, %v380, %v382
  %v388 = vsel %vm385, %v382, %v384
  %v390 = vsel %vm71, %v50, 0
  %v392 = vsel %vm75, %v386, 0
  %v394 = vsel %vm75, %v387, 0
  %v396 = vsel %vm75, %v388, 0
  %v398 = vsel %vm75, %v384, 0
  %400 = vmatpush.msra.mxu0 0.0
  %401 = vmatpush.msra.mxu0 0.0
  %402 = vmatpush.msra.mxu0 0.0
  %403 = vmatpush.msra.mxu0 0.0
  %404 = vmatpush.msra.mxu0 0.0
  %405 = vmatpush.msra.mxu0 0.0
  %406 = vmatpush.msra.mxu0 0.0
  %407 = vmatpush.msra.mxu0 0.0
  %408 = vmatpush.msra.mxu0 0.0
  %409 = vmatpush.msra.mxu0 0.0
  %410 = vmatpush.msra.mxu0 0.0
  %411 = vmatpush.msra.mxu0 0.0
  %412 = vmatpush.msra.mxu0 0.0
  %413 = vmatpush.msra.mxu0 0.0
  %414 = vmatpush.msra.mxu0 0.0
  %415 = vmatpush.msra.mxu0 %v392
  %416 = vmatmul.f32.gmra.mxu0 %v390
  %v417 = vpop.f32.mrf.mxu0
  %v418 = vadd.f32 0.0, %v417
  %419 = vdwg.mxu0
  %420 = vmatpush.msra.mxu0 0.0
  %421 = vmatpush.msra.mxu0 0.0
  %422 = vmatpush.msra.mxu0 0.0
  %423 = vmatpush.msra.mxu0 0.0
  %424 = vmatpush.msra.mxu0 0.0
  %425 = vmatpush.msra.mxu0 0.0
  %426 = vmatpush.msra.mxu0 0.0
  %427 = vmatpush.msra.mxu0 0.0
  %428 = vmatpush.msra.mxu0 0.0
  %429 = vmatpush.msra.mxu0 0.0
  %430 = vmatpush.msra.mxu0 0.0
  %431 = vmatpush.msra.mxu0 0.0
  %432 = vmatpush.msra.mxu0 0.0
  %433 = vmatpush.msra.mxu0 0.0
  %434 = vmatpush.msra.mxu0 0.0
  %435 = vmatpush.msra.mxu0 %v394
  %436 = vmatmul.f32.gmra.mxu0 %v390
  %v437 = vpop.f32.mrf.mxu0
  %v438 = vadd.f32 0.0, %v437
  %439 = vdwg.mxu0
  %440 = vmatpush.msra.mxu0 0.0
  %441 = vmatpush.msra.mxu0 0.0
  %442 = vmatpush.msra.mxu0 0.0
  %443 = vmatpush.msra.mxu0 0.0
  %444 = vmatpush.msra.mxu0 0.0
  %445 = vmatpush.msra.mxu0 0.0
  %446 = vmatpush.msra.mxu0 0.0
  %447 = vmatpush.msra.mxu0 0.0
  %448 = vmatpush.msra.mxu0 0.0
  %449 = vmatpush.msra.mxu0 0.0
  %450 = vmatpush.msra.mxu0 0.0
  %451 = vmatpush.msra.mxu0 0.0
  %452 = vmatpush.msra.mxu0 0.0
  %453 = vmatpush.msra.mxu0 0.0
  %454 = vmatpush.msra.mxu0 0.0
  %455 = vmatpush.msra.mxu0 %v396
  %456 = vmatmul.f32.gmra.mxu0 %v390
  %v457 = vpop.f32.mrf.mxu0
  %v458 = vadd.f32 0.0, %v457
  %459 = vdwg.mxu0
  %460 = vmatpush.msra.mxu0 0.0
  %461 = vmatpush.msra.mxu0 0.0
  %462 = vmatpush.msra.mxu0 0.0
  %463 = vmatpush.msra.mxu0 0.0
  %464 = vmatpush.msra.mxu0 0.0
  %465 = vmatpush.msra.mxu0 0.0
  %466 = vmatpush.msra.mxu0 0.0
  %467 = vmatpush.msra.mxu0 0.0
  %468 = vmatpush.msra.mxu0 0.0
  %469 = vmatpush.msra.mxu0 0.0
  %470 = vmatpush.msra.mxu0 0.0
  %471 = vmatpush.msra.mxu0 0.0
  %472 = vmatpush.msra.mxu0 0.0
  %473 = vmatpush.msra.mxu0 0.0
  %474 = vmatpush.msra.mxu0 0.0
  %475 = vmatpush.msra.mxu0 %v398
  %476 = vmatmul.f32.gmra.mxu0 %v390
  %v477 = vpop.f32.mrf.mxu0
  %v478 = vadd.f32 0.0, %v477
  %479 = vdwg.mxu0
  %v480 = vadd.f32 %v368, %v418
  %v481 = vadd.f32 %v369, %v438
  %v482 = vadd.f32 %v370, %v458
  %v483 = vadd.f32 %v371, %v478
  %484 = vst [vmem:[#allocation1] ss:$4 sm:$0xff] %v44
  %v485 = vld.sshfl [vmem:[#allocation1] sm:$0xff pattern:$0x73625140]
  %v486 = vld.sshfl [vmem:[#allocation1 + $0x8] sm:$0xff pattern:$0x73625140]
  %v487 = vld.sshfl [vmem:[#allocation1 + $0x10] sm:$0xff pattern:$0x73625140]
  %v488 = vld.sshfl [vmem:[#allocation1 + $0x18] sm:$0xff pattern:$0x73625140]
  %489 = vrot.lane.b32.xlu0 %v485, 124
  %v490 = vpop.permute.xlu0 %489
  %491 = vrot.lane.b32.xlu0 %v486, 124
  %v492 = vpop.permute.xlu0 %491
  %493 = vrot.lane.b32.xlu0 %v487, 124
  %v494 = vpop.permute.xlu0 %493
  %495 = vrot.lane.b32.xlu0 %v488, 124
  %v496 = vpop.permute.xlu0 %495
  %vm497 = vcmask 1014784
  %v498 = vsel %vm497, %v490, %v492
  %v499 = vsel %vm497, %v492, %v494
  %v500 = vsel %vm497, %v494, %v496
  %v502 = vsel %vm71, %v51, 0
  %v504 = vsel %vm75, %v498, 0
  %v506 = vsel %vm75, %v499, 0
  %v508 = vsel %vm75, %v500, 0
  %v510 = vsel %vm75, %v496, 0
  %512 = vmatpush.msra.mxu0 0.0
  %513 = vmatpush.msra.mxu0 0.0
  %514 = vmatpush.msra.mxu0 0.0
  %515 = vmatpush.msra.mxu0 0.0
  %516 = vmatpush.msra.mxu0 0.0
  %517 = vmatpush.msra.mxu0 0.0
  %518 = vmatpush.msra.mxu0 0.0
  %519 = vmatpush.msra.mxu0 0.0
  %520 = vmatpush.msra.mxu0 0.0
  %521 = vmatpush.msra.mxu0 0.0
  %522 = vmatpush.msra.mxu0 0.0
  %523 = vmatpush.msra.mxu0 0.0
  %524 = vmatpush.msra.mxu0 0.0
  %525 = vmatpush.msra.mxu0 0.0
  %526 = vmatpush.msra.mxu0 0.0
  %527 = vmatpush.msra.mxu0 %v504
  %528 = vmatmul.f32.gmra.mxu0 %v502
  %v529 = vpop.f32.mrf.mxu0
  %v530 = vadd.f32 0.0, %v529
  %531 = vdwg.mxu0
  %532 = vmatpush.msra.mxu0 0.0
  %533 = vmatpush.msra.mxu0 0.0
  %534 = vmatpush.msra.mxu0 0.0
  %535 = vmatpush.msra.mxu0 0.0
  %536 = vmatpush.msra.mxu0 0.0
  %537 = vmatpush.msra.mxu0 0.0
  %538 = vmatpush.msra.mxu0 0.0
  %539 = vmatpush.msra.mxu0 0.0
  %540 = vmatpush.msra.mxu0 0.0
  %541 = vmatpush.msra.mxu0 0.0
  %542 = vmatpush.msra.mxu0 0.0
  %543 = vmatpush.msra.mxu0 0.0
  %544 = vmatpush.msra.mxu0 0.0
  %545 = vmatpush.msra.mxu0 0.0
  %546 = vmatpush.msra.mxu0 0.0
  %547 = vmatpush.msra.mxu0 %v506
  %548 = vmatmul.f32.gmra.mxu0 %v502
  %v549 = vpop.f32.mrf.mxu0
  %v550 = vadd.f32 0.0, %v549
  %551 = vdwg.mxu0
  %552 = vmatpush.msra.mxu0 0.0
  %553 = vmatpush.msra.mxu0 0.0
  %554 = vmatpush.msra.mxu0 0.0
  %555 = vmatpush.msra.mxu0 0.0
  %556 = vmatpush.msra.mxu0 0.0
  %557 = vmatpush.msra.mxu0 0.0
  %558 = vmatpush.msra.mxu0 0.0
  %559 = vmatpush.msra.mxu0 0.0
  %560 = vmatpush.msra.mxu0 0.0
  %561 = vmatpush.msra.mxu0 0.0
  %562 = vmatpush.msra.mxu0 0.0
  %563 = vmatpush.msra.mxu0 0.0
  %564 = vmatpush.msra.mxu0 0.0
  %565 = vmatpush.msra.mxu0 0.0
  %566 = vmatpush.msra.mxu0 0.0
  %567 = vmatpush.msra.mxu0 %v508
  %568 = vmatmul.f32.gmra.mxu0 %v502
  %v569 = vpop.f32.mrf.mxu0
  %v570 = vadd.f32 0.0, %v569
  %571 = vdwg.mxu0
  %572 = vmatpush.msra.mxu0 0.0
  %573 = vmatpush.msra.mxu0 0.0
  %574 = vmatpush.msra.mxu0 0.0
  %575 = vmatpush.msra.mxu0 0.0
  %576 = vmatpush.msra.mxu0 0.0
  %577 = vmatpush.msra.mxu0 0.0
  %578 = vmatpush.msra.mxu0 0.0
  %579 = vmatpush.msra.mxu0 0.0
  %580 = vmatpush.msra.mxu0 0.0
  %581 = vmatpush.msra.mxu0 0.0
  %582 = vmatpush.msra.mxu0 0.0
  %583 = vmatpush.msra.mxu0 0.0
  %584 = vmatpush.msra.mxu0 0.0
  %585 = vmatpush.msra.mxu0 0.0
  %586 = vmatpush.msra.mxu0 0.0
  %587 = vmatpush.msra.mxu0 %v510
  %588 = vmatmul.f32.gmra.mxu0 %v502
  %v589 = vpop.f32.mrf.mxu0
  %v590 = vadd.f32 0.0, %v589
  %591 = vdwg.mxu0
  %v592 = vadd.f32 %v480, %v530
  %v593 = vadd.f32 %v481, %v550
  %v594 = vadd.f32 %v482, %v570
  %v595 = vadd.f32 %v483, %v590
  %597 = vset.pattern.permute.xlu0 0
  %598 = vperm.xlu0 %597, %v52
  %v599 = vpop.permute.xlu0 %598
  %v601 = vadd.f32 %v592, %v599
  %v602 = vadd.f32 %v593, %v599
  %v603 = vadd.f32 %v594, %v599
  %v604 = vadd.f32 %v595, %v599
  %vm605 = vcmp.ge.f32.partialorder %v601, 0.0
  %vm606 = vcmp.ge.f32.partialorder %v602, 0.0
  %vm607 = vcmp.ge.f32.partialorder %v603, 0.0
  %vm608 = vcmp.ge.f32.partialorder %v604, 0.0
  %v609 = vmul.f32 %v601, 0.2
  %v610 = vmul.f32 %v602, 0.2
  %v611 = vmul.f32 %v603, 0.2
  %v612 = vmul.f32 %v604, 0.2
  %v613 = vsel %vm605, %v601, %v609
  %v614 = vsel %vm606, %v602, %v610
  %v615 = vsel %vm607, %v603, %v611
  %v616 = vsel %vm608, %v604, %v612
  %v617 = vlaneseq
  %v618 = vshrl.u32 %v617, 7
  %v619 = vadd.s32 %v618, 8
  %v620 = vadd.s32 %v618, 16
  %v621 = vadd.s32 %v618, 24
  %v622 = vadd.s32 %v618, 32
  %v623 = vadd.s32 %v618, 40
  %v624 = vadd.s32 %v618, 48
  %v625 = vadd.s32 %v618, 56
  %v626 = vadd.s32 %v618, 64
  %v627 = vadd.s32 %v618, 72
  %v628 = vadd.s32 %v618, 80
  %v629 = vadd.s32 %v618, 88
  %v630 = vadd.s32 %v618, 96
  %v631 = vadd.s32 %v618, 104
  %v632 = vadd.s32 %v618, 112
  %v633 = vadd.s32 %v618, 120
  %v634 = vadd.s32 %v618, 128
  %v635 = vadd.s32 %v618, 136
  %v636 = vadd.s32 %v618, 144
  %v637 = vadd.s32 %v618, 152
  %v638 = vadd.s32 %v618, 160
  %v639 = vadd.s32 %v618, 168
  %v640 = vadd.s32 %v618, 176
  %v641 = vadd.s32 %v618, 184
  %v642 = vadd.s32 %v618, 192
  %v643 = vadd.s32 %v618, 200
  %v644 = vadd.s32 %v618, 208
  %v645 = vadd.s32 %v618, 216
  %v646 = vadd.s32 %v618, 224
  %v647 = vadd.s32 %v618, 232
  %v648 = vadd.s32 %v618, 240
  %v649 = vadd.s32 %v618, 248
  %v650 = vadd.s32 %v618, 256
  %v651 = vadd.s32 %v618, 264
  %v652 = vadd.s32 %v618, 272
  %v653 = vadd.s32 %v618, 280
  %v654 = vadd.s32 %v618, 288
  %v655 = vadd.s32 %v618, 296
  %v656 = vadd.s32 %v618, 304
  %v657 = vadd.s32 %v618, 312
  %v658 = vadd.s32 %v618, 320
  %v659 = vadd.s32 %v618, 328
  %v660 = vadd.s32 %v618, 336
  %v661 = vadd.s32 %v618, 344
  %v662 = vadd.s32 %v618, 352
  %v663 = vadd.s32 %v618, 360
  %v664 = vadd.s32 %v618, 368
  %v665 = vadd.s32 %v618, 376
  %v666 = vadd.s32 %v618, 384
  %v667 = vadd.s32 %v618, 392
  %v668 = vadd.s32 %v618, 400
  %v669 = vadd.s32 %v618, 408
  %v670 = vadd.s32 %v618, 416
  %v671 = vadd.s32 %v618, 424
  %v672 = vadd.s32 %v618, 432
  %v673 = vadd.s32 %v618, 440
  %v674 = vadd.s32 %v618, 448
  %v675 = vadd.s32 %v618, 456
  %v676 = vadd.s32 %v618, 464
  %v677 = vadd.s32 %v618, 472
  %v678 = vadd.s32 %v618, 480
  %v679 = vadd.s32 %v618, 488
  %v680 = vadd.s32 %v618, 496
  %v681 = vadd.s32 %v618, 504
  %v682 = vlaneseq
  %v683 = vand.u32 %v682, 127
  %v684 = vadd.s32 %v683, 128
  %v685 = vmul.u32 %v683, 3
  %v686 = vmul.u32 %v684, 3
  %vm687 = vcmp.eq.s32.totalorder %v618, %v685
  %vm688 = vcmp.eq.s32.totalorder %v618, %v686
  %vm689 = vcmp.eq.s32.totalorder %v619, %v685
  %vm690 = vcmp.eq.s32.totalorder %v619, %v686
  %vm691 = vcmp.eq.s32.totalorder %v620, %v685
  %vm692 = vcmp.eq.s32.totalorder %v620, %v686
  %vm693 = vcmp.eq.s32.totalorder %v621, %v685
  %vm694 = vcmp.eq.s32.totalorder %v621, %v686
  %vm695 = vcmp.eq.s32.totalorder %v622, %v685
  %vm696 = vcmp.eq.s32.totalorder %v622, %v686
  %vm697 = vcmp.eq.s32.totalorder %v623, %v685
  %vm698 = vcmp.eq.s32.totalorder %v623, %v686
  %vm699 = vcmp.eq.s32.totalorder %v624, %v685
  %vm700 = vcmp.eq.s32.totalorder %v624, %v686
  %vm701 = vcmp.eq.s32.totalorder %v625, %v685
  %vm702 = vcmp.eq.s32.totalorder %v625, %v686
  %vm703 = vcmp.eq.s32.totalorder %v626, %v685
  %vm704 = vcmp.eq.s32.totalorder %v626, %v686
  %vm705 = vcmp.eq.s32.totalorder %v627, %v685
  %vm706 = vcmp.eq.s32.totalorder %v627, %v686
  %vm707 = vcmp.eq.s32.totalorder %v628, %v685
  %vm708 = vcmp.eq.s32.totalorder %v628, %v686
  %vm709 = vcmp.eq.s32.totalorder %v629, %v685
  %vm710 = vcmp.eq.s32.totalorder %v629, %v686
  %vm711 = vcmp.eq.s32.totalorder %v630, %v685
  %vm712 = vcmp.eq.s32.totalorder %v630, %v686
  %vm713 = vcmp.eq.s32.totalorder %v631, %v685
  %vm714 = vcmp.eq.s32.totalorder %v631, %v686
  %vm715 = vcmp.eq.s32.totalorder %v632, %v685
  %vm716 = vcmp.eq.s32.totalorder %v632, %v686
  %vm717 = vcmp.eq.s32.totalorder %v633, %v685
  %vm718 = vcmp.eq.s32.totalorder %v633, %v686
  %vm719 = vcmp.eq.s32.totalorder %v634, %v685
  %vm720 = vcmp.eq.s32.totalorder %v634, %v686
  %vm721 = vcmp.eq.s32.totalorder %v635, %v685
  %vm722 = vcmp.eq.s32.totalorder %v635, %v686
  %vm723 = vcmp.eq.s32.totalorder %v636, %v685
  %vm724 = vcmp.eq.s32.totalorder %v636, %v686
  %vm725 = vcmp.eq.s32.totalorder %v637, %v685
  %vm726 = vcmp.eq.s32.totalorder %v637, %v686
  %vm727 = vcmp.eq.s32.totalorder %v638, %v685
  %vm728 = vcmp.eq.s32.totalorder %v638, %v686
  %vm729 = vcmp.eq.s32.totalorder %v639, %v685
  %vm730 = vcmp.eq.s32.totalorder %v639, %v686
  %vm731 = vcmp.eq.s32.totalorder %v640, %v685
  %vm732 = vcmp.eq.s32.totalorder %v640, %v686
  %vm733 = vcmp.eq.s32.totalorder %v641, %v685
  %vm734 = vcmp.eq.s32.totalorder %v641, %v686
  %vm735 = vcmp.eq.s32.totalorder %v642, %v685
  %vm736 = vcmp.eq.s32.totalorder %v642, %v686
  %vm737 = vcmp.eq.s32.totalorder %v643, %v685
  %vm738 = vcmp.eq.s32.totalorder %v643, %v686
  %vm739 = vcmp.eq.s32.totalorder %v644, %v685
  %vm740 = vcmp.eq.s32.totalorder %v644, %v686
  %vm741 = vcmp.eq.s32.totalorder %v645, %v685
  %vm742 = vcmp.eq.s32.totalorder %v645, %v686
  %vm743 = vcmp.eq.s32.totalorder %v646, %v685
  %vm744 = vcmp.eq.s32.totalorder %v646, %v686
  %vm745 = vcmp.eq.s32.totalorder %v647, %v685
  %vm746 = vcmp.eq.s32.totalorder %v647, %v686
  %vm747 = vcmp.eq.s32.totalorder %v648, %v685
  %vm748 = vcmp.eq.s32.totalorder %v648, %v686
  %vm749 = vcmp.eq.s32.totalorder %v649, %v685
  %vm750 = vcmp.eq.s32.totalorder %v649, %v686
  %vm751 = vcmp.eq.s32.totalorder %v650, %v685
  %vm752 = vcmp.eq.s32.totalorder %v650, %v686
  %vm753 = vcmp.eq.s32.totalorder %v651, %v685
  %vm754 = vcmp.eq.s32.totalorder %v651, %v686
  %vm755 = vcmp.eq.s32.totalorder %v652, %v685
  %vm756 = vcmp.eq.s32.totalorder %v652, %v686
  %vm757 = vcmp.eq.s32.totalorder %v653, %v685
  %vm758 = vcmp.eq.s32.totalorder %v653, %v686
  %vm759 = vcmp.eq.s32.totalorder %v654, %v685
  %vm760 = vcmp.eq.s32.totalorder %v654, %v686
  %vm761 = vcmp.eq.s32.totalorder %v655, %v685
  %vm762 = vcmp.eq.s32.totalorder %v655, %v686
  %vm763 = vcmp.eq.s32.totalorder %v656, %v685
  %vm764 = vcmp.eq.s32.totalorder %v656, %v686
  %vm765 = vcmp.eq.s32.totalorder %v657, %v685
  %vm766 = vcmp.eq.s32.totalorder %v657, %v686
  %vm767 = vcmp.eq.s32.totalorder %v658, %v685
  %vm768 = vcmp.eq.s32.totalorder %v658, %v686
  %vm769 = vcmp.eq.s32.totalorder %v659, %v685
  %vm770 = vcmp.eq.s32.totalorder %v659, %v686
  %vm771 = vcmp.eq.s32.totalorder %v660, %v685
  %vm772 = vcmp.eq.s32.totalorder %v660, %v686
  %vm773 = vcmp.eq.s32.totalorder %v661, %v685
  %vm774 = vcmp.eq.s32.totalorder %v661, %v686
  %vm775 = vcmp.eq.s32.totalorder %v662, %v685
  %vm776 = vcmp.eq.s32.totalorder %v662, %v686
  %vm777 = vcmp.eq.s32.totalorder %v663, %v685
  %vm778 = vcmp.eq.s32.totalorder %v663, %v686
  %vm779 = vcmp.eq.s32.totalorder %v664, %v685
  %vm780 = vcmp.eq.s32.totalorder %v664, %v686
  %vm781 = vcmp.eq.s32.totalorder %v665, %v685
  %vm782 = vcmp.eq.s32.totalorder %v665, %v686
  %vm783 = vcmp.eq.s32.totalorder %v666, %v685
  %vm784 = vcmp.eq.s32.totalorder %v666, %v686
  %vm785 = vcmp.eq.s32.totalorder %v667, %v685
  %vm786 = vcmp.eq.s32.totalorder %v667, %v686
  %vm787 = vcmp.eq.s32.totalorder %v668, %v685
  %vm788 = vcmp.eq.s32.totalorder %v668, %v686
  %vm789 = vcmp.eq.s32.totalorder %v669, %v685
  %vm790 = vcmp.eq.s32.totalorder %v669, %v686
  %vm791 = vcmp.eq.s32.totalorder %v670, %v685
  %vm792 = vcmp.eq.s32.totalorder %v670, %v686
  %vm793 = vcmp.eq.s32.totalorder %v671, %v685
  %vm794 = vcmp.eq.s32.totalorder %v671, %v686
  %vm795 = vcmp.eq.s32.totalorder %v672, %v685
  %vm796 = vcmp.eq.s32.totalorder %v672, %v686
  %vm797 = vcmp.eq.s32.totalorder %v673, %v685
  %vm798 = vcmp.eq.s32.totalorder %v673, %v686
  %vm799 = vcmp.eq.s32.totalorder %v674, %v685
  %vm800 = vcmp.eq.s32.totalorder %v674, %v686
  %vm801 = vcmp.eq.s32.totalorder %v675, %v685
  %vm802 = vcmp.eq.s32.totalorder %v675, %v686
  %vm803 = vcmp.eq.s32.totalorder %v676, %v685
  %vm804 = vcmp.eq.s32.totalorder %v676, %v686
  %vm805 = vcmp.eq.s32.totalorder %v677, %v685
  %vm806 = vcmp.eq.s32.totalorder %v677, %v686
  %vm807 = vcmp.eq.s32.totalorder %v678, %v685
  %vm808 = vcmp.eq.s32.totalorder %v678, %v686
  %vm809 = vcmp.eq.s32.totalorder %v679, %v685
  %vm810 = vcmp.eq.s32.totalorder %v679, %v686
  %vm811 = vcmp.eq.s32.totalorder %v680, %v685
  %vm812 = vcmp.eq.s32.totalorder %v680, %v686
  %vm813 = vcmp.eq.s32.totalorder %v681, %v685
  %vm814 = vcmp.eq.s32.totalorder %v681, %v686
  %v815 = vsel %vm687, 1, 0
  %v816 = vsel %vm688, 1, 0
  %v817 = vsel %vm689, 1, 0
  %v818 = vsel %vm690, 1, 0
  %v819 = vsel %vm691, 1, 0
  %v820 = vsel %vm692, 1, 0
  %v821 = vsel %vm693, 1, 0
  %v822 = vsel %vm694, 1, 0
  %v823 = vsel %vm695, 1, 0
  %v824 = vsel %vm696, 1, 0
  %v825 = vsel %vm697, 1, 0
  %v826 = vsel %vm698, 1, 0
  %v827 = vsel %vm699, 1, 0
  %v828 = vsel %vm700, 1, 0
  %v829 = vsel %vm701, 1, 0
  %v830 = vsel %vm702, 1, 0
  %v831 = vsel %vm703, 1, 0
  %v832 = vsel %vm704, 1, 0
  %v833 = vsel %vm705, 1, 0
  %v834 = vsel %vm706, 1, 0
  %v835 = vsel %vm707, 1, 0
  %v836 = vsel %vm708, 1, 0
  %v837 = vsel %vm709, 1, 0
  %v838 = vsel %vm710, 1, 0
  %v839 = vsel %vm711, 1, 0
  %v840 = vsel %vm712, 1, 0
  %v841 = vsel %vm713, 1, 0
  %v842 = vsel %vm714, 1, 0
  %v843 = vsel %vm715, 1, 0
  %v844 = vsel %vm716, 1, 0
  %v845 = vsel %vm717, 1, 0
  %v846 = vsel %vm718, 1, 0
  %v847 = vsel %vm719, 1, 0
  %v848 = vsel %vm720, 1, 0
  %v849 = vsel %vm721, 1, 0
  %v850 = vsel %vm722, 1, 0
  %v851 = vsel %vm723, 1, 0
  %v852 = vsel %vm724, 1, 0
  %v853 = vsel %vm725, 1, 0
  %v854 = vsel %vm726, 1, 0
  %v855 = vsel %vm727, 1, 0
  %v856 = vsel %vm728, 1, 0
  %v857 = vsel %vm729, 1, 0
  %v858 = vsel %vm730, 1, 0
  %v859 = vsel %vm731, 1, 0
  %v860 = vsel %vm732, 1, 0
  %v861 = vsel %vm733, 1, 0
  %v862 = vsel %vm734, 1, 0
  %v863 = vsel %vm735, 1, 0
  %v864 = vsel %vm736, 1, 0
  %v865 = vsel %vm737, 1, 0
  %v866 = vsel %vm738, 1, 0
  %v867 = vsel %vm739, 1, 0
  %v868 = vsel %vm740, 1, 0
  %v869 = vsel %vm741, 1, 0
  %v870 = vsel %vm742, 1, 0
  %v871 = vsel %vm743, 1, 0
  %v872 = vsel %vm744, 1, 0
  %v873 = vsel %vm745, 1, 0
  %v874 = vsel %vm746, 1, 0
  %v875 = vsel %vm747, 1, 0
  %v876 = vsel %vm748, 1, 0
  %v877 = vsel %vm749, 1, 0
  %v878 = vsel %vm750, 1, 0
  %v879 = vsel %vm751, 1, 0
  %v880 = vsel %vm752, 1, 0
  %v881 = vsel %vm753, 1, 0
  %v882 = vsel %vm754, 1, 0
  %v883 = vsel %vm755, 1, 0
  %v884 = vsel %vm756, 1, 0
  %v885 = vsel %vm757, 1, 0
  %v886 = vsel %vm758, 1, 0
  %v887 = vsel %vm759, 1, 0
  %v888 = vsel %vm760, 1, 0
  %v889 = vsel %vm761, 1, 0
  %v890 = vsel %vm762, 1, 0
  %v891 = vsel %vm763, 1, 0
  %v892 = vsel %vm764, 1, 0
  %v893 = vsel %vm765, 1, 0
  %v894 = vsel %vm766, 1, 0
  %v895 = vsel %vm767, 1, 0
  %v896 = vsel %vm768, 1, 0
  %v897 = vsel %vm769, 1, 0
  %v898 = vsel %vm770, 1, 0
  %v899 = vsel %vm771, 1, 0
  %v900 = vsel %vm772, 1, 0
  %v901 = vsel %vm773, 1, 0
  %v902 = vsel %vm774, 1, 0
  %v903 = vsel %vm775, 1, 0
  %v904 = vsel %vm776, 1, 0
  %v905 = vsel %vm777, 1, 0
  %v906 = vsel %vm778, 1, 0
  %v907 = vsel %vm779, 1, 0
  %v908 = vsel %vm780, 1, 0
  %v909 = vsel %vm781, 1, 0
  %v910 = vsel %vm782, 1, 0
  %v911 = vsel %vm783, 1, 0
  %v912 = vsel %vm784, 1, 0
  %v913 = vsel %vm785, 1, 0
  %v914 = vsel %vm786, 1, 0
  %v915 = vsel %vm787, 1, 0
  %v916 = vsel %vm788, 1, 0
  %v917 = vsel %vm789, 1, 0
  %v918 = vsel %vm790, 1, 0
  %v919 = vsel %vm791, 1, 0
  %v920 = vsel %vm792, 1, 0
  %v921 = vsel %vm793, 1, 0
  %v922 = vsel %vm794, 1, 0
  %v923 = vsel %vm795, 1, 0
  %v924 = vsel %vm796, 1, 0
  %v925 = vsel %vm797, 1, 0
  %v926 = vsel %vm798, 1, 0
  %v927 = vsel %vm799, 1, 0
  %v928 = vsel %vm800, 1, 0
  %v929 = vsel %vm801, 1, 0
  %v930 = vsel %vm802, 1, 0
  %v931 = vsel %vm803, 1, 0
  %v932 = vsel %vm804, 1, 0
  %v933 = vsel %vm805, 1, 0
  %v934 = vsel %vm806, 1, 0
  %v935 = vsel %vm807, 1, 0
  %v936 = vsel %vm808, 1, 0
  %v937 = vsel %vm809, 1, 0
  %v938 = vsel %vm810, 1, 0
  %v939 = vsel %vm811, 1, 0
  %v940 = vsel %vm812, 1, 0
  %v941 = vsel %vm813, 1, 0
  %v942 = vsel %vm814, 1, 0
  %v943 = vcvt.s32.f32 %v815
  %v944 = vcvt.s32.f32 %v816
  %v945 = vcvt.s32.f32 %v817
  %v946 = vcvt.s32.f32 %v818
  %v947 = vcvt.s32.f32 %v819
  %v948 = vcvt.s32.f32 %v820
  %v949 = vcvt.s32.f32 %v821
  %v950 = vcvt.s32.f32 %v822
  %v951 = vcvt.s32.f32 %v823
  %v952 = vcvt.s32.f32 %v824
  %v953 = vcvt.s32.f32 %v825
  %v954 = vcvt.s32.f32 %v826
  %v955 = vcvt.s32.f32 %v827
  %v956 = vcvt.s32.f32 %v828
  %v957 = vcvt.s32.f32 %v829
  %v958 = vcvt.s32.f32 %v830
  %v959 = vcvt.s32.f32 %v831
  %v960 = vcvt.s32.f32 %v832
  %v961 = vcvt.s32.f32 %v833
  %v962 = vcvt.s32.f32 %v834
  %v963 = vcvt.s32.f32 %v835
  %v964 = vcvt.s32.f32 %v836
  %v965 = vcvt.s32.f32 %v837
  %v966 = vcvt.s32.f32 %v838
  %v967 = vcvt.s32.f32 %v839
  %v968 = vcvt.s32.f32 %v840
  %v969 = vcvt.s32.f32 %v841
  %v970 = vcvt.s32.f32 %v842
  %v971 = vcvt.s32.f32 %v843
  %v972 = vcvt.s32.f32 %v844
  %v973 = vcvt.s32.f32 %v845
  %v974 = vcvt.s32.f32 %v846
  %v975 = vcvt.s32.f32 %v847
  %v976 = vcvt.s32.f32 %v848
  %v977 = vcvt.s32.f32 %v849
  %v978 = vcvt.s32.f32 %v850
  %v979 = vcvt.s32.f32 %v851
  %v980 = vcvt.s32.f32 %v852
  %v981 = vcvt.s32.f32 %v853
  %v982 = vcvt.s32.f32 %v854
  %v983 = vcvt.s32.f32 %v855
  %v984 = vcvt.s32.f32 %v856
  %v985 = vcvt.s32.f32 %v857
  %v986 = vcvt.s32.f32 %v858
  %v987 = vcvt.s32.f32 %v859
  %v988 = vcvt.s32.f32 %v860
  %v989 = vcvt.s32.f32 %v861
  %v990 = vcvt.s32.f32 %v862
  %v991 = vcvt.s32.f32 %v863
  %v992 = vcvt.s32.f32 %v864
  %v993 = vcvt.s32.f32 %v865
  %v994 = vcvt.s32.f32 %v866
  %v995 = vcvt.s32.f32 %v867
  %v996 = vcvt.s32.f32 %v868
  %v997 = vcvt.s32.f32 %v869
  %v998 = vcvt.s32.f32 %v870
  %v999 = vcvt.s32.f32 %v871
  %v1000 = vcvt.s32.f32 %v872
  %v1001 = vcvt.s32.f32 %v873
  %v1002 = vcvt.s32.f32 %v874
  %v1003 = vcvt.s32.f32 %v875
  %v1004 = vcvt.s32.f32 %v876
  %v1005 = vcvt.s32.f32 %v877
  %v1006 = vcvt.s32.f32 %v878
  %v1007 = vcvt.s32.f32 %v879
  %v1008 = vcvt.s32.f32 %v880
  %v1009 = vcvt.s32.f32 %v881
  %v1010 = vcvt.s32.f32 %v882
  %v1011 = vcvt.s32.f32 %v883
  %v1012 = vcvt.s32.f32 %v884
  %v1013 = vcvt.s32.f32 %v885
  %v1014 = vcvt.s32.f32 %v886
  %v1015 = vcvt.s32.f32 %v887
  %v1016 = vcvt.s32.f32 %v888
  %v1017 = vcvt.s32.f32 %v889
  %v1018 = vcvt.s32.f32 %v890
  %v1019 = vcvt.s32.f32 %v891
  %v1020 = vcvt.s32.f32 %v892
  %v1021 = vcvt.s32.f32 %v893
  %v1022 = vcvt.s32.f32 %v894
  %v1023 = vcvt.s32.f32 %v895
  %v1024 = vcvt.s32.f32 %v896
  %v1025 = vcvt.s32.f32 %v897
  %v1026 = vcvt.s32.f32 %v898
  %v1027 = vcvt.s32.f32 %v899
  %v1028 = vcvt.s32.f32 %v900
  %v1029 = vcvt.s32.f32 %v901
  %v1030 = vcvt.s32.f32 %v902
  %v1031 = vcvt.s32.f32 %v903
  %v1032 = vcvt.s32.f32 %v904
  %v1033 = vcvt.s32.f32 %v905
  %v1034 = vcvt.s32.f32 %v906
  %v1035 = vcvt.s32.f32 %v907
  %v1036 = vcvt.s32.f32 %v908
  %v1037 = vcvt.s32.f32 %v909
  %v1038 = vcvt.s32.f32 %v910
  %v1039 = vcvt.s32.f32 %v911
  %v1040 = vcvt.s32.f32 %v912
  %v1041 = vcvt.s32.f32 %v913
  %v1042 = vcvt.s32.f32 %v914
  %v1043 = vcvt.s32.f32 %v915
  %v1044 = vcvt.s32.f32 %v916
  %v1045 = vcvt.s32.f32 %v917
  %v1046 = vcvt.s32.f32 %v918
  %v1047 = vcvt.s32.f32 %v919
  %v1048 = vcvt.s32.f32 %v920
  %v1049 = vcvt.s32.f32 %v921
  %v1050 = vcvt.s32.f32 %v922
  %v1051 = vcvt.s32.f32 %v923
  %v1052 = vcvt.s32.f32 %v924
  %v1053 = vcvt.s32.f32 %v925
  %v1054 = vcvt.s32.f32 %v926
  %v1055 = vcvt.s32.f32 %v927
  %v1056 = vcvt.s32.f32 %v928
  %v1057 = vcvt.s32.f32 %v929
  %v1058 = vcvt.s32.f32 %v930
  %v1059 = vcvt.s32.f32 %v931
  %v1060 = vcvt.s32.f32 %v932
  %v1061 = vcvt.s32.f32 %v933
  %v1062 = vcvt.s32.f32 %v934
  %v1063 = vcvt.s32.f32 %v935
  %v1064 = vcvt.s32.f32 %v936
  %v1065 = vcvt.s32.f32 %v937
  %v1066 = vcvt.s32.f32 %v938
  %v1067 = vcvt.s32.f32 %v939
  %v1068 = vcvt.s32.f32 %v940
  %v1069 = vcvt.s32.f32 %v941
  %v1070 = vcvt.s32.f32 %v942
  %v1072 = vsel %vm497, %v616, 0
  %vm1074 = vcmask 1043456
  %v1076 = vsel %vm1074, %v1069, 0
  %v1079 = vsel %vm1074, %v1070, 0
  %1081 = vmatpush.msra.mxu0 %v973
  %1082 = vmatpush.msra.mxu0 %v971
  %1083 = vmatpush.msra.mxu0 %v969
  %1084 = vmatpush.msra.mxu0 %v967
  %1085 = vmatpush.msra.mxu0 %v965
  %1086 = vmatpush.msra.mxu0 %v963
  %1087 = vmatpush.msra.mxu0 %v961
  %1088 = vmatpush.msra.mxu0 %v959
  %1089 = vmatpush.msra.mxu0 %v957
  %1090 = vmatpush.msra.mxu0 %v955
  %1091 = vmatpush.msra.mxu0 %v953
  %1092 = vmatpush.msra.mxu0 %v951
  %1093 = vmatpush.msra.mxu0 %v949
  %1094 = vmatpush.msra.mxu0 %v947
  %1095 = vmatpush.msra.mxu0 %v945
  %1096 = vmatpush.msra.mxu0 %v943
  %1097 = vmatmul.f32.gmra.mxu0 %v613
  %v1098 = vpop.f32.mrf.mxu0
  %v1099 = vadd.f32 0.0, %v1098
  %1100 = vdwg.mxu0
  %1101 = vmatpush.msra.mxu0 %v1005
  %1102 = vmatpush.msra.mxu0 %v1003
  %1103 = vmatpush.msra.mxu0 %v1001
  %1104 = vmatpush.msra.mxu0 %v999
  %1105 = vmatpush.msra.mxu0 %v997
  %1106 = vmatpush.msra.mxu0 %v995
  %1107 = vmatpush.msra.mxu0 %v993
  %1108 = vmatpush.msra.mxu0 %v991
  %1109 = vmatpush.msra.mxu0 %v989
  %1110 = vmatpush.msra.mxu0 %v987
  %1111 = vmatpush.msra.mxu0 %v985
  %1112 = vmatpush.msra.mxu0 %v983
  %1113 = vmatpush.msra.mxu0 %v981
  %1114 = vmatpush.msra.mxu0 %v979
  %1115 = vmatpush.msra.mxu0 %v977
  %1116 = vmatpush.msra.mxu0 %v975
  %1117 = vmatmul.f32.gmra.mxu0 %v614
  %v1118 = vpop.f32.mrf.mxu0
  %v1119 = vadd.f32 %v1099, %v1118
  %1120 = vdwg.mxu0
  %1121 = vmatpush.msra.mxu0 %v1037
  %1122 = vmatpush.msra.mxu0 %v1035
  %1123 = vmatpush.msra.mxu0 %v1033
  %1124 = vmatpush.msra.mxu0 %v1031
  %1125 = vmatpush.msra.mxu0 %v1029
  %1126 = vmatpush.msra.mxu0 %v1027
  %1127 = vmatpush.msra.mxu0 %v1025
  %1128 = vmatpush.msra.mxu0 %v1023
  %1129 = vmatpush.msra.mxu0 %v1021
  %1130 = vmatpush.msra.mxu0 %v1019
  %1131 = vmatpush.msra.mxu0 %v1017
  %1132 = vmatpush.msra.mxu0 %v1015
  %1133 = vmatpush.msra.mxu0 %v1013
  %1134 = vmatpush.msra.mxu0 %v1011
  %1135 = vmatpush.msra.mxu0 %v1009
  %1136 = vmatpush.msra.mxu0 %v1007
  %1137 = vmatmul.f32.gmra.mxu0 %v615
  %v1138 = vpop.f32.mrf.mxu0
  %v1139 = vadd.f32 %v1119, %v1138
  %1140 = vdwg.mxu0
  %1141 = vmatpush.msra.mxu0 %v1076
  %1142 = vmatpush.msra.mxu0 %v1067
  %1143 = vmatpush.msra.mxu0 %v1065
  %1144 = vmatpush.msra.mxu0 %v1063
  %1145 = vmatpush.msra.mxu0 %v1061
  %1146 = vmatpush.msra.mxu0 %v1059
  %1147 = vmatpush.msra.mxu0 %v1057
  %1148 = vmatpush.msra.mxu0 %v1055
  %1149 = vmatpush.msra.mxu0 %v1053
  %1150 = vmatpush.msra.mxu0 %v1051
  %1151 = vmatpush.msra.mxu0 %v1049
  %1152 = vmatpush.msra.mxu0 %v1047
  %1153 = vmatpush.msra.mxu0 %v1045
  %1154 = vmatpush.msra.mxu0 %v1043
  %1155 = vmatpush.msra.mxu0 %v1041
  %1156 = vmatpush.msra.mxu0 %v1039
  %1157 = vmatmul.f32.gmra.mxu0 %v1072
  %v1158 = vpop.f32.mrf.mxu0
  %v1159 = vadd.f32 %v1139, %v1158
  %1160 = vdwg.mxu0
  %1161 = vmatpush.msra.mxu0 %v974
  %1162 = vmatpush.msra.mxu0 %v972
  %1163 = vmatpush.msra.mxu0 %v970
  %1164 = vmatpush.msra.mxu0 %v968
  %1165 = vmatpush.msra.mxu0 %v966
  %1166 = vmatpush.msra.mxu0 %v964
  %1167 = vmatpush.msra.mxu0 %v962
  %1168 = vmatpush.msra.mxu0 %v960
  %1169 = vmatpush.msra.mxu0 %v958
  %1170 = vmatpush.msra.mxu0 %v956
  %1171 = vmatpush.msra.mxu0 %v954
  %1172 = vmatpush.msra.mxu0 %v952
  %1173 = vmatpush.msra.mxu0 %v950
  %1174 = vmatpush.msra.mxu0 %v948
  %1175 = vmatpush.msra.mxu0 %v946
  %1176 = vmatpush.msra.mxu0 %v944
  %1177 = vmatmul.f32.gmra.mxu0 %v613
  %v1178 = vpop.f32.mrf.mxu0
  %v1179 = vadd.f32 0.0, %v1178
  %1180 = vdwg.mxu0
  %1181 = vmatpush.msra.mxu0 %v1006
  %1182 = vmatpush.msra.mxu0 %v1004
  %1183 = vmatpush.msra.mxu0 %v1002
  %1184 = vmatpush.msra.mxu0 %v1000
  %1185 = vmatpush.msra.mxu0 %v998
  %1186 = vmatpush.msra.mxu0 %v996
  %1187 = vmatpush.msra.mxu0 %v994
  %1188 = vmatpush.msra.mxu0 %v992
  %1189 = vmatpush.msra.mxu0 %v990
  %1190 = vmatpush.msra.mxu0 %v988
  %1191 = vmatpush.msra.mxu0 %v986
  %1192 = vmatpush.msra.mxu0 %v984
  %1193 = vmatpush.msra.mxu0 %v982
  %1194 = vmatpush.msra.mxu0 %v980
  %1195 = vmatpush.msra.mxu0 %v978
  %1196 = vmatpush.msra.mxu0 %v976
  %1197 = vmatmul.f32.gmra.mxu0 %v614
  %v1198 = vpop.f32.mrf.mxu0
  %v1199 = vadd.f32 %v1179, %v1198
  %1200 = vdwg.mxu0
  %1201 = vmatpush.msra.mxu0 %v1038
  %1202 = vmatpush.msra.mxu0 %v1036
  %1203 = vmatpush.msra.mxu0 %v1034
  %1204 = vmatpush.msra.mxu0 %v1032
  %1205 = vmatpush.msra.mxu0 %v1030
  %1206 = vmatpush.msra.mxu0 %v1028
  %1207 = vmatpush.msra.mxu0 %v1026
  %1208 = vmatpush.msra.mxu0 %v1024
  %1209 = vmatpush.msra.mxu0 %v1022
  %1210 = vmatpush.msra.mxu0 %v1020
  %1211 = vmatpush.msra.mxu0 %v1018
  %1212 = vmatpush.msra.mxu0 %v1016
  %1213 = vmatpush.msra.mxu0 %v1014
  %1214 = vmatpush.msra.mxu0 %v1012
  %1215 = vmatpush.msra.mxu0 %v1010
  %1216 = vmatpush.msra.mxu0 %v1008
  %1217 = vmatmul.f32.gmra.mxu0 %v615
  %v1218 = vpop.f32.mrf.mxu0
  %v1219 = vadd.f32 %v1199, %v1218
  %1220 = vdwg.mxu0
  %1221 = vmatpush.msra.mxu0 %v1079
  %1222 = vmatpush.msra.mxu0 %v1068
  %1223 = vmatpush.msra.mxu0 %v1066
  %1224 = vmatpush.msra.mxu0 %v1064
  %1225 = vmatpush.msra.mxu0 %v1062
  %1226 = vmatpush.msra.mxu0 %v1060
  %1227 = vmatpush.msra.mxu0 %v1058
  %1228 = vmatpush.msra.mxu0 %v1056
  %1229 = vmatpush.msra.mxu0 %v1054
  %1230 = vmatpush.msra.mxu0 %v1052
  %1231 = vmatpush.msra.mxu0 %v1050
  %1232 = vmatpush.msra.mxu0 %v1048
  %1233 = vmatpush.msra.mxu0 %v1046
  %1234 = vmatpush.msra.mxu0 %v1044
  %1235 = vmatpush.msra.mxu0 %v1042
  %1236 = vmatpush.msra.mxu0 %v1040
  %1237 = vmatmul.f32.gmra.mxu0 %v1072
  %v1238 = vpop.f32.mrf.mxu0
  %v1239 = vadd.f32 %v1219, %v1238
  %1240 = vdwg.mxu0
  %v1241 = vadd.s32 %v685, 1
  %v1242 = vadd.s32 %v686, 1
  %vm1243 = vcmp.eq.s32.totalorder %v618, %v1241
  %vm1244 = vcmp.eq.s32.totalorder %v618, %v1242
  %vm1245 = vcmp.eq.s32.totalorder %v619, %v1241
  %vm1246 = vcmp.eq.s32.totalorder %v619, %v1242
  %vm1247 = vcmp.eq.s32.totalorder %v620, %v1241
  %vm1248 = vcmp.eq.s32.totalorder %v620, %v1242
  %vm1249 = vcmp.eq.s32.totalorder %v621, %v1241
  %vm1250 = vcmp.eq.s32.totalorder %v621, %v1242
  %vm1251 = vcmp.eq.s32.totalorder %v622, %v1241
  %vm1252 = vcmp.eq.s32.totalorder %v622, %v1242
  %vm1253 = vcmp.eq.s32.totalorder %v623, %v1241
  %vm1254 = vcmp.eq.s32.totalorder %v623, %v1242
  %vm1255 = vcmp.eq.s32.totalorder %v624, %v1241
  %vm1256 = vcmp.eq.s32.totalorder %v624, %v1242
  %vm1257 = vcmp.eq.s32.totalorder %v625, %v1241
  %vm1258 = vcmp.eq.s32.totalorder %v625, %v1242
  %vm1259 = vcmp.eq.s32.totalorder %v626, %v1241
  %vm1260 = vcmp.eq.s32.totalorder %v626, %v1242
  %vm1261 = vcmp.eq.s32.totalorder %v627, %v1241
  %vm1262 = vcmp.eq.s32.totalorder %v627, %v1242
  %vm1263 = vcmp.eq.s32.totalorder %v628, %v1241
  %vm1264 = vcmp.eq.s32.totalorder %v628, %v1242
  %vm1265 = vcmp.eq.s32.totalorder %v629, %v1241
  %vm1266 = vcmp.eq.s32.totalorder %v629, %v1242
  %vm1267 = vcmp.eq.s32.totalorder %v630, %v1241
  %vm1268 = vcmp.eq.s32.totalorder %v630, %v1242
  %vm1269 = vcmp.eq.s32.totalorder %v631, %v1241
  %vm1270 = vcmp.eq.s32.totalorder %v631, %v1242
  %vm1271 = vcmp.eq.s32.totalorder %v632, %v1241
  %vm1272 = vcmp.eq.s32.totalorder %v632, %v1242
  %vm1273 = vcmp.eq.s32.totalorder %v633, %v1241
  %vm1274 = vcmp.eq.s32.totalorder %v633, %v1242
  %vm1275 = vcmp.eq.s32.totalorder %v634, %v1241
  %vm1276 = vcmp.eq.s32.totalorder %v634, %v1242
  %vm1277 = vcmp.eq.s32.totalorder %v635, %v1241
  %vm1278 = vcmp.eq.s32.totalorder %v635, %v1242
  %vm1279 = vcmp.eq.s32.totalorder %v636, %v1241
  %vm1280 = vcmp.eq.s32.totalorder %v636, %v1242
  %vm1281 = vcmp.eq.s32.totalorder %v637, %v1241
  %vm1282 = vcmp.eq.s32.totalorder %v637, %v1242
  %vm1283 = vcmp.eq.s32.totalorder %v638, %v1241
  %vm1284 = vcmp.eq.s32.totalorder %v638, %v1242
  %vm1285 = vcmp.eq.s32.totalorder %v639, %v1241
  %vm1286 = vcmp.eq.s32.totalorder %v639, %v1242
  %vm1287 = vcmp.eq.s32.totalorder %v640, %v1241
  %vm1288 = vcmp.eq.s32.totalorder %v640, %v1242
  %vm1289 = vcmp.eq.s32.totalorder %v641, %v1241
  %vm1290 = vcmp.eq.s32.totalorder %v641, %v1242
  %vm1291 = vcmp.eq.s32.totalorder %v642, %v1241
  %vm1292 = vcmp.eq.s32.totalorder %v642, %v1242
  %vm1293 = vcmp.eq.s32.totalorder %v643, %v1241
  %vm1294 = vcmp.eq.s32.totalorder %v643, %v1242
  %vm1295 = vcmp.eq.s32.totalorder %v644, %v1241
  %vm1296 = vcmp.eq.s32.totalorder %v644, %v1242
  %vm1297 = vcmp.eq.s32.totalorder %v645, %v1241
  %vm1298 = vcmp.eq.s32.totalorder %v645, %v1242
  %vm1299 = vcmp.eq.s32.totalorder %v646, %v1241
  %vm1300 = vcmp.eq.s32.totalorder %v646, %v1242
  %vm1301 = vcmp.eq.s32.totalorder %v647, %v1241
  %vm1302 = vcmp.eq.s32.totalorder %v647, %v1242
  %vm1303 = vcmp.eq.s32.totalorder %v648, %v1241
  %vm1304 = vcmp.eq.s32.totalorder %v648, %v1242
  %vm1305 = vcmp.eq.s32.totalorder %v649, %v1241
  %vm1306 = vcmp.eq.s32.totalorder %v649, %v1242
  %vm1307 = vcmp.eq.s32.totalorder %v650, %v1241
  %vm1308 = vcmp.eq.s32.totalorder %v650, %v1242
  %vm1309 = vcmp.eq.s32.totalorder %v651, %v1241
  %vm1310 = vcmp.eq.s32.totalorder %v651, %v1242
  %vm1311 = vcmp.eq.s32.totalorder %v652, %v1241
  %vm1312 = vcmp.eq.s32.totalorder %v652, %v1242
  %vm1313 = vcmp.eq.s32.totalorder %v653, %v1241
  %vm1314 = vcmp.eq.s32.totalorder %v653, %v1242
  %vm1315 = vcmp.eq.s32.totalorder %v654, %v1241
  %vm1316 = vcmp.eq.s32.totalorder %v654, %v1242
  %vm1317 = vcmp.eq.s32.totalorder %v655, %v1241
  %vm1318 = vcmp.eq.s32.totalorder %v655, %v1242
  %vm1319 = vcmp.eq.s32.totalorder %v656, %v1241
  %vm1320 = vcmp.eq.s32.totalorder %v656, %v1242
  %vm1321 = vcmp.eq.s32.totalorder %v657, %v1241
  %vm1322 = vcmp.eq.s32.totalorder %v657, %v1242
  %vm1323 = vcmp.eq.s32.totalorder %v658, %v1241
  %vm1324 = vcmp.eq.s32.totalorder %v658, %v1242
  %vm1325 = vcmp.eq.s32.totalorder %v659, %v1241
  %vm1326 = vcmp.eq.s32.totalorder %v659, %v1242
  %vm1327 = vcmp.eq.s32.totalorder %v660, %v1241
  %vm1328 = vcmp.eq.s32.totalorder %v660, %v1242
  %vm1329 = vcmp.eq.s32.totalorder %v661, %v1241
  %vm1330 = vcmp.eq.s32.totalorder %v661, %v1242
  %vm1331 = vcmp.eq.s32.totalorder %v662, %v1241
  %vm1332 = vcmp.eq.s32.totalorder %v662, %v1242
  %vm1333 = vcmp.eq.s32.totalorder %v663, %v1241
  %vm1334 = vcmp.eq.s32.totalorder %v663, %v1242
  %vm1335 = vcmp.eq.s32.totalorder %v664, %v1241
  %vm1336 = vcmp.eq.s32.totalorder %v664, %v1242
  %vm1337 = vcmp.eq.s32.totalorder %v665, %v1241
  %vm1338 = vcmp.eq.s32.totalorder %v665, %v1242
  %vm1339 = vcmp.eq.s32.totalorder %v666, %v1241
  %vm1340 = vcmp.eq.s32.totalorder %v666, %v1242
  %vm1341 = vcmp.eq.s32.totalorder %v667, %v1241
  %vm1342 = vcmp.eq.s32.totalorder %v667, %v1242
  %vm1343 = vcmp.eq.s32.totalorder %v668, %v1241
  %vm1344 = vcmp.eq.s32.totalorder %v668, %v1242
  %vm1345 = vcmp.eq.s32.totalorder %v669, %v1241
  %vm1346 = vcmp.eq.s32.totalorder %v669, %v1242
  %vm1347 = vcmp.eq.s32.totalorder %v670, %v1241
  %vm1348 = vcmp.eq.s32.totalorder %v670, %v1242
  %vm1349 = vcmp.eq.s32.totalorder %v671, %v1241
  %vm1350 = vcmp.eq.s32.totalorder %v671, %v1242
  %vm1351 = vcmp.eq.s32.totalorder %v672, %v1241
  %vm1352 = vcmp.eq.s32.totalorder %v672, %v1242
  %vm1353 = vcmp.eq.s32.totalorder %v673, %v1241
  %vm1354 = vcmp.eq.s32.totalorder %v673, %v1242
  %vm1355 = vcmp.eq.s32.totalorder %v674, %v1241
  %vm1356 = vcmp.eq.s32.totalorder %v674, %v1242
  %vm1357 = vcmp.eq.s32.totalorder %v675, %v1241
  %vm1358 = vcmp.eq.s32.totalorder %v675, %v1242
  %vm1359 = vcmp.eq.s32.totalorder %v676, %v1241
  %vm1360 = vcmp.eq.s32.totalorder %v676, %v1242
  %vm1361 = vcmp.eq.s32.totalorder %v677, %v1241
  %vm1362 = vcmp.eq.s32.totalorder %v677, %v1242
  %vm1363 = vcmp.eq.s32.totalorder %v678, %v1241
  %vm1364 = vcmp.eq.s32.totalorder %v678, %v1242
  %vm1365 = vcmp.eq.s32.totalorder %v679, %v1241
  %vm1366 = vcmp.eq.s32.totalorder %v679, %v1242
  %vm1367 = vcmp.eq.s32.totalorder %v680, %v1241
  %vm1368 = vcmp.eq.s32.totalorder %v680, %v1242
  %vm1369 = vcmp.eq.s32.totalorder %v681, %v1241
  %vm1370 = vcmp.eq.s32.totalorder %v681, %v1242
  %v1371 = vsel %vm1243, 1, 0
  %v1372 = vsel %vm1244, 1, 0
  %v1373 = vsel %vm1245, 1, 0
  %v1374 = vsel %vm1246, 1, 0
  %v1375 = vsel %vm1247, 1, 0
  %v1376 = vsel %vm1248, 1, 0
  %v1377 = vsel %vm1249, 1, 0
  %v1378 = vsel %vm1250, 1, 0
  %v1379 = vsel %vm1251, 1, 0
  %v1380 = vsel %vm1252, 1, 0
  %v1381 = vsel %vm1253, 1, 0
  %v1382 = vsel %vm1254, 1, 0
  %v1383 = vsel %vm1255, 1, 0
  %v1384 = vsel %vm1256, 1, 0
  %v1385 = vsel %vm1257, 1, 0
  %v1386 = vsel %vm1258, 1, 0
  %v1387 = vsel %vm1259, 1, 0
  %v1388 = vsel %vm1260, 1, 0
  %v1389 = vsel %vm1261, 1, 0
  %v1390 = vsel %vm1262, 1, 0
  %v1391 = vsel %vm1263, 1, 0
  %v1392 = vsel %vm1264, 1, 0
  %v1393 = vsel %vm1265, 1, 0
  %v1394 = vsel %vm1266, 1, 0
  %v1395 = vsel %vm1267, 1, 0
  %v1396 = vsel %vm1268, 1, 0
  %v1397 = vsel %vm1269, 1, 0
  %v1398 = vsel %vm1270, 1, 0
  %v1399 = vsel %vm1271, 1, 0
  %v1400 = vsel %vm1272, 1, 0
  %v1401 = vsel %vm1273, 1, 0
  %v1402 = vsel %vm1274, 1, 0
  %v1403 = vsel %vm1275, 1, 0
  %v1404 = vsel %vm1276, 1, 0
  %v1405 = vsel %vm1277, 1, 0
  %v1406 = vsel %vm1278, 1, 0
  %v1407 = vsel %vm1279, 1, 0
  %v1408 = vsel %vm1280, 1, 0
  %v1409 = vsel %vm1281, 1, 0
  %v1410 = vsel %vm1282, 1, 0
  %v1411 = vsel %vm1283, 1, 0
  %v1412 = vsel %vm1284, 1, 0
  %v1413 = vsel %vm1285, 1, 0
  %v1414 = vsel %vm1286, 1, 0
  %v1415 = vsel %vm1287, 1, 0
  %v1416 = vsel %vm1288, 1, 0
  %v1417 = vsel %vm1289, 1, 0
  %v1418 = vsel %vm1290, 1, 0
  %v1419 = vsel %vm1291, 1, 0
  %v1420 = vsel %vm1292, 1, 0
  %v1421 = vsel %vm1293, 1, 0
  %v1422 = vsel %vm1294, 1, 0
  %v1423 = vsel %vm1295, 1, 0
  %v1424 = vsel %vm1296, 1, 0
  %v1425 = vsel %vm1297, 1, 0
  %v1426 = vsel %vm1298, 1, 0
  %v1427 = vsel %vm1299, 1, 0
  %v1428 = vsel %vm1300, 1, 0
  %v1429 = vsel %vm1301, 1, 0
  %v1430 = vsel %vm1302, 1, 0
  %v1431 = vsel %vm1303, 1, 0
  %v1432 = vsel %vm1304, 1, 0
  %v1433 = vsel %vm1305, 1, 0
  %v1434 = vsel %vm1306, 1, 0
  %v1435 = vsel %vm1307, 1, 0
  %v1436 = vsel %vm1308, 1, 0
  %v1437 = vsel %vm1309, 1, 0
  %v1438 = vsel %vm1310, 1, 0
  %v1439 = vsel %vm1311, 1, 0
  %v1440 = vsel %vm1312, 1, 0
  %v1441 = vsel %vm1313, 1, 0
  %v1442 = vsel %vm1314, 1, 0
  %v1443 = vsel %vm1315, 1, 0
  %v1444 = vsel %vm1316, 1, 0
  %v1445 = vsel %vm1317, 1, 0
  %v1446 = vsel %vm1318, 1, 0
  %v1447 = vsel %vm1319, 1, 0
  %v1448 = vsel %vm1320, 1, 0
  %v1449 = vsel %vm1321, 1, 0
  %v1450 = vsel %vm1322, 1, 0
  %v1451 = vsel %vm1323, 1, 0
  %v1452 = vsel %vm1324, 1, 0
  %v1453 = vsel %vm1325, 1, 0
  %v1454 = vsel %vm1326, 1, 0
  %v1455 = vsel %vm1327, 1, 0
  %v1456 = vsel %vm1328, 1, 0
  %v1457 = vsel %vm1329, 1, 0
  %v1458 = vsel %vm1330, 1, 0
  %v1459 = vsel %vm1331, 1, 0
  %v1460 = vsel %vm1332, 1, 0
  %v1461 = vsel %vm1333, 1, 0
  %v1462 = vsel %vm1334, 1, 0
  %v1463 = vsel %vm1335, 1, 0
  %v1464 = vsel %vm1336, 1, 0
  %v1465 = vsel %vm1337, 1, 0
  %v1466 = vsel %vm1338, 1, 0
  %v1467 = vsel %vm1339, 1, 0
  %v1468 = vsel %vm1340, 1, 0
  %v1469 = vsel %vm1341, 1, 0
  %v1470 = vsel %vm1342, 1, 0
  %v1471 = vsel %vm1343, 1, 0
  %v1472 = vsel %vm1344, 1, 0
  %v1473 = vsel %vm1345, 1, 0
  %v1474 = vsel %vm1346, 1, 0
  %v1475 = vsel %vm1347, 1, 0
  %v1476 = vsel %vm1348, 1, 0
  %v1477 = vsel %vm1349, 1, 0
  %v1478 = vsel %vm1350, 1, 0
  %v1479 = vsel %vm1351, 1, 0
  %v1480 = vsel %vm1352, 1, 0
  %v1481 = vsel %vm1353, 1, 0
  %v1482 = vsel %vm1354, 1, 0
  %v1483 = vsel %vm1355, 1, 0
  %v1484 = vsel %vm1356, 1, 0
  %v1485 = vsel %vm1357, 1, 0
  %v1486 = vsel %vm1358, 1, 0
  %v1487 = vsel %vm1359, 1, 0
  %v1488 = vsel %vm1360, 1, 0
  %v1489 = vsel %vm1361, 1, 0
  %v1490 = vsel %vm1362, 1, 0
  %v1491 = vsel %vm1363, 1, 0
  %v1492 = vsel %vm1364, 1, 0
  %v1493 = vsel %vm1365, 1, 0
  %v1494 = vsel %vm1366, 1, 0
  %v1495 = vsel %vm1367, 1, 0
  %v1496 = vsel %vm1368, 1, 0
  %v1497 = vsel %vm1369, 1, 0
  %v1498 = vsel %vm1370, 1, 0
  %v1499 = vcvt.s32.f32 %v1371
  %v1500 = vcvt.s32.f32 %v1372
  %v1501 = vcvt.s32.f32 %v1373
  %v1502 = vcvt.s32.f32 %v1374
  %v1503 = vcvt.s32.f32 %v1375
  %v1504 = vcvt.s32.f32 %v1376
  %v1505 = vcvt.s32.f32 %v1377
  %v1506 = vcvt.s32.f32 %v1378
  %v1507 = vcvt.s32.f32 %v1379
  %v1508 = vcvt.s32.f32 %v1380
  %v1509 = vcvt.s32.f32 %v1381
  %v1510 = vcvt.s32.f32 %v1382
  %v1511 = vcvt.s32.f32 %v1383
  %v1512 = vcvt.s32.f32 %v1384
  %v1513 = vcvt.s32.f32 %v1385
  %v1514 = vcvt.s32.f32 %v1386
  %v1515 = vcvt.s32.f32 %v1387
  %v1516 = vcvt.s32.f32 %v1388
  %v1517 = vcvt.s32.f32 %v1389
  %v1518 = vcvt.s32.f32 %v1390
  %v1519 = vcvt.s32.f32 %v1391
  %v1520 = vcvt.s32.f32 %v1392
  %v1521 = vcvt.s32.f32 %v1393
  %v1522 = vcvt.s32.f32 %v1394
  %v1523 = vcvt.s32.f32 %v1395
  %v1524 = vcvt.s32.f32 %v1396
  %v1525 = vcvt.s32.f32 %v1397
  %v1526 = vcvt.s32.f32 %v1398
  %v1527 = vcvt.s32.f32 %v1399
  %v1528 = vcvt.s32.f32 %v1400
  %v1529 = vcvt.s32.f32 %v1401
  %v1530 = vcvt.s32.f32 %v1402
  %v1531 = vcvt.s32.f32 %v1403
  %v1532 = vcvt.s32.f32 %v1404
  %v1533 = vcvt.s32.f32 %v1405
  %v1534 = vcvt.s32.f32 %v1406
  %v1535 = vcvt.s32.f32 %v1407
  %v1536 = vcvt.s32.f32 %v1408
  %v1537 = vcvt.s32.f32 %v1409
  %v1538 = vcvt.s32.f32 %v1410
  %v1539 = vcvt.s32.f32 %v1411
  %v1540 = vcvt.s32.f32 %v1412
  %v1541 = vcvt.s32.f32 %v1413
  %v1542 = vcvt.s32.f32 %v1414
  %v1543 = vcvt.s32.f32 %v1415
  %v1544 = vcvt.s32.f32 %v1416
  %v1545 = vcvt.s32.f32 %v1417
  %v1546 = vcvt.s32.f32 %v1418
  %v1547 = vcvt.s32.f32 %v1419
  %v1548 = vcvt.s32.f32 %v1420
  %v1549 = vcvt.s32.f32 %v1421
  %v1550 = vcvt.s32.f32 %v1422
  %v1551 = vcvt.s32.f32 %v1423
  %v1552 = vcvt.s32.f32 %v1424
  %v1553 = vcvt.s32.f32 %v1425
  %v1554 = vcvt.s32.f32 %v1426
  %v1555 = vcvt.s32.f32 %v1427
  %v1556 = vcvt.s32.f32 %v1428
  %v1557 = vcvt.s32.f32 %v1429
  %v1558 = vcvt.s32.f32 %v1430
  %v1559 = vcvt.s32.f32 %v1431
  %v1560 = vcvt.s32.f32 %v1432
  %v1561 = vcvt.s32.f32 %v1433
  %v1562 = vcvt.s32.f32 %v1434
  %v1563 = vcvt.s32.f32 %v1435
  %v1564 = vcvt.s32.f32 %v1436
  %v1565 = vcvt.s32.f32 %v1437
  %v1566 = vcvt.s32.f32 %v1438
  %v1567 = vcvt.s32.f32 %v1439
  %v1568 = vcvt.s32.f32 %v1440
  %v1569 = vcvt.s32.f32 %v1441
  %v1570 = vcvt.s32.f32 %v1442
  %v1571 = vcvt.s32.f32 %v1443
  %v1572 = vcvt.s32.f32 %v1444
  %v1573 = vcvt.s32.f32 %v1445
  %v1574 = vcvt.s32.f32 %v1446
  %v1575 = vcvt.s32.f32 %v1447
  %v1576 = vcvt.s32.f32 %v1448
  %v1577 = vcvt.s32.f32 %v1449
  %v1578 = vcvt.s32.f32 %v1450
  %v1579 = vcvt.s32.f32 %v1451
  %v1580 = vcvt.s32.f32 %v1452
  %v1581 = vcvt.s32.f32 %v1453
  %v1582 = vcvt.s32.f32 %v1454
  %v1583 = vcvt.s32.f32 %v1455
  %v1584 = vcvt.s32.f32 %v1456
  %v1585 = vcvt.s32.f32 %v1457
  %v1586 = vcvt.s32.f32 %v1458
  %v1587 = vcvt.s32.f32 %v1459
  %v1588 = vcvt.s32.f32 %v1460
  %v1589 = vcvt.s32.f32 %v1461
  %v1590 = vcvt.s32.f32 %v1462
  %v1591 = vcvt.s32.f32 %v1463
  %v1592 = vcvt.s32.f32 %v1464
  %v1593 = vcvt.s32.f32 %v1465
  %v1594 = vcvt.s32.f32 %v1466
  %v1595 = vcvt.s32.f32 %v1467
  %v1596 = vcvt.s32.f32 %v1468
  %v1597 = vcvt.s32.f32 %v1469
  %v1598 = vcvt.s32.f32 %v1470
  %v1599 = vcvt.s32.f32 %v1471
  %v1600 = vcvt.s32.f32 %v1472
  %v1601 = vcvt.s32.f32 %v1473
  %v1602 = vcvt.s32.f32 %v1474
  %v1603 = vcvt.s32.f32 %v1475
  %v1604 = vcvt.s32.f32 %v1476
  %v1605 = vcvt.s32.f32 %v1477
  %v1606 = vcvt.s32.f32 %v1478
  %v1607 = vcvt.s32.f32 %v1479
  %v1608 = vcvt.s32.f32 %v1480
  %v1609 = vcvt.s32.f32 %v1481
  %v1610 = vcvt.s32.f32 %v1482
  %v1611 = vcvt.s32.f32 %v1483
  %v1612 = vcvt.s32.f32 %v1484
  %v1613 = vcvt.s32.f32 %v1485
  %v1614 = vcvt.s32.f32 %v1486
  %v1615 = vcvt.s32.f32 %v1487
  %v1616 = vcvt.s32.f32 %v1488
  %v1617 = vcvt.s32.f32 %v1489
  %v1618 = vcvt.s32.f32 %v1490
  %v1619 = vcvt.s32.f32 %v1491
  %v1620 = vcvt.s32.f32 %v1492
  %v1621 = vcvt.s32.f32 %v1493
  %v1622 = vcvt.s32.f32 %v1494
  %v1623 = vcvt.s32.f32 %v1495
  %v1624 = vcvt.s32.f32 %v1496
  %v1625 = vcvt.s32.f32 %v1497
  %v1626 = vcvt.s32.f32 %v1498
  %v1628 = vsel %vm1074, %v1625, 0
  %v1631 = vsel %vm1074, %v1626, 0
  %1633 = vmatpush.msra.mxu0 %v1529
  %1634 = vmatpush.msra.mxu0 %v1527
  %1635 = vmatpush.msra.mxu0 %v1525
  %1636 = vmatpush.msra.mxu0 %v1523
  %1637 = vmatpush.msra.mxu0 %v1521
  %1638 = vmatpush.msra.mxu0 %v1519
  %1639 = vmatpush.msra.mxu0 %v1517
  %1640 = vmatpush.msra.mxu0 %v1515
  %1641 = vmatpush.msra.mxu0 %v1513
  %1642 = vmatpush.msra.mxu0 %v1511
  %1643 = vmatpush.msra.mxu0 %v1509
  %1644 = vmatpush.msra.mxu0 %v1507
  %1645 = vmatpush.msra.mxu0 %v1505
  %1646 = vmatpush.msra.mxu0 %v1503
  %1647 = vmatpush.msra.mxu0 %v1501
  %1648 = vmatpush.msra.mxu0 %v1499
  %1649 = vmatmul.f32.gmra.mxu0 %v613
  %v1650 = vpop.f32.mrf.mxu0
  %v1651 = vadd.f32 0.0, %v1650
  %1652 = vdwg.mxu0
  %1653 = vmatpush.msra.mxu0 %v1561
  %1654 = vmatpush.msra.mxu0 %v1559
  %1655 = vmatpush.msra.mxu0 %v1557
  %1656 = vmatpush.msra.mxu0 %v1555
  %1657 = vmatpush.msra.mxu0 %v1553
  %1658 = vmatpush.msra.mxu0 %v1551
  %1659 = vmatpush.msra.mxu0 %v1549
  %1660 = vmatpush.msra.mxu0 %v1547
  %1661 = vmatpush.msra.mxu0 %v1545
  %1662 = vmatpush.msra.mxu0 %v1543
  %1663 = vmatpush.msra.mxu0 %v1541
  %1664 = vmatpush.msra.mxu0 %v1539
  %1665 = vmatpush.msra.mxu0 %v1537
  %1666 = vmatpush.msra.mxu0 %v1535
  %1667 = vmatpush.msra.mxu0 %v1533
  %1668 = vmatpush.msra.mxu0 %v1531
  %1669 = vmatmul.f32.gmra.mxu0 %v614
  %v1670 = vpop.f32.mrf.mxu0
  %v1671 = vadd.f32 %v1651, %v1670
  %1672 = vdwg.mxu0
  %1673 = vmatpush.msra.mxu0 %v1593
  %1674 = vmatpush.msra.mxu0 %v1591
  %1675 = vmatpush.msra.mxu0 %v1589
  %1676 = vmatpush.msra.mxu0 %v1587
  %1677 = vmatpush.msra.mxu0 %v1585
  %1678 = vmatpush.msra.mxu0 %v1583
  %1679 = vmatpush.msra.mxu0 %v1581
  %1680 = vmatpush.msra.mxu0 %v1579
  %1681 = vmatpush.msra.mxu0 %v1577
  %1682 = vmatpush.msra.mxu0 %v1575
  %1683 = vmatpush.msra.mxu0 %v1573
  %1684 = vmatpush.msra.mxu0 %v1571
  %1685 = vmatpush.msra.mxu0 %v1569
  %1686 = vmatpush.msra.mxu0 %v1567
  %1687 = vmatpush.msra.mxu0 %v1565
  %1688 = vmatpush.msra.mxu0 %v1563
  %1689 = vmatmul.f32.gmra.mxu0 %v615
  %v1690 = vpop.f32.mrf.mxu0
  %v1691 = vadd.f32 %v1671, %v1690
  %1692 = vdwg.mxu0
  %1693 = vmatpush.msra.mxu0 %v1628
  %1694 = vmatpush.msra.mxu0 %v1623
  %1695 = vmatpush.msra.mxu0 %v1621
  %1696 = vmatpush.msra.mxu0 %v1619
  %1697 = vmatpush.msra.mxu0 %v1617
  %1698 = vmatpush.msra.mxu0 %v1615
  %1699 = vmatpush.msra.mxu0 %v1613
  %1700 = vmatpush.msra.mxu0 %v1611
  %1701 = vmatpush.msra.mxu0 %v1609
  %1702 = vmatpush.msra.mxu0 %v1607
  %1703 = vmatpush.msra.mxu0 %v1605
  %1704 = vmatpush.msra.mxu0 %v1603
  %1705 = vmatpush.msra.mxu0 %v1601
  %1706 = vmatpush.msra.mxu0 %v1599
  %1707 = vmatpush.msra.mxu0 %v1597
  %1708 = vmatpush.msra.mxu0 %v1595
  %1709 = vmatmul.f32.gmra.mxu0 %v1072
  %v1710 = vpop.f32.mrf.mxu0
  %v1711 = vadd.f32 %v1691, %v1710
  %1712 = vdwg.mxu0
  %1713 = vmatpush.msra.mxu0 %v1530
  %1714 = vmatpush.msra.mxu0 %v1528
  %1715 = vmatpush.msra.mxu0 %v1526
  %1716 = vmatpush.msra.mxu0 %v1524
  %1717 = vmatpush.msra.mxu0 %v1522
  %1718 = vmatpush.msra.mxu0 %v1520
  %1719 = vmatpush.msra.mxu0 %v1518
  %1720 = vmatpush.msra.mxu0 %v1516
  %1721 = vmatpush.msra.mxu0 %v1514
  %1722 = vmatpush.msra.mxu0 %v1512
  %1723 = vmatpush.msra.mxu0 %v1510
  %1724 = vmatpush.msra.mxu0 %v1508
  %1725 = vmatpush.msra.mxu0 %v1506
  %1726 = vmatpush.msra.mxu0 %v1504
  %1727 = vmatpush.msra.mxu0 %v1502
  %1728 = vmatpush.msra.mxu0 %v1500
  %1729 = vmatmul.f32.gmra.mxu0 %v613
  %v1730 = vpop.f32.mrf.mxu0
  %v1731 = vadd.f32 0.0, %v1730
  %1732 = vdwg.mxu0
  %1733 = vmatpush.msra.mxu0 %v1562
  %1734 = vmatpush.msra.mxu0 %v1560
  %1735 = vmatpush.msra.mxu0 %v1558
  %1736 = vmatpush.msra.mxu0 %v1556
  %1737 = vmatpush.msra.mxu0 %v1554
  %1738 = vmatpush.msra.mxu0 %v1552
  %1739 = vmatpush.msra.mxu0 %v1550
  %1740 = vmatpush.msra.mxu0 %v1548
  %1741 = vmatpush.msra.mxu0 %v1546
  %1742 = vmatpush.msra.mxu0 %v1544
  %1743 = vmatpush.msra.mxu0 %v1542
  %1744 = vmatpush.msra.mxu0 %v1540
  %1745 = vmatpush.msra.mxu0 %v1538
  %1746 = vmatpush.msra.mxu0 %v1536
  %1747 = vmatpush.msra.mxu0 %v1534
  %1748 = vmatpush.msra.mxu0 %v1532
  %1749 = vmatmul.f32.gmra.mxu0 %v614
  %v1750 = vpop.f32.mrf.mxu0
  %v1751 = vadd.f32 %v1731, %v1750
  %1752 = vdwg.mxu0
  %1753 = vmatpush.msra.mxu0 %v1594
  %1754 = vmatpush.msra.mxu0 %v1592
  %1755 = vmatpush.msra.mxu0 %v1590
  %1756 = vmatpush.msra.mxu0 %v1588
  %1757 = vmatpush.msra.mxu0 %v1586
  %1758 = vmatpush.msra.mxu0 %v1584
  %1759 = vmatpush.msra.mxu0 %v1582
  %1760 = vmatpush.msra.mxu0 %v1580
  %1761 = vmatpush.msra.mxu0 %v1578
  %1762 = vmatpush.msra.mxu0 %v1576
  %1763 = vmatpush.msra.mxu0 %v1574
  %1764 = vmatpush.msra.mxu0 %v1572
  %1765 = vmatpush.msra.mxu0 %v1570
  %1766 = vmatpush.msra.mxu0 %v1568
  %1767 = vmatpush.msra.mxu0 %v1566
  %1768 = vmatpush.msra.mxu0 %v1564
  %1769 = vmatmul.f32.gmra.mxu0 %v615
  %v1770 = vpop.f32.mrf.mxu0
  %v1771 = vadd.f32 %v1751, %v1770
  %1772 = vdwg.mxu0
  %1773 = vmatpush.msra.mxu0 %v1631
  %1774 = vmatpush.msra.mxu0 %v1624
  %1775 = vmatpush.msra.mxu0 %v1622
  %1776 = vmatpush.msra.mxu0 %v1620
  %1777 = vmatpush.msra.mxu0 %v1618
  %1778 = vmatpush.msra.mxu0 %v1616
  %1779 = vmatpush.msra.mxu0 %v1614
  %1780 = vmatpush.msra.mxu0 %v1612
  %1781 = vmatpush.msra.mxu0 %v1610
  %1782 = vmatpush.msra.mxu0 %v1608
  %1783 = vmatpush.msra.mxu0 %v1606
  %1784 = vmatpush.msra.mxu0 %v1604
  %1785 = vmatpush.msra.mxu0 %v1602
  %1786 = vmatpush.msra.mxu0 %v1600
  %1787 = vmatpush.msra.mxu0 %v1598
  %1788 = vmatpush.msra.mxu0 %v1596
  %1789 = vmatmul.f32.gmra.mxu0 %v1072
  %v1790 = vpop.f32.mrf.mxu0
  %v1791 = vadd.f32 %v1771, %v1790
  %1792 = vdwg.mxu0
  %v1793 = vmax.f32 %v1159, %v1711
  %v1794 = vmax.f32 %v1239, %v1791
  %v1795 = vadd.s32 %v685, 2
  %v1796 = vadd.s32 %v686, 2
  %vm1797 = vcmp.eq.s32.totalorder %v618, %v1795
  %vm1798 = vcmp.eq.s32.totalorder %v618, %v1796
  %vm1799 = vcmp.eq.s32.totalorder %v619, %v1795
  %vm1800 = vcmp.eq.s32.totalorder %v619, %v1796
  %vm1801 = vcmp.eq.s32.totalorder %v620, %v1795
  %vm1802 = vcmp.eq.s32.totalorder %v620, %v1796
  %vm1803 = vcmp.eq.s32.totalorder %v621, %v1795
  %vm1804 = vcmp.eq.s32.totalorder %v621, %v1796
  %vm1805 = vcmp.eq.s32.totalorder %v622, %v1795
  %vm1806 = vcmp.eq.s32.totalorder %v622, %v1796
  %vm1807 = vcmp.eq.s32.totalorder %v623, %v1795
  %vm1808 = vcmp.eq.s32.totalorder %v623, %v1796
  %vm1809 = vcmp.eq.s32.totalorder %v624, %v1795
  %vm1810 = vcmp.eq.s32.totalorder %v624, %v1796
  %vm1811 = vcmp.eq.s32.totalorder %v625, %v1795
  %vm1812 = vcmp.eq.s32.totalorder %v625, %v1796
  %vm1813 = vcmp.eq.s32.totalorder %v626, %v1795
  %vm1814 = vcmp.eq.s32.totalorder %v626, %v1796
  %vm1815 = vcmp.eq.s32.totalorder %v627, %v1795
  %vm1816 = vcmp.eq.s32.totalorder %v627, %v1796
  %vm1817 = vcmp.eq.s32.totalorder %v628, %v1795
  %vm1818 = vcmp.eq.s32.totalorder %v628, %v1796
  %vm1819 = vcmp.eq.s32.totalorder %v629, %v1795
  %vm1820 = vcmp.eq.s32.totalorder %v629, %v1796
  %vm1821 = vcmp.eq.s32.totalorder %v630, %v1795
  %vm1822 = vcmp.eq.s32.totalorder %v630, %v1796
  %vm1823 = vcmp.eq.s32.totalorder %v631, %v1795
  %vm1824 = vcmp.eq.s32.totalorder %v631, %v1796
  %vm1825 = vcmp.eq.s32.totalorder %v632, %v1795
  %vm1826 = vcmp.eq.s32.totalorder %v632, %v1796
  %vm1827 = vcmp.eq.s32.totalorder %v633, %v1795
  %vm1828 = vcmp.eq.s32.totalorder %v633, %v1796
  %vm1829 = vcmp.eq.s32.totalorder %v634, %v1795
  %vm1830 = vcmp.eq.s32.totalorder %v634, %v1796
  %vm1831 = vcmp.eq.s32.totalorder %v635, %v1795
  %vm1832 = vcmp.eq.s32.totalorder %v635, %v1796
  %vm1833 = vcmp.eq.s32.totalorder %v636, %v1795
  %vm1834 = vcmp.eq.s32.totalorder %v636, %v1796
  %vm1835 = vcmp.eq.s32.totalorder %v637, %v1795
  %vm1836 = vcmp.eq.s32.totalorder %v637, %v1796
  %vm1837 = vcmp.eq.s32.totalorder %v638, %v1795
  %vm1838 = vcmp.eq.s32.totalorder %v638, %v1796
  %vm1839 = vcmp.eq.s32.totalorder %v639, %v1795
  %vm1840 = vcmp.eq.s32.totalorder %v639, %v1796
  %vm1841 = vcmp.eq.s32.totalorder %v640, %v1795
  %vm1842 = vcmp.eq.s32.totalorder %v640, %v1796
  %vm1843 = vcmp.eq.s32.totalorder %v641, %v1795
  %vm1844 = vcmp.eq.s32.totalorder %v641, %v1796
  %vm1845 = vcmp.eq.s32.totalorder %v642, %v1795
  %vm1846 = vcmp.eq.s32.totalorder %v642, %v1796
  %vm1847 = vcmp.eq.s32.totalorder %v643, %v1795
  %vm1848 = vcmp.eq.s32.totalorder %v643, %v1796
  %vm1849 = vcmp.eq.s32.totalorder %v644, %v1795
  %vm1850 = vcmp.eq.s32.totalorder %v644, %v1796
  %vm1851 = vcmp.eq.s32.totalorder %v645, %v1795
  %vm1852 = vcmp.eq.s32.totalorder %v645, %v1796
  %vm1853 = vcmp.eq.s32.totalorder %v646, %v1795
  %vm1854 = vcmp.eq.s32.totalorder %v646, %v1796
  %vm1855 = vcmp.eq.s32.totalorder %v647, %v1795
  %vm1856 = vcmp.eq.s32.totalorder %v647, %v1796
  %vm1857 = vcmp.eq.s32.totalorder %v648, %v1795
  %vm1858 = vcmp.eq.s32.totalorder %v648, %v1796
  %vm1859 = vcmp.eq.s32.totalorder %v649, %v1795
  %vm1860 = vcmp.eq.s32.totalorder %v649, %v1796
  %vm1861 = vcmp.eq.s32.totalorder %v650, %v1795
  %vm1862 = vcmp.eq.s32.totalorder %v650, %v1796
  %vm1863 = vcmp.eq.s32.totalorder %v651, %v1795
  %vm1864 = vcmp.eq.s32.totalorder %v651, %v1796
  %vm1865 = vcmp.eq.s32.totalorder %v652, %v1795
  %vm1866 = vcmp.eq.s32.totalorder %v652, %v1796
  %vm1867 = vcmp.eq.s32.totalorder %v653, %v1795
  %vm1868 = vcmp.eq.s32.totalorder %v653, %v1796
  %vm1869 = vcmp.eq.s32.totalorder %v654, %v1795
  %vm1870 = vcmp.eq.s32.totalorder %v654, %v1796
  %vm1871 = vcmp.eq.s32.totalorder %v655, %v1795
  %vm1872 = vcmp.eq.s32.totalorder %v655, %v1796
  %vm1873 = vcmp.eq.s32.totalorder %v656, %v1795
  %vm1874 = vcmp.eq.s32.totalorder %v656, %v1796
  %vm1875 = vcmp.eq.s32.totalorder %v657, %v1795
  %vm1876 = vcmp.eq.s32.totalorder %v657, %v1796
  %vm1877 = vcmp.eq.s32.totalorder %v658, %v1795
  %vm1878 = vcmp.eq.s32.totalorder %v658, %v1796
  %vm1879 = vcmp.eq.s32.totalorder %v659, %v1795
  %vm1880 = vcmp.eq.s32.totalorder %v659, %v1796
  %vm1881 = vcmp.eq.s32.totalorder %v660, %v1795
  %vm1882 = vcmp.eq.s32.totalorder %v660, %v1796
  %vm1883 = vcmp.eq.s32.totalorder %v661, %v1795
  %vm1884 = vcmp.eq.s32.totalorder %v661, %v1796
  %vm1885 = vcmp.eq.s32.totalorder %v662, %v1795
  %vm1886 = vcmp.eq.s32.totalorder %v662, %v1796
  %vm1887 = vcmp.eq.s32.totalorder %v663, %v1795
  %vm1888 = vcmp.eq.s32.totalorder %v663, %v1796
  %vm1889 = vcmp.eq.s32.totalorder %v664, %v1795
  %vm1890 = vcmp.eq.s32.totalorder %v664, %v1796
  %vm1891 = vcmp.eq.s32.totalorder %v665, %v1795
  %vm1892 = vcmp.eq.s32.totalorder %v665, %v1796
  %vm1893 = vcmp.eq.s32.totalorder %v666, %v1795
  %vm1894 = vcmp.eq.s32.totalorder %v666, %v1796
  %vm1895 = vcmp.eq.s32.totalorder %v667, %v1795
  %vm1896 = vcmp.eq.s32.totalorder %v667, %v1796
  %vm1897 = vcmp.eq.s32.totalorder %v668, %v1795
  %vm1898 = vcmp.eq.s32.totalorder %v668, %v1796
  %vm1899 = vcmp.eq.s32.totalorder %v669, %v1795
  %vm1900 = vcmp.eq.s32.totalorder %v669, %v1796
  %vm1901 = vcmp.eq.s32.totalorder %v670, %v1795
  %vm1902 = vcmp.eq.s32.totalorder %v670, %v1796
  %vm1903 = vcmp.eq.s32.totalorder %v671, %v1795
  %vm1904 = vcmp.eq.s32.totalorder %v671, %v1796
  %vm1905 = vcmp.eq.s32.totalorder %v672, %v1795
  %vm1906 = vcmp.eq.s32.totalorder %v672, %v1796
  %vm1907 = vcmp.eq.s32.totalorder %v673, %v1795
  %vm1908 = vcmp.eq.s32.totalorder %v673, %v1796
  %vm1909 = vcmp.eq.s32.totalorder %v674, %v1795
  %vm1910 = vcmp.eq.s32.totalorder %v674, %v1796
  %vm1911 = vcmp.eq.s32.totalorder %v675, %v1795
  %vm1912 = vcmp.eq.s32.totalorder %v675, %v1796
  %vm1913 = vcmp.eq.s32.totalorder %v676, %v1795
  %vm1914 = vcmp.eq.s32.totalorder %v676, %v1796
  %vm1915 = vcmp.eq.s32.totalorder %v677, %v1795
  %vm1916 = vcmp.eq.s32.totalorder %v677, %v1796
  %vm1917 = vcmp.eq.s32.totalorder %v678, %v1795
  %vm1918 = vcmp.eq.s32.totalorder %v678, %v1796
  %vm1919 = vcmp.eq.s32.totalorder %v679, %v1795
  %vm1920 = vcmp.eq.s32.totalorder %v679, %v1796
  %vm1921 = vcmp.eq.s32.totalorder %v680, %v1795
  %vm1922 = vcmp.eq.s32.totalorder %v680, %v1796
  %vm1923 = vcmp.eq.s32.totalorder %v681, %v1795
  %vm1924 = vcmp.eq.s32.totalorder %v681, %v1796
  %v1925 = vsel %vm1797, 1, 0
  %v1926 = vsel %vm1798, 1, 0
  %v1927 = vsel %vm1799, 1, 0
  %v1928 = vsel %vm1800, 1, 0
  %v1929 = vsel %vm1801, 1, 0
  %v1930 = vsel %vm1802, 1, 0
  %v1931 = vsel %vm1803, 1, 0
  %v1932 = vsel %vm1804, 1, 0
  %v1933 = vsel %vm1805, 1, 0
  %v1934 = vsel %vm1806, 1, 0
  %v1935 = vsel %vm1807, 1, 0
  %v1936 = vsel %vm1808, 1, 0
  %v1937 = vsel %vm1809, 1, 0
  %v1938 = vsel %vm1810, 1, 0
  %v1939 = vsel %vm1811, 1, 0
  %v1940 = vsel %vm1812, 1, 0
  %v1941 = vsel %vm1813, 1, 0
  %v1942 = vsel %vm1814, 1, 0
  %v1943 = vsel %vm1815, 1, 0
  %v1944 = vsel %vm1816, 1, 0
  %v1945 = vsel %vm1817, 1, 0
  %v1946 = vsel %vm1818, 1, 0
  %v1947 = vsel %vm1819, 1, 0
  %v1948 = vsel %vm1820, 1, 0
  %v1949 = vsel %vm1821, 1, 0
  %v1950 = vsel %vm1822, 1, 0
  %v1951 = vsel %vm1823, 1, 0
  %v1952 = vsel %vm1824, 1, 0
  %v1953 = vsel %vm1825, 1, 0
  %v1954 = vsel %vm1826, 1, 0
  %v1955 = vsel %vm1827, 1, 0
  %v1956 = vsel %vm1828, 1, 0
  %v1957 = vsel %vm1829, 1, 0
  %v1958 = vsel %vm1830, 1, 0
  %v1959 = vsel %vm1831, 1, 0
  %v1960 = vsel %vm1832, 1, 0
  %v1961 = vsel %vm1833, 1, 0
  %v1962 = vsel %vm1834, 1, 0
  %v1963 = vsel %vm1835, 1, 0
  %v1964 = vsel %vm1836, 1, 0
  %v1965 = vsel %vm1837, 1, 0
  %v1966 = vsel %vm1838, 1, 0
  %v1967 = vsel %vm1839, 1, 0
  %v1968 = vsel %vm1840, 1, 0
  %v1969 = vsel %vm1841, 1, 0
  %v1970 = vsel %vm1842, 1, 0
  %v1971 = vsel %vm1843, 1, 0
  %v1972 = vsel %vm1844, 1, 0
  %v1973 = vsel %vm1845, 1, 0
  %v1974 = vsel %vm1846, 1, 0
  %v1975 = vsel %vm1847, 1, 0
  %v1976 = vsel %vm1848, 1, 0
  %v1977 = vsel %vm1849, 1, 0
  %v1978 = vsel %vm1850, 1, 0
  %v1979 = vsel %vm1851, 1, 0
  %v1980 = vsel %vm1852, 1, 0
  %v1981 = vsel %vm1853, 1, 0
  %v1982 = vsel %vm1854, 1, 0
  %v1983 = vsel %vm1855, 1, 0
  %v1984 = vsel %vm1856, 1, 0
  %v1985 = vsel %vm1857, 1, 0
  %v1986 = vsel %vm1858, 1, 0
  %v1987 = vsel %vm1859, 1, 0
  %v1988 = vsel %vm1860, 1, 0
  %v1989 = vsel %vm1861, 1, 0
  %v1990 = vsel %vm1862, 1, 0
  %v1991 = vsel %vm1863, 1, 0
  %v1992 = vsel %vm1864, 1, 0
  %v1993 = vsel %vm1865, 1, 0
  %v1994 = vsel %vm1866, 1, 0
  %v1995 = vsel %vm1867, 1, 0
  %v1996 = vsel %vm1868, 1, 0
  %v1997 = vsel %vm1869, 1, 0
  %v1998 = vsel %vm1870, 1, 0
  %v1999 = vsel %vm1871, 1, 0
  %v2000 = vsel %vm1872, 1, 0
  %v2001 = vsel %vm1873, 1, 0
  %v2002 = vsel %vm1874, 1, 0
  %v2003 = vsel %vm1875, 1, 0
  %v2004 = vsel %vm1876, 1, 0
  %v2005 = vsel %vm1877, 1, 0
  %v2006 = vsel %vm1878, 1, 0
  %v2007 = vsel %vm1879, 1, 0
  %v2008 = vsel %vm1880, 1, 0
  %v2009 = vsel %vm1881, 1, 0
  %v2010 = vsel %vm1882, 1, 0
  %v2011 = vsel %vm1883, 1, 0
  %v2012 = vsel %vm1884, 1, 0
  %v2013 = vsel %vm1885, 1, 0
  %v2014 = vsel %vm1886, 1, 0
  %v2015 = vsel %vm1887, 1, 0
  %v2016 = vsel %vm1888, 1, 0
  %v2017 = vsel %vm1889, 1, 0
  %v2018 = vsel %vm1890, 1, 0
  %v2019 = vsel %vm1891, 1, 0
  %v2020 = vsel %vm1892, 1, 0
  %v2021 = vsel %vm1893, 1, 0
  %v2022 = vsel %vm1894, 1, 0
  %v2023 = vsel %vm1895, 1, 0
  %v2024 = vsel %vm1896, 1, 0
  %v2025 = vsel %vm1897, 1, 0
  %v2026 = vsel %vm1898, 1, 0
  %v2027 = vsel %vm1899, 1, 0
  %v2028 = vsel %vm1900, 1, 0
  %v2029 = vsel %vm1901, 1, 0
  %v2030 = vsel %vm1902, 1, 0
  %v2031 = vsel %vm1903, 1, 0
  %v2032 = vsel %vm1904, 1, 0
  %v2033 = vsel %vm1905, 1, 0
  %v2034 = vsel %vm1906, 1, 0
  %v2035 = vsel %vm1907, 1, 0
  %v2036 = vsel %vm1908, 1, 0
  %v2037 = vsel %vm1909, 1, 0
  %v2038 = vsel %vm1910, 1, 0
  %v2039 = vsel %vm1911, 1, 0
  %v2040 = vsel %vm1912, 1, 0
  %v2041 = vsel %vm1913, 1, 0
  %v2042 = vsel %vm1914, 1, 0
  %v2043 = vsel %vm1915, 1, 0
  %v2044 = vsel %vm1916, 1, 0
  %v2045 = vsel %vm1917, 1, 0
  %v2046 = vsel %vm1918, 1, 0
  %v2047 = vsel %vm1919, 1, 0
  %v2048 = vsel %vm1920, 1, 0
  %v2049 = vsel %vm1921, 1, 0
  %v2050 = vsel %vm1922, 1, 0
  %v2051 = vsel %vm1923, 1, 0
  %v2052 = vsel %vm1924, 1, 0
  %v2053 = vcvt.s32.f32 %v1925
  %v2054 = vcvt.s32.f32 %v1926
  %v2055 = vcvt.s32.f32 %v1927
  %v2056 = vcvt.s32.f32 %v1928
  %v2057 = vcvt.s32.f32 %v1929
  %v2058 = vcvt.s32.f32 %v1930
  %v2059 = vcvt.s32.f32 %v1931
  %v2060 = vcvt.s32.f32 %v1932
  %v2061 = vcvt.s32.f32 %v1933
  %v2062 = vcvt.s32.f32 %v1934
  %v2063 = vcvt.s32.f32 %v1935
  %v2064 = vcvt.s32.f32 %v1936
  %v2065 = vcvt.s32.f32 %v1937
  %v2066 = vcvt.s32.f32 %v1938
  %v2067 = vcvt.s32.f32 %v1939
  %v2068 = vcvt.s32.f32 %v1940
  %v2069 = vcvt.s32.f32 %v1941
  %v2070 = vcvt.s32.f32 %v1942
  %v2071 = vcvt.s32.f32 %v1943
  %v2072 = vcvt.s32.f32 %v1944
  %v2073 = vcvt.s32.f32 %v1945
  %v2074 = vcvt.s32.f32 %v1946
  %v2075 = vcvt.s32.f32 %v1947
  %v2076 = vcvt.s32.f32 %v1948
  %v2077 = vcvt.s32.f32 %v1949
  %v2078 = vcvt.s32.f32 %v1950
  %v2079 = vcvt.s32.f32 %v1951
  %v2080 = vcvt.s32.f32 %v1952
  %v2081 = vcvt.s32.f32 %v1953
  %v2082 = vcvt.s32.f32 %v1954
  %v2083 = vcvt.s32.f32 %v1955
  %v2084 = vcvt.s32.f32 %v1956
  %v2085 = vcvt.s32.f32 %v1957
  %v2086 = vcvt.s32.f32 %v1958
  %v2087 = vcvt.s32.f32 %v1959
  %v2088 = vcvt.s32.f32 %v1960
  %v2089 = vcvt.s32.f32 %v1961
  %v2090 = vcvt.s32.f32 %v1962
  %v2091 = vcvt.s32.f32 %v1963
  %v2092 = vcvt.s32.f32 %v1964
  %v2093 = vcvt.s32.f32 %v1965
  %v2094 = vcvt.s32.f32 %v1966
  %v2095 = vcvt.s32.f32 %v1967
  %v2096 = vcvt.s32.f32 %v1968
  %v2097 = vcvt.s32.f32 %v1969
  %v2098 = vcvt.s32.f32 %v1970
  %v2099 = vcvt.s32.f32 %v1971
  %v2100 = vcvt.s32.f32 %v1972
  %v2101 = vcvt.s32.f32 %v1973
  %v2102 = vcvt.s32.f32 %v1974
  %v2103 = vcvt.s32.f32 %v1975
  %v2104 = vcvt.s32.f32 %v1976
  %v2105 = vcvt.s32.f32 %v1977
  %v2106 = vcvt.s32.f32 %v1978
  %v2107 = vcvt.s32.f32 %v1979
  %v2108 = vcvt.s32.f32 %v1980
  %v2109 = vcvt.s32.f32 %v1981
  %v2110 = vcvt.s32.f32 %v1982
  %v2111 = vcvt.s32.f32 %v1983
  %v2112 = vcvt.s32.f32 %v1984
  %v2113 = vcvt.s32.f32 %v1985
  %v2114 = vcvt.s32.f32 %v1986
  %v2115 = vcvt.s32.f32 %v1987
  %v2116 = vcvt.s32.f32 %v1988
  %v2117 = vcvt.s32.f32 %v1989
  %v2118 = vcvt.s32.f32 %v1990
  %v2119 = vcvt.s32.f32 %v1991
  %v2120 = vcvt.s32.f32 %v1992
  %v2121 = vcvt.s32.f32 %v1993
  %v2122 = vcvt.s32.f32 %v1994
  %v2123 = vcvt.s32.f32 %v1995
  %v2124 = vcvt.s32.f32 %v1996
  %v2125 = vcvt.s32.f32 %v1997
  %v2126 = vcvt.s32.f32 %v1998
  %v2127 = vcvt.s32.f32 %v1999
  %v2128 = vcvt.s32.f32 %v2000
  %v2129 = vcvt.s32.f32 %v2001
  %v2130 = vcvt.s32.f32 %v2002
  %v2131 = vcvt.s32.f32 %v2003
  %v2132 = vcvt.s32.f32 %v2004
  %v2133 = vcvt.s32.f32 %v2005
  %v2134 = vcvt.s32.f32 %v2006
  %v2135 = vcvt.s32.f32 %v2007
  %v2136 = vcvt.s32.f32 %v2008
  %v2137 = vcvt.s32.f32 %v2009
  %v2138 = vcvt.s32.f32 %v2010
  %v2139 = vcvt.s32.f32 %v2011
  %v2140 = vcvt.s32.f32 %v2012
  %v2141 = vcvt.s32.f32 %v2013
  %v2142 = vcvt.s32.f32 %v2014
  %v2143 = vcvt.s32.f32 %v2015
  %v2144 = vcvt.s32.f32 %v2016
  %v2145 = vcvt.s32.f32 %v2017
  %v2146 = vcvt.s32.f32 %v2018
  %v2147 = vcvt.s32.f32 %v2019
  %v2148 = vcvt.s32.f32 %v2020
  %v2149 = vcvt.s32.f32 %v2021
  %v2150 = vcvt.s32.f32 %v2022
  %v2151 = vcvt.s32.f32 %v2023
  %v2152 = vcvt.s32.f32 %v2024
  %v2153 = vcvt.s32.f32 %v2025
  %v2154 = vcvt.s32.f32 %v2026
  %v2155 = vcvt.s32.f32 %v2027
  %v2156 = vcvt.s32.f32 %v2028
  %v2157 = vcvt.s32.f32 %v2029
  %v2158 = vcvt.s32.f32 %v2030
  %v2159 = vcvt.s32.f32 %v2031
  %v2160 = vcvt.s32.f32 %v2032
  %v2161 = vcvt.s32.f32 %v2033
  %v2162 = vcvt.s32.f32 %v2034
  %v2163 = vcvt.s32.f32 %v2035
  %v2164 = vcvt.s32.f32 %v2036
  %v2165 = vcvt.s32.f32 %v2037
  %v2166 = vcvt.s32.f32 %v2038
  %v2167 = vcvt.s32.f32 %v2039
  %v2168 = vcvt.s32.f32 %v2040
  %v2169 = vcvt.s32.f32 %v2041
  %v2170 = vcvt.s32.f32 %v2042
  %v2171 = vcvt.s32.f32 %v2043
  %v2172 = vcvt.s32.f32 %v2044
  %v2173 = vcvt.s32.f32 %v2045
  %v2174 = vcvt.s32.f32 %v2046
  %v2175 = vcvt.s32.f32 %v2047
  %v2176 = vcvt.s32.f32 %v2048
  %v2177 = vcvt.s32.f32 %v2049
  %v2178 = vcvt.s32.f32 %v2050
  %v2179 = vcvt.s32.f32 %v2051
  %v2180 = vcvt.s32.f32 %v2052
  %v2182 = vsel %vm1074, %v2179, 0
  %v2185 = vsel %vm1074, %v2180, 0
  %2187 = vmatpush.msra.mxu0 %v2083
  %2188 = vmatpush.msra.mxu0 %v2081
  %2189 = vmatpush.msra.mxu0 %v2079
  %2190 = vmatpush.msra.mxu0 %v2077
  %2191 = vmatpush.msra.mxu0 %v2075
  %2192 = vmatpush.msra.mxu0 %v2073
  %2193 = vmatpush.msra.mxu0 %v2071
  %2194 = vmatpush.msra.mxu0 %v2069
  %2195 = vmatpush.msra.mxu0 %v2067
  %2196 = vmatpush.msra.mxu0 %v2065
  %2197 = vmatpush.msra.mxu0 %v2063
  %2198 = vmatpush.msra.mxu0 %v2061
  %2199 = vmatpush.msra.mxu0 %v2059
  %2200 = vmatpush.msra.mxu0 %v2057
  %2201 = vmatpush.msra.mxu0 %v2055
  %2202 = vmatpush.msra.mxu0 %v2053
  %2203 = vmatmul.f32.gmra.mxu0 %v613
  %v2204 = vpop.f32.mrf.mxu0
  %v2205 = vadd.f32 0.0, %v2204
  %2206 = vdwg.mxu0
  %2207 = vmatpush.msra.mxu0 %v2115
  %2208 = vmatpush.msra.mxu0 %v2113
  %2209 = vmatpush.msra.mxu0 %v2111
  %2210 = vmatpush.msra.mxu0 %v2109
  %2211 = vmatpush.msra.mxu0 %v2107
  %2212 = vmatpush.msra.mxu0 %v2105
  %2213 = vmatpush.msra.mxu0 %v2103
  %2214 = vmatpush.msra.mxu0 %v2101
  %2215 = vmatpush.msra.mxu0 %v2099
  %2216 = vmatpush.msra.mxu0 %v2097
  %2217 = vmatpush.msra.mxu0 %v2095
  %2218 = vmatpush.msra.mxu0 %v2093
  %2219 = vmatpush.msra.mxu0 %v2091
  %2220 = vmatpush.msra.mxu0 %v2089
  %2221 = vmatpush.msra.mxu0 %v2087
  %2222 = vmatpush.msra.mxu0 %v2085
  %2223 = vmatmul.f32.gmra.mxu0 %v614
  %v2224 = vpop.f32.mrf.mxu0
  %v2225 = vadd.f32 %v2205, %v2224
  %2226 = vdwg.mxu0
  %2227 = vmatpush.msra.mxu0 %v2147
  %2228 = vmatpush.msra.mxu0 %v2145
  %2229 = vmatpush.msra.mxu0 %v2143
  %2230 = vmatpush.msra.mxu0 %v2141
  %2231 = vmatpush.msra.mxu0 %v2139
  %2232 = vmatpush.msra.mxu0 %v2137
  %2233 = vmatpush.msra.mxu0 %v2135
  %2234 = vmatpush.msra.mxu0 %v2133
  %2235 = vmatpush.msra.mxu0 %v2131
  %2236 = vmatpush.msra.mxu0 %v2129
  %2237 = vmatpush.msra.mxu0 %v2127
  %2238 = vmatpush.msra.mxu0 %v2125
  %2239 = vmatpush.msra.mxu0 %v2123
  %2240 = vmatpush.msra.mxu0 %v2121
  %2241 = vmatpush.msra.mxu0 %v2119
  %2242 = vmatpush.msra.mxu0 %v2117
  %2243 = vmatmul.f32.gmra.mxu0 %v615
  %v2244 = vpop.f32.mrf.mxu0
  %v2245 = vadd.f32 %v2225, %v2244
  %2246 = vdwg.mxu0
  %2247 = vmatpush.msra.mxu0 %v2182
  %2248 = vmatpush.msra.mxu0 %v2177
  %2249 = vmatpush.msra.mxu0 %v2175
  %2250 = vmatpush.msra.mxu0 %v2173
  %2251 = vmatpush.msra.mxu0 %v2171
  %2252 = vmatpush.msra.mxu0 %v2169
  %2253 = vmatpush.msra.mxu0 %v2167
  %2254 = vmatpush.msra.mxu0 %v2165
  %2255 = vmatpush.msra.mxu0 %v2163
  %2256 = vmatpush.msra.mxu0 %v2161
  %2257 = vmatpush.msra.mxu0 %v2159
  %2258 = vmatpush.msra.mxu0 %v2157
  %2259 = vmatpush.msra.mxu0 %v2155
  %2260 = vmatpush.msra.mxu0 %v2153
  %2261 = vmatpush.msra.mxu0 %v2151
  %2262 = vmatpush.msra.mxu0 %v2149
  %2263 = vmatmul.f32.gmra.mxu0 %v1072
  %v2264 = vpop.f32.mrf.mxu0
  %v2265 = vadd.f32 %v2245, %v2264
  %2266 = vdwg.mxu0
  %2267 = vmatpush.msra.mxu0 %v2084
  %2268 = vmatpush.msra.mxu0 %v2082
  %2269 = vmatpush.msra.mxu0 %v2080
  %2270 = vmatpush.msra.mxu0 %v2078
  %2271 = vmatpush.msra.mxu0 %v2076
  %2272 = vmatpush.msra.mxu0 %v2074
  %2273 = vmatpush.msra.mxu0 %v2072
  %2274 = vmatpush.msra.mxu0 %v2070
  %2275 = vmatpush.msra.mxu0 %v2068
  %2276 = vmatpush.msra.mxu0 %v2066
  %2277 = vmatpush.msra.mxu0 %v2064
  %2278 = vmatpush.msra.mxu0 %v2062
  %2279 = vmatpush.msra.mxu0 %v2060
  %2280 = vmatpush.msra.mxu0 %v2058
  %2281 = vmatpush.msra.mxu0 %v2056
  %2282 = vmatpush.msra.mxu0 %v2054
  %2283 = vmatmul.f32.gmra.mxu0 %v613
  %v2284 = vpop.f32.mrf.mxu0
  %v2285 = vadd.f32 0.0, %v2284
  %2286 = vdwg.mxu0
  %2287 = vmatpush.msra.mxu0 %v2116
  %2288 = vmatpush.msra.mxu0 %v2114
  %2289 = vmatpush.msra.mxu0 %v2112
  %2290 = vmatpush.msra.mxu0 %v2110
  %2291 = vmatpush.msra.mxu0 %v2108
  %2292 = vmatpush.msra.mxu0 %v2106
  %2293 = vmatpush.msra.mxu0 %v2104
  %2294 = vmatpush.msra.mxu0 %v2102
  %2295 = vmatpush.msra.mxu0 %v2100
  %2296 = vmatpush.msra.mxu0 %v2098
  %2297 = vmatpush.msra.mxu0 %v2096
  %2298 = vmatpush.msra.mxu0 %v2094
  %2299 = vmatpush.msra.mxu0 %v2092
  %2300 = vmatpush.msra.mxu0 %v2090
  %2301 = vmatpush.msra.mxu0 %v2088
  %2302 = vmatpush.msra.mxu0 %v2086
  %2303 = vmatmul.f32.gmra.mxu0 %v614
  %v2304 = vpop.f32.mrf.mxu0
  %v2305 = vadd.f32 %v2285, %v2304
  %2306 = vdwg.mxu0
  %2307 = vmatpush.msra.mxu0 %v2148
  %2308 = vmatpush.msra.mxu0 %v2146
  %2309 = vmatpush.msra.mxu0 %v2144
  %2310 = vmatpush.msra.mxu0 %v2142
  %2311 = vmatpush.msra.mxu0 %v2140
  %2312 = vmatpush.msra.mxu0 %v2138
  %2313 = vmatpush.msra.mxu0 %v2136
  %2314 = vmatpush.msra.mxu0 %v2134
  %2315 = vmatpush.msra.mxu0 %v2132
  %2316 = vmatpush.msra.mxu0 %v2130
  %2317 = vmatpush.msra.mxu0 %v2128
  %2318 = vmatpush.msra.mxu0 %v2126
  %2319 = vmatpush.msra.mxu0 %v2124
  %2320 = vmatpush.msra.mxu0 %v2122
  %2321 = vmatpush.msra.mxu0 %v2120
  %2322 = vmatpush.msra.mxu0 %v2118
  %2323 = vmatmul.f32.gmra.mxu0 %v615
  %v2324 = vpop.f32.mrf.mxu0
  %v2325 = vadd.f32 %v2305, %v2324
  %2326 = vdwg.mxu0
  %2327 = vmatpush.msra.mxu0 %v2185
  %2328 = vmatpush.msra.mxu0 %v2178
  %2329 = vmatpush.msra.mxu0 %v2176
  %2330 = vmatpush.msra.mxu0 %v2174
  %2331 = vmatpush.msra.mxu0 %v2172
  %2332 = vmatpush.msra.mxu0 %v2170
  %2333 = vmatpush.msra.mxu0 %v2168
  %2334 = vmatpush.msra.mxu0 %v2166
  %2335 = vmatpush.msra.mxu0 %v2164
  %2336 = vmatpush.msra.mxu0 %v2162
  %2337 = vmatpush.msra.mxu0 %v2160
  %2338 = vmatpush.msra.mxu0 %v2158
  %2339 = vmatpush.msra.mxu0 %v2156
  %2340 = vmatpush.msra.mxu0 %v2154
  %2341 = vmatpush.msra.mxu0 %v2152
  %2342 = vmatpush.msra.mxu0 %v2150
  %2343 = vmatmul.f32.gmra.mxu0 %v1072
  %v2344 = vpop.f32.mrf.mxu0
  %v2345 = vadd.f32 %v2325, %v2344
  %2346 = vdwg.mxu0
  %v2347 = vmax.f32 %v1793, %v2265
  %v2348 = vmax.f32 %v1794, %v2345
  %2350 = vst [vmem:[#allocation1] ss:$4 sm:$0xff] %v46
  %v2351 = vld.sshfl [vmem:[#allocation1] sm:$0xff pattern:$0x73625140]
  %v2352 = vld.sshfl [vmem:[#allocation1 + $0x8] sm:$0xff pattern:$0x73625140]
  %v2353 = vld.sshfl [vmem:[#allocation1 + $0x10] sm:$0xff pattern:$0x73625140]
  %v2354 = vld.sshfl [vmem:[#allocation1 + $0x18] sm:$0xff pattern:$0x73625140]
  %2355 = vrot.lane.b32.xlu0 %v2351, 127
  %v2356 = vpop.permute.xlu0 %2355
  %2357 = vrot.lane.b32.xlu0 %v2352, 127
  %v2358 = vpop.permute.xlu0 %2357
  %2359 = vrot.lane.b32.xlu0 %v2353, 127
  %v2360 = vpop.permute.xlu0 %2359
  %2361 = vrot.lane.b32.xlu0 %v2354, 127
  %v2362 = vpop.permute.xlu0 %2361
  %v2363 = vsel %vm67, %v2356, %v2358
  %v2364 = vsel %vm67, %v2358, %v2360
  %v2365 = vsel %vm67, %v2360, %v2362
  %v2366 = vsel %vm75, %v2363, 0
  %v2368 = vsel %vm75, %v2364, 0
  %v2370 = vsel %vm75, %v2365, 0
  %v2372 = vsel %vm75, %v2362, 0
  %2374 = vmatpush.msra.mxu0 0.0
  %2375 = vmatpush.msra.mxu0 0.0
  %2376 = vmatpush.msra.mxu0 0.0
  %2377 = vmatpush.msra.mxu0 0.0
  %2378 = vmatpush.msra.mxu0 0.0
  %2379 = vmatpush.msra.mxu0 0.0
  %2380 = vmatpush.msra.mxu0 0.0
  %2381 = vmatpush.msra.mxu0 0.0
  %2382 = vmatpush.msra.mxu0 0.0
  %2383 = vmatpush.msra.mxu0 0.0
  %2384 = vmatpush.msra.mxu0 0.0
  %2385 = vmatpush.msra.mxu0 0.0
  %2386 = vmatpush.msra.mxu0 0.0
  %2387 = vmatpush.msra.mxu0 0.0
  %2388 = vmatpush.msra.mxu0 0.0
  %2389 = vmatpush.msra.mxu0 %v2366
  %2390 = vmatmul.f32.gmra.mxu0 %v73
  %v2391 = vpop.f32.mrf.mxu0
  %v2392 = vadd.f32 0.0, %v2391
  %2393 = vdwg.mxu0
  %2394 = vmatpush.msra.mxu0 0.0
  %2395 = vmatpush.msra.mxu0 0.0
  %2396 = vmatpush.msra.mxu0 0.0
  %2397 = vmatpush.msra.mxu0 0.0
  %2398 = vmatpush.msra.mxu0 0.0
  %2399 = vmatpush.msra.mxu0 0.0
  %2400 = vmatpush.msra.mxu0 0.0
  %2401 = vmatpush.msra.mxu0 0.0
  %2402 = vmatpush.msra.mxu0 0.0
  %2403 = vmatpush.msra.mxu0 0.0
  %2404 = vmatpush.msra.mxu0 0.0
  %2405 = vmatpush.msra.mxu0 0.0
  %2406 = vmatpush.msra.mxu0 0.0
  %2407 = vmatpush.msra.mxu0 0.0
  %2408 = vmatpush.msra.mxu0 0.0
  %2409 = vmatpush.msra.mxu0 %v2368
  %2410 = vmatmul.f32.gmra.mxu0 %v73
  %v2411 = vpop.f32.mrf.mxu0
  %v2412 = vadd.f32 0.0, %v2411
  %2413 = vdwg.mxu0
  %2414 = vmatpush.msra.mxu0 0.0
  %2415 = vmatpush.msra.mxu0 0.0
  %2416 = vmatpush.msra.mxu0 0.0
  %2417 = vmatpush.msra.mxu0 0.0
  %2418 = vmatpush.msra.mxu0 0.0
  %2419 = vmatpush.msra.mxu0 0.0
  %2420 = vmatpush.msra.mxu0 0.0
  %2421 = vmatpush.msra.mxu0 0.0
  %2422 = vmatpush.msra.mxu0 0.0
  %2423 = vmatpush.msra.mxu0 0.0
  %2424 = vmatpush.msra.mxu0 0.0
  %2425 = vmatpush.msra.mxu0 0.0
  %2426 = vmatpush.msra.mxu0 0.0
  %2427 = vmatpush.msra.mxu0 0.0
  %2428 = vmatpush.msra.mxu0 0.0
  %2429 = vmatpush.msra.mxu0 %v2370
  %2430 = vmatmul.f32.gmra.mxu0 %v73
  %v2431 = vpop.f32.mrf.mxu0
  %v2432 = vadd.f32 0.0, %v2431
  %2433 = vdwg.mxu0
  %2434 = vmatpush.msra.mxu0 0.0
  %2435 = vmatpush.msra.mxu0 0.0
  %2436 = vmatpush.msra.mxu0 0.0
  %2437 = vmatpush.msra.mxu0 0.0
  %2438 = vmatpush.msra.mxu0 0.0
  %2439 = vmatpush.msra.mxu0 0.0
  %2440 = vmatpush.msra.mxu0 0.0
  %2441 = vmatpush.msra.mxu0 0.0
  %2442 = vmatpush.msra.mxu0 0.0
  %2443 = vmatpush.msra.mxu0 0.0
  %2444 = vmatpush.msra.mxu0 0.0
  %2445 = vmatpush.msra.mxu0 0.0
  %2446 = vmatpush.msra.mxu0 0.0
  %2447 = vmatpush.msra.mxu0 0.0
  %2448 = vmatpush.msra.mxu0 0.0
  %2449 = vmatpush.msra.mxu0 %v2372
  %2450 = vmatmul.f32.gmra.mxu0 %v73
  %v2451 = vpop.f32.mrf.mxu0
  %v2452 = vadd.f32 0.0, %v2451
  %2453 = vdwg.mxu0
  %2454 = vst [vmem:[#allocation1] ss:$4 sm:$0xff] %v46
  %v2455 = vld.sshfl [vmem:[#allocation1] sm:$0xff pattern:$0x73625140]
  %v2456 = vld.sshfl [vmem:[#allocation1 + $0x8] sm:$0xff pattern:$0x73625140]
  %v2457 = vld.sshfl [vmem:[#allocation1 + $0x10] sm:$0xff pattern:$0x73625140]
  %v2458 = vld.sshfl [vmem:[#allocation1 + $0x18] sm:$0xff pattern:$0x73625140]
  %v2459 = vsel %vm75, %v2455, 0
  %v2461 = vsel %vm75, %v2456, 0
  %v2463 = vsel %vm75, %v2457, 0
  %v2465 = vsel %vm75, %v2458, 0
  %2467 = vmatpush.msra.mxu0 0.0
  %2468 = vmatpush.msra.mxu0 0.0
  %2469 = vmatpush.msra.mxu0 0.0
  %2470 = vmatpush.msra.mxu0 0.0
  %2471 = vmatpush.msra.mxu0 0.0
  %2472 = vmatpush.msra.mxu0 0.0
  %2473 = vmatpush.msra.mxu0 0.0
  %2474 = vmatpush.msra.mxu0 0.0
  %2475 = vmatpush.msra.mxu0 0.0
  %2476 = vmatpush.msra.mxu0 0.0
  %2477 = vmatpush.msra.mxu0 0.0
  %2478 = vmatpush.msra.mxu0 0.0
  %2479 = vmatpush.msra.mxu0 0.0
  %2480 = vmatpush.msra.mxu0 0.0
  %2481 = vmatpush.msra.mxu0 0.0
  %2482 = vmatpush.msra.mxu0 %v2459
  %2483 = vmatmul.f32.gmra.mxu0 %v170
  %v2484 = vpop.f32.mrf.mxu0
  %v2485 = vadd.f32 %v2392, %v2484
  %2486 = vdwg.mxu0
  %2487 = vmatpush.msra.mxu0 0.0
  %2488 = vmatpush.msra.mxu0 0.0
  %2489 = vmatpush.msra.mxu0 0.0
  %2490 = vmatpush.msra.mxu0 0.0
  %2491 = vmatpush.msra.mxu0 0.0
  %2492 = vmatpush.msra.mxu0 0.0
  %2493 = vmatpush.msra.mxu0 0.0
  %2494 = vmatpush.msra.mxu0 0.0
  %2495 = vmatpush.msra.mxu0 0.0
  %2496 = vmatpush.msra.mxu0 0.0
  %2497 = vmatpush.msra.mxu0 0.0
  %2498 = vmatpush.msra.mxu0 0.0
  %2499 = vmatpush.msra.mxu0 0.0
  %2500 = vmatpush.msra.mxu0 0.0
  %2501 = vmatpush.msra.mxu0 0.0
  %2502 = vmatpush.msra.mxu0 %v2461
  %2503 = vmatmul.f32.gmra.mxu0 %v170
  %v2504 = vpop.f32.mrf.mxu0
  %v2505 = vadd.f32 %v2412, %v2504
  %2506 = vdwg.mxu0
  %2507 = vmatpush.msra.mxu0 0.0
  %2508 = vmatpush.msra.mxu0 0.0
  %2509 = vmatpush.msra.mxu0 0.0
  %2510 = vmatpush.msra.mxu0 0.0
  %2511 = vmatpush.msra.mxu0 0.0
  %2512 = vmatpush.msra.mxu0 0.0
  %2513 = vmatpush.msra.mxu0 0.0
  %2514 = vmatpush.msra.mxu0 0.0
  %2515 = vmatpush.msra.mxu0 0.0
  %2516 = vmatpush.msra.mxu0 0.0
  %2517 = vmatpush.msra.mxu0 0.0
  %2518 = vmatpush.msra.mxu0 0.0
  %2519 = vmatpush.msra.mxu0 0.0
  %2520 = vmatpush.msra.mxu0 0.0
  %2521 = vmatpush.msra.mxu0 0.0
  %2522 = vmatpush.msra.mxu0 %v2463
  %2523 = vmatmul.f32.gmra.mxu0 %v170
  %v2524 = vpop.f32.mrf.mxu0
  %v2525 = vadd.f32 %v2432, %v2524
  %2526 = vdwg.mxu0
  %2527 = vmatpush.msra.mxu0 0.0
  %2528 = vmatpush.msra.mxu0 0.0
  %2529 = vmatpush.msra.mxu0 0.0
  %2530 = vmatpush.msra.mxu0 0.0
  %2531 = vmatpush.msra.mxu0 0.0
  %2532 = vmatpush.msra.mxu0 0.0
  %2533 = vmatpush.msra.mxu0 0.0
  %2534 = vmatpush.msra.mxu0 0.0
  %2535 = vmatpush.msra.mxu0 0.0
  %2536 = vmatpush.msra.mxu0 0.0
  %2537 = vmatpush.msra.mxu0 0.0
  %2538 = vmatpush.msra.mxu0 0.0
  %2539 = vmatpush.msra.mxu0 0.0
  %2540 = vmatpush.msra.mxu0 0.0
  %2541 = vmatpush.msra.mxu0 0.0
  %2542 = vmatpush.msra.mxu0 %v2465
  %2543 = vmatmul.f32.gmra.mxu0 %v170
  %v2544 = vpop.f32.mrf.mxu0
  %v2545 = vadd.f32 %v2452, %v2544
  %2546 = vdwg.mxu0
  %2547 = vst [vmem:[#allocation1] ss:$4 sm:$0xff] %v46
  %v2548 = vld.sshfl [vmem:[#allocation1] sm:$0xff pattern:$0x73625140]
  %v2549 = vld.sshfl [vmem:[#allocation1 + $0x8] sm:$0xff pattern:$0x73625140]
  %v2550 = vld.sshfl [vmem:[#allocation1 + $0x10] sm:$0xff pattern:$0x73625140]
  %v2551 = vld.sshfl [vmem:[#allocation1 + $0x18] sm:$0xff pattern:$0x73625140]
  %2552 = vrot.lane.b32.xlu0 %v2548, 126
  %v2553 = vpop.permute.xlu0 %2552
  %2554 = vrot.lane.b32.xlu0 %v2549, 126
  %v2555 = vpop.permute.xlu0 %2554
  %2556 = vrot.lane.b32.xlu0 %v2550, 126
  %v2557 = vpop.permute.xlu0 %2556
  %2558 = vrot.lane.b32.xlu0 %v2551, 126
  %v2559 = vpop.permute.xlu0 %2558
  %v2560 = vsel %vm273, %v2553, %v2555
  %v2561 = vsel %vm273, %v2555, %v2557
  %v2562 = vsel %vm273, %v2557, %v2559
  %v2563 = vsel %vm75, %v2560, 0
  %v2565 = vsel %vm75, %v2561, 0
  %v2567 = vsel %vm75, %v2562, 0
  %v2569 = vsel %vm75, %v2559, 0
  %2571 = vmatpush.msra.mxu0 0.0
  %2572 = vmatpush.msra.mxu0 0.0
  %2573 = vmatpush.msra.mxu0 0.0
  %2574 = vmatpush.msra.mxu0 0.0
  %2575 = vmatpush.msra.mxu0 0.0
  %2576 = vmatpush.msra.mxu0 0.0
  %2577 = vmatpush.msra.mxu0 0.0
  %2578 = vmatpush.msra.mxu0 0.0
  %2579 = vmatpush.msra.mxu0 0.0
  %2580 = vmatpush.msra.mxu0 0.0
  %2581 = vmatpush.msra.mxu0 0.0
  %2582 = vmatpush.msra.mxu0 0.0
  %2583 = vmatpush.msra.mxu0 0.0
  %2584 = vmatpush.msra.mxu0 0.0
  %2585 = vmatpush.msra.mxu0 0.0
  %2586 = vmatpush.msra.mxu0 %v2563
  %2587 = vmatmul.f32.gmra.mxu0 %v278
  %v2588 = vpop.f32.mrf.mxu0
  %v2589 = vadd.f32 0.0, %v2588
  %2590 = vdwg.mxu0
  %2591 = vmatpush.msra.mxu0 0.0
  %2592 = vmatpush.msra.mxu0 0.0
  %2593 = vmatpush.msra.mxu0 0.0
  %2594 = vmatpush.msra.mxu0 0.0
  %2595 = vmatpush.msra.mxu0 0.0
  %2596 = vmatpush.msra.mxu0 0.0
  %2597 = vmatpush.msra.mxu0 0.0
  %2598 = vmatpush.msra.mxu0 0.0
  %2599 = vmatpush.msra.mxu0 0.0
  %2600 = vmatpush.msra.mxu0 0.0
  %2601 = vmatpush.msra.mxu0 0.0
  %2602 = vmatpush.msra.mxu0 0.0
  %2603 = vmatpush.msra.mxu0 0.0
  %2604 = vmatpush.msra.mxu0 0.0
  %2605 = vmatpush.msra.mxu0 0.0
  %2606 = vmatpush.msra.mxu0 %v2565
  %2607 = vmatmul.f32.gmra.mxu0 %v278
  %v2608 = vpop.f32.mrf.mxu0
  %v2609 = vadd.f32 0.0, %v2608
  %2610 = vdwg.mxu0
  %2611 = vmatpush.msra.mxu0 0.0
  %2612 = vmatpush.msra.mxu0 0.0
  %2613 = vmatpush.msra.mxu0 0.0
  %2614 = vmatpush.msra.mxu0 0.0
  %2615 = vmatpush.msra.mxu0 0.0
  %2616 = vmatpush.msra.mxu0 0.0
  %2617 = vmatpush.msra.mxu0 0.0
  %2618 = vmatpush.msra.mxu0 0.0
  %2619 = vmatpush.msra.mxu0 0.0
  %2620 = vmatpush.msra.mxu0 0.0
  %2621 = vmatpush.msra.mxu0 0.0
  %2622 = vmatpush.msra.mxu0 0.0
  %2623 = vmatpush.msra.mxu0 0.0
  %2624 = vmatpush.msra.mxu0 0.0
  %2625 = vmatpush.msra.mxu0 0.0
  %2626 = vmatpush.msra.mxu0 %v2567
  %2627 = vmatmul.f32.gmra.mxu0 %v278
  %v2628 = vpop.f32.mrf.mxu0
  %v2629 = vadd.f32 0.0, %v2628
  %2630 = vdwg.mxu0
  %2631 = vmatpush.msra.mxu0 0.0
  %2632 = vmatpush.msra.mxu0 0.0
  %2633 = vmatpush.msra.mxu0 0.0
  %2634 = vmatpush.msra.mxu0 0.0
  %2635 = vmatpush.msra.mxu0 0.0
  %2636 = vmatpush.msra.mxu0 0.0
  %2637 = vmatpush.msra.mxu0 0.0
  %2638 = vmatpush.msra.mxu0 0.0
  %2639 = vmatpush.msra.mxu0 0.0
  %2640 = vmatpush.msra.mxu0 0.0
  %2641 = vmatpush.msra.mxu0 0.0
  %2642 = vmatpush.msra.mxu0 0.0
  %2643 = vmatpush.msra.mxu0 0.0
  %2644 = vmatpush.msra.mxu0 0.0
  %2645 = vmatpush.msra.mxu0 0.0
  %2646 = vmatpush.msra.mxu0 %v2569
  %2647 = vmatmul.f32.gmra.mxu0 %v278
  %v2648 = vpop.f32.mrf.mxu0
  %v2649 = vadd.f32 0.0, %v2648
  %2650 = vdwg.mxu0
  %v2651 = vadd.f32 %v2485, %v2589
  %v2652 = vadd.f32 %v2505, %v2609
  %v2653 = vadd.f32 %v2525, %v2629
  %v2654 = vadd.f32 %v2545, %v2649
  %2655 = vst [vmem:[#allocation1] ss:$4 sm:$0xff] %v46
  %v2656 = vld.sshfl [vmem:[#allocation1] sm:$0xff pattern:$0x73625140]
  %v2657 = vld.sshfl [vmem:[#allocation1 + $0x8] sm:$0xff pattern:$0x73625140]
  %v2658 = vld.sshfl [vmem:[#allocation1 + $0x10] sm:$0xff pattern:$0x73625140]
  %v2659 = vld.sshfl [vmem:[#allocation1 + $0x18] sm:$0xff pattern:$0x73625140]
  %2660 = vrot.lane.b32.xlu0 %v2656, 125
  %v2661 = vpop.permute.xlu0 %2660
  %2662 = vrot.lane.b32.xlu0 %v2657, 125
  %v2663 = vpop.permute.xlu0 %2662
  %2664 = vrot.lane.b32.xlu0 %v2658, 125
  %v2665 = vpop.permute.xlu0 %2664
  %2666 = vrot.lane.b32.xlu0 %v2659, 125
  %v2667 = vpop.permute.xlu0 %2666
  %v2668 = vsel %vm385, %v2661, %v2663
  %v2669 = vsel %vm385, %v2663, %v2665
  %v2670 = vsel %vm385, %v2665, %v2667
  %v2671 = vsel %vm75, %v2668, 0
  %v2673 = vsel %vm75, %v2669, 0
  %v2675 = vsel %vm75, %v2670, 0
  %v2677 = vsel %vm75, %v2667, 0
  %2679 = vmatpush.msra.mxu0 0.0
  %2680 = vmatpush.msra.mxu0 0.0
  %2681 = vmatpush.msra.mxu0 0.0
  %2682 = vmatpush.msra.mxu0 0.0
  %2683 = vmatpush.msra.mxu0 0.0
  %2684 = vmatpush.msra.mxu0 0.0
  %2685 = vmatpush.msra.mxu0 0.0
  %2686 = vmatpush.msra.mxu0 0.0
  %2687 = vmatpush.msra.mxu0 0.0
  %2688 = vmatpush.msra.mxu0 0.0
  %2689 = vmatpush.msra.mxu0 0.0
  %2690 = vmatpush.msra.mxu0 0.0
  %2691 = vmatpush.msra.mxu0 0.0
  %2692 = vmatpush.msra.mxu0 0.0
  %2693 = vmatpush.msra.mxu0 0.0
  %2694 = vmatpush.msra.mxu0 %v2671
  %2695 = vmatmul.f32.gmra.mxu0 %v390
  %v2696 = vpop.f32.mrf.mxu0
  %v2697 = vadd.f32 0.0, %v2696
  %2698 = vdwg.mxu0
  %2699 = vmatpush.msra.mxu0 0.0
  %2700 = vmatpush.msra.mxu0 0.0
  %2701 = vmatpush.msra.mxu0 0.0
  %2702 = vmatpush.msra.mxu0 0.0
  %2703 = vmatpush.msra.mxu0 0.0
  %2704 = vmatpush.msra.mxu0 0.0
  %2705 = vmatpush.msra.mxu0 0.0
  %2706 = vmatpush.msra.mxu0 0.0
  %2707 = vmatpush.msra.mxu0 0.0
  %2708 = vmatpush.msra.mxu0 0.0
  %2709 = vmatpush.msra.mxu0 0.0
  %2710 = vmatpush.msra.mxu0 0.0
  %2711 = vmatpush.msra.mxu0 0.0
  %2712 = vmatpush.msra.mxu0 0.0
  %2713 = vmatpush.msra.mxu0 0.0
  %2714 = vmatpush.msra.mxu0 %v2673
  %2715 = vmatmul.f32.gmra.mxu0 %v390
  %v2716 = vpop.f32.mrf.mxu0
  %v2717 = vadd.f32 0.0, %v2716
  %2718 = vdwg.mxu0
  %2719 = vmatpush.msra.mxu0 0.0
  %2720 = vmatpush.msra.mxu0 0.0
  %2721 = vmatpush.msra.mxu0 0.0
  %2722 = vmatpush.msra.mxu0 0.0
  %2723 = vmatpush.msra.mxu0 0.0
  %2724 = vmatpush.msra.mxu0 0.0
  %2725 = vmatpush.msra.mxu0 0.0
  %2726 = vmatpush.msra.mxu0 0.0
  %2727 = vmatpush.msra.mxu0 0.0
  %2728 = vmatpush.msra.mxu0 0.0
  %2729 = vmatpush.msra.mxu0 0.0
  %2730 = vmatpush.msra.mxu0 0.0
  %2731 = vmatpush.msra.mxu0 0.0
  %2732 = vmatpush.msra.mxu0 0.0
  %2733 = vmatpush.msra.mxu0 0.0
  %2734 = vmatpush.msra.mxu0 %v2675
  %2735 = vmatmul.f32.gmra.mxu0 %v390
  %v2736 = vpop.f32.mrf.mxu0
  %v2737 = vadd.f32 0.0, %v2736
  %2738 = vdwg.mxu0
  %2739 = vmatpush.msra.mxu0 0.0
  %2740 = vmatpush.msra.mxu0 0.0
  %2741 = vmatpush.msra.mxu0 0.0
  %2742 = vmatpush.msra.mxu0 0.0
  %2743 = vmatpush.msra.mxu0 0.0
  %2744 = vmatpush.msra.mxu0 0.0
  %2745 = vmatpush.msra.mxu0 0.0
  %2746 = vmatpush.msra.mxu0 0.0
  %2747 = vmatpush.msra.mxu0 0.0
  %2748 = vmatpush.msra.mxu0 0.0
  %2749 = vmatpush.msra.mxu0 0.0
  %2750 = vmatpush.msra.mxu0 0.0
  %2751 = vmatpush.msra.mxu0 0.0
  %2752 = vmatpush.msra.mxu0 0.0
  %2753 = vmatpush.msra.mxu0 0.0
  %2754 = vmatpush.msra.mxu0 %v2677
  %2755 = vmatmul.f32.gmra.mxu0 %v390
  %v2756 = vpop.f32.mrf.mxu0
  %v2757 = vadd.f32 0.0, %v2756
  %2758 = vdwg.mxu0
  %v2759 = vadd.f32 %v2651, %v2697
  %v2760 = vadd.f32 %v2652, %v2717
  %v2761 = vadd.f32 %v2653, %v2737
  %v2762 = vadd.f32 %v2654, %v2757
  %2763 = vst [vmem:[#allocation1] ss:$4 sm:$0xff] %v46
  %v2764 = vld.sshfl [vmem:[#allocation1] sm:$0xff pattern:$0x73625140]
  %v2765 = vld.sshfl [vmem:[#allocation1 + $0x8] sm:$0xff pattern:$0x73625140]
  %v2766 = vld.sshfl [vmem:[#allocation1 + $0x10] sm:$0xff pattern:$0x73625140]
  %v2767 = vld.sshfl [vmem:[#allocation1 + $0x18] sm:$0xff pattern:$0x73625140]
  %2768 = vrot.lane.b32.xlu0 %v2764, 124
  %v2769 = vpop.permute.xlu0 %2768
  %2770 = vrot.lane.b32.xlu0 %v2765, 124
  %v2771 = vpop.permute.xlu0 %2770
  %2772 = vrot.lane.b32.xlu0 %v2766, 124
  %v2773 = vpop.permute.xlu0 %2772
  %2774 = vrot.lane.b32.xlu0 %v2767, 124
  %v2775 = vpop.permute.xlu0 %2774
  %v2776 = vsel %vm497, %v2769, %v2771
  %v2777 = vsel %vm497, %v2771, %v2773
  %v2778 = vsel %vm497, %v2773, %v2775
  %v2779 = vsel %vm75, %v2776, 0
  %v2781 = vsel %vm75, %v2777, 0
  %v2783 = vsel %vm75, %v2778, 0
  %v2785 = vsel %vm75, %v2775, 0
  %2787 = vmatpush.msra.mxu0 0.0
  %2788 = vmatpush.msra.mxu0 0.0
  %2789 = vmatpush.msra.mxu0 0.0
  %2790 = vmatpush.msra.mxu0 0.0
  %2791 = vmatpush.msra.mxu0 0.0
  %2792 = vmatpush.msra.mxu0 0.0
  %2793 = vmatpush.msra.mxu0 0.0
  %2794 = vmatpush.msra.mxu0 0.0
  %2795 = vmatpush.msra.mxu0 0.0
  %2796 = vmatpush.msra.mxu0 0.0
  %2797 = vmatpush.msra.mxu0 0.0
  %2798 = vmatpush.msra.mxu0 0.0
  %2799 = vmatpush.msra.mxu0 0.0
  %2800 = vmatpush.msra.mxu0 0.0
  %2801 = vmatpush.msra.mxu0 0.0
  %2802 = vmatpush.msra.mxu0 %v2779
  %2803 = vmatmul.f32.gmra.mxu0 %v502
  %v2804 = vpop.f32.mrf.mxu0
  %v2805 = vadd.f32 0.0, %v2804
  %2806 = vdwg.mxu0
  %2807 = vmatpush.msra.mxu0 0.0
  %2808 = vmatpush.msra.mxu0 0.0
  %2809 = vmatpush.msra.mxu0 0.0
  %2810 = vmatpush.msra.mxu0 0.0
  %2811 = vmatpush.msra.mxu0 0.0
  %2812 = vmatpush.msra.mxu0 0.0
  %2813 = vmatpush.msra.mxu0 0.0
  %2814 = vmatpush.msra.mxu0 0.0
  %2815 = vmatpush.msra.mxu0 0.0
  %2816 = vmatpush.msra.mxu0 0.0
  %2817 = vmatpush.msra.mxu0 0.0
  %2818 = vmatpush.msra.mxu0 0.0
  %2819 = vmatpush.msra.mxu0 0.0
  %2820 = vmatpush.msra.mxu0 0.0
  %2821 = vmatpush.msra.mxu0 0.0
  %2822 = vmatpush.msra.mxu0 %v2781
  %2823 = vmatmul.f32.gmra.mxu0 %v502
  %v2824 = vpop.f32.mrf.mxu0
  %v2825 = vadd.f32 0.0, %v2824
  %2826 = vdwg.mxu0
  %2827 = vmatpush.msra.mxu0 0.0
  %2828 = vmatpush.msra.mxu0 0.0
  %2829 = vmatpush.msra.mxu0 0.0
  %2830 = vmatpush.msra.mxu0 0.0
  %2831 = vmatpush.msra.mxu0 0.0
  %2832 = vmatpush.msra.mxu0 0.0
  %2833 = vmatpush.msra.mxu0 0.0
  %2834 = vmatpush.msra.mxu0 0.0
  %2835 = vmatpush.msra.mxu0 0.0
  %2836 = vmatpush.msra.mxu0 0.0
  %2837 = vmatpush.msra.mxu0 0.0
  %2838 = vmatpush.msra.mxu0 0.0
  %2839 = vmatpush.msra.mxu0 0.0
  %2840 = vmatpush.msra.mxu0 0.0
  %2841 = vmatpush.msra.mxu0 0.0
  %2842 = vmatpush.msra.mxu0 %v2783
  %2843 = vmatmul.f32.gmra.mxu0 %v502
  %v2844 = vpop.f32.mrf.mxu0
  %v2845 = vadd.f32 0.0, %v2844
  %2846 = vdwg.mxu0
  %2847 = vmatpush.msra.mxu0 0.0
  %2848 = vmatpush.msra.mxu0 0.0
  %2849 = vmatpush.msra.mxu0 0.0
  %2850 = vmatpush.msra.mxu0 0.0
  %2851 = vmatpush.msra.mxu0 0.0
  %2852 = vmatpush.msra.mxu0 0.0
  %2853 = vmatpush.msra.mxu0 0.0
  %2854 = vmatpush.msra.mxu0 0.0
  %2855 = vmatpush.msra.mxu0 0.0
  %2856 = vmatpush.msra.mxu0 0.0
  %2857 = vmatpush.msra.mxu0 0.0
  %2858 = vmatpush.msra.mxu0 0.0
  %2859 = vmatpush.msra.mxu0 0.0
  %2860 = vmatpush.msra.mxu0 0.0
  %2861 = vmatpush.msra.mxu0 0.0
  %2862 = vmatpush.msra.mxu0 %v2785
  %2863 = vmatmul.f32.gmra.mxu0 %v502
  %v2864 = vpop.f32.mrf.mxu0
  %v2865 = vadd.f32 0.0, %v2864
  %2866 = vdwg.mxu0
  %v2867 = vadd.f32 %v2759, %v2805
  %v2868 = vadd.f32 %v2760, %v2825
  %v2869 = vadd.f32 %v2761, %v2845
  %v2870 = vadd.f32 %v2762, %v2865
  %v2871 = vadd.f32 %v2867, %v599
  %v2872 = vadd.f32 %v2868, %v599
  %v2873 = vadd.f32 %v2869, %v599
  %v2874 = vadd.f32 %v2870, %v599
  %vm2875 = vcmp.ge.f32.partialorder %v2871, 0.0
  %vm2876 = vcmp.ge.f32.partialorder %v2872, 0.0
  %vm2877 = vcmp.ge.f32.partialorder %v2873, 0.0
  %vm2878 = vcmp.ge.f32.partialorder %v2874, 0.0
  %v2879 = vmul.f32 %v2871, 0.2
  %v2880 = vmul.f32 %v2872, 0.2
  %v2881 = vmul.f32 %v2873, 0.2
  %v2882 = vmul.f32 %v2874, 0.2
  %v2883 = vsel %vm2875, %v2871, %v2879
  %v2884 = vsel %vm2876, %v2872, %v2880
  %v2885 = vsel %vm2877, %v2873, %v2881
  %v2886 = vsel %vm2878, %v2874, %v2882
  %v2888 = vsel %vm497, %v2886, 0
  %2890 = vmatpush.msra.mxu0 %v973
  %2891 = vmatpush.msra.mxu0 %v971
  %2892 = vmatpush.msra.mxu0 %v969
  %2893 = vmatpush.msra.mxu0 %v967
  %2894 = vmatpush.msra.mxu0 %v965
  %2895 = vmatpush.msra.mxu0 %v963
  %2896 = vmatpush.msra.mxu0 %v961
  %2897 = vmatpush.msra.mxu0 %v959
  %2898 = vmatpush.msra.mxu0 %v957
  %2899 = vmatpush.msra.mxu0 %v955
  %2900 = vmatpush.msra.mxu0 %v953
  %2901 = vmatpush.msra.mxu0 %v951
  %2902 = vmatpush.msra.mxu0 %v949
  %2903 = vmatpush.msra.mxu0 %v947
  %2904 = vmatpush.msra.mxu0 %v945
  %2905 = vmatpush.msra.mxu0 %v943
  %2906 = vmatmul.f32.gmra.mxu0 %v2883
  %v2907 = vpop.f32.mrf.mxu0
  %v2908 = vadd.f32 0.0, %v2907
  %2909 = vdwg.mxu0
  %2910 = vmatpush.msra.mxu0 %v1005
  %2911 = vmatpush.msra.mxu0 %v1003
  %2912 = vmatpush.msra.mxu0 %v1001
  %2913 = vmatpush.msra.mxu0 %v999
  %2914 = vmatpush.msra.mxu0 %v997
  %2915 = vmatpush.msra.mxu0 %v995
  %2916 = vmatpush.msra.mxu0 %v993
  %2917 = vmatpush.msra.mxu0 %v991
  %2918 = vmatpush.msra.mxu0 %v989
  %2919 = vmatpush.msra.mxu0 %v987
  %2920 = vmatpush.msra.mxu0 %v985
  %2921 = vmatpush.msra.mxu0 %v983
  %2922 = vmatpush.msra.mxu0 %v981
  %2923 = vmatpush.msra.mxu0 %v979
  %2924 = vmatpush.msra.mxu0 %v977
  %2925 = vmatpush.msra.mxu0 %v975
  %2926 = vmatmul.f32.gmra.mxu0 %v2884
  %v2927 = vpop.f32.mrf.mxu0
  %v2928 = vadd.f32 %v2908, %v2927
  %2929 = vdwg.mxu0
  %2930 = vmatpush.msra.mxu0 %v1037
  %2931 = vmatpush.msra.mxu0 %v1035
  %2932 = vmatpush.msra.mxu0 %v1033
  %2933 = vmatpush.msra.mxu0 %v1031
  %2934 = vmatpush.msra.mxu0 %v1029
  %2935 = vmatpush.msra.mxu0 %v1027
  %2936 = vmatpush.msra.mxu0 %v1025
  %2937 = vmatpush.msra.mxu0 %v1023
  %2938 = vmatpush.msra.mxu0 %v1021
  %2939 = vmatpush.msra.mxu0 %v1019
  %2940 = vmatpush.msra.mxu0 %v1017
  %2941 = vmatpush.msra.mxu0 %v1015
  %2942 = vmatpush.msra.mxu0 %v1013
  %2943 = vmatpush.msra.mxu0 %v1011
  %2944 = vmatpush.msra.mxu0 %v1009
  %2945 = vmatpush.msra.mxu0 %v1007
  %2946 = vmatmul.f32.gmra.mxu0 %v2885
  %v2947 = vpop.f32.mrf.mxu0
  %v2948 = vadd.f32 %v2928, %v2947
  %2949 = vdwg.mxu0
  %2950 = vmatpush.msra.mxu0 %v1076
  %2951 = vmatpush.msra.mxu0 %v1067
  %2952 = vmatpush.msra.mxu0 %v1065
  %2953 = vmatpush.msra.mxu0 %v1063
  %2954 = vmatpush.msra.mxu0 %v1061
  %2955 = vmatpush.msra.mxu0 %v1059
  %2956 = vmatpush.msra.mxu0 %v1057
  %2957 = vmatpush.msra.mxu0 %v1055
  %2958 = vmatpush.msra.mxu0 %v1053
  %2959 = vmatpush.msra.mxu0 %v1051
  %2960 = vmatpush.msra.mxu0 %v1049
  %2961 = vmatpush.msra.mxu0 %v1047
  %2962 = vmatpush.msra.mxu0 %v1045
  %2963 = vmatpush.msra.mxu0 %v1043
  %2964 = vmatpush.msra.mxu0 %v1041
  %2965 = vmatpush.msra.mxu0 %v1039
  %2966 = vmatmul.f32.gmra.mxu0 %v2888
  %v2967 = vpop.f32.mrf.mxu0
  %v2968 = vadd.f32 %v2948, %v2967
  %2969 = vdwg.mxu0
  %2970 = vmatpush.msra.mxu0 %v974
  %2971 = vmatpush.msra.mxu0 %v972
  %2972 = vmatpush.msra.mxu0 %v970
  %2973 = vmatpush.msra.mxu0 %v968
  %2974 = vmatpush.msra.mxu0 %v966
  %2975 = vmatpush.msra.mxu0 %v964
  %2976 = vmatpush.msra.mxu0 %v962
  %2977 = vmatpush.msra.mxu0 %v960
  %2978 = vmatpush.msra.mxu0 %v958
  %2979 = vmatpush.msra.mxu0 %v956
  %2980 = vmatpush.msra.mxu0 %v954
  %2981 = vmatpush.msra.mxu0 %v952
  %2982 = vmatpush.msra.mxu0 %v950
  %2983 = vmatpush.msra.mxu0 %v948
  %2984 = vmatpush.msra.mxu0 %v946
  %2985 = vmatpush.msra.mxu0 %v944
  %2986 = vmatmul.f32.gmra.mxu0 %v2883
  %v2987 = vpop.f32.mrf.mxu0
  %v2988 = vadd.f32 0.0, %v2987
  %2989 = vdwg.mxu0
  %2990 = vmatpush.msra.mxu0 %v1006
  %2991 = vmatpush.msra.mxu0 %v1004
  %2992 = vmatpush.msra.mxu0 %v1002
  %2993 = vmatpush.msra.mxu0 %v1000
  %2994 = vmatpush.msra.mxu0 %v998
  %2995 = vmatpush.msra.mxu0 %v996
  %2996 = vmatpush.msra.mxu0 %v994
  %2997 = vmatpush.msra.mxu0 %v992
  %2998 = vmatpush.msra.mxu0 %v990
  %2999 = vmatpush.msra.mxu0 %v988
  %3000 = vmatpush.msra.mxu0 %v986
  %3001 = vmatpush.msra.mxu0 %v984
  %3002 = vmatpush.msra.mxu0 %v982
  %3003 = vmatpush.msra.mxu0 %v980
  %3004 = vmatpush.msra.mxu0 %v978
  %3005 = vmatpush.msra.mxu0 %v976
  %3006 = vmatmul.f32.gmra.mxu0 %v2884
  %v3007 = vpop.f32.mrf.mxu0
  %v3008 = vadd.f32 %v2988, %v3007
  %3009 = vdwg.mxu0
  %3010 = vmatpush.msra.mxu0 %v1038
  %3011 = vmatpush.msra.mxu0 %v1036
  %3012 = vmatpush.msra.mxu0 %v1034
  %3013 = vmatpush.msra.mxu0 %v1032
  %3014 = vmatpush.msra.mxu0 %v1030
  %3015 = vmatpush.msra.mxu0 %v1028
  %3016 = vmatpush.msra.mxu0 %v1026
  %3017 = vmatpush.msra.mxu0 %v1024
  %3018 = vmatpush.msra.mxu0 %v1022
  %3019 = vmatpush.msra.mxu0 %v1020
  %3020 = vmatpush.msra.mxu0 %v1018
  %3021 = vmatpush.msra.mxu0 %v1016
  %3022 = vmatpush.msra.mxu0 %v1014
  %3023 = vmatpush.msra.mxu0 %v1012
  %3024 = vmatpush.msra.mxu0 %v1010
  %3025 = vmatpush.msra.mxu0 %v1008
  %3026 = vmatmul.f32.gmra.mxu0 %v2885
  %v3027 = vpop.f32.mrf.mxu0
  %v3028 = vadd.f32 %v3008, %v3027
  %3029 = vdwg.mxu0
  %3030 = vmatpush.msra.mxu0 %v1079
  %3031 = vmatpush.msra.mxu0 %v1068
  %3032 = vmatpush.msra.mxu0 %v1066
  %3033 = vmatpush.msra.mxu0 %v1064
  %3034 = vmatpush.msra.mxu0 %v1062
  %3035 = vmatpush.msra.mxu0 %v1060
  %3036 = vmatpush.msra.mxu0 %v1058
  %3037 = vmatpush.msra.mxu0 %v1056
  %3038 = vmatpush.msra.mxu0 %v1054
  %3039 = vmatpush.msra.mxu0 %v1052
  %3040 = vmatpush.msra.mxu0 %v1050
  %3041 = vmatpush.msra.mxu0 %v1048
  %3042 = vmatpush.msra.mxu0 %v1046
  %3043 = vmatpush.msra.mxu0 %v1044
  %3044 = vmatpush.msra.mxu0 %v1042
  %3045 = vmatpush.msra.mxu0 %v1040
  %3046 = vmatmul.f32.gmra.mxu0 %v2888
  %v3047 = vpop.f32.mrf.mxu0
  %v3048 = vadd.f32 %v3028, %v3047
  %3049 = vdwg.mxu0
  %3050 = vmatpush.msra.mxu0 %v1529
  %3051 = vmatpush.msra.mxu0 %v1527
  %3052 = vmatpush.msra.mxu0 %v1525
  %3053 = vmatpush.msra.mxu0 %v1523
  %3054 = vmatpush.msra.mxu0 %v1521
  %3055 = vmatpush.msra.mxu0 %v1519
  %3056 = vmatpush.msra.mxu0 %v1517
  %3057 = vmatpush.msra.mxu0 %v1515
  %3058 = vmatpush.msra.mxu0 %v1513
  %3059 = vmatpush.msra.mxu0 %v1511
  %3060 = vmatpush.msra.mxu0 %v1509
  %3061 = vmatpush.msra.mxu0 %v1507
  %3062 = vmatpush.msra.mxu0 %v1505
  %3063 = vmatpush.msra.mxu0 %v1503
  %3064 = vmatpush.msra.mxu0 %v1501
  %3065 = vmatpush.msra.mxu0 %v1499
  %3066 = vmatmul.f32.gmra.mxu0 %v2883
  %v3067 = vpop.f32.mrf.mxu0
  %v3068 = vadd.f32 0.0, %v3067
  %3069 = vdwg.mxu0
  %3070 = vmatpush.msra.mxu0 %v1561
  %3071 = vmatpush.msra.mxu0 %v1559
  %3072 = vmatpush.msra.mxu0 %v1557
  %3073 = vmatpush.msra.mxu0 %v1555
  %3074 = vmatpush.msra.mxu0 %v1553
  %3075 = vmatpush.msra.mxu0 %v1551
  %3076 = vmatpush.msra.mxu0 %v1549
  %3077 = vmatpush.msra.mxu0 %v1547
  %3078 = vmatpush.msra.mxu0 %v1545
  %3079 = vmatpush.msra.mxu0 %v1543
  %3080 = vmatpush.msra.mxu0 %v1541
  %3081 = vmatpush.msra.mxu0 %v1539
  %3082 = vmatpush.msra.mxu0 %v1537
  %3083 = vmatpush.msra.mxu0 %v1535
  %3084 = vmatpush.msra.mxu0 %v1533
  %3085 = vmatpush.msra.mxu0 %v1531
  %3086 = vmatmul.f32.gmra.mxu0 %v2884
  %v3087 = vpop.f32.mrf.mxu0
  %v3088 = vadd.f32 %v3068, %v3087
  %3089 = vdwg.mxu0
  %3090 = vmatpush.msra.mxu0 %v1593
  %3091 = vmatpush.msra.mxu0 %v1591
  %3092 = vmatpush.msra.mxu0 %v1589
  %3093 = vmatpush.msra.mxu0 %v1587
  %3094 = vmatpush.msra.mxu0 %v1585
  %3095 = vmatpush.msra.mxu0 %v1583
  %3096 = vmatpush.msra.mxu0 %v1581
  %3097 = vmatpush.msra.mxu0 %v1579
  %3098 = vmatpush.msra.mxu0 %v1577
  %3099 = vmatpush.msra.mxu0 %v1575
  %3100 = vmatpush.msra.mxu0 %v1573
  %3101 = vmatpush.msra.mxu0 %v1571
  %3102 = vmatpush.msra.mxu0 %v1569
  %3103 = vmatpush.msra.mxu0 %v1567
  %3104 = vmatpush.msra.mxu0 %v1565
  %3105 = vmatpush.msra.mxu0 %v1563
  %3106 = vmatmul.f32.gmra.mxu0 %v2885
  %v3107 = vpop.f32.mrf.mxu0
  %v3108 = vadd.f32 %v3088, %v3107
  %3109 = vdwg.mxu0
  %3110 = vmatpush.msra.mxu0 %v1628
  %3111 = vmatpush.msra.mxu0 %v1623
  %3112 = vmatpush.msra.mxu0 %v1621
  %3113 = vmatpush.msra.mxu0 %v1619
  %3114 = vmatpush.msra.mxu0 %v1617
  %3115 = vmatpush.msra.mxu0 %v1615
  %3116 = vmatpush.msra.mxu0 %v1613
  %3117 = vmatpush.msra.mxu0 %v1611
  %3118 = vmatpush.msra.mxu0 %v1609
  %3119 = vmatpush.msra.mxu0 %v1607
  %3120 = vmatpush.msra.mxu0 %v1605
  %3121 = vmatpush.msra.mxu0 %v1603
  %3122 = vmatpush.msra.mxu0 %v1601
  %3123 = vmatpush.msra.mxu0 %v1599
  %3124 = vmatpush.msra.mxu0 %v1597
  %3125 = vmatpush.msra.mxu0 %v1595
  %3126 = vmatmul.f32.gmra.mxu0 %v2888
  %v3127 = vpop.f32.mrf.mxu0
  %v3128 = vadd.f32 %v3108, %v3127
  %3129 = vdwg.mxu0
  %3130 = vmatpush.msra.mxu0 %v1530
  %3131 = vmatpush.msra.mxu0 %v1528
  %3132 = vmatpush.msra.mxu0 %v1526
  %3133 = vmatpush.msra.mxu0 %v1524
  %3134 = vmatpush.msra.mxu0 %v1522
  %3135 = vmatpush.msra.mxu0 %v1520
  %3136 = vmatpush.msra.mxu0 %v1518
  %3137 = vmatpush.msra.mxu0 %v1516
  %3138 = vmatpush.msra.mxu0 %v1514
  %3139 = vmatpush.msra.mxu0 %v1512
  %3140 = vmatpush.msra.mxu0 %v1510
  %3141 = vmatpush.msra.mxu0 %v1508
  %3142 = vmatpush.msra.mxu0 %v1506
  %3143 = vmatpush.msra.mxu0 %v1504
  %3144 = vmatpush.msra.mxu0 %v1502
  %3145 = vmatpush.msra.mxu0 %v1500
  %3146 = vmatmul.f32.gmra.mxu0 %v2883
  %v3147 = vpop.f32.mrf.mxu0
  %v3148 = vadd.f32 0.0, %v3147
  %3149 = vdwg.mxu0
  %3150 = vmatpush.msra.mxu0 %v1562
  %3151 = vmatpush.msra.mxu0 %v1560
  %3152 = vmatpush.msra.mxu0 %v1558
  %3153 = vmatpush.msra.mxu0 %v1556
  %3154 = vmatpush.msra.mxu0 %v1554
  %3155 = vmatpush.msra.mxu0 %v1552
  %3156 = vmatpush.msra.mxu0 %v1550
  %3157 = vmatpush.msra.mxu0 %v1548
  %3158 = vmatpush.msra.mxu0 %v1546
  %3159 = vmatpush.msra.mxu0 %v1544
  %3160 = vmatpush.msra.mxu0 %v1542
  %3161 = vmatpush.msra.mxu0 %v1540
  %3162 = vmatpush.msra.mxu0 %v1538
  %3163 = vmatpush.msra.mxu0 %v1536
  %3164 = vmatpush.msra.mxu0 %v1534
  %3165 = vmatpush.msra.mxu0 %v1532
  %3166 = vmatmul.f32.gmra.mxu0 %v2884
  %v3167 = vpop.f32.mrf.mxu0
  %v3168 = vadd.f32 %v3148, %v3167
  %3169 = vdwg.mxu0
  %3170 = vmatpush.msra.mxu0 %v1594
  %3171 = vmatpush.msra.mxu0 %v1592
  %3172 = vmatpush.msra.mxu0 %v1590
  %3173 = vmatpush.msra.mxu0 %v1588
  %3174 = vmatpush.msra.mxu0 %v1586
  %3175 = vmatpush.msra.mxu0 %v1584
  %3176 = vmatpush.msra.mxu0 %v1582
  %3177 = vmatpush.msra.mxu0 %v1580
  %3178 = vmatpush.msra.mxu0 %v1578
  %3179 = vmatpush.msra.mxu0 %v1576
  %3180 = vmatpush.msra.mxu0 %v1574
  %3181 = vmatpush.msra.mxu0 %v1572
  %3182 = vmatpush.msra.mxu0 %v1570
  %3183 = vmatpush.msra.mxu0 %v1568
  %3184 = vmatpush.msra.mxu0 %v1566
  %3185 = vmatpush.msra.mxu0 %v1564
  %3186 = vmatmul.f32.gmra.mxu0 %v2885
  %v3187 = vpop.f32.mrf.mxu0
  %v3188 = vadd.f32 %v3168, %v3187
  %3189 = vdwg.mxu0
  %3190 = vmatpush.msra.mxu0 %v1631
  %3191 = vmatpush.msra.mxu0 %v1624
  %3192 = vmatpush.msra.mxu0 %v1622
  %3193 = vmatpush.msra.mxu0 %v1620
  %3194 = vmatpush.msra.mxu0 %v1618
  %3195 = vmatpush.msra.mxu0 %v1616
  %3196 = vmatpush.msra.mxu0 %v1614
  %3197 = vmatpush.msra.mxu0 %v1612
  %3198 = vmatpush.msra.mxu0 %v1610
  %3199 = vmatpush.msra.mxu0 %v1608
  %3200 = vmatpush.msra.mxu0 %v1606
  %3201 = vmatpush.msra.mxu0 %v1604
  %3202 = vmatpush.msra.mxu0 %v1602
  %3203 = vmatpush.msra.mxu0 %v1600
  %3204 = vmatpush.msra.mxu0 %v1598
  %3205 = vmatpush.msra.mxu0 %v1596
  %3206 = vmatmul.f32.gmra.mxu0 %v2888
  %v3207 = vpop.f32.mrf.mxu0
  %v3208 = vadd.f32 %v3188, %v3207
  %3209 = vdwg.mxu0
  %v3210 = vmax.f32 %v2968, %v3128
  %v3211 = vmax.f32 %v3048, %v3208
  %3212 = vmatpush.msra.mxu0 %v2083
  %3213 = vmatpush.msra.mxu0 %v2081
  %3214 = vmatpush.msra.mxu0 %v2079
  %3215 = vmatpush.msra.mxu0 %v2077
  %3216 = vmatpush.msra.mxu0 %v2075
  %3217 = vmatpush.msra.mxu0 %v2073
  %3218 = vmatpush.msra.mxu0 %v2071
  %3219 = vmatpush.msra.mxu0 %v2069
  %3220 = vmatpush.msra.mxu0 %v2067
  %3221 = vmatpush.msra.mxu0 %v2065
  %3222 = vmatpush.msra.mxu0 %v2063
  %3223 = vmatpush.msra.mxu0 %v2061
  %3224 = vmatpush.msra.mxu0 %v2059
  %3225 = vmatpush.msra.mxu0 %v2057
  %3226 = vmatpush.msra.mxu0 %v2055
  %3227 = vmatpush.msra.mxu0 %v2053
  %3228 = vmatmul.f32.gmra.mxu0 %v2883
  %v3229 = vpop.f32.mrf.mxu0
  %v3230 = vadd.f32 0.0, %v3229
  %3231 = vdwg.mxu0
  %3232 = vmatpush.msra.mxu0 %v2115
  %3233 = vmatpush.msra.mxu0 %v2113
  %3234 = vmatpush.msra.mxu0 %v2111
  %3235 = vmatpush.msra.mxu0 %v2109
  %3236 = vmatpush.msra.mxu0 %v2107
  %3237 = vmatpush.msra.mxu0 %v2105
  %3238 = vmatpush.msra.mxu0 %v2103
  %3239 = vmatpush.msra.mxu0 %v2101
  %3240 = vmatpush.msra.mxu0 %v2099
  %3241 = vmatpush.msra.mxu0 %v2097
  %3242 = vmatpush.msra.mxu0 %v2095
  %3243 = vmatpush.msra.mxu0 %v2093
  %3244 = vmatpush.msra.mxu0 %v2091
  %3245 = vmatpush.msra.mxu0 %v2089
  %3246 = vmatpush.msra.mxu0 %v2087
  %3247 = vmatpush.msra.mxu0 %v2085
  %3248 = vmatmul.f32.gmra.mxu0 %v2884
  %v3249 = vpop.f32.mrf.mxu0
  %v3250 = vadd.f32 %v3230, %v3249
  %3251 = vdwg.mxu0
  %3252 = vmatpush.msra.mxu0 %v2147
  %3253 = vmatpush.msra.mxu0 %v2145
  %3254 = vmatpush.msra.mxu0 %v2143
  %3255 = vmatpush.msra.mxu0 %v2141
  %3256 = vmatpush.msra.mxu0 %v2139
  %3257 = vmatpush.msra.mxu0 %v2137
  %3258 = vmatpush.msra.mxu0 %v2135
  %3259 = vmatpush.msra.mxu0 %v2133
  %3260 = vmatpush.msra.mxu0 %v2131
  %3261 = vmatpush.msra.mxu0 %v2129
  %3262 = vmatpush.msra.mxu0 %v2127
  %3263 = vmatpush.msra.mxu0 %v2125
  %3264 = vmatpush.msra.mxu0 %v2123
  %3265 = vmatpush.msra.mxu0 %v2121
  %3266 = vmatpush.msra.mxu0 %v2119
  %3267 = vmatpush.msra.mxu0 %v2117
  %3268 = vmatmul.f32.gmra.mxu0 %v2885
  %v3269 = vpop.f32.mrf.mxu0
  %v3270 = vadd.f32 %v3250, %v3269
  %3271 = vdwg.mxu0
  %3272 = vmatpush.msra.mxu0 %v2182
  %3273 = vmatpush.msra.mxu0 %v2177
  %3274 = vmatpush.msra.mxu0 %v2175
  %3275 = vmatpush.msra.mxu0 %v2173
  %3276 = vmatpush.msra.mxu0 %v2171
  %3277 = vmatpush.msra.mxu0 %v2169
  %3278 = vmatpush.msra.mxu0 %v2167
  %3279 = vmatpush.msra.mxu0 %v2165
  %3280 = vmatpush.msra.mxu0 %v2163
  %3281 = vmatpush.msra.mxu0 %v2161
  %3282 = vmatpush.msra.mxu0 %v2159
  %3283 = vmatpush.msra.mxu0 %v2157
  %3284 = vmatpush.msra.mxu0 %v2155
  %3285 = vmatpush.msra.mxu0 %v2153
  %3286 = vmatpush.msra.mxu0 %v2151
  %3287 = vmatpush.msra.mxu0 %v2149
  %3288 = vmatmul.f32.gmra.mxu0 %v2888
  %v3289 = vpop.f32.mrf.mxu0
  %v3290 = vadd.f32 %v3270, %v3289
  %3291 = vdwg.mxu0
  %3292 = vmatpush.msra.mxu0 %v2084
  %3293 = vmatpush.msra.mxu0 %v2082
  %3294 = vmatpush.msra.mxu0 %v2080
  %3295 = vmatpush.msra.mxu0 %v2078
  %3296 = vmatpush.msra.mxu0 %v2076
  %3297 = vmatpush.msra.mxu0 %v2074
  %3298 = vmatpush.msra.mxu0 %v2072
  %3299 = vmatpush.msra.mxu0 %v2070
  %3300 = vmatpush.msra.mxu0 %v2068
  %3301 = vmatpush.msra.mxu0 %v2066
  %3302 = vmatpush.msra.mxu0 %v2064
  %3303 = vmatpush.msra.mxu0 %v2062
  %3304 = vmatpush.msra.mxu0 %v2060
  %3305 = vmatpush.msra.mxu0 %v2058
  %3306 = vmatpush.msra.mxu0 %v2056
  %3307 = vmatpush.msra.mxu0 %v2054
  %3308 = vmatmul.f32.gmra.mxu0 %v2883
  %v3309 = vpop.f32.mrf.mxu0
  %v3310 = vadd.f32 0.0, %v3309
  %3311 = vdwg.mxu0
  %3312 = vmatpush.msra.mxu0 %v2116
  %3313 = vmatpush.msra.mxu0 %v2114
  %3314 = vmatpush.msra.mxu0 %v2112
  %3315 = vmatpush.msra.mxu0 %v2110
  %3316 = vmatpush.msra.mxu0 %v2108
  %3317 = vmatpush.msra.mxu0 %v2106
  %3318 = vmatpush.msra.mxu0 %v2104
  %3319 = vmatpush.msra.mxu0 %v2102
  %3320 = vmatpush.msra.mxu0 %v2100
  %3321 = vmatpush.msra.mxu0 %v2098
  %3322 = vmatpush.msra.mxu0 %v2096
  %3323 = vmatpush.msra.mxu0 %v2094
  %3324 = vmatpush.msra.mxu0 %v2092
  %3325 = vmatpush.msra.mxu0 %v2090
  %3326 = vmatpush.msra.mxu0 %v2088
  %3327 = vmatpush.msra.mxu0 %v2086
  %3328 = vmatmul.f32.gmra.mxu0 %v2884
  %v3329 = vpop.f32.mrf.mxu0
  %v3330 = vadd.f32 %v3310, %v3329
  %3331 = vdwg.mxu0
  %3332 = vmatpush.msra.mxu0 %v2148
  %3333 = vmatpush.msra.mxu0 %v2146
  %3334 = vmatpush.msra.mxu0 %v2144
  %3335 = vmatpush.msra.mxu0 %v2142
  %3336 = vmatpush.msra.mxu0 %v2140
  %3337 = vmatpush.msra.mxu0 %v2138
  %3338 = vmatpush.msra.mxu0 %v2136
  %3339 = vmatpush.msra.mxu0 %v2134
  %3340 = vmatpush.msra.mxu0 %v2132
  %3341 = vmatpush.msra.mxu0 %v2130
  %3342 = vmatpush.msra.mxu0 %v2128
  %3343 = vmatpush.msra.mxu0 %v2126
  %3344 = vmatpush.msra.mxu0 %v2124
  %3345 = vmatpush.msra.mxu0 %v2122
  %3346 = vmatpush.msra.mxu0 %v2120
  %3347 = vmatpush.msra.mxu0 %v2118
  %3348 = vmatmul.f32.gmra.mxu0 %v2885
  %v3349 = vpop.f32.mrf.mxu0
  %v3350 = vadd.f32 %v3330, %v3349
  %3351 = vdwg.mxu0
  %3352 = vmatpush.msra.mxu0 %v2185
  %3353 = vmatpush.msra.mxu0 %v2178
  %3354 = vmatpush.msra.mxu0 %v2176
  %3355 = vmatpush.msra.mxu0 %v2174
  %3356 = vmatpush.msra.mxu0 %v2172
  %3357 = vmatpush.msra.mxu0 %v2170
  %3358 = vmatpush.msra.mxu0 %v2168
  %3359 = vmatpush.msra.mxu0 %v2166
  %3360 = vmatpush.msra.mxu0 %v2164
  %3361 = vmatpush.msra.mxu0 %v2162
  %3362 = vmatpush.msra.mxu0 %v2160
  %3363 = vmatpush.msra.mxu0 %v2158
  %3364 = vmatpush.msra.mxu0 %v2156
  %3365 = vmatpush.msra.mxu0 %v2154
  %3366 = vmatpush.msra.mxu0 %v2152
  %3367 = vmatpush.msra.mxu0 %v2150
  %3368 = vmatmul.f32.gmra.mxu0 %v2888
  %v3369 = vpop.f32.mrf.mxu0
  %v3370 = vadd.f32 %v3350, %v3369
  %3371 = vdwg.mxu0
  %v3372 = vmax.f32 %v3210, %v3290
  %v3373 = vmax.f32 %v3211, %v3370
  %v3374 = vld [vmem:[%s3] sm:$0xff]
  %v3375 = vld [vmem:[%s3 + $0x8] sm:$0xff]
  %v3376 = vld [vmem:[%s3 + $0x10] sm:$0xff]
  %v3377 = vld [vmem:[%s3 + $0x18] sm:$0xff]
  %v3378 = vld [vmem:[%s3 + $0x20] sm:$0xff]
  %v3379 = vld [vmem:[%s4] sm:$0xff]
  %3382 = vrot.lane.b32.xlu0 %v2347, 127
  %v3383 = vpop.permute.xlu0 %3382
  %3384 = vrot.lane.b32.xlu0 %v2348, 127
  %v3385 = vpop.permute.xlu0 %3384
  %v3386 = vsel %vm67, %v3383, %v3385
  %vm3389 = vcmask 64512
  %v3391 = vsel %vm3389, %v3375, 0
  %3393 = vmatpush.msra.mxu0 0.0
  %3394 = vmatpush.msra.mxu0 0.0
  %3395 = vmatpush.msra.mxu0 0.0
  %3396 = vmatpush.msra.mxu0 0.0
  %3397 = vmatpush.msra.mxu0 0.0
  %3398 = vmatpush.msra.mxu0 0.0
  %3399 = vmatpush.msra.mxu0 0.0
  %3400 = vmatpush.msra.mxu0 0.0
  %3401 = vmatpush.msra.mxu0 0.0
  %3402 = vmatpush.msra.mxu0 0.0
  %3403 = vmatpush.msra.mxu0 0.0
  %3404 = vmatpush.msra.mxu0 0.0
  %3405 = vmatpush.msra.mxu0 0.0
  %3406 = vmatpush.msra.mxu0 0.0
  %3407 = vmatpush.msra.mxu0 0.0
  %3408 = vmatpush.msra.mxu0 %v3386
  %3409 = vmatmul.f32.gmra.mxu0 %v3391
  %v3410 = vpop.f32.mrf.mxu0
  %v3411 = vadd.f32 0.0, %v3410
  %3412 = vdwg.mxu0
  %3413 = vmatpush.msra.mxu0 0.0
  %3414 = vmatpush.msra.mxu0 0.0
  %3415 = vmatpush.msra.mxu0 0.0
  %3416 = vmatpush.msra.mxu0 0.0
  %3417 = vmatpush.msra.mxu0 0.0
  %3418 = vmatpush.msra.mxu0 0.0
  %3419 = vmatpush.msra.mxu0 0.0
  %3420 = vmatpush.msra.mxu0 0.0
  %3421 = vmatpush.msra.mxu0 0.0
  %3422 = vmatpush.msra.mxu0 0.0
  %3423 = vmatpush.msra.mxu0 0.0
  %3424 = vmatpush.msra.mxu0 0.0
  %3425 = vmatpush.msra.mxu0 0.0
  %3426 = vmatpush.msra.mxu0 0.0
  %3427 = vmatpush.msra.mxu0 0.0
  %3428 = vmatpush.msra.mxu0 %v3385
  %3429 = vmatmul.f32.gmra.mxu0 %v3391
  %v3430 = vpop.f32.mrf.mxu0
  %v3431 = vadd.f32 0.0, %v3430
  %3432 = vdwg.mxu0
  %v3434 = vsel %vm3389, %v3374, 0
  %3436 = vmatpush.msra.mxu0 0.0
  %3437 = vmatpush.msra.mxu0 0.0
  %3438 = vmatpush.msra.mxu0 0.0
  %3439 = vmatpush.msra.mxu0 0.0
  %3440 = vmatpush.msra.mxu0 0.0
  %3441 = vmatpush.msra.mxu0 0.0
  %3442 = vmatpush.msra.mxu0 0.0
  %3443 = vmatpush.msra.mxu0 0.0
  %3444 = vmatpush.msra.mxu0 0.0
  %3445 = vmatpush.msra.mxu0 0.0
  %3446 = vmatpush.msra.mxu0 0.0
  %3447 = vmatpush.msra.mxu0 0.0
  %3448 = vmatpush.msra.mxu0 0.0
  %3449 = vmatpush.msra.mxu0 0.0
  %3450 = vmatpush.msra.mxu0 0.0
  %3451 = vmatpush.msra.mxu0 %v2347
  %3452 = vmatmul.f32.gmra.mxu0 %v3434
  %v3453 = vpop.f32.mrf.mxu0
  %v3454 = vadd.f32 %v3411, %v3453
  %3455 = vdwg.mxu0
  %3456 = vmatpush.msra.mxu0 0.0
  %3457 = vmatpush.msra.mxu0 0.0
  %3458 = vmatpush.msra.mxu0 0.0
  %3459 = vmatpush.msra.mxu0 0.0
  %3460 = vmatpush.msra.mxu0 0.0
  %3461 = vmatpush.msra.mxu0 0.0
  %3462 = vmatpush.msra.mxu0 0.0
  %3463 = vmatpush.msra.mxu0 0.0
  %3464 = vmatpush.msra.mxu0 0.0
  %3465 = vmatpush.msra.mxu0 0.0
  %3466 = vmatpush.msra.mxu0 0.0
  %3467 = vmatpush.msra.mxu0 0.0
  %3468 = vmatpush.msra.mxu0 0.0
  %3469 = vmatpush.msra.mxu0 0.0
  %3470 = vmatpush.msra.mxu0 0.0
  %3471 = vmatpush.msra.mxu0 %v2348
  %3472 = vmatmul.f32.gmra.mxu0 %v3434
  %v3473 = vpop.f32.mrf.mxu0
  %v3474 = vadd.f32 %v3431, %v3473
  %3475 = vdwg.mxu0
  %3476 = vrot.lane.b32.xlu0 %v2347, 126
  %v3477 = vpop.permute.xlu0 %3476
  %3478 = vrot.lane.b32.xlu0 %v2348, 126
  %v3479 = vpop.permute.xlu0 %3478
  %v3480 = vsel %vm273, %v3477, %v3479
  %v3484 = vsel %vm3389, %v3376, 0
  %3486 = vmatpush.msra.mxu0 0.0
  %3487 = vmatpush.msra.mxu0 0.0
  %3488 = vmatpush.msra.mxu0 0.0
  %3489 = vmatpush.msra.mxu0 0.0
  %3490 = vmatpush.msra.mxu0 0.0
  %3491 = vmatpush.msra.mxu0 0.0
  %3492 = vmatpush.msra.mxu0 0.0
  %3493 = vmatpush.msra.mxu0 0.0
  %3494 = vmatpush.msra.mxu0 0.0
  %3495 = vmatpush.msra.mxu0 0.0
  %3496 = vmatpush.msra.mxu0 0.0
  %3497 = vmatpush.msra.mxu0 0.0
  %3498 = vmatpush.msra.mxu0 0.0
  %3499 = vmatpush.msra.mxu0 0.0
  %3500 = vmatpush.msra.mxu0 0.0
  %3501 = vmatpush.msra.mxu0 %v3480
  %3502 = vmatmul.f32.gmra.mxu0 %v3484
  %v3503 = vpop.f32.mrf.mxu0
  %v3504 = vadd.f32 0.0, %v3503
  %3505 = vdwg.mxu0
  %3506 = vmatpush.msra.mxu0 0.0
  %3507 = vmatpush.msra.mxu0 0.0
  %3508 = vmatpush.msra.mxu0 0.0
  %3509 = vmatpush.msra.mxu0 0.0
  %3510 = vmatpush.msra.mxu0 0.0
  %3511 = vmatpush.msra.mxu0 0.0
  %3512 = vmatpush.msra.mxu0 0.0
  %3513 = vmatpush.msra.mxu0 0.0
  %3514 = vmatpush.msra.mxu0 0.0
  %3515 = vmatpush.msra.mxu0 0.0
  %3516 = vmatpush.msra.mxu0 0.0
  %3517 = vmatpush.msra.mxu0 0.0
  %3518 = vmatpush.msra.mxu0 0.0
  %3519 = vmatpush.msra.mxu0 0.0
  %3520 = vmatpush.msra.mxu0 0.0
  %3521 = vmatpush.msra.mxu0 %v3479
  %3522 = vmatmul.f32.gmra.mxu0 %v3484
  %v3523 = vpop.f32.mrf.mxu0
  %v3524 = vadd.f32 0.0, %v3523
  %3525 = vdwg.mxu0
  %v3526 = vadd.f32 %v3454, %v3504
  %v3527 = vadd.f32 %v3474, %v3524
  %3528 = vrot.lane.b32.xlu0 %v2347, 125
  %v3529 = vpop.permute.xlu0 %3528
  %3530 = vrot.lane.b32.xlu0 %v2348, 125
  %v3531 = vpop.permute.xlu0 %3530
  %v3532 = vsel %vm385, %v3529, %v3531
  %v3536 = vsel %vm3389, %v3377, 0
  %3538 = vmatpush.msra.mxu0 0.0
  %3539 = vmatpush.msra.mxu0 0.0
  %3540 = vmatpush.msra.mxu0 0.0
  %3541 = vmatpush.msra.mxu0 0.0
  %3542 = vmatpush.msra.mxu0 0.0
  %3543 = vmatpush.msra.mxu0 0.0
  %3544 = vmatpush.msra.mxu0 0.0
  %3545 = vmatpush.msra.mxu0 0.0
  %3546 = vmatpush.msra.mxu0 0.0
  %3547 = vmatpush.msra.mxu0 0.0
  %3548 = vmatpush.msra.mxu0 0.0
  %3549 = vmatpush.msra.mxu0 0.0
  %3550 = vmatpush.msra.mxu0 0.0
  %3551 = vmatpush.msra.mxu0 0.0
  %3552 = vmatpush.msra.mxu0 0.0
  %3553 = vmatpush.msra.mxu0 %v3532
  %3554 = vmatmul.f32.gmra.mxu0 %v3536
  %v3555 = vpop.f32.mrf.mxu0
  %v3556 = vadd.f32 0.0, %v3555
  %3557 = vdwg.mxu0
  %3558 = vmatpush.msra.mxu0 0.0
  %3559 = vmatpush.msra.mxu0 0.0
  %3560 = vmatpush.msra.mxu0 0.0
  %3561 = vmatpush.msra.mxu0 0.0
  %3562 = vmatpush.msra.mxu0 0.0
  %3563 = vmatpush.msra.mxu0 0.0
  %3564 = vmatpush.msra.mxu0 0.0
  %3565 = vmatpush.msra.mxu0 0.0
  %3566 = vmatpush.msra.mxu0 0.0
  %3567 = vmatpush.msra.mxu0 0.0
  %3568 = vmatpush.msra.mxu0 0.0
  %3569 = vmatpush.msra.mxu0 0.0
  %3570 = vmatpush.msra.mxu0 0.0
  %3571 = vmatpush.msra.mxu0 0.0
  %3572 = vmatpush.msra.mxu0 0.0
  %3573 = vmatpush.msra.mxu0 %v3531
  %3574 = vmatmul.f32.gmra.mxu0 %v3536
  %v3575 = vpop.f32.mrf.mxu0
  %v3576 = vadd.f32 0.0, %v3575
  %3577 = vdwg.mxu0
  %v3578 = vadd.f32 %v3526, %v3556
  %v3579 = vadd.f32 %v3527, %v3576
  %3580 = vrot.lane.b32.xlu0 %v2347, 124
  %v3581 = vpop.permute.xlu0 %3580
  %3582 = vrot.lane.b32.xlu0 %v2348, 124
  %v3583 = vpop.permute.xlu0 %3582
  %v3584 = vsel %vm497, %v3581, %v3583
  %v3588 = vsel %vm3389, %v3378, 0
  %3590 = vmatpush.msra.mxu0 0.0
  %3591 = vmatpush.msra.mxu0 0.0
  %3592 = vmatpush.msra.mxu0 0.0
  %3593 = vmatpush.msra.mxu0 0.0
  %3594 = vmatpush.msra.mxu0 0.0
  %3595 = vmatpush.msra.mxu0 0.0
  %3596 = vmatpush.msra.mxu0 0.0
  %3597 = vmatpush.msra.mxu0 0.0
  %3598 = vmatpush.msra.mxu0 0.0
  %3599 = vmatpush.msra.mxu0 0.0
  %3600 = vmatpush.msra.mxu0 0.0
  %3601 = vmatpush.msra.mxu0 0.0
  %3602 = vmatpush.msra.mxu0 0.0
  %3603 = vmatpush.msra.mxu0 0.0
  %3604 = vmatpush.msra.mxu0 0.0
  %3605 = vmatpush.msra.mxu0 %v3584
  %3606 = vmatmul.f32.gmra.mxu0 %v3588
  %v3607 = vpop.f32.mrf.mxu0
  %v3608 = vadd.f32 0.0, %v3607
  %3609 = vdwg.mxu0
  %3610 = vmatpush.msra.mxu0 0.0
  %3611 = vmatpush.msra.mxu0 0.0
  %3612 = vmatpush.msra.mxu0 0.0
  %3613 = vmatpush.msra.mxu0 0.0
  %3614 = vmatpush.msra.mxu0 0.0
  %3615 = vmatpush.msra.mxu0 0.0
  %3616 = vmatpush.msra.mxu0 0.0
  %3617 = vmatpush.msra.mxu0 0.0
  %3618 = vmatpush.msra.mxu0 0.0
  %3619 = vmatpush.msra.mxu0 0.0
  %3620 = vmatpush.msra.mxu0 0.0
  %3621 = vmatpush.msra.mxu0 0.0
  %3622 = vmatpush.msra.mxu0 0.0
  %3623 = vmatpush.msra.mxu0 0.0
  %3624 = vmatpush.msra.mxu0 0.0
  %3625 = vmatpush.msra.mxu0 %v3583
  %3626 = vmatmul.f32.gmra.mxu0 %v3588
  %v3627 = vpop.f32.mrf.mxu0
  %v3628 = vadd.f32 0.0, %v3627
  %3629 = vdwg.mxu0
  %v3630 = vadd.f32 %v3578, %v3608
  %v3631 = vadd.f32 %v3579, %v3628
  %3633 = vset.pattern.permute.xlu0 0
  %3634 = vperm.xlu0 %3633, %v3379
  %v3635 = vpop.permute.xlu0 %3634
  %v3637 = vadd.f32 %v3630, %v3635
  %v3638 = vadd.f32 %v3631, %v3635
  %vm3639 = vcmp.ge.f32.partialorder %v3637, 0.0
  %vm3640 = vcmp.ge.f32.partialorder %v3638, 0.0
  %v3641 = vmul.f32 %v3637, 0.2
  %v3642 = vmul.f32 %v3638, 0.2
  %v3643 = vsel %vm3639, %v3637, %v3641
  %v3644 = vsel %vm3640, %v3638, %v3642
  %vm3645 = vcmask 302080
  %v3647 = vsel %vm3645, %v3644, 0
  %vm3649 = vcmask 1044480
  %v3651 = vsel %vm3649, %v983, 0
  %3653 = vmatpush.msra.mxu0 %v973
  %3654 = vmatpush.msra.mxu0 %v971
  %3655 = vmatpush.msra.mxu0 %v969
  %3656 = vmatpush.msra.mxu0 %v967
  %3657 = vmatpush.msra.mxu0 %v965
  %3658 = vmatpush.msra.mxu0 %v963
  %3659 = vmatpush.msra.mxu0 %v961
  %3660 = vmatpush.msra.mxu0 %v959
  %3661 = vmatpush.msra.mxu0 %v957
  %3662 = vmatpush.msra.mxu0 %v955
  %3663 = vmatpush.msra.mxu0 %v953
  %3664 = vmatpush.msra.mxu0 %v951
  %3665 = vmatpush.msra.mxu0 %v949
  %3666 = vmatpush.msra.mxu0 %v947
  %3667 = vmatpush.msra.mxu0 %v945
  %3668 = vmatpush.msra.mxu0 %v943
  %3669 = vmatmul.f32.gmra.mxu0 %v3643
  %v3670 = vpop.f32.mrf.mxu0
  %v3671 = vadd.f32 0.0, %v3670
  %3672 = vdwg.mxu0
  %3673 = vmatpush.msra.mxu0 0.0
  %3674 = vmatpush.msra.mxu0 0.0
  %3675 = vmatpush.msra.mxu0 0.0
  %3676 = vmatpush.msra.mxu0 0.0
  %3677 = vmatpush.msra.mxu0 0.0
  %3678 = vmatpush.msra.mxu0 0.0
  %3679 = vmatpush.msra.mxu0 0.0
  %3680 = vmatpush.msra.mxu0 0.0
  %3681 = vmatpush.msra.mxu0 0.0
  %3682 = vmatpush.msra.mxu0 0.0
  %3683 = vmatpush.msra.mxu0 0.0
  %3684 = vmatpush.msra.mxu0 %v3651
  %3685 = vmatpush.msra.mxu0 %v981
  %3686 = vmatpush.msra.mxu0 %v979
  %3687 = vmatpush.msra.mxu0 %v977
  %3688 = vmatpush.msra.mxu0 %v975
  %3689 = vmatmul.f32.gmra.mxu0 %v3647
  %v3690 = vpop.f32.mrf.mxu0
  %v3691 = vadd.f32 %v3671, %v3690
  %3692 = vdwg.mxu0
  %v3694 = vsel %vm3649, %v1539, 0
  %3696 = vmatpush.msra.mxu0 %v1529
  %3697 = vmatpush.msra.mxu0 %v1527
  %3698 = vmatpush.msra.mxu0 %v1525
  %3699 = vmatpush.msra.mxu0 %v1523
  %3700 = vmatpush.msra.mxu0 %v1521
  %3701 = vmatpush.msra.mxu0 %v1519
  %3702 = vmatpush.msra.mxu0 %v1517
  %3703 = vmatpush.msra.mxu0 %v1515
  %3704 = vmatpush.msra.mxu0 %v1513
  %3705 = vmatpush.msra.mxu0 %v1511
  %3706 = vmatpush.msra.mxu0 %v1509
  %3707 = vmatpush.msra.mxu0 %v1507
  %3708 = vmatpush.msra.mxu0 %v1505
  %3709 = vmatpush.msra.mxu0 %v1503
  %3710 = vmatpush.msra.mxu0 %v1501
  %3711 = vmatpush.msra.mxu0 %v1499
  %3712 = vmatmul.f32.gmra.mxu0 %v3643
  %v3713 = vpop.f32.mrf.mxu0
  %v3714 = vadd.f32 0.0, %v3713
  %3715 = vdwg.mxu0
  %3716 = vmatpush.msra.mxu0 0.0
  %3717 = vmatpush.msra.mxu0 0.0
  %3718 = vmatpush.msra.mxu0 0.0
  %3719 = vmatpush.msra.mxu0 0.0
  %3720 = vmatpush.msra.mxu0 0.0
  %3721 = vmatpush.msra.mxu0 0.0
  %3722 = vmatpush.msra.mxu0 0.0
  %3723 = vmatpush.msra.mxu0 0.0
  %3724 = vmatpush.msra.mxu0 0.0
  %3725 = vmatpush.msra.mxu0 0.0
  %3726 = vmatpush.msra.mxu0 0.0
  %3727 = vmatpush.msra.mxu0 %v3694
  %3728 = vmatpush.msra.mxu0 %v1537
  %3729 = vmatpush.msra.mxu0 %v1535
  %3730 = vmatpush.msra.mxu0 %v1533
  %3731 = vmatpush.msra.mxu0 %v1531
  %3732 = vmatmul.f32.gmra.mxu0 %v3647
  %v3733 = vpop.f32.mrf.mxu0
  %v3734 = vadd.f32 %v3714, %v3733
  %3735 = vdwg.mxu0
  %v3736 = vmax.f32 %v3691, %v3734
  %v3738 = vsel %vm3649, %v2093, 0
  %3740 = vmatpush.msra.mxu0 %v2083
  %3741 = vmatpush.msra.mxu0 %v2081
  %3742 = vmatpush.msra.mxu0 %v2079
  %3743 = vmatpush.msra.mxu0 %v2077
  %3744 = vmatpush.msra.mxu0 %v2075
  %3745 = vmatpush.msra.mxu0 %v2073
  %3746 = vmatpush.msra.mxu0 %v2071
  %3747 = vmatpush.msra.mxu0 %v2069
  %3748 = vmatpush.msra.mxu0 %v2067
  %3749 = vmatpush.msra.mxu0 %v2065
  %3750 = vmatpush.msra.mxu0 %v2063
  %3751 = vmatpush.msra.mxu0 %v2061
  %3752 = vmatpush.msra.mxu0 %v2059
  %3753 = vmatpush.msra.mxu0 %v2057
  %3754 = vmatpush.msra.mxu0 %v2055
  %3755 = vmatpush.msra.mxu0 %v2053
  %3756 = vmatmul.f32.gmra.mxu0 %v3643
  %v3757 = vpop.f32.mrf.mxu0
  %v3758 = vadd.f32 0.0, %v3757
  %3759 = vdwg.mxu0
  %3760 = vmatpush.msra.mxu0 0.0
  %3761 = vmatpush.msra.mxu0 0.0
  %3762 = vmatpush.msra.mxu0 0.0
  %3763 = vmatpush.msra.mxu0 0.0
  %3764 = vmatpush.msra.mxu0 0.0
  %3765 = vmatpush.msra.mxu0 0.0
  %3766 = vmatpush.msra.mxu0 0.0
  %3767 = vmatpush.msra.mxu0 0.0
  %3768 = vmatpush.msra.mxu0 0.0
  %3769 = vmatpush.msra.mxu0 0.0
  %3770 = vmatpush.msra.mxu0 0.0
  %3771 = vmatpush.msra.mxu0 %v3738
  %3772 = vmatpush.msra.mxu0 %v2091
  %3773 = vmatpush.msra.mxu0 %v2089
  %3774 = vmatpush.msra.mxu0 %v2087
  %3775 = vmatpush.msra.mxu0 %v2085
  %3776 = vmatmul.f32.gmra.mxu0 %v3647
  %v3777 = vpop.f32.mrf.mxu0
  %v3778 = vadd.f32 %v3758, %v3777
  %3779 = vdwg.mxu0
  %v3780 = vmax.f32 %v3736, %v3778
  %3783 = vrot.lane.b32.xlu0 %v3372, 127
  %v3784 = vpop.permute.xlu0 %3783
  %3785 = vrot.lane.b32.xlu0 %v3373, 127
  %v3786 = vpop.permute.xlu0 %3785
  %v3787 = vsel %vm67, %v3784, %v3786
  %3790 = vmatpush.msra.mxu0 0.0
  %3791 = vmatpush.msra.mxu0 0.0
  %3792 = vmatpush.msra.mxu0 0.0
  %3793 = vmatpush.msra.mxu0 0.0
  %3794 = vmatpush.msra.mxu0 0.0
  %3795 = vmatpush.msra.mxu0 0.0
  %3796 = vmatpush.msra.mxu0 0.0
  %3797 = vmatpush.msra.mxu0 0.0
  %3798 = vmatpush.msra.mxu0 0.0
  %3799 = vmatpush.msra.mxu0 0.0
  %3800 = vmatpush.msra.mxu0 0.0
  %3801 = vmatpush.msra.mxu0 0.0
  %3802 = vmatpush.msra.mxu0 0.0
  %3803 = vmatpush.msra.mxu0 0.0
  %3804 = vmatpush.msra.mxu0 0.0
  %3805 = vmatpush.msra.mxu0 %v3787
  %3806 = vmatmul.f32.gmra.mxu0 %v3391
  %v3807 = vpop.f32.mrf.mxu0
  %v3808 = vadd.f32 0.0, %v3807
  %3809 = vdwg.mxu0
  %3810 = vmatpush.msra.mxu0 0.0
  %3811 = vmatpush.msra.mxu0 0.0
  %3812 = vmatpush.msra.mxu0 0.0
  %3813 = vmatpush.msra.mxu0 0.0
  %3814 = vmatpush.msra.mxu0 0.0
  %3815 = vmatpush.msra.mxu0 0.0
  %3816 = vmatpush.msra.mxu0 0.0
  %3817 = vmatpush.msra.mxu0 0.0
  %3818 = vmatpush.msra.mxu0 0.0
  %3819 = vmatpush.msra.mxu0 0.0
  %3820 = vmatpush.msra.mxu0 0.0
  %3821 = vmatpush.msra.mxu0 0.0
  %3822 = vmatpush.msra.mxu0 0.0
  %3823 = vmatpush.msra.mxu0 0.0
  %3824 = vmatpush.msra.mxu0 0.0
  %3825 = vmatpush.msra.mxu0 %v3786
  %3826 = vmatmul.f32.gmra.mxu0 %v3391
  %v3827 = vpop.f32.mrf.mxu0
  %v3828 = vadd.f32 0.0, %v3827
  %3829 = vdwg.mxu0
  %3830 = vmatpush.msra.mxu0 0.0
  %3831 = vmatpush.msra.mxu0 0.0
  %3832 = vmatpush.msra.mxu0 0.0
  %3833 = vmatpush.msra.mxu0 0.0
  %3834 = vmatpush.msra.mxu0 0.0
  %3835 = vmatpush.msra.mxu0 0.0
  %3836 = vmatpush.msra.mxu0 0.0
  %3837 = vmatpush.msra.mxu0 0.0
  %3838 = vmatpush.msra.mxu0 0.0
  %3839 = vmatpush.msra.mxu0 0.0
  %3840 = vmatpush.msra.mxu0 0.0
  %3841 = vmatpush.msra.mxu0 0.0
  %3842 = vmatpush.msra.mxu0 0.0
  %3843 = vmatpush.msra.mxu0 0.0
  %3844 = vmatpush.msra.mxu0 0.0
  %3845 = vmatpush.msra.mxu0 %v3372
  %3846 = vmatmul.f32.gmra.mxu0 %v3434
  %v3847 = vpop.f32.mrf.mxu0
  %v3848 = vadd.f32 %v3808, %v3847
  %3849 = vdwg.mxu0
  %3850 = vmatpush.msra.mxu0 0.0
  %3851 = vmatpush.msra.mxu0 0.0
  %3852 = vmatpush.msra.mxu0 0.0
  %3853 = vmatpush.msra.mxu0 0.0
  %3854 = vmatpush.msra.mxu0 0.0
  %3855 = vmatpush.msra.mxu0 0.0
  %3856 = vmatpush.msra.mxu0 0.0
  %3857 = vmatpush.msra.mxu0 0.0
  %3858 = vmatpush.msra.mxu0 0.0
  %3859 = vmatpush.msra.mxu0 0.0
  %3860 = vmatpush.msra.mxu0 0.0
  %3861 = vmatpush.msra.mxu0 0.0
  %3862 = vmatpush.msra.mxu0 0.0
  %3863 = vmatpush.msra.mxu0 0.0
  %3864 = vmatpush.msra.mxu0 0.0
  %3865 = vmatpush.msra.mxu0 %v3373
  %3866 = vmatmul.f32.gmra.mxu0 %v3434
  %v3867 = vpop.f32.mrf.mxu0
  %v3868 = vadd.f32 %v3828, %v3867
  %3869 = vdwg.mxu0
  %3870 = vrot.lane.b32.xlu0 %v3372, 126
  %v3871 = vpop.permute.xlu0 %3870
  %3872 = vrot.lane.b32.xlu0 %v3373, 126
  %v3873 = vpop.permute.xlu0 %3872
  %v3874 = vsel %vm273, %v3871, %v3873
  %3877 = vmatpush.msra.mxu0 0.0
  %3878 = vmatpush.msra.mxu0 0.0
  %3879 = vmatpush.msra.mxu0 0.0
  %3880 = vmatpush.msra.mxu0 0.0
  %3881 = vmatpush.msra.mxu0 0.0
  %3882 = vmatpush.msra.mxu0 0.0
  %3883 = vmatpush.msra.mxu0 0.0
  %3884 = vmatpush.msra.mxu0 0.0
  %3885 = vmatpush.msra.mxu0 0.0
  %3886 = vmatpush.msra.mxu0 0.0
  %3887 = vmatpush.msra.mxu0 0.0
  %3888 = vmatpush.msra.mxu0 0.0
  %3889 = vmatpush.msra.mxu0 0.0
  %3890 = vmatpush.msra.mxu0 0.0
  %3891 = vmatpush.msra.mxu0 0.0
  %3892 = vmatpush.msra.mxu0 %v3874
  %3893 = vmatmul.f32.gmra.mxu0 %v3484
  %v3894 = vpop.f32.mrf.mxu0
  %v3895 = vadd.f32 0.0, %v3894
  %3896 = vdwg.mxu0
  %3897 = vmatpush.msra.mxu0 0.0
  %3898 = vmatpush.msra.mxu0 0.0
  %3899 = vmatpush.msra.mxu0 0.0
  %3900 = vmatpush.msra.mxu0 0.0
  %3901 = vmatpush.msra.mxu0 0.0
  %3902 = vmatpush.msra.mxu0 0.0
  %3903 = vmatpush.msra.mxu0 0.0
  %3904 = vmatpush.msra.mxu0 0.0
  %3905 = vmatpush.msra.mxu0 0.0
  %3906 = vmatpush.msra.mxu0 0.0
  %3907 = vmatpush.msra.mxu0 0.0
  %3908 = vmatpush.msra.mxu0 0.0
  %3909 = vmatpush.msra.mxu0 0.0
  %3910 = vmatpush.msra.mxu0 0.0
  %3911 = vmatpush.msra.mxu0 0.0
  %3912 = vmatpush.msra.mxu0 %v3873
  %3913 = vmatmul.f32.gmra.mxu0 %v3484
  %v3914 = vpop.f32.mrf.mxu0
  %v3915 = vadd.f32 0.0, %v3914
  %3916 = vdwg.mxu0
  %v3917 = vadd.f32 %v3848, %v3895
  %v3918 = vadd.f32 %v3868, %v3915
  %3919 = vrot.lane.b32.xlu0 %v3372, 125
  %v3920 = vpop.permute.xlu0 %3919
  %3921 = vrot.lane.b32.xlu0 %v3373, 125
  %v3922 = vpop.permute.xlu0 %3921
  %v3923 = vsel %vm385, %v3920, %v3922
  %3926 = vmatpush.msra.mxu0 0.0
  %3927 = vmatpush.msra.mxu0 0.0
  %3928 = vmatpush.msra.mxu0 0.0
  %3929 = vmatpush.msra.mxu0 0.0
  %3930 = vmatpush.msra.mxu0 0.0
  %3931 = vmatpush.msra.mxu0 0.0
  %3932 = vmatpush.msra.mxu0 0.0
  %3933 = vmatpush.msra.mxu0 0.0
  %3934 = vmatpush.msra.mxu0 0.0
  %3935 = vmatpush.msra.mxu0 0.0
  %3936 = vmatpush.msra.mxu0 0.0
  %3937 = vmatpush.msra.mxu0 0.0
  %3938 = vmatpush.msra.mxu0 0.0
  %3939 = vmatpush.msra.mxu0 0.0
  %3940 = vmatpush.msra.mxu0 0.0
  %3941 = vmatpush.msra.mxu0 %v3923
  %3942 = vmatmul.f32.gmra.mxu0 %v3536
  %v3943 = vpop.f32.mrf.mxu0
  %v3944 = vadd.f32 0.0, %v3943
  %3945 = vdwg.mxu0
  %3946 = vmatpush.msra.mxu0 0.0
  %3947 = vmatpush.msra.mxu0 0.0
  %3948 = vmatpush.msra.mxu0 0.0
  %3949 = vmatpush.msra.mxu0 0.0
  %3950 = vmatpush.msra.mxu0 0.0
  %3951 = vmatpush.msra.mxu0 0.0
  %3952 = vmatpush.msra.mxu0 0.0
  %3953 = vmatpush.msra.mxu0 0.0
  %3954 = vmatpush.msra.mxu0 0.0
  %3955 = vmatpush.msra.mxu0 0.0
  %3956 = vmatpush.msra.mxu0 0.0
  %3957 = vmatpush.msra.mxu0 0.0
  %3958 = vmatpush.msra.mxu0 0.0
  %3959 = vmatpush.msra.mxu0 0.0
  %3960 = vmatpush.msra.mxu0 0.0
  %3961 = vmatpush.msra.mxu0 %v3922
  %3962 = vmatmul.f32.gmra.mxu0 %v3536
  %v3963 = vpop.f32.mrf.mxu0
  %v3964 = vadd.f32 0.0, %v3963
  %3965 = vdwg.mxu0
  %v3966 = vadd.f32 %v3917, %v3944
  %v3967 = vadd.f32 %v3918, %v3964
  %3968 = vrot.lane.b32.xlu0 %v3372, 124
  %v3969 = vpop.permute.xlu0 %3968
  %3970 = vrot.lane.b32.xlu0 %v3373, 124
  %v3971 = vpop.permute.xlu0 %3970
  %v3972 = vsel %vm497, %v3969, %v3971
  %3975 = vmatpush.msra.mxu0 0.0
  %3976 = vmatpush.msra.mxu0 0.0
  %3977 = vmatpush.msra.mxu0 0.0
  %3978 = vmatpush.msra.mxu0 0.0
  %3979 = vmatpush.msra.mxu0 0.0
  %3980 = vmatpush.msra.mxu0 0.0
  %3981 = vmatpush.msra.mxu0 0.0
  %3982 = vmatpush.msra.mxu0 0.0
  %3983 = vmatpush.msra.mxu0 0.0
  %3984 = vmatpush.msra.mxu0 0.0
  %3985 = vmatpush.msra.mxu0 0.0
  %3986 = vmatpush.msra.mxu0 0.0
  %3987 = vmatpush.msra.mxu0 0.0
  %3988 = vmatpush.msra.mxu0 0.0
  %3989 = vmatpush.msra.mxu0 0.0
  %3990 = vmatpush.msra.mxu0 %v3972
  %3991 = vmatmul.f32.gmra.mxu0 %v3588
  %v3992 = vpop.f32.mrf.mxu0
  %v3993 = vadd.f32 0.0, %v3992
  %3994 = vdwg.mxu0
  %3995 = vmatpush.msra.mxu0 0.0
  %3996 = vmatpush.msra.mxu0 0.0
  %3997 = vmatpush.msra.mxu0 0.0
  %3998 = vmatpush.msra.mxu0 0.0
  %3999 = vmatpush.msra.mxu0 0.0
  %4000 = vmatpush.msra.mxu0 0.0
  %4001 = vmatpush.msra.mxu0 0.0
  %4002 = vmatpush.msra.mxu0 0.0
  %4003 = vmatpush.msra.mxu0 0.0
  %4004 = vmatpush.msra.mxu0 0.0
  %4005 = vmatpush.msra.mxu0 0.0
  %4006 = vmatpush.msra.mxu0 0.0
  %4007 = vmatpush.msra.mxu0 0.0
  %4008 = vmatpush.msra.mxu0 0.0
  %4009 = vmatpush.msra.mxu0 0.0
  %4010 = vmatpush.msra.mxu0 %v3971
  %4011 = vmatmul.f32.gmra.mxu0 %v3588
  %v4012 = vpop.f32.mrf.mxu0
  %v4013 = vadd.f32 0.0, %v4012
  %4014 = vdwg.mxu0
  %v4015 = vadd.f32 %v3966, %v3993
  %v4016 = vadd.f32 %v3967, %v4013
  %v4017 = vadd.f32 %v4015, %v3635
  %v4018 = vadd.f32 %v4016, %v3635
  %vm4019 = vcmp.ge.f32.partialorder %v4017, 0.0
  %vm4020 = vcmp.ge.f32.partialorder %v4018, 0.0
  %v4021 = vmul.f32 %v4017, 0.2
  %v4022 = vmul.f32 %v4018, 0.2
  %v4023 = vsel %vm4019, %v4017, %v4021
  %v4024 = vsel %vm4020, %v4018, %v4022
  %v4026 = vsel %vm3645, %v4024, 0
  %4028 = vmatpush.msra.mxu0 %v973
  %4029 = vmatpush.msra.mxu0 %v971
  %4030 = vmatpush.msra.mxu0 %v969
  %4031 = vmatpush.msra.mxu0 %v967
  %4032 = vmatpush.msra.mxu0 %v965
  %4033 = vmatpush.msra.mxu0 %v963
  %4034 = vmatpush.msra.mxu0 %v961
  %4035 = vmatpush.msra.mxu0 %v959
  %4036 = vmatpush.msra.mxu0 %v957
  %4037 = vmatpush.msra.mxu0 %v955
  %4038 = vmatpush.msra.mxu0 %v953
  %4039 = vmatpush.msra.mxu0 %v951
  %4040 = vmatpush.msra.mxu0 %v949
  %4041 = vmatpush.msra.mxu0 %v947
  %4042 = vmatpush.msra.mxu0 %v945
  %4043 = vmatpush.msra.mxu0 %v943
  %4044 = vmatmul.f32.gmra.mxu0 %v4023
  %v4045 = vpop.f32.mrf.mxu0
  %v4046 = vadd.f32 0.0, %v4045
  %4047 = vdwg.mxu0
  %4048 = vmatpush.msra.mxu0 0.0
  %4049 = vmatpush.msra.mxu0 0.0
  %4050 = vmatpush.msra.mxu0 0.0
  %4051 = vmatpush.msra.mxu0 0.0
  %4052 = vmatpush.msra.mxu0 0.0
  %4053 = vmatpush.msra.mxu0 0.0
  %4054 = vmatpush.msra.mxu0 0.0
  %4055 = vmatpush.msra.mxu0 0.0
  %4056 = vmatpush.msra.mxu0 0.0
  %4057 = vmatpush.msra.mxu0 0.0
  %4058 = vmatpush.msra.mxu0 0.0
  %4059 = vmatpush.msra.mxu0 %v3651
  %4060 = vmatpush.msra.mxu0 %v981
  %4061 = vmatpush.msra.mxu0 %v979
  %4062 = vmatpush.msra.mxu0 %v977
  %4063 = vmatpush.msra.mxu0 %v975
  %4064 = vmatmul.f32.gmra.mxu0 %v4026
  %v4065 = vpop.f32.mrf.mxu0
  %v4066 = vadd.f32 %v4046, %v4065
  %4067 = vdwg.mxu0
  %4068 = vmatpush.msra.mxu0 %v1529
  %4069 = vmatpush.msra.mxu0 %v1527
  %4070 = vmatpush.msra.mxu0 %v1525
  %4071 = vmatpush.msra.mxu0 %v1523
  %4072 = vmatpush.msra.mxu0 %v1521
  %4073 = vmatpush.msra.mxu0 %v1519
  %4074 = vmatpush.msra.mxu0 %v1517
  %4075 = vmatpush.msra.mxu0 %v1515
  %4076 = vmatpush.msra.mxu0 %v1513
  %4077 = vmatpush.msra.mxu0 %v1511
  %4078 = vmatpush.msra.mxu0 %v1509
  %4079 = vmatpush.msra.mxu0 %v1507
  %4080 = vmatpush.msra.mxu0 %v1505
  %4081 = vmatpush.msra.mxu0 %v1503
  %4082 = vmatpush.msra.mxu0 %v1501
  %4083 = vmatpush.msra.mxu0 %v1499
  %4084 = vmatmul.f32.gmra.mxu0 %v4023
  %v4085 = vpop.f32.mrf.mxu0
  %v4086 = vadd.f32 0.0, %v4085
  %4087 = vdwg.mxu0
  %4088 = vmatpush.msra.mxu0 0.0
  %4089 = vmatpush.msra.mxu0 0.0
  %4090 = vmatpush.msra.mxu0 0.0
  %4091 = vmatpush.msra.mxu0 0.0
  %4092 = vmatpush.msra.mxu0 0.0
  %4093 = vmatpush.msra.mxu0 0.0
  %4094 = vmatpush.msra.mxu0 0.0
  %4095 = vmatpush.msra.mxu0 0.0
  %4096 = vmatpush.msra.mxu0 0.0
  %4097 = vmatpush.msra.mxu0 0.0
  %4098 = vmatpush.msra.mxu0 0.0
  %4099 = vmatpush.msra.mxu0 %v3694
  %4100 = vmatpush.msra.mxu0 %v1537
  %4101 = vmatpush.msra.mxu0 %v1535
  %4102 = vmatpush.msra.mxu0 %v1533
  %4103 = vmatpush.msra.mxu0 %v1531
  %4104 = vmatmul.f32.gmra.mxu0 %v4026
  %v4105 = vpop.f32.mrf.mxu0
  %v4106 = vadd.f32 %v4086, %v4105
  %4107 = vdwg.mxu0
  %v4108 = vmax.f32 %v4066, %v4106
  %4109 = vmatpush.msra.mxu0 %v2083
  %4110 = vmatpush.msra.mxu0 %v2081
  %4111 = vmatpush.msra.mxu0 %v2079
  %4112 = vmatpush.msra.mxu0 %v2077
  %4113 = vmatpush.msra.mxu0 %v2075
  %4114 = vmatpush.msra.mxu0 %v2073
  %4115 = vmatpush.msra.mxu0 %v2071
  %4116 = vmatpush.msra.mxu0 %v2069
  %4117 = vmatpush.msra.mxu0 %v2067
  %4118 = vmatpush.msra.mxu0 %v2065
  %4119 = vmatpush.msra.mxu0 %v2063
  %4120 = vmatpush.msra.mxu0 %v2061
  %4121 = vmatpush.msra.mxu0 %v2059
  %4122 = vmatpush.msra.mxu0 %v2057
  %4123 = vmatpush.msra.mxu0 %v2055
  %4124 = vmatpush.msra.mxu0 %v2053
  %4125 = vmatmul.f32.gmra.mxu0 %v4023
  %v4126 = vpop.f32.mrf.mxu0
  %v4127 = vadd.f32 0.0, %v4126
  %4128 = vdwg.mxu0
  %4129 = vmatpush.msra.mxu0 0.0
  %4130 = vmatpush.msra.mxu0 0.0
  %4131 = vmatpush.msra.mxu0 0.0
  %4132 = vmatpush.msra.mxu0 0.0
  %4133 = vmatpush.msra.mxu0 0.0
  %4134 = vmatpush.msra.mxu0 0.0
  %4135 = vmatpush.msra.mxu0 0.0
  %4136 = vmatpush.msra.mxu0 0.0
  %4137 = vmatpush.msra.mxu0 0.0
  %4138 = vmatpush.msra.mxu0 0.0
  %4139 = vmatpush.msra.mxu0 0.0
  %4140 = vmatpush.msra.mxu0 %v3738
  %4141 = vmatpush.msra.mxu0 %v2091
  %4142 = vmatpush.msra.mxu0 %v2089
  %4143 = vmatpush.msra.mxu0 %v2087
  %4144 = vmatpush.msra.mxu0 %v2085
  %4145 = vmatmul.f32.gmra.mxu0 %v4026
  %v4146 = vpop.f32.mrf.mxu0
  %v4147 = vadd.f32 %v4127, %v4146
  %4148 = vdwg.mxu0
  %v4149 = vmax.f32 %v4108, %v4147
  %v4150 = vld [vmem:[%s5] sm:$0xff]
  %v4151 = vld [vmem:[%s5 + $0x8] sm:$0xff]
  %v4152 = vld [vmem:[%s5 + $0x10] sm:$0xff]
  %v4153 = vld [vmem:[%s5 + $0x18] sm:$0xff]
  %v4154 = vld [vmem:[%s5 + $0x20] sm:$0xff]
  %v4155 = vld [vmem:[%s6] sm:$0xff]
  %4157 = vrot.lane.b32.xlu0 %v3780, 127
  %v4158 = vpop.permute.xlu0 %4157
  %v4161 = vsel %vm3389, %v4151, 0
  %4163 = vmatpush.msra.mxu0 0.0
  %4164 = vmatpush.msra.mxu0 0.0
  %4165 = vmatpush.msra.mxu0 0.0
  %4166 = vmatpush.msra.mxu0 0.0
  %4167 = vmatpush.msra.mxu0 0.0
  %4168 = vmatpush.msra.mxu0 0.0
  %4169 = vmatpush.msra.mxu0 0.0
  %4170 = vmatpush.msra.mxu0 0.0
  %4171 = vmatpush.msra.mxu0 0.0
  %4172 = vmatpush.msra.mxu0 0.0
  %4173 = vmatpush.msra.mxu0 0.0
  %4174 = vmatpush.msra.mxu0 0.0
  %4175 = vmatpush.msra.mxu0 0.0
  %4176 = vmatpush.msra.mxu0 0.0
  %4177 = vmatpush.msra.mxu0 0.0
  %4178 = vmatpush.msra.mxu0 %v4158
  %4179 = vmatmul.f32.gmra.mxu0 %v4161
  %v4180 = vpop.f32.mrf.mxu0
  %v4181 = vadd.f32 0.0, %v4180
  %4182 = vdwg.mxu0
  %v4184 = vsel %vm3389, %v4150, 0
  %4186 = vmatpush.msra.mxu0 0.0
  %4187 = vmatpush.msra.mxu0 0.0
  %4188 = vmatpush.msra.mxu0 0.0
  %4189 = vmatpush.msra.mxu0 0.0
  %4190 = vmatpush.msra.mxu0 0.0
  %4191 = vmatpush.msra.mxu0 0.0
  %4192 = vmatpush.msra.mxu0 0.0
  %4193 = vmatpush.msra.mxu0 0.0
  %4194 = vmatpush.msra.mxu0 0.0
  %4195 = vmatpush.msra.mxu0 0.0
  %4196 = vmatpush.msra.mxu0 0.0
  %4197 = vmatpush.msra.mxu0 0.0
  %4198 = vmatpush.msra.mxu0 0.0
  %4199 = vmatpush.msra.mxu0 0.0
  %4200 = vmatpush.msra.mxu0 0.0
  %4201 = vmatpush.msra.mxu0 %v3780
  %4202 = vmatmul.f32.gmra.mxu0 %v4184
  %v4203 = vpop.f32.mrf.mxu0
  %v4204 = vadd.f32 %v4181, %v4203
  %4205 = vdwg.mxu0
  %4206 = vrot.lane.b32.xlu0 %v3780, 126
  %v4207 = vpop.permute.xlu0 %4206
  %v4210 = vsel %vm3389, %v4152, 0
  %4212 = vmatpush.msra.mxu0 0.0
  %4213 = vmatpush.msra.mxu0 0.0
  %4214 = vmatpush.msra.mxu0 0.0
  %4215 = vmatpush.msra.mxu0 0.0
  %4216 = vmatpush.msra.mxu0 0.0
  %4217 = vmatpush.msra.mxu0 0.0
  %4218 = vmatpush.msra.mxu0 0.0
  %4219 = vmatpush.msra.mxu0 0.0
  %4220 = vmatpush.msra.mxu0 0.0
  %4221 = vmatpush.msra.mxu0 0.0
  %4222 = vmatpush.msra.mxu0 0.0
  %4223 = vmatpush.msra.mxu0 0.0
  %4224 = vmatpush.msra.mxu0 0.0
  %4225 = vmatpush.msra.mxu0 0.0
  %4226 = vmatpush.msra.mxu0 0.0
  %4227 = vmatpush.msra.mxu0 %v4207
  %4228 = vmatmul.f32.gmra.mxu0 %v4210
  %v4229 = vpop.f32.mrf.mxu0
  %v4230 = vadd.f32 0.0, %v4229
  %4231 = vdwg.mxu0
  %v4232 = vadd.f32 %v4204, %v4230
  %4233 = vrot.lane.b32.xlu0 %v3780, 125
  %v4234 = vpop.permute.xlu0 %4233
  %v4237 = vsel %vm3389, %v4153, 0
  %4239 = vmatpush.msra.mxu0 0.0
  %4240 = vmatpush.msra.mxu0 0.0
  %4241 = vmatpush.msra.mxu0 0.0
  %4242 = vmatpush.msra.mxu0 0.0
  %4243 = vmatpush.msra.mxu0 0.0
  %4244 = vmatpush.msra.mxu0 0.0
  %4245 = vmatpush.msra.mxu0 0.0
  %4246 = vmatpush.msra.mxu0 0.0
  %4247 = vmatpush.msra.mxu0 0.0
  %4248 = vmatpush.msra.mxu0 0.0
  %4249 = vmatpush.msra.mxu0 0.0
  %4250 = vmatpush.msra.mxu0 0.0
  %4251 = vmatpush.msra.mxu0 0.0
  %4252 = vmatpush.msra.mxu0 0.0
  %4253 = vmatpush.msra.mxu0 0.0
  %4254 = vmatpush.msra.mxu0 %v4234
  %4255 = vmatmul.f32.gmra.mxu0 %v4237
  %v4256 = vpop.f32.mrf.mxu0
  %v4257 = vadd.f32 0.0, %v4256
  %4258 = vdwg.mxu0
  %v4259 = vadd.f32 %v4232, %v4257
  %4260 = vrot.lane.b32.xlu0 %v3780, 124
  %v4261 = vpop.permute.xlu0 %4260
  %v4264 = vsel %vm3389, %v4154, 0
  %4266 = vmatpush.msra.mxu0 0.0
  %4267 = vmatpush.msra.mxu0 0.0
  %4268 = vmatpush.msra.mxu0 0.0
  %4269 = vmatpush.msra.mxu0 0.0
  %4270 = vmatpush.msra.mxu0 0.0
  %4271 = vmatpush.msra.mxu0 0.0
  %4272 = vmatpush.msra.mxu0 0.0
  %4273 = vmatpush.msra.mxu0 0.0
  %4274 = vmatpush.msra.mxu0 0.0
  %4275 = vmatpush.msra.mxu0 0.0
  %4276 = vmatpush.msra.mxu0 0.0
  %4277 = vmatpush.msra.mxu0 0.0
  %4278 = vmatpush.msra.mxu0 0.0
  %4279 = vmatpush.msra.mxu0 0.0
  %4280 = vmatpush.msra.mxu0 0.0
  %4281 = vmatpush.msra.mxu0 %v4261
  %4282 = vmatmul.f32.gmra.mxu0 %v4264
  %v4283 = vpop.f32.mrf.mxu0
  %v4284 = vadd.f32 0.0, %v4283
  %4285 = vdwg.mxu0
  %v4286 = vadd.f32 %v4259, %v4284
  %4288 = vset.pattern.permute.xlu0 0
  %4289 = vperm.xlu0 %4288, %v4155
  %v4290 = vpop.permute.xlu0 %4289
  %v4292 = vadd.f32 %v4286, %v4290
  %vm4293 = vcmp.ge.f32.partialorder %v4292, 0.0
  %v4294 = vmul.f32 %v4292, 0.2
  %v4295 = vsel %vm4293, %v4292, %v4294
  %vm4296 = vcmask 416768
  %v4298 = vsel %vm4296, %v4295, 0
  %vm4300 = vcmask 1042432
  %v4302 = vsel %vm4300, %v955, 0
  %4304 = vmatpush.msra.mxu0 0.0
  %4305 = vmatpush.msra.mxu0 0.0
  %4306 = vmatpush.msra.mxu0 0.0
  %4307 = vmatpush.msra.mxu0 0.0
  %4308 = vmatpush.msra.mxu0 0.0
  %4309 = vmatpush.msra.mxu0 0.0
  %4310 = vmatpush.msra.mxu0 0.0
  %4311 = vmatpush.msra.mxu0 0.0
  %4312 = vmatpush.msra.mxu0 0.0
  %4313 = vmatpush.msra.mxu0 %v4302
  %4314 = vmatpush.msra.mxu0 %v953
  %4315 = vmatpush.msra.mxu0 %v951
  %4316 = vmatpush.msra.mxu0 %v949
  %4317 = vmatpush.msra.mxu0 %v947
  %4318 = vmatpush.msra.mxu0 %v945
  %4319 = vmatpush.msra.mxu0 %v943
  %4320 = vmatmul.f32.gmra.mxu0 %v4298
  %v4321 = vpop.f32.mrf.mxu0
  %v4322 = vadd.f32 0.0, %v4321
  %4323 = vdwg.mxu0
  %v4325 = vsel %vm4300, %v1511, 0
  %4327 = vmatpush.msra.mxu0 0.0
  %4328 = vmatpush.msra.mxu0 0.0
  %4329 = vmatpush.msra.mxu0 0.0
  %4330 = vmatpush.msra.mxu0 0.0
  %4331 = vmatpush.msra.mxu0 0.0
  %4332 = vmatpush.msra.mxu0 0.0
  %4333 = vmatpush.msra.mxu0 0.0
  %4334 = vmatpush.msra.mxu0 0.0
  %4335 = vmatpush.msra.mxu0 0.0
  %4336 = vmatpush.msra.mxu0 %v4325
  %4337 = vmatpush.msra.mxu0 %v1509
  %4338 = vmatpush.msra.mxu0 %v1507
  %4339 = vmatpush.msra.mxu0 %v1505
  %4340 = vmatpush.msra.mxu0 %v1503
  %4341 = vmatpush.msra.mxu0 %v1501
  %4342 = vmatpush.msra.mxu0 %v1499
  %4343 = vmatmul.f32.gmra.mxu0 %v4298
  %v4344 = vpop.f32.mrf.mxu0
  %v4345 = vadd.f32 0.0, %v4344
  %4346 = vdwg.mxu0
  %v4347 = vmax.f32 %v4322, %v4345
  %v4349 = vsel %vm4300, %v2065, 0
  %4351 = vmatpush.msra.mxu0 0.0
  %4352 = vmatpush.msra.mxu0 0.0
  %4353 = vmatpush.msra.mxu0 0.0
  %4354 = vmatpush.msra.mxu0 0.0
  %4355 = vmatpush.msra.mxu0 0.0
  %4356 = vmatpush.msra.mxu0 0.0
  %4357 = vmatpush.msra.mxu0 0.0
  %4358 = vmatpush.msra.mxu0 0.0
  %4359 = vmatpush.msra.mxu0 0.0
  %4360 = vmatpush.msra.mxu0 %v4349
  %4361 = vmatpush.msra.mxu0 %v2063
  %4362 = vmatpush.msra.mxu0 %v2061
  %4363 = vmatpush.msra.mxu0 %v2059
  %4364 = vmatpush.msra.mxu0 %v2057
  %4365 = vmatpush.msra.mxu0 %v2055
  %4366 = vmatpush.msra.mxu0 %v2053
  %4367 = vmatmul.f32.gmra.mxu0 %v4298
  %v4368 = vpop.f32.mrf.mxu0
  %v4369 = vadd.f32 0.0, %v4368
  %4370 = vdwg.mxu0
  %v4371 = vmax.f32 %v4347, %v4369
  %4373 = vrot.lane.b32.xlu0 %v4149, 127
  %v4374 = vpop.permute.xlu0 %4373
  %4376 = vmatpush.msra.mxu0 0.0
  %4377 = vmatpush.msra.mxu0 0.0
  %4378 = vmatpush.msra.mxu0 0.0
  %4379 = vmatpush.msra.mxu0 0.0
  %4380 = vmatpush.msra.mxu0 0.0
  %4381 = vmatpush.msra.mxu0 0.0
  %4382 = vmatpush.msra.mxu0 0.0
  %4383 = vmatpush.msra.mxu0 0.0
  %4384 = vmatpush.msra.mxu0 0.0
  %4385 = vmatpush.msra.mxu0 0.0
  %4386 = vmatpush.msra.mxu0 0.0
  %4387 = vmatpush.msra.mxu0 0.0
  %4388 = vmatpush.msra.mxu0 0.0
  %4389 = vmatpush.msra.mxu0 0.0
  %4390 = vmatpush.msra.mxu0 0.0
  %4391 = vmatpush.msra.mxu0 %v4374
  %4392 = vmatmul.f32.gmra.mxu0 %v4161
  %v4393 = vpop.f32.mrf.mxu0
  %v4394 = vadd.f32 0.0, %v4393
  %4395 = vdwg.mxu0
  %4396 = vmatpush.msra.mxu0 0.0
  %4397 = vmatpush.msra.mxu0 0.0
  %4398 = vmatpush.msra.mxu0 0.0
  %4399 = vmatpush.msra.mxu0 0.0
  %4400 = vmatpush.msra.mxu0 0.0
  %4401 = vmatpush.msra.mxu0 0.0
  %4402 = vmatpush.msra.mxu0 0.0
  %4403 = vmatpush.msra.mxu0 0.0
  %4404 = vmatpush.msra.mxu0 0.0
  %4405 = vmatpush.msra.mxu0 0.0
  %4406 = vmatpush.msra.mxu0 0.0
  %4407 = vmatpush.msra.mxu0 0.0
  %4408 = vmatpush.msra.mxu0 0.0
  %4409 = vmatpush.msra.mxu0 0.0
  %4410 = vmatpush.msra.mxu0 0.0
  %4411 = vmatpush.msra.mxu0 %v4149
  %4412 = vmatmul.f32.gmra.mxu0 %v4184
  %v4413 = vpop.f32.mrf.mxu0
  %v4414 = vadd.f32 %v4394, %v4413
  %4415 = vdwg.mxu0
  %4416 = vrot.lane.b32.xlu0 %v4149, 126
  %v4417 = vpop.permute.xlu0 %4416
  %4419 = vmatpush.msra.mxu0 0.0
  %4420 = vmatpush.msra.mxu0 0.0
  %4421 = vmatpush.msra.mxu0 0.0
  %4422 = vmatpush.msra.mxu0 0.0
  %4423 = vmatpush.msra.mxu0 0.0
  %4424 = vmatpush.msra.mxu0 0.0
  %4425 = vmatpush.msra.mxu0 0.0
  %4426 = vmatpush.msra.mxu0 0.0
  %4427 = vmatpush.msra.mxu0 0.0
  %4428 = vmatpush.msra.mxu0 0.0
  %4429 = vmatpush.msra.mxu0 0.0
  %4430 = vmatpush.msra.mxu0 0.0
  %4431 = vmatpush.msra.mxu0 0.0
  %4432 = vmatpush.msra.mxu0 0.0
  %4433 = vmatpush.msra.mxu0 0.0
  %4434 = vmatpush.msra.mxu0 %v4417
  %4435 = vmatmul.f32.gmra.mxu0 %v4210
  %v4436 = vpop.f32.mrf.mxu0
  %v4437 = vadd.f32 0.0, %v4436
  %4438 = vdwg.mxu0
  %v4439 = vadd.f32 %v4414, %v4437
  %4440 = vrot.lane.b32.xlu0 %v4149, 125
  %v4441 = vpop.permute.xlu0 %4440
  %4443 = vmatpush.msra.mxu0 0.0
  %4444 = vmatpush.msra.mxu0 0.0
  %4445 = vmatpush.msra.mxu0 0.0
  %4446 = vmatpush.msra.mxu0 0.0
  %4447 = vmatpush.msra.mxu0 0.0
  %4448 = vmatpush.msra.mxu0 0.0
  %4449 = vmatpush.msra.mxu0 0.0
  %4450 = vmatpush.msra.mxu0 0.0
  %4451 = vmatpush.msra.mxu0 0.0
  %4452 = vmatpush.msra.mxu0 0.0
  %4453 = vmatpush.msra.mxu0 0.0
  %4454 = vmatpush.msra.mxu0 0.0
  %4455 = vmatpush.msra.mxu0 0.0
  %4456 = vmatpush.msra.mxu0 0.0
  %4457 = vmatpush.msra.mxu0 0.0
  %4458 = vmatpush.msra.mxu0 %v4441
  %4459 = vmatmul.f32.gmra.mxu0 %v4237
  %v4460 = vpop.f32.mrf.mxu0
  %v4461 = vadd.f32 0.0, %v4460
  %4462 = vdwg.mxu0
  %v4463 = vadd.f32 %v4439, %v4461
  %4464 = vrot.lane.b32.xlu0 %v4149, 124
  %v4465 = vpop.permute.xlu0 %4464
  %4467 = vmatpush.msra.mxu0 0.0
  %4468 = vmatpush.msra.mxu0 0.0
  %4469 = vmatpush.msra.mxu0 0.0
  %4470 = vmatpush.msra.mxu0 0.0
  %4471 = vmatpush.msra.mxu0 0.0
  %4472 = vmatpush.msra.mxu0 0.0
  %4473 = vmatpush.msra.mxu0 0.0
  %4474 = vmatpush.msra.mxu0 0.0
  %4475 = vmatpush.msra.mxu0 0.0
  %4476 = vmatpush.msra.mxu0 0.0
  %4477 = vmatpush.msra.mxu0 0.0
  %4478 = vmatpush.msra.mxu0 0.0
  %4479 = vmatpush.msra.mxu0 0.0
  %4480 = vmatpush.msra.mxu0 0.0
  %4481 = vmatpush.msra.mxu0 0.0
  %4482 = vmatpush.msra.mxu0 %v4465
  %4483 = vmatmul.f32.gmra.mxu0 %v4264
  %v4484 = vpop.f32.mrf.mxu0
  %v4485 = vadd.f32 0.0, %v4484
  %4486 = vdwg.mxu0
  %v4487 = vadd.f32 %v4463, %v4485
  %v4488 = vadd.f32 %v4487, %v4290
  %vm4489 = vcmp.ge.f32.partialorder %v4488, 0.0
  %v4490 = vmul.f32 %v4488, 0.2
  %v4491 = vsel %vm4489, %v4488, %v4490
  %v4493 = vsel %vm4296, %v4491, 0
  %4495 = vmatpush.msra.mxu0 0.0
  %4496 = vmatpush.msra.mxu0 0.0
  %4497 = vmatpush.msra.mxu0 0.0
  %4498 = vmatpush.msra.mxu0 0.0
  %4499 = vmatpush.msra.mxu0 0.0
  %4500 = vmatpush.msra.mxu0 0.0
  %4501 = vmatpush.msra.mxu0 0.0
  %4502 = vmatpush.msra.mxu0 0.0
  %4503 = vmatpush.msra.mxu0 0.0
  %4504 = vmatpush.msra.mxu0 %v4302
  %4505 = vmatpush.msra.mxu0 %v953
  %4506 = vmatpush.msra.mxu0 %v951
  %4507 = vmatpush.msra.mxu0 %v949
  %4508 = vmatpush.msra.mxu0 %v947
  %4509 = vmatpush.msra.mxu0 %v945
  %4510 = vmatpush.msra.mxu0 %v943
  %4511 = vmatmul.f32.gmra.mxu0 %v4493
  %v4512 = vpop.f32.mrf.mxu0
  %v4513 = vadd.f32 0.0, %v4512
  %4514 = vdwg.mxu0
  %4515 = vmatpush.msra.mxu0 0.0
  %4516 = vmatpush.msra.mxu0 0.0
  %4517 = vmatpush.msra.mxu0 0.0
  %4518 = vmatpush.msra.mxu0 0.0
  %4519 = vmatpush.msra.mxu0 0.0
  %4520 = vmatpush.msra.mxu0 0.0
  %4521 = vmatpush.msra.mxu0 0.0
  %4522 = vmatpush.msra.mxu0 0.0
  %4523 = vmatpush.msra.mxu0 0.0
  %4524 = vmatpush.msra.mxu0 %v4325
  %4525 = vmatpush.msra.mxu0 %v1509
  %4526 = vmatpush.msra.mxu0 %v1507
  %4527 = vmatpush.msra.mxu0 %v1505
  %4528 = vmatpush.msra.mxu0 %v1503
  %4529 = vmatpush.msra.mxu0 %v1501
  %4530 = vmatpush.msra.mxu0 %v1499
  %4531 = vmatmul.f32.gmra.mxu0 %v4493
  %v4532 = vpop.f32.mrf.mxu0
  %v4533 = vadd.f32 0.0, %v4532
  %4534 = vdwg.mxu0
  %v4535 = vmax.f32 %v4513, %v4533
  %4536 = vmatpush.msra.mxu0 0.0
  %4537 = vmatpush.msra.mxu0 0.0
  %4538 = vmatpush.msra.mxu0 0.0
  %4539 = vmatpush.msra.mxu0 0.0
  %4540 = vmatpush.msra.mxu0 0.0
  %4541 = vmatpush.msra.mxu0 0.0
  %4542 = vmatpush.msra.mxu0 0.0
  %4543 = vmatpush.msra.mxu0 0.0
  %4544 = vmatpush.msra.mxu0 0.0
  %4545 = vmatpush.msra.mxu0 %v4349
  %4546 = vmatpush.msra.mxu0 %v2063
  %4547 = vmatpush.msra.mxu0 %v2061
  %4548 = vmatpush.msra.mxu0 %v2059
  %4549 = vmatpush.msra.mxu0 %v2057
  %4550 = vmatpush.msra.mxu0 %v2055
  %4551 = vmatpush.msra.mxu0 %v2053
  %4552 = vmatmul.f32.gmra.mxu0 %v4493
  %v4553 = vpop.f32.mrf.mxu0
  %v4554 = vadd.f32 0.0, %v4553
  %4555 = vdwg.mxu0
  %v4556 = vmax.f32 %v4535, %v4554
  %v4557 = vld [vmem:[%s7] sm:$0xff]
  %v4558 = vld [vmem:[%s7 + $0x8] sm:$0xff]
  %v4559 = vld [vmem:[%s7 + $0x10] sm:$0xff]
  %v4560 = vld [vmem:[%s7 + $0x18] sm:$0xff]
  %v4561 = vld [vmem:[%s7 + $0x20] sm:$0xff]
  %v4562 = vld [vmem:[%s8] sm:$0xff]
  %4564 = vrot.lane.b32.xlu0 %v4371, 127
  %v4565 = vpop.permute.xlu0 %4564
  %v4568 = vsel %vm3389, %v4558, 0
  %4570 = vmatpush.msra.mxu0 0.0
  %4571 = vmatpush.msra.mxu0 0.0
  %4572 = vmatpush.msra.mxu0 0.0
  %4573 = vmatpush.msra.mxu0 0.0
  %4574 = vmatpush.msra.mxu0 0.0
  %4575 = vmatpush.msra.mxu0 0.0
  %4576 = vmatpush.msra.mxu0 0.0
  %4577 = vmatpush.msra.mxu0 0.0
  %4578 = vmatpush.msra.mxu0 0.0
  %4579 = vmatpush.msra.mxu0 0.0
  %4580 = vmatpush.msra.mxu0 0.0
  %4581 = vmatpush.msra.mxu0 0.0
  %4582 = vmatpush.msra.mxu0 0.0
  %4583 = vmatpush.msra.mxu0 0.0
  %4584 = vmatpush.msra.mxu0 0.0
  %4585 = vmatpush.msra.mxu0 %v4565
  %4586 = vmatmul.f32.gmra.mxu0 %v4568
  %v4587 = vpop.f32.mrf.mxu0
  %v4588 = vadd.f32 0.0, %v4587
  %4589 = vdwg.mxu0
  %v4591 = vsel %vm3389, %v4557, 0
  %4593 = vmatpush.msra.mxu0 0.0
  %4594 = vmatpush.msra.mxu0 0.0
  %4595 = vmatpush.msra.mxu0 0.0
  %4596 = vmatpush.msra.mxu0 0.0
  %4597 = vmatpush.msra.mxu0 0.0
  %4598 = vmatpush.msra.mxu0 0.0
  %4599 = vmatpush.msra.mxu0 0.0
  %4600 = vmatpush.msra.mxu0 0.0
  %4601 = vmatpush.msra.mxu0 0.0
  %4602 = vmatpush.msra.mxu0 0.0
  %4603 = vmatpush.msra.mxu0 0.0
  %4604 = vmatpush.msra.mxu0 0.0
  %4605 = vmatpush.msra.mxu0 0.0
  %4606 = vmatpush.msra.mxu0 0.0
  %4607 = vmatpush.msra.mxu0 0.0
  %4608 = vmatpush.msra.mxu0 %v4371
  %4609 = vmatmul.f32.gmra.mxu0 %v4591
  %v4610 = vpop.f32.mrf.mxu0
  %v4611 = vadd.f32 %v4588, %v4610
  %4612 = vdwg.mxu0
  %4613 = vrot.lane.b32.xlu0 %v4371, 126
  %v4614 = vpop.permute.xlu0 %4613
  %v4617 = vsel %vm3389, %v4559, 0
  %4619 = vmatpush.msra.mxu0 0.0
  %4620 = vmatpush.msra.mxu0 0.0
  %4621 = vmatpush.msra.mxu0 0.0
  %4622 = vmatpush.msra.mxu0 0.0
  %4623 = vmatpush.msra.mxu0 0.0
  %4624 = vmatpush.msra.mxu0 0.0
  %4625 = vmatpush.msra.mxu0 0.0
  %4626 = vmatpush.msra.mxu0 0.0
  %4627 = vmatpush.msra.mxu0 0.0
  %4628 = vmatpush.msra.mxu0 0.0
  %4629 = vmatpush.msra.mxu0 0.0
  %4630 = vmatpush.msra.mxu0 0.0
  %4631 = vmatpush.msra.mxu0 0.0
  %4632 = vmatpush.msra.mxu0 0.0
  %4633 = vmatpush.msra.mxu0 0.0
  %4634 = vmatpush.msra.mxu0 %v4614
  %4635 = vmatmul.f32.gmra.mxu0 %v4617
  %v4636 = vpop.f32.mrf.mxu0
  %v4637 = vadd.f32 0.0, %v4636
  %4638 = vdwg.mxu0
  %v4639 = vadd.f32 %v4611, %v4637
  %4640 = vrot.lane.b32.xlu0 %v4371, 125
  %v4641 = vpop.permute.xlu0 %4640
  %v4644 = vsel %vm3389, %v4560, 0
  %4646 = vmatpush.msra.mxu0 0.0
  %4647 = vmatpush.msra.mxu0 0.0
  %4648 = vmatpush.msra.mxu0 0.0
  %4649 = vmatpush.msra.mxu0 0.0
  %4650 = vmatpush.msra.mxu0 0.0
  %4651 = vmatpush.msra.mxu0 0.0
  %4652 = vmatpush.msra.mxu0 0.0
  %4653 = vmatpush.msra.mxu0 0.0
  %4654 = vmatpush.msra.mxu0 0.0
  %4655 = vmatpush.msra.mxu0 0.0
  %4656 = vmatpush.msra.mxu0 0.0
  %4657 = vmatpush.msra.mxu0 0.0
  %4658 = vmatpush.msra.mxu0 0.0
  %4659 = vmatpush.msra.mxu0 0.0
  %4660 = vmatpush.msra.mxu0 0.0
  %4661 = vmatpush.msra.mxu0 %v4641
  %4662 = vmatmul.f32.gmra.mxu0 %v4644
  %v4663 = vpop.f32.mrf.mxu0
  %v4664 = vadd.f32 0.0, %v4663
  %4665 = vdwg.mxu0
  %v4666 = vadd.f32 %v4639, %v4664
  %4667 = vrot.lane.b32.xlu0 %v4371, 124
  %v4668 = vpop.permute.xlu0 %4667
  %v4671 = vsel %vm3389, %v4561, 0
  %4673 = vmatpush.msra.mxu0 0.0
  %4674 = vmatpush.msra.mxu0 0.0
  %4675 = vmatpush.msra.mxu0 0.0
  %4676 = vmatpush.msra.mxu0 0.0
  %4677 = vmatpush.msra.mxu0 0.0
  %4678 = vmatpush.msra.mxu0 0.0
  %4679 = vmatpush.msra.mxu0 0.0
  %4680 = vmatpush.msra.mxu0 0.0
  %4681 = vmatpush.msra.mxu0 0.0
  %4682 = vmatpush.msra.mxu0 0.0
  %4683 = vmatpush.msra.mxu0 0.0
  %4684 = vmatpush.msra.mxu0 0.0
  %4685 = vmatpush.msra.mxu0 0.0
  %4686 = vmatpush.msra.mxu0 0.0
  %4687 = vmatpush.msra.mxu0 0.0
  %4688 = vmatpush.msra.mxu0 %v4668
  %4689 = vmatmul.f32.gmra.mxu0 %v4671
  %v4690 = vpop.f32.mrf.mxu0
  %v4691 = vadd.f32 0.0, %v4690
  %4692 = vdwg.mxu0
  %v4693 = vadd.f32 %v4666, %v4691
  %4695 = vset.pattern.permute.xlu0 0
  %4696 = vperm.xlu0 %4695, %v4562
  %v4697 = vpop.permute.xlu0 %4696
  %v4699 = vadd.f32 %v4693, %v4697
  %vm4700 = vcmp.ge.f32.partialorder %v4699, 0.0
  %v4701 = vmul.f32 %v4699, 0.2
  %v4702 = vsel %vm4700, %v4699, %v4701
  %vm4703 = vcmask 105472
  %v4705 = vsel %vm4703, %v4702, 0
  %v4708 = vsel %vm3649, %v945, 0
  %4710 = vmatpush.msra.mxu0 0.0
  %4711 = vmatpush.msra.mxu0 0.0
  %4712 = vmatpush.msra.mxu0 0.0
  %4713 = vmatpush.msra.mxu0 0.0
  %4714 = vmatpush.msra.mxu0 0.0
  %4715 = vmatpush.msra.mxu0 0.0
  %4716 = vmatpush.msra.mxu0 0.0
  %4717 = vmatpush.msra.mxu0 0.0
  %4718 = vmatpush.msra.mxu0 0.0
  %4719 = vmatpush.msra.mxu0 0.0
  %4720 = vmatpush.msra.mxu0 0.0
  %4721 = vmatpush.msra.mxu0 0.0
  %4722 = vmatpush.msra.mxu0 0.0
  %4723 = vmatpush.msra.mxu0 0.0
  %4724 = vmatpush.msra.mxu0 %v4708
  %4725 = vmatpush.msra.mxu0 %v943
  %4726 = vmatmul.f32.gmra.mxu0 %v4705
  %v4727 = vpop.f32.mrf.mxu0
  %v4728 = vadd.f32 0.0, %v4727
  %4729 = vdwg.mxu0
  %v4731 = vsel %vm3649, %v1501, 0
  %4733 = vmatpush.msra.mxu0 0.0
  %4734 = vmatpush.msra.mxu0 0.0
  %4735 = vmatpush.msra.mxu0 0.0
  %4736 = vmatpush.msra.mxu0 0.0
  %4737 = vmatpush.msra.mxu0 0.0
  %4738 = vmatpush.msra.mxu0 0.0
  %4739 = vmatpush.msra.mxu0 0.0
  %4740 = vmatpush.msra.mxu0 0.0
  %4741 = vmatpush.msra.mxu0 0.0
  %4742 = vmatpush.msra.mxu0 0.0
  %4743 = vmatpush.msra.mxu0 0.0
  %4744 = vmatpush.msra.mxu0 0.0
  %4745 = vmatpush.msra.mxu0 0.0
  %4746 = vmatpush.msra.mxu0 0.0
  %4747 = vmatpush.msra.mxu0 %v4731
  %4748 = vmatpush.msra.mxu0 %v1499
  %4749 = vmatmul.f32.gmra.mxu0 %v4705
  %v4750 = vpop.f32.mrf.mxu0
  %v4751 = vadd.f32 0.0, %v4750
  %4752 = vdwg.mxu0
  %v4753 = vmax.f32 %v4728, %v4751
  %v4755 = vsel %vm3649, %v2055, 0
  %4757 = vmatpush.msra.mxu0 0.0
  %4758 = vmatpush.msra.mxu0 0.0
  %4759 = vmatpush.msra.mxu0 0.0
  %4760 = vmatpush.msra.mxu0 0.0
  %4761 = vmatpush.msra.mxu0 0.0
  %4762 = vmatpush.msra.mxu0 0.0
  %4763 = vmatpush.msra.mxu0 0.0
  %4764 = vmatpush.msra.mxu0 0.0
  %4765 = vmatpush.msra.mxu0 0.0
  %4766 = vmatpush.msra.mxu0 0.0
  %4767 = vmatpush.msra.mxu0 0.0
  %4768 = vmatpush.msra.mxu0 0.0
  %4769 = vmatpush.msra.mxu0 0.0
  %4770 = vmatpush.msra.mxu0 0.0
  %4771 = vmatpush.msra.mxu0 %v4755
  %4772 = vmatpush.msra.mxu0 %v2053
  %4773 = vmatmul.f32.gmra.mxu0 %v4705
  %v4774 = vpop.f32.mrf.mxu0
  %v4775 = vadd.f32 0.0, %v4774
  %4776 = vdwg.mxu0
  %v4777 = vmax.f32 %v4753, %v4775
  %4779 = vrot.lane.b32.xlu0 %v4556, 127
  %v4780 = vpop.permute.xlu0 %4779
  %4782 = vmatpush.msra.mxu0 0.0
  %4783 = vmatpush.msra.mxu0 0.0
  %4784 = vmatpush.msra.mxu0 0.0
  %4785 = vmatpush.msra.mxu0 0.0
  %4786 = vmatpush.msra.mxu0 0.0
  %4787 = vmatpush.msra.mxu0 0.0
  %4788 = vmatpush.msra.mxu0 0.0
  %4789 = vmatpush.msra.mxu0 0.0
  %4790 = vmatpush.msra.mxu0 0.0
  %4791 = vmatpush.msra.mxu0 0.0
  %4792 = vmatpush.msra.mxu0 0.0
  %4793 = vmatpush.msra.mxu0 0.0
  %4794 = vmatpush.msra.mxu0 0.0
  %4795 = vmatpush.msra.mxu0 0.0
  %4796 = vmatpush.msra.mxu0 0.0
  %4797 = vmatpush.msra.mxu0 %v4780
  %4798 = vmatmul.f32.gmra.mxu0 %v4568
  %v4799 = vpop.f32.mrf.mxu0
  %v4800 = vadd.f32 0.0, %v4799
  %4801 = vdwg.mxu0
  %4802 = vmatpush.msra.mxu0 0.0
  %4803 = vmatpush.msra.mxu0 0.0
  %4804 = vmatpush.msra.mxu0 0.0
  %4805 = vmatpush.msra.mxu0 0.0
  %4806 = vmatpush.msra.mxu0 0.0
  %4807 = vmatpush.msra.mxu0 0.0
  %4808 = vmatpush.msra.mxu0 0.0
  %4809 = vmatpush.msra.mxu0 0.0
  %4810 = vmatpush.msra.mxu0 0.0
  %4811 = vmatpush.msra.mxu0 0.0
  %4812 = vmatpush.msra.mxu0 0.0
  %4813 = vmatpush.msra.mxu0 0.0
  %4814 = vmatpush.msra.mxu0 0.0
  %4815 = vmatpush.msra.mxu0 0.0
  %4816 = vmatpush.msra.mxu0 0.0
  %4817 = vmatpush.msra.mxu0 %v4556
  %4818 = vmatmul.f32.gmra.mxu0 %v4591
  %v4819 = vpop.f32.mrf.mxu0
  %v4820 = vadd.f32 %v4800, %v4819
  %4821 = vdwg.mxu0
  %4822 = vrot.lane.b32.xlu0 %v4556, 126
  %v4823 = vpop.permute.xlu0 %4822
  %4825 = vmatpush.msra.mxu0 0.0
  %4826 = vmatpush.msra.mxu0 0.0
  %4827 = vmatpush.msra.mxu0 0.0
  %4828 = vmatpush.msra.mxu0 0.0
  %4829 = vmatpush.msra.mxu0 0.0
  %4830 = vmatpush.msra.mxu0 0.0
  %4831 = vmatpush.msra.mxu0 0.0
  %4832 = vmatpush.msra.mxu0 0.0
  %4833 = vmatpush.msra.mxu0 0.0
  %4834 = vmatpush.msra.mxu0 0.0
  %4835 = vmatpush.msra.mxu0 0.0
  %4836 = vmatpush.msra.mxu0 0.0
  %4837 = vmatpush.msra.mxu0 0.0
  %4838 = vmatpush.msra.mxu0 0.0
  %4839 = vmatpush.msra.mxu0 0.0
  %4840 = vmatpush.msra.mxu0 %v4823
  %4841 = vmatmul.f32.gmra.mxu0 %v4617
  %v4842 = vpop.f32.mrf.mxu0
  %v4843 = vadd.f32 0.0, %v4842
  %4844 = vdwg.mxu0
  %v4845 = vadd.f32 %v4820, %v4843
  %4846 = vrot.lane.b32.xlu0 %v4556, 125
  %v4847 = vpop.permute.xlu0 %4846
  %4849 = vmatpush.msra.mxu0 0.0
  %4850 = vmatpush.msra.mxu0 0.0
  %4851 = vmatpush.msra.mxu0 0.0
  %4852 = vmatpush.msra.mxu0 0.0
  %4853 = vmatpush.msra.mxu0 0.0
  %4854 = vmatpush.msra.mxu0 0.0
  %4855 = vmatpush.msra.mxu0 0.0
  %4856 = vmatpush.msra.mxu0 0.0
  %4857 = vmatpush.msra.mxu0 0.0
  %4858 = vmatpush.msra.mxu0 0.0
  %4859 = vmatpush.msra.mxu0 0.0
  %4860 = vmatpush.msra.mxu0 0.0
  %4861 = vmatpush.msra.mxu0 0.0
  %4862 = vmatpush.msra.mxu0 0.0
  %4863 = vmatpush.msra.mxu0 0.0
  %4864 = vmatpush.msra.mxu0 %v4847
  %4865 = vmatmul.f32.gmra.mxu0 %v4644
  %v4866 = vpop.f32.mrf.mxu0
  %v4867 = vadd.f32 0.0, %v4866
  %4868 = vdwg.mxu0
  %v4869 = vadd.f32 %v4845, %v4867
  %4870 = vrot.lane.b32.xlu0 %v4556, 124
  %v4871 = vpop.permute.xlu0 %4870
  %4873 = vmatpush.msra.mxu0 0.0
  %4874 = vmatpush.msra.mxu0 0.0
  %4875 = vmatpush.msra.mxu0 0.0
  %4876 = vmatpush.msra.mxu0 0.0
  %4877 = vmatpush.msra.mxu0 0.0
  %4878 = vmatpush.msra.mxu0 0.0
  %4879 = vmatpush.msra.mxu0 0.0
  %4880 = vmatpush.msra.mxu0 0.0
  %4881 = vmatpush.msra.mxu0 0.0
  %4882 = vmatpush.msra.mxu0 0.0
  %4883 = vmatpush.msra.mxu0 0.0
  %4884 = vmatpush.msra.mxu0 0.0
  %4885 = vmatpush.msra.mxu0 0.0
  %4886 = vmatpush.msra.mxu0 0.0
  %4887 = vmatpush.msra.mxu0 0.0
  %4888 = vmatpush.msra.mxu0 %v4871
  %4889 = vmatmul.f32.gmra.mxu0 %v4671
  %v4890 = vpop.f32.mrf.mxu0
  %v4891 = vadd.f32 0.0, %v4890
  %4892 = vdwg.mxu0
  %v4893 = vadd.f32 %v4869, %v4891
  %v4894 = vadd.f32 %v4893, %v4697
  %vm4895 = vcmp.ge.f32.partialorder %v4894, 0.0
  %v4896 = vmul.f32 %v4894, 0.2
  %v4897 = vsel %vm4895, %v4894, %v4896
  %v4899 = vsel %vm4703, %v4897, 0
  %4901 = vmatpush.msra.mxu0 0.0
  %4902 = vmatpush.msra.mxu0 0.0
  %4903 = vmatpush.msra.mxu0 0.0
  %4904 = vmatpush.msra.mxu0 0.0
  %4905 = vmatpush.msra.mxu0 0.0
  %4906 = vmatpush.msra.mxu0 0.0
  %4907 = vmatpush.msra.mxu0 0.0
  %4908 = vmatpush.msra.mxu0 0.0
  %4909 = vmatpush.msra.mxu0 0.0
  %4910 = vmatpush.msra.mxu0 0.0
  %4911 = vmatpush.msra.mxu0 0.0
  %4912 = vmatpush.msra.mxu0 0.0
  %4913 = vmatpush.msra.mxu0 0.0
  %4914 = vmatpush.msra.mxu0 0.0
  %4915 = vmatpush.msra.mxu0 %v4708
  %4916 = vmatpush.msra.mxu0 %v943
  %4917 = vmatmul.f32.gmra.mxu0 %v4899
  %v4918 = vpop.f32.mrf.mxu0
  %v4919 = vadd.f32 0.0, %v4918
  %4920 = vdwg.mxu0
  %4921 = vmatpush.msra.mxu0 0.0
  %4922 = vmatpush.msra.mxu0 0.0
  %4923 = vmatpush.msra.mxu0 0.0
  %4924 = vmatpush.msra.mxu0 0.0
  %4925 = vmatpush.msra.mxu0 0.0
  %4926 = vmatpush.msra.mxu0 0.0
  %4927 = vmatpush.msra.mxu0 0.0
  %4928 = vmatpush.msra.mxu0 0.0
  %4929 = vmatpush.msra.mxu0 0.0
  %4930 = vmatpush.msra.mxu0 0.0
  %4931 = vmatpush.msra.mxu0 0.0
  %4932 = vmatpush.msra.mxu0 0.0
  %4933 = vmatpush.msra.mxu0 0.0
  %4934 = vmatpush.msra.mxu0 0.0
  %4935 = vmatpush.msra.mxu0 %v4731
  %4936 = vmatpush.msra.mxu0 %v1499
  %4937 = vmatmul.f32.gmra.mxu0 %v4899
  %v4938 = vpop.f32.mrf.mxu0
  %v4939 = vadd.f32 0.0, %v4938
  %4940 = vdwg.mxu0
  %v4941 = vmax.f32 %v4919, %v4939
  %4942 = vmatpush.msra.mxu0 0.0
  %4943 = vmatpush.msra.mxu0 0.0
  %4944 = vmatpush.msra.mxu0 0.0
  %4945 = vmatpush.msra.mxu0 0.0
  %4946 = vmatpush.msra.mxu0 0.0
  %4947 = vmatpush.msra.mxu0 0.0
  %4948 = vmatpush.msra.mxu0 0.0
  %4949 = vmatpush.msra.mxu0 0.0
  %4950 = vmatpush.msra.mxu0 0.0
  %4951 = vmatpush.msra.mxu0 0.0
  %4952 = vmatpush.msra.mxu0 0.0
  %4953 = vmatpush.msra.mxu0 0.0
  %4954 = vmatpush.msra.mxu0 0.0
  %4955 = vmatpush.msra.mxu0 0.0
  %4956 = vmatpush.msra.mxu0 %v4755
  %4957 = vmatpush.msra.mxu0 %v2053
  %4958 = vmatmul.f32.gmra.mxu0 %v4899
  %v4959 = vpop.f32.mrf.mxu0
  %v4960 = vadd.f32 0.0, %v4959
  %4961 = vdwg.mxu0
  %v4962 = vmax.f32 %v4941, %v4960
  %v4963 = vld [vmem:[%s9] sm:$0x3]
  %v4964 = vld [vmem:[%s9 + $0x2] sm:$0x3]
  %v4965 = vld [vmem:[%s9 + $0x4] sm:$0x3]
  %v4966 = vld [vmem:[%s10] sm:$0x3]
  %v4967 = vld [vmem:[%s11] sm:$0xf]
  %v4968 = vld [vmem:[%s11 + $0x4] sm:$0xf]
  %v4969 = vld [vmem:[%s12] sm:$0xf]
  %4971 = vrot.lane.b32.xlu0 %v4777, 127
  %v4972 = vpop.permute.xlu0 %4971
  %v4975 = vsel %vm3389, %v4964, 0
  %4977 = vmatpush.msra.mxu0 0.0
  %4978 = vmatpush.msra.mxu0 0.0
  %4979 = vmatpush.msra.mxu0 0.0
  %4980 = vmatpush.msra.mxu0 0.0
  %4981 = vmatpush.msra.mxu0 0.0
  %4982 = vmatpush.msra.mxu0 0.0
  %4983 = vmatpush.msra.mxu0 0.0
  %4984 = vmatpush.msra.mxu0 0.0
  %4985 = vmatpush.msra.mxu0 0.0
  %4986 = vmatpush.msra.mxu0 0.0
  %4987 = vmatpush.msra.mxu0 0.0
  %4988 = vmatpush.msra.mxu0 0.0
  %4989 = vmatpush.msra.mxu0 0.0
  %4990 = vmatpush.msra.mxu0 0.0
  %4991 = vmatpush.msra.mxu0 0.0
  %4992 = vmatpush.msra.mxu0 %v4972
  %4993 = vmatmul.f32.gmra.mxu0 %v4975
  %v4994 = vpop.f32.mrf.mxu0
  %v4995 = vadd.f32 0.0, %v4994
  %4996 = vdwg.mxu0
  %v4998 = vsel %vm3389, %v4963, 0
  %5000 = vmatpush.msra.mxu0 0.0
  %5001 = vmatpush.msra.mxu0 0.0
  %5002 = vmatpush.msra.mxu0 0.0
  %5003 = vmatpush.msra.mxu0 0.0
  %5004 = vmatpush.msra.mxu0 0.0
  %5005 = vmatpush.msra.mxu0 0.0
  %5006 = vmatpush.msra.mxu0 0.0
  %5007 = vmatpush.msra.mxu0 0.0
  %5008 = vmatpush.msra.mxu0 0.0
  %5009 = vmatpush.msra.mxu0 0.0
  %5010 = vmatpush.msra.mxu0 0.0
  %5011 = vmatpush.msra.mxu0 0.0
  %5012 = vmatpush.msra.mxu0 0.0
  %5013 = vmatpush.msra.mxu0 0.0
  %5014 = vmatpush.msra.mxu0 0.0
  %5015 = vmatpush.msra.mxu0 %v4777
  %5016 = vmatmul.f32.gmra.mxu0 %v4998
  %v5017 = vpop.f32.mrf.mxu0
  %v5018 = vadd.f32 %v4995, %v5017
  %5019 = vdwg.mxu0
  %5020 = vrot.lane.b32.xlu0 %v4777, 126
  %v5021 = vpop.permute.xlu0 %5020
  %v5024 = vsel %vm3389, %v4965, 0
  %5026 = vmatpush.msra.mxu0 0.0
  %5027 = vmatpush.msra.mxu0 0.0
  %5028 = vmatpush.msra.mxu0 0.0
  %5029 = vmatpush.msra.mxu0 0.0
  %5030 = vmatpush.msra.mxu0 0.0
  %5031 = vmatpush.msra.mxu0 0.0
  %5032 = vmatpush.msra.mxu0 0.0
  %5033 = vmatpush.msra.mxu0 0.0
  %5034 = vmatpush.msra.mxu0 0.0
  %5035 = vmatpush.msra.mxu0 0.0
  %5036 = vmatpush.msra.mxu0 0.0
  %5037 = vmatpush.msra.mxu0 0.0
  %5038 = vmatpush.msra.mxu0 0.0
  %5039 = vmatpush.msra.mxu0 0.0
  %5040 = vmatpush.msra.mxu0 0.0
  %5041 = vmatpush.msra.mxu0 %v5021
  %5042 = vmatmul.f32.gmra.mxu0 %v5024
  %v5043 = vpop.f32.mrf.mxu0
  %v5044 = vadd.f32 0.0, %v5043
  %5045 = vdwg.mxu0
  %v5046 = vadd.f32 %v5018, %v5044
  %5048 = vset.pattern.permute.xlu0 0
  %5049 = vperm.xlu0 %5048, %v4966
  %v5050 = vpop.permute.xlu0 %5049
  %v5052 = vadd.f32 %v5046, %v5050
  %vm5053 = vcmp.gt.f32.partialorder %v5052, 0.0
  %v5054 = vmul.f32 %v5052, 1.442695
  %v5055 = vpow.pop %v5054
  %v5056 = vsub.f32 %v5055, 1.0
  %v5057 = vsel %vm5053, %v5052, %v5056
  %5059 = vrot.lane.b32.xlu0 %v5057, 127
  %v5060 = vpop.permute.xlu0 %5059
  %v5062 = vsel %vm71, %v4968, 0
  %v5064 = vsel %vm75, %v5060, 0
  %5066 = vmatpush.msra.mxu0 0.0
  %5067 = vmatpush.msra.mxu0 0.0
  %5068 = vmatpush.msra.mxu0 0.0
  %5069 = vmatpush.msra.mxu0 0.0
  %5070 = vmatpush.msra.mxu0 0.0
  %5071 = vmatpush.msra.mxu0 0.0
  %5072 = vmatpush.msra.mxu0 0.0
  %5073 = vmatpush.msra.mxu0 0.0
  %5074 = vmatpush.msra.mxu0 0.0
  %5075 = vmatpush.msra.mxu0 0.0
  %5076 = vmatpush.msra.mxu0 0.0
  %5077 = vmatpush.msra.mxu0 0.0
  %5078 = vmatpush.msra.mxu0 0.0
  %5079 = vmatpush.msra.mxu0 0.0
  %5080 = vmatpush.msra.mxu0 0.0
  %5081 = vmatpush.msra.mxu0 %v5064
  %5082 = vmatmul.f32.gmra.mxu0 %v5062
  %v5083 = vpop.f32.mrf.mxu0
  %v5084 = vadd.f32 0.0, %v5083
  %5085 = vdwg.mxu0
  %v5087 = vsel %vm71, %v4967, 0
  %v5089 = vsel %vm75, %v5057, 0
  %5091 = vmatpush.msra.mxu0 0.0
  %5092 = vmatpush.msra.mxu0 0.0
  %5093 = vmatpush.msra.mxu0 0.0
  %5094 = vmatpush.msra.mxu0 0.0
  %5095 = vmatpush.msra.mxu0 0.0
  %5096 = vmatpush.msra.mxu0 0.0
  %5097 = vmatpush.msra.mxu0 0.0
  %5098 = vmatpush.msra.mxu0 0.0
  %5099 = vmatpush.msra.mxu0 0.0
  %5100 = vmatpush.msra.mxu0 0.0
  %5101 = vmatpush.msra.mxu0 0.0
  %5102 = vmatpush.msra.mxu0 0.0
  %5103 = vmatpush.msra.mxu0 0.0
  %5104 = vmatpush.msra.mxu0 0.0
  %5105 = vmatpush.msra.mxu0 0.0
  %5106 = vmatpush.msra.mxu0 %v5089
  %5107 = vmatmul.f32.gmra.mxu0 %v5087
  %v5108 = vpop.f32.mrf.mxu0
  %v5109 = vadd.f32 %v5084, %v5108
  %5110 = vdwg.mxu0
  %v5111 = vadd.f32 %v5109, %v4969
  %vm5112 = vcmask 3072
  %v5113 = vsel %vm5112, %v5111, -inf
  %v5114 = vrot.slane %v5113, 4
  %v5115 = vmax.f32 %v5113, %v5114
  %v5116 = vrot.slane %v5115, 2
  %v5117 = vmax.f32 %v5115, %v5116
  %v5118 = vrot.slane %v5117, 1
  %v5119 = vmax.f32 %v5117, %v5118
  %v5120 = vsub.f32 %v5111, %v5119
  %v5121 = vmul.f32 %v5120, 1.442695
  %v5122 = vpow.pop %v5121
  %v5123 = vsel %vm5112, %v5122, 0.0
  %v5124 = vrot.slane %v5123, 4
  %v5125 = vadd.f32 %v5123, %v5124
  %v5126 = vrot.slane %v5125, 2
  %v5127 = vadd.f32 %v5125, %v5126
  %v5128 = vrot.slane %v5127, 1
  %v5129 = vadd.f32 %v5127, %v5128
  %v5130 = vlog2.pop %v5129
  %v5131 = vmul.f32 %v5130, 0.6931472
  %v5132 = vsub.f32 %v5120, %v5131
  %5133 = vst.msk [vmem:[%s13] sm:$0xf] %vm5112, %v5132
  %5135 = vrot.lane.b32.xlu0 %v4962, 127
  %v5136 = vpop.permute.xlu0 %5135
  %5138 = vmatpush.msra.mxu0 0.0
  %5139 = vmatpush.msra.mxu0 0.0
  %5140 = vmatpush.msra.mxu0 0.0
  %5141 = vmatpush.msra.mxu0 0.0
  %5142 = vmatpush.msra.mxu0 0.0
  %5143 = vmatpush.msra.mxu0 0.0
  %5144 = vmatpush.msra.mxu0 0.0
  %5145 = vmatpush.msra.mxu0 0.0
  %5146 = vmatpush.msra.mxu0 0.0
  %5147 = vmatpush.msra.mxu0 0.0
  %5148 = vmatpush.msra.mxu0 0.0
  %5149 = vmatpush.msra.mxu0 0.0
  %5150 = vmatpush.msra.mxu0 0.0
  %5151 = vmatpush.msra.mxu0 0.0
  %5152 = vmatpush.msra.mxu0 0.0
  %5153 = vmatpush.msra.mxu0 %v5136
  %5154 = vmatmul.f32.gmra.mxu0 %v4975
  %v5155 = vpop.f32.mrf.mxu0
  %v5156 = vadd.f32 0.0, %v5155
  %5157 = vdwg.mxu0
  %5158 = vmatpush.msra.mxu0 0.0
  %5159 = vmatpush.msra.mxu0 0.0
  %5160 = vmatpush.msra.mxu0 0.0
  %5161 = vmatpush.msra.mxu0 0.0
  %5162 = vmatpush.msra.mxu0 0.0
  %5163 = vmatpush.msra.mxu0 0.0
  %5164 = vmatpush.msra.mxu0 0.0
  %5165 = vmatpush.msra.mxu0 0.0
  %5166 = vmatpush.msra.mxu0 0.0
  %5167 = vmatpush.msra.mxu0 0.0
  %5168 = vmatpush.msra.mxu0 0.0
  %5169 = vmatpush.msra.mxu0 0.0
  %5170 = vmatpush.msra.mxu0 0.0
  %5171 = vmatpush.msra.mxu0 0.0
  %5172 = vmatpush.msra.mxu0 0.0
  %5173 = vmatpush.msra.mxu0 %v4962
  %5174 = vmatmul.f32.gmra.mxu0 %v4998
  %v5175 = vpop.f32.mrf.mxu0
  %v5176 = vadd.f32 %v5156, %v5175
  %5177 = vdwg.mxu0
  %5178 = vrot.lane.b32.xlu0 %v4962, 126
  %v5179 = vpop.permute.xlu0 %5178
  %5181 = vmatpush.msra.mxu0 0.0
  %5182 = vmatpush.msra.mxu0 0.0
  %5183 = vmatpush.msra.mxu0 0.0
  %5184 = vmatpush.msra.mxu0 0.0
  %5185 = vmatpush.msra.mxu0 0.0
  %5186 = vmatpush.msra.mxu0 0.0
  %5187 = vmatpush.msra.mxu0 0.0
  %5188 = vmatpush.msra.mxu0 0.0
  %5189 = vmatpush.msra.mxu0 0.0
  %5190 = vmatpush.msra.mxu0 0.0
  %5191 = vmatpush.msra.mxu0 0.0
  %5192 = vmatpush.msra.mxu0 0.0
  %5193 = vmatpush.msra.mxu0 0.0
  %5194 = vmatpush.msra.mxu0 0.0
  %5195 = vmatpush.msra.mxu0 0.0
  %5196 = vmatpush.msra.mxu0 %v5179
  %5197 = vmatmul.f32.gmra.mxu0 %v5024
  %v5198 = vpop.f32.mrf.mxu0
  %v5199 = vadd.f32 0.0, %v5198
  %5200 = vdwg.mxu0
  %v5201 = vadd.f32 %v5176, %v5199
  %v5202 = vadd.f32 %v5201, %v5050
  %vm5203 = vcmp.gt.f32.partialorder %v5202, 0.0
  %v5204 = vmul.f32 %v5202, 1.442695
  %v5205 = vpow.pop %v5204
  %v5206 = vsub.f32 %v5205, 1.0
  %v5207 = vsel %vm5203, %v5202, %v5206
  %5209 = vrot.lane.b32.xlu0 %v5207, 127
  %v5210 = vpop.permute.xlu0 %5209
  %v5211 = vsel %vm75, %v5210, 0
  %5213 = vmatpush.msra.mxu0 0.0
  %5214 = vmatpush.msra.mxu0 0.0
  %5215 = vmatpush.msra.mxu0 0.0
  %5216 = vmatpush.msra.mxu0 0.0
  %5217 = vmatpush.msra.mxu0 0.0
  %5218 = vmatpush.msra.mxu0 0.0
  %5219 = vmatpush.msra.mxu0 0.0
  %5220 = vmatpush.msra.mxu0 0.0
  %5221 = vmatpush.msra.mxu0 0.0
  %5222 = vmatpush.msra.mxu0 0.0
  %5223 = vmatpush.msra.mxu0 0.0
  %5224 = vmatpush.msra.mxu0 0.0
  %5225 = vmatpush.msra.mxu0 0.0
  %5226 = vmatpush.msra.mxu0 0.0
  %5227 = vmatpush.msra.mxu0 0.0
  %5228 = vmatpush.msra.mxu0 %v5211
  %5229 = vmatmul.f32.gmra.mxu0 %v5062
  %v5230 = vpop.f32.mrf.mxu0
  %v5231 = vadd.f32 0.0, %v5230
  %5232 = vdwg.mxu0
  %v5233 = vsel %vm75, %v5207, 0
  %5235 = vmatpush.msra.mxu0 0.0
  %5236 = vmatpush.msra.mxu0 0.0
  %5237 = vmatpush.msra.mxu0 0.0
  %5238 = vmatpush.msra.mxu0 0.0
  %5239 = vmatpush.msra.mxu0 0.0
  %5240 = vmatpush.msra.mxu0 0.0
  %5241 = vmatpush.msra.mxu0 0.0
  %5242 = vmatpush.msra.mxu0 0.0
  %5243 = vmatpush.msra.mxu0 0.0
  %5244 = vmatpush.msra.mxu0 0.0
  %5245 = vmatpush.msra.mxu0 0.0
  %5246 = vmatpush.msra.mxu0 0.0
  %5247 = vmatpush.msra.mxu0 0.0
  %5248 = vmatpush.msra.mxu0 0.0
  %5249 = vmatpush.msra.mxu0 0.0
  %5250 = vmatpush.msra.mxu0 %v5233
  %5251 = vmatmul.f32.gmra.mxu0 %v5087
  %v5252 = vpop.f32.mrf.mxu0
  %v5253 = vadd.f32 %v5231, %v5252
  %5254 = vdwg.mxu0
  %v5255 = vadd.f32 %v5253, %v4969
  %v5256 = vsel %vm5112, %v5255, -inf
  %v5257 = vrot.slane %v5256, 4
  %v5258 = vmax.f32 %v5256, %v5257
  %v5259 = vrot.slane %v5258, 2
  %v5260 = vmax.f32 %v5258, %v5259
  %v5261 = vrot.slane %v5260, 1
  %v5262 = vmax.f32 %v5260, %v5261
  %v5263 = vsub.f32 %v5255, %v5262
  %v5264 = vmul.f32 %v5263, 1.442695
  %v5265 = vpow.pop %v5264
  %v5266 = vsel %vm5112, %v5265, 0.0
  %v5267 = vrot.slane %v5266, 4
  %v5268 = vadd.f32 %v5266, %v5267
  %v5269 = vrot.slane %v5268, 2
  %v5270 = vadd.f32 %v5268, %v5269
  %v5271 = vrot.slane %v5270, 1
  %v5272 = vadd.f32 %v5270, %v5271
  %v5273 = vlog2.pop %v5272
  %v5274 = vmul.f32 %v5273, 0.6931472
  %v5275 = vsub.f32 %v5263, %v5274
  %s5276 = scalar_lea.vmem %s13, 4
  %5277 = vst.msk [vmem:[%s5276] sm:$0xf] %vm5112, %v5275
  // Predicated region
  $region54: #{_lambda_.1} parent=0 // pred_check
    _
  $region55: #{_lambda_.1} parent=0 // pred_check_branch
    %5279 = sbr.rel (0) target = $region57
  $region56: #{_lambda_.1} parent=0 // pred_region
    _
  $region57: #{_lambda_.1} parent=0 // pred_fallthru
    _
  // Predicated region
  $region58: #{_lambda_.1} parent=0 // pred_check
    _
  $region59: #{_lambda_.1} parent=0 // pred_check_branch
    %5281 = sbr.rel (0) target = $region61
  $region60: #{_lambda_.1} parent=0 // pred_region
    _
  $region61: #{_lambda_.1} parent=0 // pred_fallthru
    _

</llo_original>
